<compile_context>
chip_gen: v7x
topology: tpu7x:2x2x1
jax: 0.10.0
libtpu: 0.0.40
codegen_flags: <defaults>
</compile_context>

<pallas_src>
import functools

import jax
import jax.numpy as jnp
from jax import lax
from jax.experimental import pallas as pl
from jax.experimental.pallas import tpu as pltpu

_CDT = jnp.bfloat16      # MXU-operand / on-chip activation dtype (native on v5e/v6e/v7x)
_LANE = 128


# ---------------------------------------------------------------------------
# tiling / VMEM budgeting helpers
# ---------------------------------------------------------------------------
def _rup(x, m):
    return -(-x // m) * m


def _vmem_capacity_bytes():
    """Physical VMEM per TensorCore (64 MiB on v7x, 128 MiB on v5e/v6e)."""
    try:
        cap = int(getattr(pltpu.get_tpu_info(), "vmem_capacity_bytes", 0))
        if cap > 0:
            return cap
    except Exception:
        pass
    return 128 * 1024 * 1024


def _pick_row_tile(Ho, vmem_of_tr, budget):
    """Largest row tile (multiple of 8 dividing Ho, or Ho itself) whose estimated VMEM
    footprint fits the budget.  Bigger tiles shrink the conv1 halo overhead (~2/(TR+2)),
    the per-grid-step cost (~0.35us) and better fill the MXU's M dimension."""
    cands = [tr for tr in range(8, Ho + 1, 8) if Ho % tr == 0]
    if Ho not in cands:
        cands.append(Ho)
    for tr in sorted(cands, reverse=True):
        if vmem_of_tr(tr) <= budget:
            return tr
    return min(cands)


def _vmem_bytes_s1(TR, H, W, Cin, P, in_b, out_b, flat_out, has_sc):
    """Conservative (flat-summed, padding-aware) VMEM estimate for one stride-1 tile."""
    TRm = TR + 2
    lane = lambda c: _rup(c, _LANE)
    sub = lambda s: _rup(s, 16)
    t = 0
    t += (H + 4) * sub(W + 2) * lane(Cin) * 2                  # padded-x scratch (bf16)
    t += TRm * sub(W + 2) * lane(P) * 2                        # conv2-pad scratch (bf16)
    t += 2 * H * sub(W) * lane(Cin) * in_b                     # x block (double buffered)
    if flat_out:
        t += 2 * sub(TR) * lane(W * P) * out_b                 # out block (double buffered)
    else:
        t += 2 * TR * sub(W) * lane(P) * out_b
    t += sub(TRm * W) * lane(9 * Cin) * 2                      # conv1 im2col patch (bf16)
    t += sub(TRm * W) * lane(P) * 4                            # conv1 f32 result
    t += sub(TR * W) * lane(9 * P) * 2                         # conv2 im2col patch (bf16)
    t += 2 * sub(TR * W) * lane(P) * 4                         # conv2 acc + shortcut (f32)
    t += lane(P) * (9 * Cin + 9 * P + (Cin if has_sc else 0)) * 2 + 3 * lane(P) * 4
    return t


def _vmem_bytes_s2(TR, Ho, Wo, Cin, P, out_b, flat_out):
    """Conservative VMEM estimate for one stride-2 tile (input is the bf16 s2d image)."""
    TRm = TR + 2
    lane = lambda c: _rup(c, _LANE)
    sub = lambda s: _rup(s, 16)
    t = 0
    t += 2 * (Ho + 3) * sub(Wo + 1) * lane(4 * Cin) * 2        # s2d x block (double buffered)
    t += TRm * sub(Wo + 2) * lane(P) * 2                       # conv2-pad scratch (bf16)
    if flat_out:
        t += 2 * sub(TR) * lane(Wo * P) * out_b
    else:
        t += 2 * TR * sub(Wo) * lane(P) * out_b
    t += sub(TRm * Wo) * lane(16 * Cin) * 2                    # conv1 im2col patch
    t += sub(TRm * Wo) * lane(P) * 4                           # conv1 f32 result
    t += sub(TR * Wo) * lane(9 * P) * 2                        # conv2 im2col patch
    t += 2 * sub(TR * Wo) * lane(P) * 4                        # conv2 acc + shortcut
    t += lane(P) * (16 * Cin + 9 * P + Cin) * 2 + 3 * lane(P) * 4
    return t


# ---------------------------------------------------------------------------
# in-kernel conv helpers
# ---------------------------------------------------------------------------
def _conv_taps(tap_fn, w_ref, *, n_taps, k_per_tap, m):
    """Convolution as matmul over n_taps shifted windows (f32 accumulation on the MXU).

    Narrow channels (per-tap K < 128): one im2col patch -> single matmul, K = n_taps*k_per_tap.
    Wide channels  (per-tap K >= 128): per-tap accumulating matmuls -- skips the big lane
    concat and its load/store traffic once K alone already fills the MXU contraction dim."""
    if k_per_tap < _LANE:
        patch = jnp.concatenate([tap_fn(i) for i in range(n_taps)], axis=-1)
        patch = patch.reshape(m, n_taps * k_per_tap)
        return jnp.dot(patch, w_ref[...], preferred_element_type=jnp.float32)
    acc = None
    for i in range(n_taps):
        tap = tap_fn(i).reshape(m, k_per_tap)
        part = jnp.dot(tap, w_ref[i * k_per_tap:(i + 1) * k_per_tap, :],
                       preferred_element_type=jnp.float32)
        acc = part if acc is None else acc + part
    return acc


def _conv2_and_residual(mid3, sc_in, w2_ref, b2_ref, sc_wb, o_ref, mid_scr, *,
                        TR, Wo, P, Cin, flat_out):
    """Fused tail: conv2 (3x3, pad 1) + shortcut + residual add + ReLU6 + store.

    mid3 : (TR+2, Wo, P) f32   conv1 output incl. one (already zeroed) halo row each side.
    sc_in: (TR, Wo, Cin) bf16  shortcut input at this tile's output positions.
    sc_wb: (ws_ref, bs_ref) for the 1x1-conv shortcut, or None for the identity shortcut.
    """
    TRm = TR + 2
    # conv2's W-axis zero padding lives in a persistent VMEM scratch: zero only the two
    # border columns and write conv1's output once into the interior (no concat copy).
    mid_scr[:, 0:1, :] = jnp.zeros((TRm, 1, P), _CDT)
    mid_scr[:, Wo + 1:Wo + 2, :] = jnp.zeros((TRm, 1, P), _CDT)
    mid_scr[:, 1:Wo + 1, :] = mid3.astype(_CDT)

    def tap2(i):
        kh, kw = i // 3, i % 3
        return mid_scr[kh:kh + TR, kw:kw + Wo, :]

    out = _conv_taps(tap2, w2_ref, n_taps=9, k_per_tap=P, m=TR * Wo)
    out = out + b2_ref[0][None, :]

    if sc_wb is not None:                                   # 1x1-conv shortcut (bf16 MXU)
        ws_ref, bs_ref = sc_wb
        sc = jnp.dot(sc_in.reshape(TR * Wo, Cin), ws_ref[...],
                     preferred_element_type=jnp.float32) + bs_ref[0][None, :]
    else:                                                   # identity shortcut (Cin == P)
        sc = sc_in.reshape(TR * Wo, P).astype(jnp.float32)

    out = jnp.clip(out + sc, 0.0, 6.0).astype(o_ref.dtype)
    if flat_out:
        o_ref[0] = out.reshape(TR, Wo * P)                  # lane-dense store (Wo*P lanes)
    else:
        o_ref[0] = out.reshape(TR, Wo, P)


# ---------------------------------------------------------------------------
# fused kernels
# ---------------------------------------------------------------------------
def _block_kernel_s1(x_ref, w1_ref, b1_ref, w2_ref, b2_ref, *rest,
                     H, W, Cin, P, TR, Ho, has_shortcut, flat_out):
    """stride=1 BasicBlock, one (batch, row-tile) grid cell.

    x_ref : (1, H, W, Cin) raw image (resident across row tiles).
    w1_ref: (9*Cin, P) bf16   w2_ref: (9*P, P) bf16   biases: (1, P) f32
    scratch: xp_scr (H+4, W+2, Cin) bf16 padded copy; mid_scr (TR+2, W+2, P) bf16 conv2 pad.
    """
    if has_shortcut:
        ws_ref, bs_ref, o_ref, xp_scr, mid_scr = rest
        sc_wb = (ws_ref, bs_ref)
    else:
        o_ref, xp_scr, mid_scr = rest
        sc_wb = None

    t = pl.program_id(1)

    @pl.when(t == 0)
    def _():
        # Build the padded bf16 copy of this image once per batch element: zero ONLY the
        # border strips, then write the interior exactly once (no redundant full zero).
        xp_scr[0:2, :, :] = jnp.zeros((2, W + 2, Cin), _CDT)
        xp_scr[H + 2:H + 4, :, :] = jnp.zeros((2, W + 2, Cin), _CDT)
        xp_scr[2:H + 2, 0:1, :] = jnp.zeros((H, 1, Cin), _CDT)
        xp_scr[2:H + 2, W + 1:W + 2, :] = jnp.zeros((H, 1, Cin), _CDT)
        xp_scr[2:H + 2, 1:W + 1, :] = x_ref[0].astype(_CDT)

    TRm = TR + 2
    r0 = pl.multiple_of(t * TR, TR)

    def tap1(i):                                            # conv1 tap (kh, kw)
        kh, kw = i // 3, i % 3
        return xp_scr[pl.ds(r0 + kh, TRm), kw:kw + W, :]    # (TRm, W, Cin) bf16

    mid = _conv_taps(tap1, w1_ref, n_taps=9, k_per_tap=Cin, m=TRm * W)
    mid = jnp.clip(mid + b1_ref[0][None, :], 0.0, 6.0)
    mid3 = mid.reshape(TRm, W, P)

    # conv1 halo rows that fall outside the image are conv2's zero padding
    j = lax.broadcasted_iota(jnp.int32, (TRm, 1, 1), 0)
    row = (r0 - 1) + j
    mid3 = jnp.where((row >= 0) & (row < Ho), mid3, 0.0)

    sc_in = xp_scr[pl.ds(r0 + 2, TR), 1:W + 1, :]           # x at this tile's output rows
    _conv2_and_residual(mid3, sc_in, w2_ref, b2_ref, sc_wb, o_ref, mid_scr,
                        TR=TR, Wo=W, P=P, Cin=Cin, flat_out=flat_out)


def _block_kernel_s2(x_ref, w1_ref, b1_ref, w2_ref, b2_ref, ws_ref, bs_ref, o_ref, mid_scr,
                     *, Ho, Wo, Cin, P, TR, flat_out):
    """stride=2 BasicBlock, one (batch, row-tile) grid cell.

    x_ref : (1, Ho+3, Wo+1, 4*Cin) bf16 space-to-depth image (pad ring + halo margin baked
            in by the wrapper); the 3x3/stride-2 conv1 becomes a dense 2x2/stride-1 conv.
    """
    t = pl.program_id(1)
    TRm = TR + 2
    r0 = pl.multiple_of(t * TR, TR)

    def tap1(i):                                            # 2x2 tap over the s2d image
        kh, kw = i // 2, i % 2
        return x_ref[0, pl.ds(r0 + kh, TRm), kw:kw + Wo, :]

    mid = _conv_taps(tap1, w1_ref, n_taps=4, k_per_tap=4 * Cin, m=TRm * Wo)
    mid = jnp.clip(mid + b1_ref[0][None, :], 0.0, 6.0)
    mid3 = mid.reshape(TRm, Wo, P)

    j = lax.broadcasted_iota(jnp.int32, (TRm, 1, 1), 0)
    row = (r0 - 1) + j
    mid3 = jnp.where((row >= 0) & (row < Ho), mid3, 0.0)

    # shortcut input x[2r, 2c, :] lives in the (dr, dc) = (1, 1) space-to-depth slot
    sc_in = x_ref[0, pl.ds(r0 + 1, TR), 0:Wo, 3 * Cin:4 * Cin]
    _conv2_and_residual(mid3, sc_in, w2_ref, b2_ref, (ws_ref, bs_ref), o_ref, mid_scr,
                        TR=TR, Wo=Wo, P=P, Cin=Cin, flat_out=flat_out)


# ---------------------------------------------------------------------------
# wrapper (pallas_call plumbing)
# ---------------------------------------------------------------------------
def basic_block_forward_nhwc(x, params, *, stride=1):
    """Fused BasicBlock forward on an NHWC activation (one pallas_call)."""
    N, H, W, Cin = x.shape
    P = params["w1"].shape[-1]
    has_sc = "ws" in params
    if not has_sc:
        assert Cin == P, "identity shortcut requires in_planes == expansion*planes"
    out_dt = x.dtype
    in_b = jnp.dtype(x.dtype).itemsize
    out_b = jnp.dtype(out_dt).itemsize
    flat_out = P < _LANE                                    # lane-dense stores when P < 128

    cap = _vmem_capacity_bytes()                            # 64 MiB (v7x) / 128 MiB (v5e/v6e)
    vmem_limit = max(32 * 1024 * 1024, int(cap * 0.70))
    tile_budget = int(vmem_limit * 0.70)

    b1 = params["b1"].reshape(1, P).astype(jnp.float32)
    b2 = params["b2"].reshape(1, P).astype(jnp.float32)
    w2f = params["w2"].reshape(9 * P, P).astype(_CDT)

    if stride == 1:
        Ho, Wo = H, W
        TR = _pick_row_tile(
            Ho, lambda tr: _vmem_bytes_s1(tr, H, W, Cin, P, in_b, out_b, flat_out, has_sc),
            tile_budget)
        T = Ho // TR
        w1f = params["w1"].reshape(9 * Cin, P).astype(_CDT)
        kernel_builder = lambda flat: functools.partial(
            _block_kernel_s1, H=H, W=W, Cin=Cin, P=P, TR=TR, Ho=Ho,
            has_shortcut=has_sc, flat_out=flat)
        in_specs = [
            pl.BlockSpec((1, H, W, Cin), lambda n, t: (n, 0, 0, 0)),
            pl.BlockSpec((9 * Cin, P), lambda n, t: (0, 0)),
            pl.BlockSpec((1, P), lambda n, t: (0, 0)),
            pl.BlockSpec((9 * P, P), lambda n, t: (0, 0)),
            pl.BlockSpec((1, P), lambda n, t: (0, 0)),
        ]
        args = [x, w1f, b1, w2f, b2]
        if has_sc:
            in_specs += [pl.BlockSpec((Cin, P), lambda n, t: (0, 0)),
                         pl.BlockSpec((1, P), lambda n, t: (0, 0))]
            args += [params["ws"].astype(_CDT),
                     params["bs"].reshape(1, P).astype(jnp.float32)]
        scratch = [pltpu.VMEM((H + 4, W + 2, Cin), _CDT),
                   pltpu.VMEM((TR + 2, Wo + 2, P), _CDT)]
        # xp_scr is built at t==0 and reused across row tiles -> tile axis stays
        # "arbitrary" unless there is only one tile (then both axes may shard across cores).
        dim_sem = ("parallel", "parallel" if T == 1 else "arbitrary")
    else:
        assert stride == 2 and H % 2 == 0 and W % 2 == 0
        assert has_sc, "stride != 1 always has a 1x1 shortcut in BasicBlock"
        Ho, Wo = H // 2, W // 2
        TR = _pick_row_tile(
            Ho, lambda tr: _vmem_bytes_s2(tr, Ho, Wo, Cin, P, out_b, flat_out),
            tile_budget)
        T = Ho // TR
        # Pad (conv ring + halo margin) and space-to-depth so the 3x3/stride-2 conv becomes
        # a dense 2x2/stride-1 conv with contiguous in-kernel slices.  Done in bf16 so this
        # prep pass moves half the bytes.
        # TODO(synk): fold this prep into the kernel with strided in-kernel reads
        #             (pl.ds(..., stride=2)) to recover the single-HBM-read property.
        xp = jnp.pad(x, ((0, 0), (3, 3), (1, 1), (0, 0)))
        Hp, Wp = H + 6, W + 2
        x_s2d = (xp.reshape(N, Hp // 2, 2, Wp // 2, 2, Cin)
                   .transpose(0, 1, 3, 2, 4, 5)
                   .reshape(N, Hp // 2, Wp // 2, 4 * Cin)
                   .astype(_CDT))
        # remap the 3x3 weights onto the 2x2 space-to-depth taps (K = 16*Cin)
        w1p = jnp.pad(params["w1"], ((0, 1), (0, 1), (0, 0), (0, 0)))       # (4,4,Cin,P)
        w1f = (w1p.reshape(2, 2, 2, 2, Cin, P)
                  .transpose(0, 2, 1, 3, 4, 5)
                  .reshape(16 * Cin, P)
                  .astype(_CDT))
        kernel_builder = lambda flat: functools.partial(
            _block_kernel_s2, Ho=Ho, Wo=Wo, Cin=Cin, P=P, TR=TR, flat_out=flat)
        in_specs = [
            pl.BlockSpec((1, Hp // 2, Wp // 2, 4 * Cin), lambda n, t: (n, 0, 0, 0)),
            pl.BlockSpec((16 * Cin, P), lambda n, t: (0, 0)),
            pl.BlockSpec((1, P), lambda n, t: (0, 0)),
            pl.BlockSpec((9 * P, P), lambda n, t: (0, 0)),
            pl.BlockSpec((1, P), lambda n, t: (0, 0)),
            pl.BlockSpec((Cin, P), lambda n, t: (0, 0)),
            pl.BlockSpec((1, P), lambda n, t: (0, 0)),
        ]
        args = [x_s2d, w1f, b1, w2f, b2,
                params["ws"].astype(_CDT),
                params["bs"].reshape(1, P).astype(jnp.float32)]
        scratch = [pltpu.VMEM((TR + 2, Wo + 2, P), _CDT)]
        dim_sem = ("parallel", "parallel")                  # no cross-tile state

    def _run(flat):
        if flat:
            oshape = jax.ShapeDtypeStruct((N, Ho, Wo * P), out_dt)
            ospec = pl.BlockSpec((1, TR, Wo * P), lambda n, t: (n, t, 0))
        else:
            oshape = jax.ShapeDtypeStruct((N, Ho, Wo, P), out_dt)
            ospec = pl.BlockSpec((1, TR, Wo, P), lambda n, t: (n, t, 0, 0))
        y = pl.pallas_call(
            kernel_builder(flat),
            out_shape=oshape,
            grid=(N, T),
            in_specs=in_specs,
            out_specs=ospec,
            scratch_shapes=scratch,
            compiler_params=pltpu.CompilerParams(
                dimension_semantics=dim_sem,
                vmem_limit_bytes=vmem_limit),
        )(*args)
        return y.reshape(N, Ho, Wo, P) if flat else y

    if flat_out:
        try:
            return _run(True)
        except Exception:
            # Fallback for Mosaic versions without the minor-dim-merging relayout needed
            # by the lane-dense store; the (N, Ho, Wo, P) layout is always supported.
            return _run(False)
    return _run(False)


def basic_block_forward(x_nchw, params, *, stride=1):
    """NCHW (PyTorch-convention) entry point.
    TODO(synk): when blocks are chained, keep activations in NHWC (basic_block_forward_nhwc)
                and hoist these two transposes to the network boundary."""
    x = jnp.transpose(x_nchw, (0, 2, 3, 1))                 # keep input dtype (no f32 upcast)
    out = basic_block_forward_nhwc(x, params, stride=stride)
    return jnp.transpose(out, (0, 3, 1, 2))


# ---------------------------------------------------------------------------
# BasicBlock params
# ---------------------------------------------------------------------------
def init_basic_block_params(key, in_planes, planes, stride=1):
    expansion = 1
    ks = jax.random.split(key, 6)
    params = {
        # weights stored HWIO (3, 3, Cin, Cout)
        "w1": 0.1 * jax.random.normal(ks[0], (3, 3, in_planes, planes), jnp.float32),
        "b1": 0.1 * jax.random.normal(ks[1], (planes,), jnp.float32),
        "w2": 0.1 * jax.random.normal(ks[2], (3, 3, planes, planes), jnp.float32),
        "b2": 0.1 * jax.random.normal(ks[3], (planes,), jnp.float32),
    }
    if stride != 1 or in_planes != expansion * planes:
        params["ws"] = 0.1 * jax.random.normal(ks[4], (in_planes, expansion * planes),
                                               jnp.float32)
        params["bs"] = 0.1 * jax.random.normal(ks[5], (expansion * planes,), jnp.float32)
    return params


# ---------------------------------------------------------------------------
# Pure-JAX reference (correctness check only)
# ---------------------------------------------------------------------------
def _ref_conv(x_nhwc, w_hwio, b, stride, pad):
    y = lax.conv_general_dilated(
        x_nhwc, w_hwio, window_strides=(stride, stride),
        padding=((pad, pad), (pad, pad)),
        dimension_numbers=("NHWC", "HWIO", "NHWC"))
    return y + b[None, None, None, :]


def basic_block_reference(x_nchw, params, *, stride=1):
    x = jnp.transpose(x_nchw, (0, 2, 3, 1))
    out = jnp.clip(_ref_conv(x, params["w1"], params["b1"], stride, 1), 0.0, 6.0)
    out = _ref_conv(out, params["w2"], params["b2"], 1, 1)
    if "ws" in params:
        shortcut = _ref_conv(x, params["ws"][None, None], params["bs"], stride, 0)
    else:
        shortcut = x
    out = jnp.clip(out + shortcut, 0.0, 6.0)
    return jnp.transpose(out, (0, 3, 1, 2))


def _check(y, r, name):
    # Kernel runs its matmuls with bf16 operands (f32 accumulation), so tolerances are
    # bf16-level; real indexing/fusion bugs produce O(1) errors and are still caught.
    assert y.shape == r.shape, f"{name}: shape {y.shape} vs {r.shape}"
    err = jnp.abs(y.astype(jnp.float32) - r.astype(jnp.float32))
    mean_e, max_e = float(err.mean()), float(err.max())
    assert mean_e < 2e-2 and max_e < 1.2e-1, f"{name}: mean={mean_e:.4f} max={max_e:.4f}"


# ---------------------------------------------------------------------------
if __name__ == "__main__":
    key = jax.random.PRNGKey(0)
    k_x, k1, k2, k3 = jax.random.split(key, 4)

    x = jax.random.normal(k_x, (2, 4, 16, 16), jnp.float32)       # NCHW

    # Case 1: identity shortcut (stride 1, same channels)
    p1 = init_basic_block_params(k1, in_planes=4, planes=4, stride=1)
    y1 = jax.block_until_ready(basic_block_forward(x, p1, stride=1))
    _check(y1, basic_block_reference(x, p1, stride=1), "identity-shortcut block")

    # Case 2: stride-2 downsample shortcut (4 -> 8 channels)
    p2 = init_basic_block_params(k2, in_planes=4, planes=8, stride=2)
    y2 = jax.block_until_ready(basic_block_forward(x, p2, stride=2))
    _check(y2, basic_block_reference(x, p2, stride=2), "downsample-shortcut block")

    # Case 3: stride-1 channel-expansion shortcut (1x1 conv shortcut at stride 1)
    p3 = init_basic_block_params(k3, in_planes=4, planes=8, stride=1)
    y3 = jax.block_until_ready(basic_block_forward(x, p3, stride=1))
    _check(y3, basic_block_reference(x, p3, stride=1), "channel-expansion block")

    print("KERNEL_OK")
</pallas_src>

<mosaic_0001>
module attributes {stable_mosaic.version = 11 : i64} {
  func.func @_block_kernel_s1(%arg0: i32, %arg1: i32, %arg2: memref<1x16x16x4xf32, #tpu.memory_space<vmem>>, %arg3: memref<36x4xbf16, #tpu.memory_space<vmem>>, %arg4: memref<1x4xf32, #tpu.memory_space<vmem>>, %arg5: memref<36x4xbf16, #tpu.memory_space<vmem>>, %arg6: memref<1x4xf32, #tpu.memory_space<vmem>>, %arg7: memref<1x16x64xf32, #tpu.memory_space<vmem>>, %arg8: memref<20x18x4xbf16, #tpu.memory_space<vmem>>, %arg9: memref<18x18x4xbf16, #tpu.memory_space<vmem>>) attributes {dimension_semantics = [#tpu.dimension_semantics<parallel>, #tpu.dimension_semantics<parallel>], iteration_bounds = array<i64: 2, 1>, scalar_prefetch = 0 : i64, scratch_operands = 2 : i64, tpu.core_type = #tpu.core_type<tc>, window_params = [{transform_indices = @transform_0, window_bounds = array<i64: 1, 16, 16, 4>}, {pipeline_mode = #tpu.pipeline_mode<synchronous>, transform_indices = @transform_1, window_bounds = array<i64: 36, 4>}, {pipeline_mode = #tpu.pipeline_mode<synchronous>, transform_indices = @transform_2, window_bounds = array<i64: 1, 4>}, {pipeline_mode = #tpu.pipeline_mode<synchronous>, transform_indices = @transform_3, window_bounds = array<i64: 36, 4>}, {pipeline_mode = #tpu.pipeline_mode<synchronous>, transform_indices = @transform_4, window_bounds = array<i64: 1, 4>}, {transform_indices = @transform_5, window_bounds = array<i64: 1, 16, 64>}]} {
    %c0_i32 = arith.constant 0 : i32
    %0 = arith.cmpi eq, %arg1, %c0_i32 : i32
    %1 = arith.extui %0 : i1 to i32
    %c0_i32_0 = arith.constant 0 : i32
    %2 = arith.cmpi ne, %1, %c0_i32_0 : i32
    scf.if %2 {
      %cst_83 = arith.constant 0.000000e+00 : bf16
      %97 = vector.broadcast %cst_83 : bf16 to vector<2x18x4xbf16>
      %c0_84 = arith.constant 0 : index
      %c0_85 = arith.constant 0 : index
      %c0_86 = arith.constant 0 : index
      %98 = vector.load %arg8[%c0_84, %c0_85, %c0_86] : memref<20x18x4xbf16, #tpu.memory_space<vmem>>, vector<2x18x4xbf16>
      tpu.vector_store %arg8[%c0_84, %c0_85, %c0_86], %97 {strides = array<i32>} : memref<20x18x4xbf16, #tpu.memory_space<vmem>>, vector<2x18x4xbf16>,
      %cst_87 = arith.constant 0.000000e+00 : bf16
      %99 = vector.broadcast %cst_87 : bf16 to vector<2x18x4xbf16>
      %c18 = arith.constant 18 : index
      %c0_88 = arith.constant 0 : index
      %c0_89 = arith.constant 0 : index
      %100 = vector.load %arg8[%c18, %c0_88, %c0_89] : memref<20x18x4xbf16, #tpu.memory_space<vmem>>, vector<2x18x4xbf16>
      tpu.vector_store %arg8[%c18, %c0_88, %c0_89], %99 {strides = array<i32>} : memref<20x18x4xbf16, #tpu.memory_space<vmem>>, vector<2x18x4xbf16>,
      %cst_90 = arith.constant 0.000000e+00 : bf16
      %101 = vector.broadcast %cst_90 : bf16 to vector<16x1x4xbf16>
      %c2_91 = arith.constant 2 : index
      %c0_92 = arith.constant 0 : index
      %c0_93 = arith.constant 0 : index
      %102 = vector.load %arg8[%c2_91, %c0_92, %c0_93] : memref<20x18x4xbf16, #tpu.memory_space<vmem>>, vector<16x1x4xbf16>
      tpu.vector_store %arg8[%c2_91, %c0_92, %c0_93], %101 {strides = array<i32>} : memref<20x18x4xbf16, #tpu.memory_space<vmem>>, vector<16x1x4xbf16>,
      %cst_94 = arith.constant 0.000000e+00 : bf16
      %103 = vector.broadcast %cst_94 : bf16 to vector<16x1x4xbf16>
      %c2_95 = arith.constant 2 : index
      %c17_96 = arith.constant 17 : index
      %c0_97 = arith.constant 0 : index
      %104 = vector.load %arg8[%c2_95, %c17_96, %c0_97] : memref<20x18x4xbf16, #tpu.memory_space<vmem>>, vector<16x1x4xbf16>
      tpu.vector_store %arg8[%c2_95, %c17_96, %c0_97], %103 {strides = array<i32>} : memref<20x18x4xbf16, #tpu.memory_space<vmem>>, vector<16x1x4xbf16>,
      %c0_98 = arith.constant 0 : index
      %c0_99 = arith.constant 0 : index
      %c0_100 = arith.constant 0 : index
      %c0_101 = arith.constant 0 : index
      %105 = vector.load %arg2[%c0_98, %c0_99, %c0_100, %c0_101] : memref<1x16x16x4xf32, #tpu.memory_space<vmem>>, vector<1x16x16x4xf32>
      %106 = vector.shape_cast %105 : vector<1x16x16x4xf32> to vector<16x16x4xf32>
      %107 = arith.truncf %106 : vector<16x16x4xf32> to vector<16x16x4xbf16>
      %c2_102 = arith.constant 2 : index
      %c1_103 = arith.constant 1 : index
      %c0_104 = arith.constant 0 : index
      %108 = vector.load %arg8[%c2_102, %c1_103, %c0_104] : memref<20x18x4xbf16, #tpu.memory_space<vmem>>, vector<16x16x4xbf16>
      tpu.vector_store %arg8[%c2_102, %c1_103, %c0_104], %107 {strides = array<i32>} : memref<20x18x4xbf16, #tpu.memory_space<vmem>>, vector<16x16x4xbf16>,
    } else {
    }
    %c16_i32 = arith.constant 16 : i32
    %3 = arith.muli %arg1, %c16_i32 : i32
    %4 = tpu.assume_multiple %3, 16 : i32
    %c0_i32_1 = arith.constant 0 : i32
    %5 = arith.addi %4, %c0_i32_1 : i32
    %6 = arith.index_cast %5 : i32 to index
    %c0 = arith.constant 0 : index
    %c0_2 = arith.constant 0 : index
    %7 = vector.load %arg8[%6, %c0, %c0_2] : memref<20x18x4xbf16, #tpu.memory_space<vmem>>, vector<18x16x4xbf16>
    %c0_i32_3 = arith.constant 0 : i32
    %8 = arith.addi %4, %c0_i32_3 : i32
    %9 = arith.index_cast %8 : i32 to index
    %c1 = arith.constant 1 : index
    %c0_4 = arith.constant 0 : index
    %10 = vector.load %arg8[%9, %c1, %c0_4] : memref<20x18x4xbf16, #tpu.memory_space<vmem>>, vector<18x16x4xbf16>
    %c0_i32_5 = arith.constant 0 : i32
    %11 = arith.addi %4, %c0_i32_5 : i32
    %12 = arith.index_cast %11 : i32 to index
    %c2 = arith.constant 2 : index
    %c0_6 = arith.constant 0 : index
    %13 = vector.load %arg8[%12, %c2, %c0_6] : memref<20x18x4xbf16, #tpu.memory_space<vmem>>, vector<18x16x4xbf16>
    %c1_i32 = arith.constant 1 : i32
    %14 = arith.addi %4, %c1_i32 : i32
    %15 = arith.index_cast %14 : i32 to index
    %c0_7 = arith.constant 0 : index
    %c0_8 = arith.constant 0 : index
    %16 = vector.load %arg8[%15, %c0_7, %c0_8] : memref<20x18x4xbf16, #tpu.memory_space<vmem>>, vector<18x16x4xbf16>
    %c1_i32_9 = arith.constant 1 : i32
    %17 = arith.addi %4, %c1_i32_9 : i32
    %18 = arith.index_cast %17 : i32 to index
    %c1_10 = arith.constant 1 : index
    %c0_11 = arith.constant 0 : index
    %19 = vector.load %arg8[%18, %c1_10, %c0_11] : memref<20x18x4xbf16, #tpu.memory_space<vmem>>, vector<18x16x4xbf16>
    %c1_i32_12 = arith.constant 1 : i32
    %20 = arith.addi %4, %c1_i32_12 : i32
    %21 = arith.index_cast %20 : i32 to index
    %c2_13 = arith.constant 2 : index
    %c0_14 = arith.constant 0 : index
    %22 = vector.load %arg8[%21, %c2_13, %c0_14] : memref<20x18x4xbf16, #tpu.memory_space<vmem>>, vector<18x16x4xbf16>
    %c2_i32 = arith.constant 2 : i32
    %23 = arith.addi %4, %c2_i32 : i32
    %24 = arith.index_cast %23 : i32 to index
    %c0_15 = arith.constant 0 : index
    %c0_16 = arith.constant 0 : index
    %25 = vector.load %arg8[%24, %c0_15, %c0_16] : memref<20x18x4xbf16, #tpu.memory_space<vmem>>, vector<18x16x4xbf16>
    %c2_i32_17 = arith.constant 2 : i32
    %26 = arith.addi %4, %c2_i32_17 : i32
    %27 = arith.index_cast %26 : i32 to index
    %c1_18 = arith.constant 1 : index
    %c0_19 = arith.constant 0 : index
    %28 = vector.load %arg8[%27, %c1_18, %c0_19] : memref<20x18x4xbf16, #tpu.memory_space<vmem>>, vector<18x16x4xbf16>
    %c2_i32_20 = arith.constant 2 : i32
    %29 = arith.addi %4, %c2_i32_20 : i32
    %30 = arith.index_cast %29 : i32 to index
    %c2_21 = arith.constant 2 : index
    %c0_22 = arith.constant 0 : index
    %31 = vector.load %arg8[%30, %c2_21, %c0_22] : memref<20x18x4xbf16, #tpu.memory_space<vmem>>, vector<18x16x4xbf16>
    %32 = tpu.concatenate %7, %10, %13, %16, %19, %22, %25, %28, %31 in 2 : vector<18x16x4xbf16>, vector<18x16x4xbf16>, vector<18x16x4xbf16>, vector<18x16x4xbf16>, vector<18x16x4xbf16>, vector<18x16x4xbf16>, vector<18x16x4xbf16>, vector<18x16x4xbf16>, vector<18x16x4xbf16> -> vector<18x16x36xbf16>
    %33 = vector.shape_cast %32 : vector<18x16x36xbf16> to vector<288x36xbf16>
    %c0_23 = arith.constant 0 : index
    %c0_24 = arith.constant 0 : index
    %34 = vector.load %arg3[%c0_23, %c0_24] : memref<36x4xbf16, #tpu.memory_space<vmem>>, vector<36x4xbf16>
    %cst = arith.constant dense<0.000000e+00> : vector<288x4xf32>
    %35 = tpu.matmul %33, %34, %cst {dimension_numbers = #tpu.dot_dimension_numbers<[1], [0], [0], [1], [0, 0, 1, 1], [], []>} : vector<288x36xbf16>, vector<36x4xbf16>, vector<288x4xf32> -> vector<288x4xf32>
    %c0_25 = arith.constant 0 : index
    %c0_26 = arith.constant 0 : index
    %36 = vector.load %arg4[%c0_25, %c0_26] : memref<1x4xf32, #tpu.memory_space<vmem>>, vector<1x4xf32>
    %37 = vector.shape_cast %36 : vector<1x4xf32> to vector<4xf32>
    %38 = vector.shape_cast %37 : vector<4xf32> to vector<1x4xf32>
    %39 = vector.broadcast %38 : vector<1x4xf32> to vector<288x4xf32>
    %40 = arith.addf %35, %39 : vector<288x4xf32>
    %cst_27 = arith.constant 0.000000e+00 : f32
    %cst_28 = arith.constant 6.000000e+00 : f32
    %41 = vector.broadcast %cst_27 : f32 to vector<288x4xf32>
    %42 = arith.maximumf %41, %40 : vector<288x4xf32>
    %43 = vector.broadcast %cst_28 : f32 to vector<288x4xf32>
    %44 = arith.minimumf %43, %42 : vector<288x4xf32>
    %45 = vector.shape_cast %44 : vector<288x4xf32> to vector<18x16x4xf32>
    %46 = tpu.iota {dimensions = array<i32: 0>} : vector<18x1x1xi32>
    %c1_i32_29 = arith.constant 1 : i32
    %47 = arith.subi %4, %c1_i32_29 : i32
    %48 = vector.broadcast %47 : i32 to vector<18x1x1xi32>
    %49 = arith.addi %48, %46 : vector<18x1x1xi32>
    %c0_i32_30 = arith.constant 0 : i32
    %50 = vector.broadcast %c0_i32_30 : i32 to vector<18x1x1xi32>
    %51 = arith.cmpi sge, %49, %50 : vector<18x1x1xi32>
    %c16_i32_31 = arith.constant 16 : i32
    %52 = vector.broadcast %c16_i32_31 : i32 to vector<18x1x1xi32>
    %53 = arith.cmpi slt, %49, %52 : vector<18x1x1xi32>
    %54 = arith.andi %51, %53 : vector<18x1x1xi1>
    %cst_32 = arith.constant 0.000000e+00 : f32
    %55 = vector.shape_cast %54 : vector<18x1x1xi1> to vector<18x1x1xi1>
    %56 = vector.broadcast %55 : vector<18x1x1xi1> to vector<18x16x4xi1>
    %57 = vector.broadcast %cst_32 : f32 to vector<18x16x4xf32>
    %58 = arith.select %56, %45, %57 : vector<18x16x4xi1>, vector<18x16x4xf32>
    %c2_i32_33 = arith.constant 2 : i32
    %59 = arith.addi %4, %c2_i32_33 : i32
    %60 = arith.index_cast %59 : i32 to index
    %c1_34 = arith.constant 1 : index
    %c0_35 = arith.constant 0 : index
    %61 = vector.load %arg8[%60, %c1_34, %c0_35] : memref<20x18x4xbf16, #tpu.memory_space<vmem>>, vector<16x16x4xbf16>
    %cst_36 = arith.constant 0.000000e+00 : bf16
    %62 = vector.broadcast %cst_36 : bf16 to vector<18x1x4xbf16>
    %c0_37 = arith.constant 0 : index
    %c0_38 = arith.constant 0 : index
    %c0_39 = arith.constant 0 : index
    %63 = vector.load %arg9[%c0_37, %c0_38, %c0_39] : memref<18x18x4xbf16, #tpu.memory_space<vmem>>, vector<18x1x4xbf16>
    tpu.vector_store %arg9[%c0_37, %c0_38, %c0_39], %62 {strides = array<i32>} : memref<18x18x4xbf16, #tpu.memory_space<vmem>>, vector<18x1x4xbf16>,
    %cst_40 = arith.constant 0.000000e+00 : bf16
    %64 = vector.broadcast %cst_40 : bf16 to vector<18x1x4xbf16>
    %c0_41 = arith.constant 0 : index
    %c17 = arith.constant 17 : index
    %c0_42 = arith.constant 0 : index
    %65 = vector.load %arg9[%c0_41, %c17, %c0_42] : memref<18x18x4xbf16, #tpu.memory_space<vmem>>, vector<18x1x4xbf16>
    tpu.vector_store %arg9[%c0_41, %c17, %c0_42], %64 {strides = array<i32>} : memref<18x18x4xbf16, #tpu.memory_space<vmem>>, vector<18x1x4xbf16>,
    %66 = arith.truncf %58 : vector<18x16x4xf32> to vector<18x16x4xbf16>
    %c0_43 = arith.constant 0 : index
    %c1_44 = arith.constant 1 : index
    %c0_45 = arith.constant 0 : index
    %67 = vector.load %arg9[%c0_43, %c1_44, %c0_45] : memref<18x18x4xbf16, #tpu.memory_space<vmem>>, vector<18x16x4xbf16>
    tpu.vector_store %arg9[%c0_43, %c1_44, %c0_45], %66 {strides = array<i32>} : memref<18x18x4xbf16, #tpu.memory_space<vmem>>, vector<18x16x4xbf16>,
    %c0_46 = arith.constant 0 : index
    %c0_47 = arith.constant 0 : index
    %c0_48 = arith.constant 0 : index
    %68 = vector.load %arg9[%c0_46, %c0_47, %c0_48] : memref<18x18x4xbf16, #tpu.memory_space<vmem>>, vector<16x16x4xbf16>
    %c0_49 = arith.constant 0 : index
    %c1_50 = arith.constant 1 : index
    %c0_51 = arith.constant 0 : index
    %69 = vector.load %arg9[%c0_49, %c1_50, %c0_51] : memref<18x18x4xbf16, #tpu.memory_space<vmem>>, vector<16x16x4xbf16>
    %c0_52 = arith.constant 0 : index
    %c2_53 = arith.constant 2 : index
    %c0_54 = arith.constant 0 : index
    %70 = vector.load %arg9[%c0_52, %c2_53, %c0_54] : memref<18x18x4xbf16, #tpu.memory_space<vmem>>, vector<16x16x4xbf16>
    %c1_55 = arith.constant 1 : index
    %c0_56 = arith.constant 0 : index
    %c0_57 = arith.constant 0 : index
    %71 = vector.load %arg9[%c1_55, %c0_56, %c0_57] : memref<18x18x4xbf16, #tpu.memory_space<vmem>>, vector<16x16x4xbf16>
    %c1_58 = arith.constant 1 : index
    %c1_59 = arith.constant 1 : index
    %c0_60 = arith.constant 0 : index
    %72 = vector.load %arg9[%c1_58, %c1_59, %c0_60] : memref<18x18x4xbf16, #tpu.memory_space<vmem>>, vector<16x16x4xbf16>
    %c1_61 = arith.constant 1 : index
    %c2_62 = arith.constant 2 : index
    %c0_63 = arith.constant 0 : index
    %73 = vector.load %arg9[%c1_61, %c2_62, %c0_63] : memref<18x18x4xbf16, #tpu.memory_space<vmem>>, vector<16x16x4xbf16>
    %c2_64 = arith.constant 2 : index
    %c0_65 = arith.constant 0 : index
    %c0_66 = arith.constant 0 : index
    %74 = vector.load %arg9[%c2_64, %c0_65, %c0_66] : memref<18x18x4xbf16, #tpu.memory_space<vmem>>, vector<16x16x4xbf16>
    %c2_67 = arith.constant 2 : index
    %c1_68 = arith.constant 1 : index
    %c0_69 = arith.constant 0 : index
    %75 = vector.load %arg9[%c2_67, %c1_68, %c0_69] : memref<18x18x4xbf16, #tpu.memory_space<vmem>>, vector<16x16x4xbf16>
    %c2_70 = arith.constant 2 : index
    %c2_71 = arith.constant 2 : index
    %c0_72 = arith.constant 0 : index
    %76 = vector.load %arg9[%c2_70, %c2_71, %c0_72] : memref<18x18x4xbf16, #tpu.memory_space<vmem>>, vector<16x16x4xbf16>
    %77 = tpu.concatenate %68, %69, %70, %71, %72, %73, %74, %75, %76 in 2 : vector<16x16x4xbf16>, vector<16x16x4xbf16>, vector<16x16x4xbf16>, vector<16x16x4xbf16>, vector<16x16x4xbf16>, vector<16x16x4xbf16>, vector<16x16x4xbf16>, vector<16x16x4xbf16>, vector<16x16x4xbf16> -> vector<16x16x36xbf16>
    %78 = vector.shape_cast %77 : vector<16x16x36xbf16> to vector<256x36xbf16>
    %c0_73 = arith.constant 0 : index
    %c0_74 = arith.constant 0 : index
    %79 = vector.load %arg5[%c0_73, %c0_74] : memref<36x4xbf16, #tpu.memory_space<vmem>>, vector<36x4xbf16>
    %cst_75 = arith.constant dense<0.000000e+00> : vector<256x4xf32>
    %80 = tpu.matmul %78, %79, %cst_75 {dimension_numbers = #tpu.dot_dimension_numbers<[1], [0], [0], [1], [0, 0, 1, 1], [], []>} : vector<256x36xbf16>, vector<36x4xbf16>, vector<256x4xf32> -> vector<256x4xf32>
    %c0_76 = arith.constant 0 : index
    %c0_77 = arith.constant 0 : index
    %81 = vector.load %arg6[%c0_76, %c0_77] : memref<1x4xf32, #tpu.memory_space<vmem>>, vector<1x4xf32>
    %82 = vector.shape_cast %81 : vector<1x4xf32> to vector<4xf32>
    %83 = vector.shape_cast %82 : vector<4xf32> to vector<1x4xf32>
    %84 = vector.broadcast %83 : vector<1x4xf32> to vector<256x4xf32>
    %85 = arith.addf %80, %84 : vector<256x4xf32>
    %86 = vector.shape_cast %61 : vector<16x16x4xbf16> to vector<256x4xbf16>
    %87 = arith.extf %86 : vector<256x4xbf16> to vector<256x4xf32>
    %88 = arith.addf %85, %87 : vector<256x4xf32>
    %cst_78 = arith.constant 0.000000e+00 : f32
    %cst_79 = arith.constant 6.000000e+00 : f32
    %89 = vector.broadcast %cst_78 : f32 to vector<256x4xf32>
    %90 = arith.maximumf %89, %88 : vector<256x4xf32>
    %91 = vector.broadcast %cst_79 : f32 to vector<256x4xf32>
    %92 = arith.minimumf %91, %90 : vector<256x4xf32>
    %93 = vector.shape_cast %92 : vector<256x4xf32> to vector<16x64xf32>
    %c0_80 = arith.constant 0 : index
    %c0_81 = arith.constant 0 : index
    %c0_82 = arith.constant 0 : index
    %94 = vector.load %arg7[%c0_80, %c0_81, %c0_82] : memref<1x16x64xf32, #tpu.memory_space<vmem>>, vector<1x16x64xf32>
    %95 = vector.shape_cast %94 : vector<1x16x64xf32> to vector<16x64xf32>
    %96 = vector.shape_cast %93 : vector<16x64xf32> to vector<1x16x64xf32>
    tpu.vector_store %arg7[%c0_80, %c0_81, %c0_82], %96 {strides = array<i32>} : memref<1x16x64xf32, #tpu.memory_space<vmem>>, vector<1x16x64xf32>,
    return
  }
  func.func @transform_0(%arg0: i32, %arg1: i32) -> (i32, i32, i32, i32) {
    %c0_i32 = arith.constant 0 : i32
    %c0_i32_0 = arith.constant 0 : i32
    %c0_i32_1 = arith.constant 0 : i32
    %c0_i32_2 = arith.constant 0 : i32
    return %arg0, %c0_i32, %c0_i32_0, %c0_i32_1 : i32, i32, i32, i32
  }
  func.func @transform_1(%arg0: i32, %arg1: i32) -> (i32, i32) {
    %c0_i32 = arith.constant 0 : i32
    %c0_i32_0 = arith.constant 0 : i32
    %c0_i32_1 = arith.constant 0 : i32
    return %c0_i32, %c0_i32_0 : i32, i32
  }
  func.func @transform_2(%arg0: i32, %arg1: i32) -> (i32, i32) {
    %c0_i32 = arith.constant 0 : i32
    %c0_i32_0 = arith.constant 0 : i32
    %c0_i32_1 = arith.constant 0 : i32
    return %c0_i32, %c0_i32_0 : i32, i32
  }
  func.func @transform_3(%arg0: i32, %arg1: i32) -> (i32, i32) {
    %c0_i32 = arith.constant 0 : i32
    %c0_i32_0 = arith.constant 0 : i32
    %c0_i32_1 = arith.constant 0 : i32
    return %c0_i32, %c0_i32_0 : i32, i32
  }
  func.func @transform_4(%arg0: i32, %arg1: i32) -> (i32, i32) {
    %c0_i32 = arith.constant 0 : i32
    %c0_i32_0 = arith.constant 0 : i32
    %c0_i32_1 = arith.constant 0 : i32
    return %c0_i32, %c0_i32_0 : i32, i32
  }
  func.func @transform_5(%arg0: i32, %arg1: i32) -> (i32, i32, i32) {
    %c0_i32 = arith.constant 0 : i32
    %c0_i32_0 = arith.constant 0 : i32
    return %arg0, %arg1, %c0_i32 : i32, i32, i32
  }
}

module attributes {stable_mosaic.version = 11 : i64} {
  func.func @_block_kernel_s1(%arg0: i32, %arg1: i32, %arg2: memref<1x16x16x4xf32, #tpu.memory_space<vmem>>, %arg3: memref<36x4xbf16, #tpu.memory_space<vmem>>, %arg4: memref<1x4xf32, #tpu.memory_space<vmem>>, %arg5: memref<36x4xbf16, #tpu.memory_space<vmem>>, %arg6: memref<1x4xf32, #tpu.memory_space<vmem>>, %arg7: memref<1x16x16x4xf32, #tpu.memory_space<vmem>>, %arg8: memref<20x18x4xbf16, #tpu.memory_space<vmem>>, %arg9: memref<18x18x4xbf16, #tpu.memory_space<vmem>>) attributes {dimension_semantics = [#tpu.dimension_semantics<parallel>, #tpu.dimension_semantics<parallel>], iteration_bounds = array<i64: 2, 1>, scalar_prefetch = 0 : i64, scratch_operands = 2 : i64, tpu.core_type = #tpu.core_type<tc>, window_params = [{transform_indices = @transform_0, window_bounds = array<i64: 1, 16, 16, 4>}, {pipeline_mode = #tpu.pipeline_mode<synchronous>, transform_indices = @transform_1, window_bounds = array<i64: 36, 4>}, {pipeline_mode = #tpu.pipeline_mode<synchronous>, transform_indices = @transform_2, window_bounds = array<i64: 1, 4>}, {pipeline_mode = #tpu.pipeline_mode<synchronous>, transform_indices = @transform_3, window_bounds = array<i64: 36, 4>}, {pipeline_mode = #tpu.pipeline_mode<synchronous>, transform_indices = @transform_4, window_bounds = array<i64: 1, 4>}, {transform_indices = @transform_5, window_bounds = array<i64: 1, 16, 16, 4>}]} {
    %c0_i32 = arith.constant 0 : i32
    %0 = arith.cmpi eq, %arg1, %c0_i32 : i32
    %1 = arith.extui %0 : i1 to i32
    %c0_i32_0 = arith.constant 0 : i32
    %2 = arith.cmpi ne, %1, %c0_i32_0 : i32
    scf.if %2 {
      %cst_84 = arith.constant 0.000000e+00 : bf16
      %97 = vector.broadcast %cst_84 : bf16 to vector<2x18x4xbf16>
      %c0_85 = arith.constant 0 : index
      %c0_86 = arith.constant 0 : index
      %c0_87 = arith.constant 0 : index
      %98 = vector.load %arg8[%c0_85, %c0_86, %c0_87] : memref<20x18x4xbf16, #tpu.memory_space<vmem>>, vector<2x18x4xbf16>
      tpu.vector_store %arg8[%c0_85, %c0_86, %c0_87], %97 {strides = array<i32>} : memref<20x18x4xbf16, #tpu.memory_space<vmem>>, vector<2x18x4xbf16>,
      %cst_88 = arith.constant 0.000000e+00 : bf16
      %99 = vector.broadcast %cst_88 : bf16 to vector<2x18x4xbf16>
      %c18 = arith.constant 18 : index
      %c0_89 = arith.constant 0 : index
      %c0_90 = arith.constant 0 : index
      %100 = vector.load %arg8[%c18, %c0_89, %c0_90] : memref<20x18x4xbf16, #tpu.memory_space<vmem>>, vector<2x18x4xbf16>
      tpu.vector_store %arg8[%c18, %c0_89, %c0_90], %99 {strides = array<i32>} : memref<20x18x4xbf16, #tpu.memory_space<vmem>>, vector<2x18x4xbf16>,
      %cst_91 = arith.constant 0.000000e+00 : bf16
      %101 = vector.broadcast %cst_91 : bf16 to vector<16x1x4xbf16>
      %c2_92 = arith.constant 2 : index
      %c0_93 = arith.constant 0 : index
      %c0_94 = arith.constant 0 : index
      %102 = vector.load %arg8[%c2_92, %c0_93, %c0_94] : memref<20x18x4xbf16, #tpu.memory_space<vmem>>, vector<16x1x4xbf16>
      tpu.vector_store %arg8[%c2_92, %c0_93, %c0_94], %101 {strides = array<i32>} : memref<20x18x4xbf16, #tpu.memory_space<vmem>>, vector<16x1x4xbf16>,
      %cst_95 = arith.constant 0.000000e+00 : bf16
      %103 = vector.broadcast %cst_95 : bf16 to vector<16x1x4xbf16>
      %c2_96 = arith.constant 2 : index
      %c17_97 = arith.constant 17 : index
      %c0_98 = arith.constant 0 : index
      %104 = vector.load %arg8[%c2_96, %c17_97, %c0_98] : memref<20x18x4xbf16, #tpu.memory_space<vmem>>, vector<16x1x4xbf16>
      tpu.vector_store %arg8[%c2_96, %c17_97, %c0_98], %103 {strides = array<i32>} : memref<20x18x4xbf16, #tpu.memory_space<vmem>>, vector<16x1x4xbf16>,
      %c0_99 = arith.constant 0 : index
      %c0_100 = arith.constant 0 : index
      %c0_101 = arith.constant 0 : index
      %c0_102 = arith.constant 0 : index
      %105 = vector.load %arg2[%c0_99, %c0_100, %c0_101, %c0_102] : memref<1x16x16x4xf32, #tpu.memory_space<vmem>>, vector<1x16x16x4xf32>
      %106 = vector.shape_cast %105 : vector<1x16x16x4xf32> to vector<16x16x4xf32>
      %107 = arith.truncf %106 : vector<16x16x4xf32> to vector<16x16x4xbf16>
      %c2_103 = arith.constant 2 : index
      %c1_104 = arith.constant 1 : index
      %c0_105 = arith.constant 0 : index
      %108 = vector.load %arg8[%c2_103, %c1_104, %c0_105] : memref<20x18x4xbf16, #tpu.memory_space<vmem>>, vector<16x16x4xbf16>
      tpu.vector_store %arg8[%c2_103, %c1_104, %c0_105], %107 {strides = array<i32>} : memref<20x18x4xbf16, #tpu.memory_space<vmem>>, vector<16x16x4xbf16>,
    } else {
    }
    %c16_i32 = arith.constant 16 : i32
    %3 = arith.muli %arg1, %c16_i32 : i32
    %4 = tpu.assume_multiple %3, 16 : i32
    %c0_i32_1 = arith.constant 0 : i32
    %5 = arith.addi %4, %c0_i32_1 : i32
    %6 = arith.index_cast %5 : i32 to index
    %c0 = arith.constant 0 : index
    %c0_2 = arith.constant 0 : index
    %7 = vector.load %arg8[%6, %c0, %c0_2] : memref<20x18x4xbf16, #tpu.memory_space<vmem>>, vector<18x16x4xbf16>
    %c0_i32_3 = arith.constant 0 : i32
    %8 = arith.addi %4, %c0_i32_3 : i32
    %9 = arith.index_cast %8 : i32 to index
    %c1 = arith.constant 1 : index
    %c0_4 = arith.constant 0 : index
    %10 = vector.load %arg8[%9, %c1, %c0_4] : memref<20x18x4xbf16, #tpu.memory_space<vmem>>, vector<18x16x4xbf16>
    %c0_i32_5 = arith.constant 0 : i32
    %11 = arith.addi %4, %c0_i32_5 : i32
    %12 = arith.index_cast %11 : i32 to index
    %c2 = arith.constant 2 : index
    %c0_6 = arith.constant 0 : index
    %13 = vector.load %arg8[%12, %c2, %c0_6] : memref<20x18x4xbf16, #tpu.memory_space<vmem>>, vector<18x16x4xbf16>
    %c1_i32 = arith.constant 1 : i32
    %14 = arith.addi %4, %c1_i32 : i32
    %15 = arith.index_cast %14 : i32 to index
    %c0_7 = arith.constant 0 : index
    %c0_8 = arith.constant 0 : index
    %16 = vector.load %arg8[%15, %c0_7, %c0_8] : memref<20x18x4xbf16, #tpu.memory_space<vmem>>, vector<18x16x4xbf16>
    %c1_i32_9 = arith.constant 1 : i32
    %17 = arith.addi %4, %c1_i32_9 : i32
    %18 = arith.index_cast %17 : i32 to index
    %c1_10 = arith.constant 1 : index
    %c0_11 = arith.constant 0 : index
    %19 = vector.load %arg8[%18, %c1_10, %c0_11] : memref<20x18x4xbf16, #tpu.memory_space<vmem>>, vector<18x16x4xbf16>
    %c1_i32_12 = arith.constant 1 : i32
    %20 = arith.addi %4, %c1_i32_12 : i32
    %21 = arith.index_cast %20 : i32 to index
    %c2_13 = arith.constant 2 : index
    %c0_14 = arith.constant 0 : index
    %22 = vector.load %arg8[%21, %c2_13, %c0_14] : memref<20x18x4xbf16, #tpu.memory_space<vmem>>, vector<18x16x4xbf16>
    %c2_i32 = arith.constant 2 : i32
    %23 = arith.addi %4, %c2_i32 : i32
    %24 = arith.index_cast %23 : i32 to index
    %c0_15 = arith.constant 0 : index
    %c0_16 = arith.constant 0 : index
    %25 = vector.load %arg8[%24, %c0_15, %c0_16] : memref<20x18x4xbf16, #tpu.memory_space<vmem>>, vector<18x16x4xbf16>
    %c2_i32_17 = arith.constant 2 : i32
    %26 = arith.addi %4, %c2_i32_17 : i32
    %27 = arith.index_cast %26 : i32 to index
    %c1_18 = arith.constant 1 : index
    %c0_19 = arith.constant 0 : index
    %28 = vector.load %arg8[%27, %c1_18, %c0_19] : memref<20x18x4xbf16, #tpu.memory_space<vmem>>, vector<18x16x4xbf16>
    %c2_i32_20 = arith.constant 2 : i32
    %29 = arith.addi %4, %c2_i32_20 : i32
    %30 = arith.index_cast %29 : i32 to index
    %c2_21 = arith.constant 2 : index
    %c0_22 = arith.constant 0 : index
    %31 = vector.load %arg8[%30, %c2_21, %c0_22] : memref<20x18x4xbf16, #tpu.memory_space<vmem>>, vector<18x16x4xbf16>
    %32 = tpu.concatenate %7, %10, %13, %16, %19, %22, %25, %28, %31 in 2 : vector<18x16x4xbf16>, vector<18x16x4xbf16>, vector<18x16x4xbf16>, vector<18x16x4xbf16>, vector<18x16x4xbf16>, vector<18x16x4xbf16>, vector<18x16x4xbf16>, vector<18x16x4xbf16>, vector<18x16x4xbf16> -> vector<18x16x36xbf16>
    %33 = vector.shape_cast %32 : vector<18x16x36xbf16> to vector<288x36xbf16>
    %c0_23 = arith.constant 0 : index
    %c0_24 = arith.constant 0 : index
    %34 = vector.load %arg3[%c0_23, %c0_24] : memref<36x4xbf16, #tpu.memory_space<vmem>>, vector<36x4xbf16>
    %cst = arith.constant dense<0.000000e+00> : vector<288x4xf32>
    %35 = tpu.matmul %33, %34, %cst {dimension_numbers = #tpu.dot_dimension_numbers<[1], [0], [0], [1], [0, 0, 1, 1], [], []>} : vector<288x36xbf16>, vector<36x4xbf16>, vector<288x4xf32> -> vector<288x4xf32>
    %c0_25 = arith.constant 0 : index
    %c0_26 = arith.constant 0 : index
    %36 = vector.load %arg4[%c0_25, %c0_26] : memref<1x4xf32, #tpu.memory_space<vmem>>, vector<1x4xf32>
    %37 = vector.shape_cast %36 : vector<1x4xf32> to vector<4xf32>
    %38 = vector.shape_cast %37 : vector<4xf32> to vector<1x4xf32>
    %39 = vector.broadcast %38 : vector<1x4xf32> to vector<288x4xf32>
    %40 = arith.addf %35, %39 : vector<288x4xf32>
    %cst_27 = arith.constant 0.000000e+00 : f32
    %cst_28 = arith.constant 6.000000e+00 : f32
    %41 = vector.broadcast %cst_27 : f32 to vector<288x4xf32>
    %42 = arith.maximumf %41, %40 : vector<288x4xf32>
    %43 = vector.broadcast %cst_28 : f32 to vector<288x4xf32>
    %44 = arith.minimumf %43, %42 : vector<288x4xf32>
    %45 = vector.shape_cast %44 : vector<288x4xf32> to vector<18x16x4xf32>
    %46 = tpu.iota {dimensions = array<i32: 0>} : vector<18x1x1xi32>
    %c1_i32_29 = arith.constant 1 : i32
    %47 = arith.subi %4, %c1_i32_29 : i32
    %48 = vector.broadcast %47 : i32 to vector<18x1x1xi32>
    %49 = arith.addi %48, %46 : vector<18x1x1xi32>
    %c0_i32_30 = arith.constant 0 : i32
    %50 = vector.broadcast %c0_i32_30 : i32 to vector<18x1x1xi32>
    %51 = arith.cmpi sge, %49, %50 : vector<18x1x1xi32>
    %c16_i32_31 = arith.constant 16 : i32
    %52 = vector.broadcast %c16_i32_31 : i32 to vector<18x1x1xi32>
    %53 = arith.cmpi slt, %49, %52 : vector<18x1x1xi32>
    %54 = arith.andi %51, %53 : vector<18x1x1xi1>
    %cst_32 = arith.constant 0.000000e+00 : f32
    %55 = vector.shape_cast %54 : vector<18x1x1xi1> to vector<18x1x1xi1>
    %56 = vector.broadcast %55 : vector<18x1x1xi1> to vector<18x16x4xi1>
    %57 = vector.broadcast %cst_32 : f32 to vector<18x16x4xf32>
    %58 = arith.select %56, %45, %57 : vector<18x16x4xi1>, vector<18x16x4xf32>
    %c2_i32_33 = arith.constant 2 : i32
    %59 = arith.addi %4, %c2_i32_33 : i32
    %60 = arith.index_cast %59 : i32 to index
    %c1_34 = arith.constant 1 : index
    %c0_35 = arith.constant 0 : index
    %61 = vector.load %arg8[%60, %c1_34, %c0_35] : memref<20x18x4xbf16, #tpu.memory_space<vmem>>, vector<16x16x4xbf16>
    %cst_36 = arith.constant 0.000000e+00 : bf16
    %62 = vector.broadcast %cst_36 : bf16 to vector<18x1x4xbf16>
    %c0_37 = arith.constant 0 : index
    %c0_38 = arith.constant 0 : index
    %c0_39 = arith.constant 0 : index
    %63 = vector.load %arg9[%c0_37, %c0_38, %c0_39] : memref<18x18x4xbf16, #tpu.memory_space<vmem>>, vector<18x1x4xbf16>
    tpu.vector_store %arg9[%c0_37, %c0_38, %c0_39], %62 {strides = array<i32>} : memref<18x18x4xbf16, #tpu.memory_space<vmem>>, vector<18x1x4xbf16>,
    %cst_40 = arith.constant 0.000000e+00 : bf16
    %64 = vector.broadcast %cst_40 : bf16 to vector<18x1x4xbf16>
    %c0_41 = arith.constant 0 : index
    %c17 = arith.constant 17 : index
    %c0_42 = arith.constant 0 : index
    %65 = vector.load %arg9[%c0_41, %c17, %c0_42] : memref<18x18x4xbf16, #tpu.memory_space<vmem>>, vector<18x1x4xbf16>
    tpu.vector_store %arg9[%c0_41, %c17, %c0_42], %64 {strides = array<i32>} : memref<18x18x4xbf16, #tpu.memory_space<vmem>>, vector<18x1x4xbf16>,
    %66 = arith.truncf %58 : vector<18x16x4xf32> to vector<18x16x4xbf16>
    %c0_43 = arith.constant 0 : index
    %c1_44 = arith.constant 1 : index
    %c0_45 = arith.constant 0 : index
    %67 = vector.load %arg9[%c0_43, %c1_44, %c0_45] : memref<18x18x4xbf16, #tpu.memory_space<vmem>>, vector<18x16x4xbf16>
    tpu.vector_store %arg9[%c0_43, %c1_44, %c0_45], %66 {strides = array<i32>} : memref<18x18x4xbf16, #tpu.memory_space<vmem>>, vector<18x16x4xbf16>,
    %c0_46 = arith.constant 0 : index
    %c0_47 = arith.constant 0 : index
    %c0_48 = arith.constant 0 : index
    %68 = vector.load %arg9[%c0_46, %c0_47, %c0_48] : memref<18x18x4xbf16, #tpu.memory_space<vmem>>, vector<16x16x4xbf16>
    %c0_49 = arith.constant 0 : index
    %c1_50 = arith.constant 1 : index
    %c0_51 = arith.constant 0 : index
    %69 = vector.load %arg9[%c0_49, %c1_50, %c0_51] : memref<18x18x4xbf16, #tpu.memory_space<vmem>>, vector<16x16x4xbf16>
    %c0_52 = arith.constant 0 : index
    %c2_53 = arith.constant 2 : index
    %c0_54 = arith.constant 0 : index
    %70 = vector.load %arg9[%c0_52, %c2_53, %c0_54] : memref<18x18x4xbf16, #tpu.memory_space<vmem>>, vector<16x16x4xbf16>
    %c1_55 = arith.constant 1 : index
    %c0_56 = arith.constant 0 : index
    %c0_57 = arith.constant 0 : index
    %71 = vector.load %arg9[%c1_55, %c0_56, %c0_57] : memref<18x18x4xbf16, #tpu.memory_space<vmem>>, vector<16x16x4xbf16>
    %c1_58 = arith.constant 1 : index
    %c1_59 = arith.constant 1 : index
    %c0_60 = arith.constant 0 : index
    %72 = vector.load %arg9[%c1_58, %c1_59, %c0_60] : memref<18x18x4xbf16, #tpu.memory_space<vmem>>, vector<16x16x4xbf16>
    %c1_61 = arith.constant 1 : index
    %c2_62 = arith.constant 2 : index
    %c0_63 = arith.constant 0 : index
    %73 = vector.load %arg9[%c1_61, %c2_62, %c0_63] : memref<18x18x4xbf16, #tpu.memory_space<vmem>>, vector<16x16x4xbf16>
    %c2_64 = arith.constant 2 : index
    %c0_65 = arith.constant 0 : index
    %c0_66 = arith.constant 0 : index
    %74 = vector.load %arg9[%c2_64, %c0_65, %c0_66] : memref<18x18x4xbf16, #tpu.memory_space<vmem>>, vector<16x16x4xbf16>
    %c2_67 = arith.constant 2 : index
    %c1_68 = arith.constant 1 : index
    %c0_69 = arith.constant 0 : index
    %75 = vector.load %arg9[%c2_67, %c1_68, %c0_69] : memref<18x18x4xbf16, #tpu.memory_space<vmem>>, vector<16x16x4xbf16>
    %c2_70 = arith.constant 2 : index
    %c2_71 = arith.constant 2 : index
    %c0_72 = arith.constant 0 : index
    %76 = vector.load %arg9[%c2_70, %c2_71, %c0_72] : memref<18x18x4xbf16, #tpu.memory_space<vmem>>, vector<16x16x4xbf16>
    %77 = tpu.concatenate %68, %69, %70, %71, %72, %73, %74, %75, %76 in 2 : vector<16x16x4xbf16>, vector<16x16x4xbf16>, vector<16x16x4xbf16>, vector<16x16x4xbf16>, vector<16x16x4xbf16>, vector<16x16x4xbf16>, vector<16x16x4xbf16>, vector<16x16x4xbf16>, vector<16x16x4xbf16> -> vector<16x16x36xbf16>
    %78 = vector.shape_cast %77 : vector<16x16x36xbf16> to vector<256x36xbf16>
    %c0_73 = arith.constant 0 : index
    %c0_74 = arith.constant 0 : index
    %79 = vector.load %arg5[%c0_73, %c0_74] : memref<36x4xbf16, #tpu.memory_space<vmem>>, vector<36x4xbf16>
    %cst_75 = arith.constant dense<0.000000e+00> : vector<256x4xf32>
    %80 = tpu.matmul %78, %79, %cst_75 {dimension_numbers = #tpu.dot_dimension_numbers<[1], [0], [0], [1], [0, 0, 1, 1], [], []>} : vector<256x36xbf16>, vector<36x4xbf16>, vector<256x4xf32> -> vector<256x4xf32>
    %c0_76 = arith.constant 0 : index
    %c0_77 = arith.constant 0 : index
    %81 = vector.load %arg6[%c0_76, %c0_77] : memref<1x4xf32, #tpu.memory_space<vmem>>, vector<1x4xf32>
    %82 = vector.shape_cast %81 : vector<1x4xf32> to vector<4xf32>
    %83 = vector.shape_cast %82 : vector<4xf32> to vector<1x4xf32>
    %84 = vector.broadcast %83 : vector<1x4xf32> to vector<256x4xf32>
    %85 = arith.addf %80, %84 : vector<256x4xf32>
    %86 = vector.shape_cast %61 : vector<16x16x4xbf16> to vector<256x4xbf16>
    %87 = arith.extf %86 : vector<256x4xbf16> to vector<256x4xf32>
    %88 = arith.addf %85, %87 : vector<256x4xf32>
    %cst_78 = arith.constant 0.000000e+00 : f32
    %cst_79 = arith.constant 6.000000e+00 : f32
    %89 = vector.broadcast %cst_78 : f32 to vector<256x4xf32>
    %90 = arith.maximumf %89, %88 : vector<256x4xf32>
    %91 = vector.broadcast %cst_79 : f32 to vector<256x4xf32>
    %92 = arith.minimumf %91, %90 : vector<256x4xf32>
    %93 = vector.shape_cast %92 : vector<256x4xf32> to vector<16x16x4xf32>
    %c0_80 = arith.constant 0 : index
    %c0_81 = arith.constant 0 : index
    %c0_82 = arith.constant 0 : index
    %c0_83 = arith.constant 0 : index
    %94 = vector.load %arg7[%c0_80, %c0_81, %c0_82, %c0_83] : memref<1x16x16x4xf32, #tpu.memory_space<vmem>>, vector<1x16x16x4xf32>
    %95 = vector.shape_cast %94 : vector<1x16x16x4xf32> to vector<16x16x4xf32>
    %96 = vector.shape_cast %93 : vector<16x16x4xf32> to vector<1x16x16x4xf32>
    tpu.vector_store %arg7[%c0_80, %c0_81, %c0_82, %c0_83], %96 {strides = array<i32>} : memref<1x16x16x4xf32, #tpu.memory_space<vmem>>, vector<1x16x16x4xf32>,
    return
  }
  func.func @transform_0(%arg0: i32, %arg1: i32) -> (i32, i32, i32, i32) {
    %c0_i32 = arith.constant 0 : i32
    %c0_i32_0 = arith.constant 0 : i32
    %c0_i32_1 = arith.constant 0 : i32
    %c0_i32_2 = arith.constant 0 : i32
    return %arg0, %c0_i32, %c0_i32_0, %c0_i32_1 : i32, i32, i32, i32
  }
  func.func @transform_1(%arg0: i32, %arg1: i32) -> (i32, i32) {
    %c0_i32 = arith.constant 0 : i32
    %c0_i32_0 = arith.constant 0 : i32
    %c0_i32_1 = arith.constant 0 : i32
    return %c0_i32, %c0_i32_0 : i32, i32
  }
  func.func @transform_2(%arg0: i32, %arg1: i32) -> (i32, i32) {
    %c0_i32 = arith.constant 0 : i32
    %c0_i32_0 = arith.constant 0 : i32
    %c0_i32_1 = arith.constant 0 : i32
    return %c0_i32, %c0_i32_0 : i32, i32
  }
  func.func @transform_3(%arg0: i32, %arg1: i32) -> (i32, i32) {
    %c0_i32 = arith.constant 0 : i32
    %c0_i32_0 = arith.constant 0 : i32
    %c0_i32_1 = arith.constant 0 : i32
    return %c0_i32, %c0_i32_0 : i32, i32
  }
  func.func @transform_4(%arg0: i32, %arg1: i32) -> (i32, i32) {
    %c0_i32 = arith.constant 0 : i32
    %c0_i32_0 = arith.constant 0 : i32
    %c0_i32_1 = arith.constant 0 : i32
    return %c0_i32, %c0_i32_0 : i32, i32
  }
  func.func @transform_5(%arg0: i32, %arg1: i32) -> (i32, i32, i32, i32) {
    %c0_i32 = arith.constant 0 : i32
    %c0_i32_0 = arith.constant 0 : i32
    %c0_i32_1 = arith.constant 0 : i32
    return %arg0, %arg1, %c0_i32, %c0_i32_0 : i32, i32, i32, i32
  }
}

</mosaic_0001>

<llo_original>
// kernel: tpu_custom_call.1
$region0: #{tpu_custom_call.1}
  #allocation0 [shape = 'u32[]', space=smem, size = 0x4, offset = 0x4, fixed_abs, tag = 'smem constant byte address 0x4 - core index']
  #allocation1 [shape = 'u32[144,128]{1,0:T(1,128)}', space=vmem, size = 0x12000, scoped, tag = 'internal scratch']
  #allocation2 [shape = 'bf16[20,18,4]{2,1,0:T(8,128)(2,1)}', space=vmem, size = 0x1e000, scoped, tag = 'scratch operand']
  #allocation3 [shape = 'bf16[18,18,4]{2,1,0:T(8,128)(2,1)}', space=vmem, size = 0x1b000, scoped, tag = 'scratch operand']
  %s0 = inlined_call_operand.hbm [shape: f32[2,16,16,4], index: 0, kind: input, shape index: {}]
  %s1 = inlined_call_operand.hbm [shape: bf16[36,4], index: 1, kind: input, shape index: {}]
  %s2 = inlined_call_operand.hbm [shape: f32[1,4], index: 2, kind: input, shape index: {}]
  %s3 = inlined_call_operand.hbm [shape: bf16[36,4], index: 3, kind: input, shape index: {}]
  %s4 = inlined_call_operand.hbm [shape: f32[1,4], index: 4, kind: input, shape index: {}]
  %s5 = inlined_call_operand.hbm [shape: f32[2,16,16,4], index: 5, kind: output, shape index: {}]
  %s6 = sld [smem:[#allocation0]]
  $region77: #{tpu_custom_call.1} parent=0
    _
  %s8 = ssub.s32 1, %s6
  %s9 = scalar_select 0, %s8, %s6
  $region1: #{tpu_custom_call.1} parent=0
    #allocation4 [shape = 'u8[262144]{0}', space=vmem, size = 0x40000, scoped, tag = 'input window, operand 0']
    #allocation5 [shape = 's32[2]{0}', space=sflag, size = 0x8, scoped, tag = 'scoped memory for tpu_custom_call.1']
    #allocation6 [shape = 's32[2]{0}', space=sflag, size = 0x8, scoped, tag = 'scoped memory for tpu_custom_call.1']
    #allocation7 [shape = 'u8[10240]{0}', space=vmem, size = 0x2800, scoped, tag = 'input window, operand 1, single buffered']
    #allocation8 [shape = 's32[1]{0}', space=sflag, size = 0x4, scoped, tag = 'scoped memory for tpu_custom_call.1']
    #allocation9 [shape = 'u8[512]{0}', space=vmem, size = 0x400, scoped, tag = 'input window, operand 2, single buffered']
    #allocation10 [shape = 'u8[10240]{0}', space=vmem, size = 0x2800, scoped, tag = 'input window, operand 3, single buffered']
    #allocation11 [shape = 's32[1]{0}', space=sflag, size = 0x4, scoped, tag = 'scoped memory for tpu_custom_call.1']
    #allocation12 [shape = 'u8[512]{0}', space=vmem, size = 0x400, scoped, tag = 'input window, operand 4, single buffered']
    #allocation13 [shape = 'u8[262144]{0}', space=vmem, size = 0x40000, scoped, tag = 'output window, operand 0']
    %10 = vsyncpa [#allocation5], 0
    %s11 = scalar_lea.sflag [#allocation5], 1
    %12 = vsyncpa %s11, 0
    %13 = vsyncpa [#allocation8], 0
    %14 = vsyncpa [#allocation11], 0
    %15 = vsyncpa [#allocation6], 0
    %s16 = scalar_lea.sflag [#allocation6], 1
    %17 = vsyncpa %s16, 0
    loop: start=0, step=1, limit=4
    $region2: #{tpu_custom_call.1} parent=1 // loop_pre_header
      _
    $region3: #{tpu_custom_call.1} parent=1 // loop_header
      %s19 = sphi 0, %s23
      %p20 = scmp.ge.s32.totalorder %s19, 4
      %s26 = sphi 0, %s38
      %s27 = sphi 0, %s34
      %s28 = sphi 0, %s26
      %s29 = sphi 0, %s27
      %s30 = sphi 0, %s28
      %s31 = sphi 0, %s29
      %s41 = sphi 0, %s43
      %s44 = sphi 0, %s41
      %s45 = sphi 0, %s44
      %s61 = sphi 0, %s45
      %s65 = sphi 0, %s65
      %s67 = sphi 0, %s65
      %s68 = sphi 0, %s67
      %s82 = sphi 0, %s68
      %s86 = sphi 0, %s86
      %s88 = sphi 0, %s86
      %s89 = sphi 0, %s88
      %s103 = sphi 0, %s89
      %s107 = sphi 0, %s107
      %s109 = sphi 0, %s107
      %s110 = sphi 0, %s109
      %s124 = sphi 0, %s110
      %s128 = sphi 0, %s128
      %s130 = sphi 0, %s128
      %s131 = sphi 0, %s130
      %s145 = sphi 0, %s131
      %s153 = sphi 0, %s155
      %s156 = sphi 0, %s153
      %s157 = sphi 0, %s156
      %s173 = sphi 0, %s157
    $region4: #{tpu_custom_call.1} parent=1 // loop_header_branch
      %22 = sbr.rel (%p20) target = $region8
    $region5: #{tpu_custom_call.1} parent=1 // loop_body
      %s24 = ssub.s32 %s19, 1
      %s25 = ssub.s32 %s19, 2
      %s32 = sadd.s32 1, %s27
      %p33 = scmp.ge.s32.totalorder %s32, 1
      %s34 = scalar_select %p33, 0, %s32
      %s35 = sadd.s32 1, %s26
      %s36 = scalar_select %p33, %s35, %s26
      %p37 = scmp.ge.s32.totalorder %s36, 2
      %s38 = scalar_select %p37, 0, %s36
      %s39 = ssub.s32 %s26, %s38
      %p40 = scmp.eq.s32.totalorder %s39, 0
      %s42 = sadd.s32 %s41, 1
      %s43 = scalar_select %p40, %s41, %s42
      %p46 = pneg %p40
      %p47 = scmp.eq.s32.totalorder %s19, 1
      %p48 = por %p46, %p47
      %p49 = scmp.ne.s32.totalorder %s41, %s44
      %p50 = scmp.eq.s32.totalorder %s19, 0
      %p51 = por %p49, %p50
      %p52 = scmp.ne.s32.totalorder %s41, %s44
      %p53 = scmp.eq.s32.totalorder %s24, 1
      %p54 = por %p52, %p53
      %p55 = scmp.ne.s32.totalorder %s44, %s45
      %p56 = scmp.eq.s32.totalorder %s24, 0
      %p57 = por %p55, %p56
      %p58 = scmp.ne.s32.totalorder %s44, %s45
      %p59 = scmp.eq.s32.totalorder %s25, 1
      %p60 = por %p58, %p59
      %p62 = scmp.ne.s32.totalorder %s45, %s61
      %p63 = scmp.eq.s32.totalorder %s25, 0
      %p64 = por %p62, %p63
      %s66 = sadd.s32 %s65, 1
      %p69 = scmp.eq.s32.totalorder %s19, 1
      %p70 = scmp.ne.s32.totalorder %s65, %s67
      %p71 = scmp.eq.s32.totalorder %s19, 0
      %p72 = por %p70, %p71
      %p73 = scmp.ne.s32.totalorder %s65, %s67
      %p74 = scmp.eq.s32.totalorder %s24, 1
      %p75 = por %p73, %p74
      %p76 = scmp.ne.s32.totalorder %s67, %s68
      %p77 = scmp.eq.s32.totalorder %s24, 0
      %p78 = por %p76, %p77
      %p79 = scmp.ne.s32.totalorder %s67, %s68
      %p80 = scmp.eq.s32.totalorder %s25, 1
      %p81 = por %p79, %p80
      %p83 = scmp.ne.s32.totalorder %s68, %s82
      %p84 = scmp.eq.s32.totalorder %s25, 0
      %p85 = por %p83, %p84
      %s87 = sadd.s32 %s86, 1
      %p90 = scmp.eq.s32.totalorder %s19, 1
      %p91 = scmp.ne.s32.totalorder %s86, %s88
      %p92 = scmp.eq.s32.totalorder %s19, 0
      %p93 = por %p91, %p92
      %p94 = scmp.ne.s32.totalorder %s86, %s88
      %p95 = scmp.eq.s32.totalorder %s24, 1
      %p96 = por %p94, %p95
      %p97 = scmp.ne.s32.totalorder %s88, %s89
      %p98 = scmp.eq.s32.totalorder %s24, 0
      %p99 = por %p97, %p98
      %p100 = scmp.ne.s32.totalorder %s88, %s89
      %p101 = scmp.eq.s32.totalorder %s25, 1
      %p102 = por %p100, %p101
      %p104 = scmp.ne.s32.totalorder %s89, %s103
      %p105 = scmp.eq.s32.totalorder %s25, 0
      %p106 = por %p104, %p105
      %s108 = sadd.s32 %s107, 1
      %p111 = scmp.eq.s32.totalorder %s19, 1
      %p112 = scmp.ne.s32.totalorder %s107, %s109
      %p113 = scmp.eq.s32.totalorder %s19, 0
      %p114 = por %p112, %p113
      %p115 = scmp.ne.s32.totalorder %s107, %s109
      %p116 = scmp.eq.s32.totalorder %s24, 1
      %p117 = por %p115, %p116
      %p118 = scmp.ne.s32.totalorder %s109, %s110
      %p119 = scmp.eq.s32.totalorder %s24, 0
      %p120 = por %p118, %p119
      %p121 = scmp.ne.s32.totalorder %s109, %s110
      %p122 = scmp.eq.s32.totalorder %s25, 1
      %p123 = por %p121, %p122
      %p125 = scmp.ne.s32.totalorder %s110, %s124
      %p126 = scmp.eq.s32.totalorder %s25, 0
      %p127 = por %p125, %p126
      %s129 = sadd.s32 %s128, 1
      %p132 = scmp.eq.s32.totalorder %s19, 1
      %p133 = scmp.ne.s32.totalorder %s128, %s130
      %p134 = scmp.eq.s32.totalorder %s19, 0
      %p135 = por %p133, %p134
      %p136 = scmp.ne.s32.totalorder %s128, %s130
      %p137 = scmp.eq.s32.totalorder %s24, 1
      %p138 = por %p136, %p137
      %p139 = scmp.ne.s32.totalorder %s130, %s131
      %p140 = scmp.eq.s32.totalorder %s24, 0
      %p141 = por %p139, %p140
      %p142 = scmp.ne.s32.totalorder %s130, %s131
      %p143 = scmp.eq.s32.totalorder %s25, 1
      %p144 = por %p142, %p143
      %p146 = scmp.ne.s32.totalorder %s131, %s145
      %p147 = scmp.eq.s32.totalorder %s25, 0
      %p148 = por %p146, %p147
      %s149 = ssub.s32 %s26, %s38
      %s150 = ssub.s32 %s27, %s34
      %s151 = sor.u32 %s149, %s150
      %p152 = scmp.eq.s32.totalorder %s151, 0
      %s154 = sadd.s32 %s153, 1
      %s155 = scalar_select %p152, %s153, %s154
      %p158 = pneg %p152
      %p159 = scmp.eq.s32.totalorder %s19, 1
      %p160 = por %p158, %p159
      %p161 = scmp.ne.s32.totalorder %s153, %s156
      %p162 = scmp.eq.s32.totalorder %s19, 0
      %p163 = por %p161, %p162
      %p164 = scmp.ne.s32.totalorder %s153, %s156
      %p165 = scmp.eq.s32.totalorder %s24, 1
      %p166 = por %p164, %p165
      %p167 = scmp.ne.s32.totalorder %s156, %s157
      %p168 = scmp.eq.s32.totalorder %s24, 0
      %p169 = por %p167, %p168
      %p170 = scmp.ne.s32.totalorder %s156, %s157
      %p171 = scmp.eq.s32.totalorder %s25, 1
      %p172 = por %p170, %p171
      %p174 = scmp.ne.s32.totalorder %s157, %s173
      %p175 = scmp.eq.s32.totalorder %s25, 0
      %p176 = por %p174, %p175
      %p177 = scmp.le.s32.totalorder 1, %s19
      %p178 = scmp.lt.s32.totalorder %s19, 3
      %p179 = pnand %p177, %p178
      %p180 = pneg %p179
      // Predicated region
      $region9: #{tpu_custom_call.1} parent=5 // pred_check
        _
      $region10: #{tpu_custom_call.1} parent=5 // pred_check_branch
        %182 = sbr.rel (%p179) target = $region12
      $region11: #{tpu_custom_call.1} parent=5 // pred_region
        %s183 = ssub.s32 %s19, 1
        // Predicated region
        $region13: #{tpu_custom_call.1} parent=11 // pred_check
          %p184 = pneg %p78
        $region14: #{tpu_custom_call.1} parent=11 // pred_check_branch
          %186 = sbr.rel (%p184) target = $region16
        $region15: #{tpu_custom_call.1} parent=11 // pred_region
          %s188 = ssub.s32 320, 320
          %189 = vsyncadd [#allocation8], %s188
          %s190 = sshll.u32 [#allocation7], 4
          %s191 = int_to_ptr.vmem [resolvable:$true] %s190
          %196 = dma.hbm_to_vmem [thread:$0]  %s1, 320, %s191, [#allocation8], 64, 64, 4
        $region16: #{tpu_custom_call.1} parent=11 // pred_fallthru
          _
        // Predicated region
        $region17: #{tpu_custom_call.1} parent=11 // pred_check
          %p197 = pneg %p99
        $region18: #{tpu_custom_call.1} parent=11 // pred_check_branch
          %199 = sbr.rel (%p197) target = $region20
        $region19: #{tpu_custom_call.1} parent=11 // pred_region
          %s201 = ssub.s32 16, 16
          %202 = vsyncadd [#allocation8], %s201
          %s204 = sshll.u32 [#allocation9], 4
          %s205 = int_to_ptr.vmem [resolvable:$true] %s204
          %207 = dma.hbm_to_vmem [thread:$0]  %s2, 16, %s205, [#allocation8]
        $region20: #{tpu_custom_call.1} parent=11 // pred_fallthru
          _
        // Predicated region
        $region21: #{tpu_custom_call.1} parent=11 // pred_check
          %p208 = pneg %p120
        $region22: #{tpu_custom_call.1} parent=11 // pred_check_branch
          %210 = sbr.rel (%p208) target = $region24
        $region23: #{tpu_custom_call.1} parent=11 // pred_region
          %s212 = ssub.s32 320, 320
          %213 = vsyncadd [#allocation11], %s212
          %s214 = sshll.u32 [#allocation10], 4
          %s215 = int_to_ptr.vmem [resolvable:$true] %s214
          %220 = dma.hbm_to_vmem [thread:$0]  %s3, 320, %s215, [#allocation11], 64, 64, 4
        $region24: #{tpu_custom_call.1} parent=11 // pred_fallthru
          _
        // Predicated region
        $region25: #{tpu_custom_call.1} parent=11 // pred_check
          %p221 = pneg %p141
        $region26: #{tpu_custom_call.1} parent=11 // pred_check_branch
          %223 = sbr.rel (%p221) target = $region28
        $region27: #{tpu_custom_call.1} parent=11 // pred_region
          %s225 = ssub.s32 16, 16
          %226 = vsyncadd [#allocation11], %s225
          %s228 = sshll.u32 [#allocation12], 4
          %s229 = int_to_ptr.vmem [resolvable:$true] %s228
          %231 = dma.hbm_to_vmem [thread:$0]  %s4, 16, %s229, [#allocation11]
        $region28: #{tpu_custom_call.1} parent=11 // pred_fallthru
          _
      $region12: #{tpu_custom_call.1} parent=5 // pred_fallthru
        _
      %p232 = scmp.lt.s32.totalorder %s19, 2
      // Predicated region
      $region29: #{tpu_custom_call.1} parent=5 // pred_check
        %p233 = pneg %p232
      $region30: #{tpu_custom_call.1} parent=5 // pred_check_branch
        %235 = sbr.rel (%p233) target = $region32
      $region31: #{tpu_custom_call.1} parent=5 // pred_region
        // Predicated region
        $region33: #{tpu_custom_call.1} parent=31 // pred_check
          %p236 = pneg %p51
        $region34: #{tpu_custom_call.1} parent=31 // pred_check_branch
          %238 = sbr.rel (%p236) target = $region36
        $region35: #{tpu_custom_call.1} parent=31 // pred_region
          %s239 = sand.u32 %s41, 1
          %s240 = scalar_lea.sflag [#allocation5], %s239
          %s241 = sand.u32 %s41, 1
          %s242 = smul.addr %s241, 256
          %s243 = scalar_lea.vmem [#allocation4], %s242
          %s245 = ssub.s32 4096, 4096
          %246 = vsyncadd %s240, %s245
          %s247 = smul.addr %s26, 32
          %s248 = smul.addr %s247, 128
          %s249 = scalar_lea.hbm %s0, %s248
          %s250 = sshll.u32 %s243, 4
          %s251 = int_to_ptr.vmem [resolvable:$true] %s250
          %256 = dma.hbm_to_vmem [thread:$0]  %s249, 4096, %s251, %s240, 128, 128, 8
        $region36: #{tpu_custom_call.1} parent=31 // pred_fallthru
          _
      $region32: #{tpu_custom_call.1} parent=5 // pred_fallthru
        _
      %p257 = scmp.le.s32.totalorder 1, %s19
      %p258 = scmp.lt.s32.totalorder %s19, 3
      %p259 = pnand %p257, %p258
      %p260 = pneg %p259
      // Predicated region
      $region37: #{tpu_custom_call.1} parent=5 // pred_check
        _
      $region38: #{tpu_custom_call.1} parent=5 // pred_check_branch
        %262 = sbr.rel (%p259) target = $region40
      $region39: #{tpu_custom_call.1} parent=5 // pred_region
        %s263 = ssub.s32 %s19, 1
        %s264 = sand.u32 %s44, 1
        %s265 = scalar_lea.sflag [#allocation5], %s264
        %s266 = sand.u32 %s44, 1
        %s267 = smul.addr %s266, 256
        %s268 = scalar_lea.vmem [#allocation4], %s267
        // Predicated region
        $region41: #{tpu_custom_call.1} parent=39 // pred_check
          %p269 = pneg %p57
        $region42: #{tpu_custom_call.1} parent=39 // pred_check_branch
          %271 = sbr.rel (%p269) target = $region44
        $region43: #{tpu_custom_call.1} parent=39 // pred_region
          %272 = dma.done %s265, 4096
        $region44: #{tpu_custom_call.1} parent=39 // pred_fallthru
          _
        // Predicated region
        $region45: #{tpu_custom_call.1} parent=39 // pred_check
          %p273 = pneg %p78
        $region46: #{tpu_custom_call.1} parent=39 // pred_check_branch
          %275 = sbr.rel (%p273) target = $region48
        $region47: #{tpu_custom_call.1} parent=39 // pred_region
          %276 = dma.done [#allocation8], 320
        $region48: #{tpu_custom_call.1} parent=39 // pred_fallthru
          _
        // Predicated region
        $region49: #{tpu_custom_call.1} parent=39 // pred_check
          %p277 = pneg %p99
        $region50: #{tpu_custom_call.1} parent=39 // pred_check_branch
          %279 = sbr.rel (%p277) target = $region52
        $region51: #{tpu_custom_call.1} parent=39 // pred_region
          %280 = dma.done [#allocation8], 16
        $region52: #{tpu_custom_call.1} parent=39 // pred_fallthru
          _
        // Predicated region
        $region53: #{tpu_custom_call.1} parent=39 // pred_check
          %p281 = pneg %p120
        $region54: #{tpu_custom_call.1} parent=39 // pred_check_branch
          %283 = sbr.rel (%p281) target = $region56
        $region55: #{tpu_custom_call.1} parent=39 // pred_region
          %284 = dma.done [#allocation11], 320
        $region56: #{tpu_custom_call.1} parent=39 // pred_fallthru
          _
        // Predicated region
        $region57: #{tpu_custom_call.1} parent=39 // pred_check
          %p285 = pneg %p141
        $region58: #{tpu_custom_call.1} parent=39 // pred_check_branch
          %287 = sbr.rel (%p285) target = $region60
        $region59: #{tpu_custom_call.1} parent=39 // pred_region
          %288 = dma.done [#allocation11], 16
        $region60: #{tpu_custom_call.1} parent=39 // pred_fallthru
          _
        %s289 = sand.u32 %s44, 1
        %s290 = scalar_lea.sflag [#allocation5], %s289
        %s291 = sand.u32 %s44, 1
        %s292 = smul.addr %s291, 256
        %s293 = scalar_lea.vmem [#allocation4], %s292
        %p294 = pneg %p57
        %p295 = pneg %p54
        %p296 = pneg %p78
        %p297 = pneg %p75
        %p298 = pneg %p99
        %p299 = pneg %p96
        %p300 = pneg %p120
        %p301 = pneg %p117
        %p302 = pneg %p141
        %p303 = pneg %p138
        %p304 = pneg %p169
        %p305 = pneg %p166
        %s306 = sand.u32 %s156, 1
        %s307 = scalar_lea.sflag [#allocation6], %s306
        %s308 = sand.u32 %s156, 1
        %s309 = smul.addr %s308, 256
        %s310 = scalar_lea.vmem [#allocation13], %s309
        %s311 = smul.u32 16, %s29
        %p313 = scmp.eq.s32.totalorder %s29, 0
        // Predicated region
        $region61: #{tpu_custom_call.1} parent=39 // pred_check
          %p314 = pneg %p313
        $region62: #{tpu_custom_call.1} parent=39 // pred_check_branch
          %316 = sbr.rel (%p314) target = $region64
        $region63: #{tpu_custom_call.1} parent=39 // pred_region
          %vm317 = vcmask 27648
          %318 = vst.msk [vmem:[#allocation2] sm:$0xf] %vm317, 0
          %319 = vst.msk [vmem:[#allocation2 + $0x4] sm:$0xf] %vm317, 0
          %vm320 = vcmask 24576
          %321 = vst.msk [vmem:[#allocation2 + $0x8] sm:$0x1] %vm320, 0
          %322 = vst.msk [vmem:[#allocation2 + $0xc] sm:$0xf] %vm317, 0
          %323 = vst.msk [vmem:[#allocation2 + $0x10] sm:$0xf] %vm317, 0
          %324 = vst.msk [vmem:[#allocation2 + $0x14] sm:$0x1] %vm320, 0
          %s325 = scalar_lea.vmem [#allocation2], 216
          %326 = vst.msk [vmem:[%s325] sm:$0xf] %vm317, 0
          %327 = vst.msk [vmem:[%s325 + $0x4] sm:$0xf] %vm317, 0
          %328 = vst.msk [vmem:[%s325 + $0x8] sm:$0x1] %vm320, 0
          %329 = vst.msk [vmem:[%s325 + $0xc] sm:$0xf] %vm317, 0
          %330 = vst.msk [vmem:[%s325 + $0x10] sm:$0xf] %vm317, 0
          %331 = vst.msk [vmem:[%s325 + $0x14] sm:$0x1] %vm320, 0
          %s332 = scalar_lea.vmem [#allocation2], 24
          %vm333 = vcmask 24576
          %vm334 = vsmask.f32 256
          %vm335 = vmand %vm333, %vm334
          %v336 = vld [vmem:[%s332] sm:$0x1]
          %v337 = vsel %vm335, 0, %v336
          %338 = vst [vmem:[%s332] sm:$0x1] %v337
          %v339 = vld [vmem:[%s332 + $0xc] sm:$0x1]
          %v340 = vsel %vm335, 0, %v339
          %341 = vst [vmem:[%s332 + $0xc] sm:$0x1] %v340
          %v342 = vld [vmem:[%s332 + $0x18] sm:$0x1]
          %v343 = vsel %vm335, 0, %v342
          %344 = vst [vmem:[%s332 + $0x18] sm:$0x1] %v343
          %v345 = vld [vmem:[%s332 + $0x24] sm:$0x1]
          %v346 = vsel %vm335, 0, %v345
          %347 = vst [vmem:[%s332 + $0x24] sm:$0x1] %v346
          %v348 = vld [vmem:[%s332 + $0x30] sm:$0x1]
          %v349 = vsel %vm335, 0, %v348
          %350 = vst [vmem:[%s332 + $0x30] sm:$0x1] %v349
          %v351 = vld [vmem:[%s332 + $0x3c] sm:$0x1]
          %v352 = vsel %vm335, 0, %v351
          %353 = vst [vmem:[%s332 + $0x3c] sm:$0x1] %v352
          %v354 = vld [vmem:[%s332 + $0x48] sm:$0x1]
          %v355 = vsel %vm335, 0, %v354
          %356 = vst [vmem:[%s332 + $0x48] sm:$0x1] %v355
          %v357 = vld [vmem:[%s332 + $0x54] sm:$0x1]
          %v358 = vsel %vm335, 0, %v357
          %359 = vst [vmem:[%s332 + $0x54] sm:$0x1] %v358
          %v360 = vld [vmem:[%s332 + $0x60] sm:$0x1]
          %v361 = vsel %vm335, 0, %v360
          %362 = vst [vmem:[%s332 + $0x60] sm:$0x1] %v361
          %v363 = vld [vmem:[%s332 + $0x6c] sm:$0x1]
          %v364 = vsel %vm335, 0, %v363
          %365 = vst [vmem:[%s332 + $0x6c] sm:$0x1] %v364
          %v366 = vld [vmem:[%s332 + $0x78] sm:$0x1]
          %v367 = vsel %vm335, 0, %v366
          %368 = vst [vmem:[%s332 + $0x78] sm:$0x1] %v367
          %v369 = vld [vmem:[%s332 + $0x84] sm:$0x1]
          %v370 = vsel %vm335, 0, %v369
          %371 = vst [vmem:[%s332 + $0x84] sm:$0x1] %v370
          %v372 = vld [vmem:[%s332 + $0x90] sm:$0x1]
          %v373 = vsel %vm335, 0, %v372
          %374 = vst [vmem:[%s332 + $0x90] sm:$0x1] %v373
          %v375 = vld [vmem:[%s332 + $0x9c] sm:$0x1]
          %v376 = vsel %vm335, 0, %v375
          %377 = vst [vmem:[%s332 + $0x9c] sm:$0x1] %v376
          %v378 = vld [vmem:[%s332 + $0xa8] sm:$0x1]
          %v379 = vsel %vm335, 0, %v378
          %380 = vst [vmem:[%s332 + $0xa8] sm:$0x1] %v379
          %v381 = vld [vmem:[%s332 + $0xb4] sm:$0x1]
          %v382 = vsel %vm335, 0, %v381
          %383 = vst [vmem:[%s332 + $0xb4] sm:$0x1] %v382
          %vm384 = vsmask.f32 7938
          %vm385 = vmand %vm333, %vm384
          %v386 = vld [vmem:[%s332 + $0x8] sm:$0x1]
          %v387 = vsel %vm385, 0, %v386
          %388 = vst [vmem:[%s332 + $0x8] sm:$0x1] %v387
          %v389 = vld [vmem:[%s332 + $0x14] sm:$0x1]
          %v390 = vsel %vm385, 0, %v389
          %391 = vst [vmem:[%s332 + $0x14] sm:$0x1] %v390
          %v392 = vld [vmem:[%s332 + $0x20] sm:$0x1]
          %v393 = vsel %vm385, 0, %v392
          %394 = vst [vmem:[%s332 + $0x20] sm:$0x1] %v393
          %v395 = vld [vmem:[%s332 + $0x2c] sm:$0x1]
          %v396 = vsel %vm385, 0, %v395
          %397 = vst [vmem:[%s332 + $0x2c] sm:$0x1] %v396
          %v398 = vld [vmem:[%s332 + $0x38] sm:$0x1]
          %v399 = vsel %vm385, 0, %v398
          %400 = vst [vmem:[%s332 + $0x38] sm:$0x1] %v399
          %v401 = vld [vmem:[%s332 + $0x44] sm:$0x1]
          %v402 = vsel %vm385, 0, %v401
          %403 = vst [vmem:[%s332 + $0x44] sm:$0x1] %v402
          %v404 = vld [vmem:[%s332 + $0x50] sm:$0x1]
          %v405 = vsel %vm385, 0, %v404
          %406 = vst [vmem:[%s332 + $0x50] sm:$0x1] %v405
          %v407 = vld [vmem:[%s332 + $0x5c] sm:$0x1]
          %v408 = vsel %vm385, 0, %v407
          %409 = vst [vmem:[%s332 + $0x5c] sm:$0x1] %v408
          %v410 = vld [vmem:[%s332 + $0x68] sm:$0x1]
          %v411 = vsel %vm385, 0, %v410
          %412 = vst [vmem:[%s332 + $0x68] sm:$0x1] %v411
          %v413 = vld [vmem:[%s332 + $0x74] sm:$0x1]
          %v414 = vsel %vm385, 0, %v413
          %415 = vst [vmem:[%s332 + $0x74] sm:$0x1] %v414
          %v416 = vld [vmem:[%s332 + $0x80] sm:$0x1]
          %v417 = vsel %vm385, 0, %v416
          %418 = vst [vmem:[%s332 + $0x80] sm:$0x1] %v417
          %v419 = vld [vmem:[%s332 + $0x8c] sm:$0x1]
          %v420 = vsel %vm385, 0, %v419
          %421 = vst [vmem:[%s332 + $0x8c] sm:$0x1] %v420
          %v422 = vld [vmem:[%s332 + $0x98] sm:$0x1]
          %v423 = vsel %vm385, 0, %v422
          %424 = vst [vmem:[%s332 + $0x98] sm:$0x1] %v423
          %v425 = vld [vmem:[%s332 + $0xa4] sm:$0x1]
          %v426 = vsel %vm385, 0, %v425
          %427 = vst [vmem:[%s332 + $0xa4] sm:$0x1] %v426
          %v428 = vld [vmem:[%s332 + $0xb0] sm:$0x1]
          %v429 = vsel %vm385, 0, %v428
          %430 = vst [vmem:[%s332 + $0xb0] sm:$0x1] %v429
          %v431 = vld [vmem:[%s332 + $0xbc] sm:$0x1]
          %v432 = vsel %vm385, 0, %v431
          %433 = vst [vmem:[%s332 + $0xbc] sm:$0x1] %v432
          %v434 = vld [vmem:[%s268] sm:$0xff]
          %v435 = vld [vmem:[%s268 + $0x8] sm:$0xff]
          %v436 = vld [vmem:[%s268 + $0x10] sm:$0xff]
          %v437 = vld [vmem:[%s268 + $0x18] sm:$0xff]
          %v438 = vld [vmem:[%s268 + $0x20] sm:$0xff]
          %v439 = vld [vmem:[%s268 + $0x28] sm:$0xff]
          %v440 = vld [vmem:[%s268 + $0x30] sm:$0xff]
          %v441 = vld [vmem:[%s268 + $0x38] sm:$0xff]
          %v442 = vld [vmem:[%s268 + $0x40] sm:$0xff]
          %v443 = vld [vmem:[%s268 + $0x48] sm:$0xff]
          %v444 = vld [vmem:[%s268 + $0x50] sm:$0xff]
          %v445 = vld [vmem:[%s268 + $0x58] sm:$0xff]
          %v446 = vld [vmem:[%s268 + $0x60] sm:$0xff]
          %v447 = vld [vmem:[%s268 + $0x68] sm:$0xff]
          %v448 = vld [vmem:[%s268 + $0x70] sm:$0xff]
          %v449 = vld [vmem:[%s268 + $0x78] sm:$0xff]
          %v450 = vld [vmem:[%s268 + $0x80] sm:$0xff]
          %v451 = vld [vmem:[%s268 + $0x88] sm:$0xff]
          %v452 = vld [vmem:[%s268 + $0x90] sm:$0xff]
          %v453 = vld [vmem:[%s268 + $0x98] sm:$0xff]
          %v454 = vld [vmem:[%s268 + $0xa0] sm:$0xff]
          %v455 = vld [vmem:[%s268 + $0xa8] sm:$0xff]
          %v456 = vld [vmem:[%s268 + $0xb0] sm:$0xff]
          %v457 = vld [vmem:[%s268 + $0xb8] sm:$0xff]
          %v458 = vld [vmem:[%s268 + $0xc0] sm:$0xff]
          %v459 = vld [vmem:[%s268 + $0xc8] sm:$0xff]
          %v460 = vld [vmem:[%s268 + $0xd0] sm:$0xff]
          %v461 = vld [vmem:[%s268 + $0xd8] sm:$0xff]
          %v462 = vld [vmem:[%s268 + $0xe0] sm:$0xff]
          %v463 = vld [vmem:[%s268 + $0xe8] sm:$0xff]
          %v464 = vld [vmem:[%s268 + $0xf0] sm:$0xff]
          %v465 = vld [vmem:[%s268 + $0xf8] sm:$0xff]
          %v466 = vpack.c.bf16 %v435, %v434
          %v467 = vpack.c.bf16 %v437, %v436
          %v468 = vpack.c.bf16 %v439, %v438
          %v469 = vpack.c.bf16 %v441, %v440
          %v470 = vpack.c.bf16 %v443, %v442
          %v471 = vpack.c.bf16 %v445, %v444
          %v472 = vpack.c.bf16 %v447, %v446
          %v473 = vpack.c.bf16 %v449, %v448
          %v474 = vpack.c.bf16 %v451, %v450
          %v475 = vpack.c.bf16 %v453, %v452
          %v476 = vpack.c.bf16 %v455, %v454
          %v477 = vpack.c.bf16 %v457, %v456
          %v478 = vpack.c.bf16 %v459, %v458
          %v479 = vpack.c.bf16 %v461, %v460
          %v480 = vpack.c.bf16 %v463, %v462
          %v481 = vpack.c.bf16 %v465, %v464
          %v498 = vunpack.c.l.b16 %v466
          %v499 = vunpack.c.h.b16 %v466
          %v500 = vunpack.c.l.b16 %v467
          %v501 = vunpack.c.h.b16 %v467
          %v502 = vunpack.c.l.b16 %v468
          %v503 = vunpack.c.h.b16 %v468
          %v504 = vunpack.c.l.b16 %v469
          %v505 = vunpack.c.h.b16 %v469
          %v506 = vunpack.c.l.b16 %v470
          %v507 = vunpack.c.h.b16 %v470
          %v508 = vunpack.c.l.b16 %v471
          %v509 = vunpack.c.h.b16 %v471
          %v510 = vunpack.c.l.b16 %v472
          %v511 = vunpack.c.h.b16 %v472
          %v512 = vunpack.c.l.b16 %v473
          %v513 = vunpack.c.h.b16 %v473
          %v514 = vunpack.c.l.b16 %v474
          %v515 = vunpack.c.h.b16 %v474
          %v516 = vunpack.c.l.b16 %v475
          %v517 = vunpack.c.h.b16 %v475
          %v518 = vunpack.c.l.b16 %v476
          %v519 = vunpack.c.h.b16 %v476
          %v520 = vunpack.c.l.b16 %v477
          %v521 = vunpack.c.h.b16 %v477
          %v522 = vunpack.c.l.b16 %v478
          %v523 = vunpack.c.h.b16 %v478
          %v524 = vunpack.c.l.b16 %v479
          %v525 = vunpack.c.h.b16 %v479
          %v526 = vunpack.c.l.b16 %v480
          %v527 = vunpack.c.h.b16 %v480
          %v528 = vunpack.c.l.b16 %v481
          %v529 = vunpack.c.h.b16 %v481
          %v530 = vpack.c.b16 %v498, %v498
          %v531 = vpack.c.b16 %v499, %v499
          %v532 = vpack.c.b16 %v500, %v500
          %v533 = vpack.c.b16 %v501, %v501
          %v534 = vpack.c.b16 %v502, %v502
          %v535 = vpack.c.b16 %v503, %v503
          %v536 = vpack.c.b16 %v504, %v504
          %v537 = vpack.c.b16 %v505, %v505
          %v538 = vpack.c.b16 %v506, %v506
          %v539 = vpack.c.b16 %v507, %v507
          %v540 = vpack.c.b16 %v508, %v508
          %v541 = vpack.c.b16 %v509, %v509
          %v542 = vpack.c.b16 %v510, %v510
          %v543 = vpack.c.b16 %v511, %v511
          %v544 = vpack.c.b16 %v512, %v512
          %v545 = vpack.c.b16 %v513, %v513
          %v546 = vpack.c.b16 %v514, %v514
          %v547 = vpack.c.b16 %v515, %v515
          %v548 = vpack.c.b16 %v516, %v516
          %v549 = vpack.c.b16 %v517, %v517
          %v550 = vpack.c.b16 %v518, %v518
          %v551 = vpack.c.b16 %v519, %v519
          %v552 = vpack.c.b16 %v520, %v520
          %v553 = vpack.c.b16 %v521, %v521
          %v554 = vpack.c.b16 %v522, %v522
          %v555 = vpack.c.b16 %v523, %v523
          %v556 = vpack.c.b16 %v524, %v524
          %v557 = vpack.c.b16 %v525, %v525
          %v558 = vpack.c.b16 %v526, %v526
          %v559 = vpack.c.b16 %v527, %v527
          %v560 = vpack.c.b16 %v528, %v528
          %v561 = vpack.c.b16 %v529, %v529
          %vm562 = vsmask.f32 4368
          %vm563 = vmor %vm334, %vm562
          %v565 = vshrl.u32 %v530, 16
          %v567 = vrot.slane %v565, 7
          %v568 = vshll.u32 %v530, 16
          %v570 = vor.u32 %v567, %v568
          %v571 = vrot.slane %v567, 4
          %v573 = vshrl.u32 %v531, 16
          %v575 = vrot.slane %v573, 7
          %v576 = vshll.u32 %v531, 16
          %v578 = vor.u32 %v575, %v576
          %v579 = vsel %vm563, %v571, %v578
          %v580 = vrot.slane %v575, 4
          %v582 = vshrl.u32 %v532, 16
          %v584 = vrot.slane %v582, 7
          %v585 = vshll.u32 %v532, 16
          %v587 = vor.u32 %v584, %v585
          %v588 = vrot.slane %v584, 4
          %v590 = vshrl.u32 %v533, 16
          %v592 = vrot.slane %v590, 7
          %v593 = vshll.u32 %v533, 16
          %v595 = vor.u32 %v592, %v593
          %v596 = vsel %vm563, %v588, %v595
          %v597 = vrot.slane %v592, 4
          %v599 = vshrl.u32 %v534, 16
          %v601 = vrot.slane %v599, 7
          %v602 = vshll.u32 %v534, 16
          %v604 = vor.u32 %v601, %v602
          %v605 = vrot.slane %v601, 4
          %v607 = vshrl.u32 %v535, 16
          %v609 = vrot.slane %v607, 7
          %v610 = vshll.u32 %v535, 16
          %v612 = vor.u32 %v609, %v610
          %v613 = vsel %vm563, %v605, %v612
          %v614 = vrot.slane %v609, 4
          %v616 = vshrl.u32 %v536, 16
          %v618 = vrot.slane %v616, 7
          %v619 = vshll.u32 %v536, 16
          %v621 = vor.u32 %v618, %v619
          %v622 = vrot.slane %v618, 4
          %v624 = vshrl.u32 %v537, 16
          %v626 = vrot.slane %v624, 7
          %v627 = vshll.u32 %v537, 16
          %v629 = vor.u32 %v626, %v627
          %v630 = vsel %vm563, %v622, %v629
          %v631 = vrot.slane %v626, 4
          %v633 = vshrl.u32 %v538, 16
          %v635 = vrot.slane %v633, 7
          %v636 = vshll.u32 %v538, 16
          %v638 = vor.u32 %v635, %v636
          %v639 = vrot.slane %v635, 4
          %v641 = vshrl.u32 %v539, 16
          %v643 = vrot.slane %v641, 7
          %v644 = vshll.u32 %v539, 16
          %v646 = vor.u32 %v643, %v644
          %v647 = vsel %vm563, %v639, %v646
          %v648 = vrot.slane %v643, 4
          %v650 = vshrl.u32 %v540, 16
          %v652 = vrot.slane %v650, 7
          %v653 = vshll.u32 %v540, 16
          %v655 = vor.u32 %v652, %v653
          %v656 = vrot.slane %v652, 4
          %v658 = vshrl.u32 %v541, 16
          %v660 = vrot.slane %v658, 7
          %v661 = vshll.u32 %v541, 16
          %v663 = vor.u32 %v660, %v661
          %v664 = vsel %vm563, %v656, %v663
          %v665 = vrot.slane %v660, 4
          %v667 = vshrl.u32 %v542, 16
          %v669 = vrot.slane %v667, 7
          %v670 = vshll.u32 %v542, 16
          %v672 = vor.u32 %v669, %v670
          %v673 = vrot.slane %v669, 4
          %v675 = vshrl.u32 %v543, 16
          %v677 = vrot.slane %v675, 7
          %v678 = vshll.u32 %v543, 16
          %v680 = vor.u32 %v677, %v678
          %v681 = vsel %vm563, %v673, %v680
          %v682 = vrot.slane %v677, 4
          %v684 = vshrl.u32 %v544, 16
          %v686 = vrot.slane %v684, 7
          %v687 = vshll.u32 %v544, 16
          %v689 = vor.u32 %v686, %v687
          %v690 = vrot.slane %v686, 4
          %v692 = vshrl.u32 %v545, 16
          %v694 = vrot.slane %v692, 7
          %v695 = vshll.u32 %v545, 16
          %v697 = vor.u32 %v694, %v695
          %v698 = vsel %vm563, %v690, %v697
          %v699 = vrot.slane %v694, 4
          %v701 = vshrl.u32 %v546, 16
          %v703 = vrot.slane %v701, 7
          %v704 = vshll.u32 %v546, 16
          %v706 = vor.u32 %v703, %v704
          %v707 = vrot.slane %v703, 4
          %v709 = vshrl.u32 %v547, 16
          %v711 = vrot.slane %v709, 7
          %v712 = vshll.u32 %v547, 16
          %v714 = vor.u32 %v711, %v712
          %v715 = vsel %vm563, %v707, %v714
          %v716 = vrot.slane %v711, 4
          %v718 = vshrl.u32 %v548, 16
          %v720 = vrot.slane %v718, 7
          %v721 = vshll.u32 %v548, 16
          %v723 = vor.u32 %v720, %v721
          %v724 = vrot.slane %v720, 4
          %v726 = vshrl.u32 %v549, 16
          %v728 = vrot.slane %v726, 7
          %v729 = vshll.u32 %v549, 16
          %v731 = vor.u32 %v728, %v729
          %v732 = vsel %vm563, %v724, %v731
          %v733 = vrot.slane %v728, 4
          %v735 = vshrl.u32 %v550, 16
          %v737 = vrot.slane %v735, 7
          %v738 = vshll.u32 %v550, 16
          %v740 = vor.u32 %v737, %v738
          %v741 = vrot.slane %v737, 4
          %v743 = vshrl.u32 %v551, 16
          %v745 = vrot.slane %v743, 7
          %v746 = vshll.u32 %v551, 16
          %v748 = vor.u32 %v745, %v746
          %v749 = vsel %vm563, %v741, %v748
          %v750 = vrot.slane %v745, 4
          %v752 = vshrl.u32 %v552, 16
          %v754 = vrot.slane %v752, 7
          %v755 = vshll.u32 %v552, 16
          %v757 = vor.u32 %v754, %v755
          %v758 = vrot.slane %v754, 4
          %v760 = vshrl.u32 %v553, 16
          %v762 = vrot.slane %v760, 7
          %v763 = vshll.u32 %v553, 16
          %v765 = vor.u32 %v762, %v763
          %v766 = vsel %vm563, %v758, %v765
          %v767 = vrot.slane %v762, 4
          %v769 = vshrl.u32 %v554, 16
          %v771 = vrot.slane %v769, 7
          %v772 = vshll.u32 %v554, 16
          %v774 = vor.u32 %v771, %v772
          %v775 = vrot.slane %v771, 4
          %v777 = vshrl.u32 %v555, 16
          %v779 = vrot.slane %v777, 7
          %v780 = vshll.u32 %v555, 16
          %v782 = vor.u32 %v779, %v780
          %v783 = vsel %vm563, %v775, %v782
          %v784 = vrot.slane %v779, 4
          %v786 = vshrl.u32 %v556, 16
          %v788 = vrot.slane %v786, 7
          %v789 = vshll.u32 %v556, 16
          %v791 = vor.u32 %v788, %v789
          %v792 = vrot.slane %v788, 4
          %v794 = vshrl.u32 %v557, 16
          %v796 = vrot.slane %v794, 7
          %v797 = vshll.u32 %v557, 16
          %v799 = vor.u32 %v796, %v797
          %v800 = vsel %vm563, %v792, %v799
          %v801 = vrot.slane %v796, 4
          %v803 = vshrl.u32 %v558, 16
          %v805 = vrot.slane %v803, 7
          %v806 = vshll.u32 %v558, 16
          %v808 = vor.u32 %v805, %v806
          %v809 = vrot.slane %v805, 4
          %v811 = vshrl.u32 %v559, 16
          %v813 = vrot.slane %v811, 7
          %v814 = vshll.u32 %v559, 16
          %v816 = vor.u32 %v813, %v814
          %v817 = vsel %vm563, %v809, %v816
          %v818 = vrot.slane %v813, 4
          %v820 = vshrl.u32 %v560, 16
          %v822 = vrot.slane %v820, 7
          %v823 = vshll.u32 %v560, 16
          %v825 = vor.u32 %v822, %v823
          %v826 = vrot.slane %v822, 4
          %v828 = vshrl.u32 %v561, 16
          %v830 = vrot.slane %v828, 7
          %v831 = vshll.u32 %v561, 16
          %v833 = vor.u32 %v830, %v831
          %v834 = vsel %vm563, %v826, %v833
          %v835 = vrot.slane %v830, 4
          %vm884 = vcmask 27648
          %vm885 = vmand %vm884, %vm384
          %v886 = vld [vmem:[%s332] sm:$0xf]
          %v887 = vsel %vm885, %v570, %v886
          %888 = vst [vmem:[%s332] sm:$0xf] %v887
          %889 = vst.msk [vmem:[%s332 + $0x4] sm:$0xf] %vm317, %v579
          %v890 = vld [vmem:[%s332 + $0x8] sm:$0x1]
          %v891 = vsel %vm335, %v580, %v890
          %892 = vst [vmem:[%s332 + $0x8] sm:$0x1] %v891
          %v893 = vld [vmem:[%s332 + $0xc] sm:$0xf]
          %v894 = vsel %vm885, %v587, %v893
          %895 = vst [vmem:[%s332 + $0xc] sm:$0xf] %v894
          %896 = vst.msk [vmem:[%s332 + $0x10] sm:$0xf] %vm317, %v596
          %v897 = vld [vmem:[%s332 + $0x14] sm:$0x1]
          %v898 = vsel %vm335, %v597, %v897
          %899 = vst [vmem:[%s332 + $0x14] sm:$0x1] %v898
          %v900 = vld [vmem:[%s332 + $0x18] sm:$0xf]
          %v901 = vsel %vm885, %v604, %v900
          %902 = vst [vmem:[%s332 + $0x18] sm:$0xf] %v901
          %903 = vst.msk [vmem:[%s332 + $0x1c] sm:$0xf] %vm317, %v613
          %v904 = vld [vmem:[%s332 + $0x20] sm:$0x1]
          %v905 = vsel %vm335, %v614, %v904
          %906 = vst [vmem:[%s332 + $0x20] sm:$0x1] %v905
          %v907 = vld [vmem:[%s332 + $0x24] sm:$0xf]
          %v908 = vsel %vm885, %v621, %v907
          %909 = vst [vmem:[%s332 + $0x24] sm:$0xf] %v908
          %910 = vst.msk [vmem:[%s332 + $0x28] sm:$0xf] %vm317, %v630
          %v911 = vld [vmem:[%s332 + $0x2c] sm:$0x1]
          %v912 = vsel %vm335, %v631, %v911
          %913 = vst [vmem:[%s332 + $0x2c] sm:$0x1] %v912
          %v914 = vld [vmem:[%s332 + $0x30] sm:$0xf]
          %v915 = vsel %vm885, %v638, %v914
          %916 = vst [vmem:[%s332 + $0x30] sm:$0xf] %v915
          %917 = vst.msk [vmem:[%s332 + $0x34] sm:$0xf] %vm317, %v647
          %v918 = vld [vmem:[%s332 + $0x38] sm:$0x1]
          %v919 = vsel %vm335, %v648, %v918
          %920 = vst [vmem:[%s332 + $0x38] sm:$0x1] %v919
          %v921 = vld [vmem:[%s332 + $0x3c] sm:$0xf]
          %v922 = vsel %vm885, %v655, %v921
          %923 = vst [vmem:[%s332 + $0x3c] sm:$0xf] %v922
          %924 = vst.msk [vmem:[%s332 + $0x40] sm:$0xf] %vm317, %v664
          %v925 = vld [vmem:[%s332 + $0x44] sm:$0x1]
          %v926 = vsel %vm335, %v665, %v925
          %927 = vst [vmem:[%s332 + $0x44] sm:$0x1] %v926
          %v928 = vld [vmem:[%s332 + $0x48] sm:$0xf]
          %v929 = vsel %vm885, %v672, %v928
          %930 = vst [vmem:[%s332 + $0x48] sm:$0xf] %v929
          %931 = vst.msk [vmem:[%s332 + $0x4c] sm:$0xf] %vm317, %v681
          %v932 = vld [vmem:[%s332 + $0x50] sm:$0x1]
          %v933 = vsel %vm335, %v682, %v932
          %934 = vst [vmem:[%s332 + $0x50] sm:$0x1] %v933
          %v935 = vld [vmem:[%s332 + $0x54] sm:$0xf]
          %v936 = vsel %vm885, %v689, %v935
          %937 = vst [vmem:[%s332 + $0x54] sm:$0xf] %v936
          %938 = vst.msk [vmem:[%s332 + $0x58] sm:$0xf] %vm317, %v698
          %v939 = vld [vmem:[%s332 + $0x5c] sm:$0x1]
          %v940 = vsel %vm335, %v699, %v939
          %941 = vst [vmem:[%s332 + $0x5c] sm:$0x1] %v940
          %v942 = vld [vmem:[%s332 + $0x60] sm:$0xf]
          %v943 = vsel %vm885, %v706, %v942
          %944 = vst [vmem:[%s332 + $0x60] sm:$0xf] %v943
          %945 = vst.msk [vmem:[%s332 + $0x64] sm:$0xf] %vm317, %v715
          %v946 = vld [vmem:[%s332 + $0x68] sm:$0x1]
          %v947 = vsel %vm335, %v716, %v946
          %948 = vst [vmem:[%s332 + $0x68] sm:$0x1] %v947
          %v949 = vld [vmem:[%s332 + $0x6c] sm:$0xf]
          %v950 = vsel %vm885, %v723, %v949
          %951 = vst [vmem:[%s332 + $0x6c] sm:$0xf] %v950
          %952 = vst.msk [vmem:[%s332 + $0x70] sm:$0xf] %vm317, %v732
          %v953 = vld [vmem:[%s332 + $0x74] sm:$0x1]
          %v954 = vsel %vm335, %v733, %v953
          %955 = vst [vmem:[%s332 + $0x74] sm:$0x1] %v954
          %v956 = vld [vmem:[%s332 + $0x78] sm:$0xf]
          %v957 = vsel %vm885, %v740, %v956
          %958 = vst [vmem:[%s332 + $0x78] sm:$0xf] %v957
          %959 = vst.msk [vmem:[%s332 + $0x7c] sm:$0xf] %vm317, %v749
          %v960 = vld [vmem:[%s332 + $0x80] sm:$0x1]
          %v961 = vsel %vm335, %v750, %v960
          %962 = vst [vmem:[%s332 + $0x80] sm:$0x1] %v961
          %v963 = vld [vmem:[%s332 + $0x84] sm:$0xf]
          %v964 = vsel %vm885, %v757, %v963
          %965 = vst [vmem:[%s332 + $0x84] sm:$0xf] %v964
          %966 = vst.msk [vmem:[%s332 + $0x88] sm:$0xf] %vm317, %v766
          %v967 = vld [vmem:[%s332 + $0x8c] sm:$0x1]
          %v968 = vsel %vm335, %v767, %v967
          %969 = vst [vmem:[%s332 + $0x8c] sm:$0x1] %v968
          %v970 = vld [vmem:[%s332 + $0x90] sm:$0xf]
          %v971 = vsel %vm885, %v774, %v970
          %972 = vst [vmem:[%s332 + $0x90] sm:$0xf] %v971
          %973 = vst.msk [vmem:[%s332 + $0x94] sm:$0xf] %vm317, %v783
          %v974 = vld [vmem:[%s332 + $0x98] sm:$0x1]
          %v975 = vsel %vm335, %v784, %v974
          %976 = vst [vmem:[%s332 + $0x98] sm:$0x1] %v975
          %v977 = vld [vmem:[%s332 + $0x9c] sm:$0xf]
          %v978 = vsel %vm885, %v791, %v977
          %979 = vst [vmem:[%s332 + $0x9c] sm:$0xf] %v978
          %980 = vst.msk [vmem:[%s332 + $0xa0] sm:$0xf] %vm317, %v800
          %v981 = vld [vmem:[%s332 + $0xa4] sm:$0x1]
          %v982 = vsel %vm335, %v801, %v981
          %983 = vst [vmem:[%s332 + $0xa4] sm:$0x1] %v982
          %v984 = vld [vmem:[%s332 + $0xa8] sm:$0xf]
          %v985 = vsel %vm885, %v808, %v984
          %986 = vst [vmem:[%s332 + $0xa8] sm:$0xf] %v985
          %987 = vst.msk [vmem:[%s332 + $0xac] sm:$0xf] %vm317, %v817
          %v988 = vld [vmem:[%s332 + $0xb0] sm:$0x1]
          %v989 = vsel %vm335, %v818, %v988
          %990 = vst [vmem:[%s332 + $0xb0] sm:$0x1] %v989
          %v991 = vld [vmem:[%s332 + $0xb4] sm:$0xf]
          %v992 = vsel %vm885, %v825, %v991
          %993 = vst [vmem:[%s332 + $0xb4] sm:$0xf] %v992
          %994 = vst.msk [vmem:[%s332 + $0xb8] sm:$0xf] %vm317, %v834
          %v995 = vld [vmem:[%s332 + $0xbc] sm:$0x1]
          %v996 = vsel %vm335, %v835, %v995
          %997 = vst [vmem:[%s332 + $0xbc] sm:$0x1] %v996
        $region64: #{tpu_custom_call.1} parent=39 // pred_fallthru
          _
        %s998 = smul.u32 %s29, 16
        %s999 = smul.u32 %s998, 3
        %s1000 = smul.addr %s999, 4
        %s1001 = scalar_lea.vmem [#allocation2], %s1000
        %v1002 = vld [vmem:[%s1001] sm:$0xf]
        %v1003 = vld [vmem:[%s1001 + $0x4] sm:$0xf]
        %v1004 = vld [vmem:[%s1001 + $0xc] sm:$0xf]
        %v1005 = vld [vmem:[%s1001 + $0x10] sm:$0xf]
        %v1006 = vld [vmem:[%s1001 + $0x18] sm:$0xf]
        %v1007 = vld [vmem:[%s1001 + $0x1c] sm:$0xf]
        %v1008 = vld [vmem:[%s1001 + $0x24] sm:$0xf]
        %v1009 = vld [vmem:[%s1001 + $0x28] sm:$0xf]
        %v1010 = vld [vmem:[%s1001 + $0x30] sm:$0xf]
        %v1011 = vld [vmem:[%s1001 + $0x34] sm:$0xf]
        %v1012 = vld [vmem:[%s1001 + $0x3c] sm:$0xf]
        %v1013 = vld [vmem:[%s1001 + $0x40] sm:$0xf]
        %v1014 = vld [vmem:[%s1001 + $0x48] sm:$0xf]
        %v1015 = vld [vmem:[%s1001 + $0x4c] sm:$0xf]
        %v1016 = vld [vmem:[%s1001 + $0x54] sm:$0xf]
        %v1017 = vld [vmem:[%s1001 + $0x58] sm:$0xf]
        %v1018 = vld [vmem:[%s1001 + $0x60] sm:$0xf]
        %v1019 = vld [vmem:[%s1001 + $0x64] sm:$0xf]
        %v1020 = vld [vmem:[%s1001 + $0x6c] sm:$0xf]
        %v1021 = vld [vmem:[%s1001 + $0x70] sm:$0xf]
        %v1022 = vld [vmem:[%s1001 + $0x78] sm:$0xf]
        %v1023 = vld [vmem:[%s1001 + $0x7c] sm:$0xf]
        %v1024 = vld [vmem:[%s1001 + $0x84] sm:$0xf]
        %v1025 = vld [vmem:[%s1001 + $0x88] sm:$0xf]
        %v1026 = vld [vmem:[%s1001 + $0x90] sm:$0xf]
        %v1027 = vld [vmem:[%s1001 + $0x94] sm:$0xf]
        %v1028 = vld [vmem:[%s1001 + $0x9c] sm:$0xf]
        %v1029 = vld [vmem:[%s1001 + $0xa0] sm:$0xf]
        %v1030 = vld [vmem:[%s1001 + $0xa8] sm:$0xf]
        %v1031 = vld [vmem:[%s1001 + $0xac] sm:$0xf]
        %v1032 = vld [vmem:[%s1001 + $0xb4] sm:$0xf]
        %v1033 = vld [vmem:[%s1001 + $0xb8] sm:$0xf]
        %v1034 = vld [vmem:[%s1001 + $0xc0] sm:$0xf]
        %v1035 = vld [vmem:[%s1001 + $0xc4] sm:$0xf]
        %v1036 = vld [vmem:[%s1001 + $0xcc] sm:$0xf]
        %v1037 = vld [vmem:[%s1001 + $0xd0] sm:$0xf]
        %v1038 = vld [vmem:[%s1001 + $0x8] sm:$0x1]
        %v1039 = vld [vmem:[%s1001 + $0x14] sm:$0x1]
        %v1040 = vld [vmem:[%s1001 + $0x20] sm:$0x1]
        %v1041 = vld [vmem:[%s1001 + $0x2c] sm:$0x1]
        %v1042 = vld [vmem:[%s1001 + $0x38] sm:$0x1]
        %v1043 = vld [vmem:[%s1001 + $0x44] sm:$0x1]
        %v1044 = vld [vmem:[%s1001 + $0x50] sm:$0x1]
        %v1045 = vld [vmem:[%s1001 + $0x5c] sm:$0x1]
        %v1046 = vld [vmem:[%s1001 + $0x68] sm:$0x1]
        %v1047 = vld [vmem:[%s1001 + $0x74] sm:$0x1]
        %v1048 = vld [vmem:[%s1001 + $0x80] sm:$0x1]
        %v1049 = vld [vmem:[%s1001 + $0x8c] sm:$0x1]
        %v1050 = vld [vmem:[%s1001 + $0x98] sm:$0x1]
        %v1051 = vld [vmem:[%s1001 + $0xa4] sm:$0x1]
        %v1052 = vld [vmem:[%s1001 + $0xb0] sm:$0x1]
        %v1053 = vld [vmem:[%s1001 + $0xbc] sm:$0x1]
        %v1054 = vld [vmem:[%s1001 + $0xc8] sm:$0x1]
        %v1055 = vld [vmem:[%s1001 + $0xd4] sm:$0x1]
        %v1056 = vld [vmem:[%s1001] sm:$0xe]
        %v1057 = vld [vmem:[%s1001 + $0xc] sm:$0xe]
        %v1058 = vld [vmem:[%s1001 + $0x18] sm:$0xe]
        %v1059 = vld [vmem:[%s1001 + $0x24] sm:$0xe]
        %v1060 = vld [vmem:[%s1001 + $0x30] sm:$0xe]
        %v1061 = vld [vmem:[%s1001 + $0x3c] sm:$0xe]
        %v1062 = vld [vmem:[%s1001 + $0x48] sm:$0xe]
        %v1063 = vld [vmem:[%s1001 + $0x54] sm:$0xe]
        %v1064 = vld [vmem:[%s1001 + $0x60] sm:$0xe]
        %v1065 = vld [vmem:[%s1001 + $0x6c] sm:$0xe]
        %v1066 = vld [vmem:[%s1001 + $0x78] sm:$0xe]
        %v1067 = vld [vmem:[%s1001 + $0x84] sm:$0xe]
        %v1068 = vld [vmem:[%s1001 + $0x90] sm:$0xe]
        %v1069 = vld [vmem:[%s1001 + $0x9c] sm:$0xe]
        %v1070 = vld [vmem:[%s1001 + $0xa8] sm:$0xe]
        %v1071 = vld [vmem:[%s1001 + $0xb4] sm:$0xe]
        %v1072 = vld [vmem:[%s1001 + $0xc0] sm:$0xe]
        %v1073 = vld [vmem:[%s1001 + $0xcc] sm:$0xe]
        %s1074 = sadd.s32 %s998, 1
        %s1075 = smul.u32 %s1074, 3
        %s1076 = smul.addr %s1075, 4
        %s1077 = scalar_lea.vmem [#allocation2], %s1076
        %v1078 = vld [vmem:[%s1077] sm:$0xf]
        %v1079 = vld [vmem:[%s1077 + $0x4] sm:$0xf]
        %v1080 = vld [vmem:[%s1077 + $0xc] sm:$0xf]
        %v1081 = vld [vmem:[%s1077 + $0x10] sm:$0xf]
        %v1082 = vld [vmem:[%s1077 + $0x18] sm:$0xf]
        %v1083 = vld [vmem:[%s1077 + $0x1c] sm:$0xf]
        %v1084 = vld [vmem:[%s1077 + $0x24] sm:$0xf]
        %v1085 = vld [vmem:[%s1077 + $0x28] sm:$0xf]
        %v1086 = vld [vmem:[%s1077 + $0x30] sm:$0xf]
        %v1087 = vld [vmem:[%s1077 + $0x34] sm:$0xf]
        %v1088 = vld [vmem:[%s1077 + $0x3c] sm:$0xf]
        %v1089 = vld [vmem:[%s1077 + $0x40] sm:$0xf]
        %v1090 = vld [vmem:[%s1077 + $0x48] sm:$0xf]
        %v1091 = vld [vmem:[%s1077 + $0x4c] sm:$0xf]
        %v1092 = vld [vmem:[%s1077 + $0x54] sm:$0xf]
        %v1093 = vld [vmem:[%s1077 + $0x58] sm:$0xf]
        %v1094 = vld [vmem:[%s1077 + $0x60] sm:$0xf]
        %v1095 = vld [vmem:[%s1077 + $0x64] sm:$0xf]
        %v1096 = vld [vmem:[%s1077 + $0x6c] sm:$0xf]
        %v1097 = vld [vmem:[%s1077 + $0x70] sm:$0xf]
        %v1098 = vld [vmem:[%s1077 + $0x78] sm:$0xf]
        %v1099 = vld [vmem:[%s1077 + $0x7c] sm:$0xf]
        %v1100 = vld [vmem:[%s1077 + $0x84] sm:$0xf]
        %v1101 = vld [vmem:[%s1077 + $0x88] sm:$0xf]
        %v1102 = vld [vmem:[%s1077 + $0x90] sm:$0xf]
        %v1103 = vld [vmem:[%s1077 + $0x94] sm:$0xf]
        %v1104 = vld [vmem:[%s1077 + $0x9c] sm:$0xf]
        %v1105 = vld [vmem:[%s1077 + $0xa0] sm:$0xf]
        %v1106 = vld [vmem:[%s1077 + $0xa8] sm:$0xf]
        %v1107 = vld [vmem:[%s1077 + $0xac] sm:$0xf]
        %v1108 = vld [vmem:[%s1077 + $0xb4] sm:$0xf]
        %v1109 = vld [vmem:[%s1077 + $0xb8] sm:$0xf]
        %v1110 = vld [vmem:[%s1077 + $0xc0] sm:$0xf]
        %v1111 = vld [vmem:[%s1077 + $0xc4] sm:$0xf]
        %v1112 = vld [vmem:[%s1077 + $0xcc] sm:$0xf]
        %v1113 = vld [vmem:[%s1077 + $0xd0] sm:$0xf]
        %v1114 = vld [vmem:[%s1077 + $0x8] sm:$0x1]
        %v1115 = vld [vmem:[%s1077 + $0x14] sm:$0x1]
        %v1116 = vld [vmem:[%s1077 + $0x20] sm:$0x1]
        %v1117 = vld [vmem:[%s1077 + $0x2c] sm:$0x1]
        %v1118 = vld [vmem:[%s1077 + $0x38] sm:$0x1]
        %v1119 = vld [vmem:[%s1077 + $0x44] sm:$0x1]
        %v1120 = vld [vmem:[%s1077 + $0x50] sm:$0x1]
        %v1121 = vld [vmem:[%s1077 + $0x5c] sm:$0x1]
        %v1122 = vld [vmem:[%s1077 + $0x68] sm:$0x1]
        %v1123 = vld [vmem:[%s1077 + $0x74] sm:$0x1]
        %v1124 = vld [vmem:[%s1077 + $0x80] sm:$0x1]
        %v1125 = vld [vmem:[%s1077 + $0x8c] sm:$0x1]
        %v1126 = vld [vmem:[%s1077 + $0x98] sm:$0x1]
        %v1127 = vld [vmem:[%s1077 + $0xa4] sm:$0x1]
        %v1128 = vld [vmem:[%s1077 + $0xb0] sm:$0x1]
        %v1129 = vld [vmem:[%s1077 + $0xbc] sm:$0x1]
        %v1130 = vld [vmem:[%s1077 + $0xc8] sm:$0x1]
        %v1131 = vld [vmem:[%s1077 + $0xd4] sm:$0x1]
        %v1132 = vld [vmem:[%s1077] sm:$0xe]
        %v1133 = vld [vmem:[%s1077 + $0xc] sm:$0xe]
        %v1134 = vld [vmem:[%s1077 + $0x18] sm:$0xe]
        %v1135 = vld [vmem:[%s1077 + $0x24] sm:$0xe]
        %v1136 = vld [vmem:[%s1077 + $0x30] sm:$0xe]
        %v1137 = vld [vmem:[%s1077 + $0x3c] sm:$0xe]
        %v1138 = vld [vmem:[%s1077 + $0x48] sm:$0xe]
        %v1139 = vld [vmem:[%s1077 + $0x54] sm:$0xe]
        %v1140 = vld [vmem:[%s1077 + $0x60] sm:$0xe]
        %v1141 = vld [vmem:[%s1077 + $0x6c] sm:$0xe]
        %v1142 = vld [vmem:[%s1077 + $0x78] sm:$0xe]
        %v1143 = vld [vmem:[%s1077 + $0x84] sm:$0xe]
        %v1144 = vld [vmem:[%s1077 + $0x90] sm:$0xe]
        %v1145 = vld [vmem:[%s1077 + $0x9c] sm:$0xe]
        %v1146 = vld [vmem:[%s1077 + $0xa8] sm:$0xe]
        %v1147 = vld [vmem:[%s1077 + $0xb4] sm:$0xe]
        %v1148 = vld [vmem:[%s1077 + $0xc0] sm:$0xe]
        %v1149 = vld [vmem:[%s1077 + $0xcc] sm:$0xe]
        %s1150 = sadd.s32 %s998, 2
        %s1151 = smul.u32 %s1150, 3
        %s1152 = smul.addr %s1151, 4
        %s1153 = scalar_lea.vmem [#allocation2], %s1152
        %v1154 = vld [vmem:[%s1153] sm:$0xf]
        %v1155 = vld [vmem:[%s1153 + $0x4] sm:$0xf]
        %v1156 = vld [vmem:[%s1153 + $0xc] sm:$0xf]
        %v1157 = vld [vmem:[%s1153 + $0x10] sm:$0xf]
        %v1158 = vld [vmem:[%s1153 + $0x18] sm:$0xf]
        %v1159 = vld [vmem:[%s1153 + $0x1c] sm:$0xf]
        %v1160 = vld [vmem:[%s1153 + $0x24] sm:$0xf]
        %v1161 = vld [vmem:[%s1153 + $0x28] sm:$0xf]
        %v1162 = vld [vmem:[%s1153 + $0x30] sm:$0xf]
        %v1163 = vld [vmem:[%s1153 + $0x34] sm:$0xf]
        %v1164 = vld [vmem:[%s1153 + $0x3c] sm:$0xf]
        %v1165 = vld [vmem:[%s1153 + $0x40] sm:$0xf]
        %v1166 = vld [vmem:[%s1153 + $0x48] sm:$0xf]
        %v1167 = vld [vmem:[%s1153 + $0x4c] sm:$0xf]
        %v1168 = vld [vmem:[%s1153 + $0x54] sm:$0xf]
        %v1169 = vld [vmem:[%s1153 + $0x58] sm:$0xf]
        %v1170 = vld [vmem:[%s1153 + $0x60] sm:$0xf]
        %v1171 = vld [vmem:[%s1153 + $0x64] sm:$0xf]
        %v1172 = vld [vmem:[%s1153 + $0x6c] sm:$0xf]
        %v1173 = vld [vmem:[%s1153 + $0x70] sm:$0xf]
        %v1174 = vld [vmem:[%s1153 + $0x78] sm:$0xf]
        %v1175 = vld [vmem:[%s1153 + $0x7c] sm:$0xf]
        %v1176 = vld [vmem:[%s1153 + $0x84] sm:$0xf]
        %v1177 = vld [vmem:[%s1153 + $0x88] sm:$0xf]
        %v1178 = vld [vmem:[%s1153 + $0x90] sm:$0xf]
        %v1179 = vld [vmem:[%s1153 + $0x94] sm:$0xf]
        %v1180 = vld [vmem:[%s1153 + $0x9c] sm:$0xf]
        %v1181 = vld [vmem:[%s1153 + $0xa0] sm:$0xf]
        %v1182 = vld [vmem:[%s1153 + $0xa8] sm:$0xf]
        %v1183 = vld [vmem:[%s1153 + $0xac] sm:$0xf]
        %v1184 = vld [vmem:[%s1153 + $0xb4] sm:$0xf]
        %v1185 = vld [vmem:[%s1153 + $0xb8] sm:$0xf]
        %v1186 = vld [vmem:[%s1153 + $0xc0] sm:$0xf]
        %v1187 = vld [vmem:[%s1153 + $0xc4] sm:$0xf]
        %v1188 = vld [vmem:[%s1153 + $0xcc] sm:$0xf]
        %v1189 = vld [vmem:[%s1153 + $0xd0] sm:$0xf]
        %v1190 = vld [vmem:[%s1153 + $0x8] sm:$0x1]
        %v1191 = vld [vmem:[%s1153 + $0x14] sm:$0x1]
        %v1192 = vld [vmem:[%s1153 + $0x20] sm:$0x1]
        %v1193 = vld [vmem:[%s1153 + $0x2c] sm:$0x1]
        %v1194 = vld [vmem:[%s1153 + $0x38] sm:$0x1]
        %v1195 = vld [vmem:[%s1153 + $0x44] sm:$0x1]
        %v1196 = vld [vmem:[%s1153 + $0x50] sm:$0x1]
        %v1197 = vld [vmem:[%s1153 + $0x5c] sm:$0x1]
        %v1198 = vld [vmem:[%s1153 + $0x68] sm:$0x1]
        %v1199 = vld [vmem:[%s1153 + $0x74] sm:$0x1]
        %v1200 = vld [vmem:[%s1153 + $0x80] sm:$0x1]
        %v1201 = vld [vmem:[%s1153 + $0x8c] sm:$0x1]
        %v1202 = vld [vmem:[%s1153 + $0x98] sm:$0x1]
        %v1203 = vld [vmem:[%s1153 + $0xa4] sm:$0x1]
        %v1204 = vld [vmem:[%s1153 + $0xb0] sm:$0x1]
        %v1205 = vld [vmem:[%s1153 + $0xbc] sm:$0x1]
        %v1206 = vld [vmem:[%s1153 + $0xc8] sm:$0x1]
        %v1207 = vld [vmem:[%s1153 + $0xd4] sm:$0x1]
        %v1208 = vld [vmem:[%s1153] sm:$0xe]
        %v1209 = vld [vmem:[%s1153 + $0xc] sm:$0xe]
        %v1210 = vld [vmem:[%s1153 + $0x18] sm:$0xe]
        %v1211 = vld [vmem:[%s1153 + $0x24] sm:$0xe]
        %v1212 = vld [vmem:[%s1153 + $0x30] sm:$0xe]
        %v1213 = vld [vmem:[%s1153 + $0x3c] sm:$0xe]
        %v1214 = vld [vmem:[%s1153 + $0x48] sm:$0xe]
        %v1215 = vld [vmem:[%s1153 + $0x54] sm:$0xe]
        %v1216 = vld [vmem:[%s1153 + $0x60] sm:$0xe]
        %v1217 = vld [vmem:[%s1153 + $0x6c] sm:$0xe]
        %v1218 = vld [vmem:[%s1153 + $0x78] sm:$0xe]
        %v1219 = vld [vmem:[%s1153 + $0x84] sm:$0xe]
        %v1220 = vld [vmem:[%s1153 + $0x90] sm:$0xe]
        %v1221 = vld [vmem:[%s1153 + $0x9c] sm:$0xe]
        %v1222 = vld [vmem:[%s1153 + $0xa8] sm:$0xe]
        %v1223 = vld [vmem:[%s1153 + $0xb4] sm:$0xe]
        %v1224 = vld [vmem:[%s1153 + $0xc0] sm:$0xe]
        %v1225 = vld [vmem:[%s1153 + $0xcc] sm:$0xe]
        %v1262 = vunpack.c.l.b16 %v1002
        %v1263 = vunpack.c.l.b16 %v1003
        %v1264 = vunpack.c.l.b16 %v1004
        %v1265 = vunpack.c.l.b16 %v1005
        %v1266 = vunpack.c.l.b16 %v1006
        %v1267 = vunpack.c.l.b16 %v1007
        %v1268 = vunpack.c.l.b16 %v1008
        %v1269 = vunpack.c.l.b16 %v1009
        %v1270 = vunpack.c.l.b16 %v1010
        %v1271 = vunpack.c.l.b16 %v1011
        %v1272 = vunpack.c.l.b16 %v1012
        %v1273 = vunpack.c.l.b16 %v1013
        %v1274 = vunpack.c.l.b16 %v1014
        %v1275 = vunpack.c.l.b16 %v1015
        %v1276 = vunpack.c.l.b16 %v1016
        %v1277 = vunpack.c.l.b16 %v1017
        %v1278 = vunpack.c.l.b16 %v1018
        %v1279 = vunpack.c.l.b16 %v1019
        %v1280 = vunpack.c.l.b16 %v1020
        %v1281 = vunpack.c.l.b16 %v1021
        %v1282 = vunpack.c.l.b16 %v1022
        %v1283 = vunpack.c.l.b16 %v1023
        %v1284 = vunpack.c.l.b16 %v1024
        %v1285 = vunpack.c.l.b16 %v1025
        %v1286 = vunpack.c.l.b16 %v1026
        %v1287 = vunpack.c.l.b16 %v1027
        %v1288 = vunpack.c.l.b16 %v1028
        %v1289 = vunpack.c.l.b16 %v1029
        %v1290 = vunpack.c.l.b16 %v1030
        %v1291 = vunpack.c.l.b16 %v1031
        %v1292 = vunpack.c.l.b16 %v1032
        %v1293 = vunpack.c.l.b16 %v1033
        %v1294 = vunpack.c.l.b16 %v1034
        %v1295 = vunpack.c.l.b16 %v1035
        %v1296 = vunpack.c.l.b16 %v1036
        %v1297 = vunpack.c.l.b16 %v1037
        %v1298 = vpack.c.b16 %v1263, %v1262
        %v1299 = vpack.c.b16 %v1265, %v1264
        %v1300 = vpack.c.b16 %v1267, %v1266
        %v1301 = vpack.c.b16 %v1269, %v1268
        %v1302 = vpack.c.b16 %v1271, %v1270
        %v1303 = vpack.c.b16 %v1273, %v1272
        %v1304 = vpack.c.b16 %v1275, %v1274
        %v1305 = vpack.c.b16 %v1277, %v1276
        %v1306 = vpack.c.b16 %v1279, %v1278
        %v1307 = vpack.c.b16 %v1281, %v1280
        %v1308 = vpack.c.b16 %v1283, %v1282
        %v1309 = vpack.c.b16 %v1285, %v1284
        %v1310 = vpack.c.b16 %v1287, %v1286
        %v1311 = vpack.c.b16 %v1289, %v1288
        %v1312 = vpack.c.b16 %v1291, %v1290
        %v1313 = vpack.c.b16 %v1293, %v1292
        %v1314 = vpack.c.b16 %v1295, %v1294
        %v1315 = vpack.c.b16 %v1297, %v1296
        %v1334 = vunpack.c.l.b16 %v1038
        %v1335 = vunpack.c.l.b16 %v1039
        %v1336 = vunpack.c.l.b16 %v1040
        %v1337 = vunpack.c.l.b16 %v1041
        %v1338 = vunpack.c.l.b16 %v1042
        %v1339 = vunpack.c.l.b16 %v1043
        %v1340 = vunpack.c.l.b16 %v1044
        %v1341 = vunpack.c.l.b16 %v1045
        %v1342 = vunpack.c.l.b16 %v1046
        %v1343 = vunpack.c.l.b16 %v1047
        %v1344 = vunpack.c.l.b16 %v1048
        %v1345 = vunpack.c.l.b16 %v1049
        %v1346 = vunpack.c.l.b16 %v1050
        %v1347 = vunpack.c.l.b16 %v1051
        %v1348 = vunpack.c.l.b16 %v1052
        %v1349 = vunpack.c.l.b16 %v1053
        %v1350 = vunpack.c.l.b16 %v1054
        %v1351 = vunpack.c.l.b16 %v1055
        %v1352 = vpack.c.b16 %v1334, %v1334
        %v1353 = vpack.c.b16 %v1335, %v1335
        %v1354 = vpack.c.b16 %v1336, %v1336
        %v1355 = vpack.c.b16 %v1337, %v1337
        %v1356 = vpack.c.b16 %v1338, %v1338
        %v1357 = vpack.c.b16 %v1339, %v1339
        %v1358 = vpack.c.b16 %v1340, %v1340
        %v1359 = vpack.c.b16 %v1341, %v1341
        %v1360 = vpack.c.b16 %v1342, %v1342
        %v1361 = vpack.c.b16 %v1343, %v1343
        %v1362 = vpack.c.b16 %v1344, %v1344
        %v1363 = vpack.c.b16 %v1345, %v1345
        %v1364 = vpack.c.b16 %v1346, %v1346
        %v1365 = vpack.c.b16 %v1347, %v1347
        %v1366 = vpack.c.b16 %v1348, %v1348
        %v1367 = vpack.c.b16 %v1349, %v1349
        %v1368 = vpack.c.b16 %v1350, %v1350
        %v1369 = vpack.c.b16 %v1351, %v1351
        %vm1370 = vsmask.f32 7424
        %v1372 = vshrl.u32 %v1298, 16
        %v1374 = vshll.u32 %v1298, 16
        %v1376 = vrot.slane %v1374, 1
        %v1377 = vor.u32 %v1372, %v1376
        %v1379 = vshll.u32 %v1352, 16
        %v1381 = vrot.slane %v1379, 1
        %v1382 = vsel %vm1370, %v1377, %v1381
        %v1384 = vshrl.u32 %v1299, 16
        %v1386 = vshll.u32 %v1299, 16
        %v1388 = vrot.slane %v1386, 1
        %v1389 = vor.u32 %v1384, %v1388
        %v1391 = vshll.u32 %v1353, 16
        %v1393 = vrot.slane %v1391, 1
        %v1394 = vsel %vm1370, %v1389, %v1393
        %v1396 = vshrl.u32 %v1300, 16
        %v1398 = vshll.u32 %v1300, 16
        %v1400 = vrot.slane %v1398, 1
        %v1401 = vor.u32 %v1396, %v1400
        %v1403 = vshll.u32 %v1354, 16
        %v1405 = vrot.slane %v1403, 1
        %v1406 = vsel %vm1370, %v1401, %v1405
        %v1408 = vshrl.u32 %v1301, 16
        %v1410 = vshll.u32 %v1301, 16
        %v1412 = vrot.slane %v1410, 1
        %v1413 = vor.u32 %v1408, %v1412
        %v1415 = vshll.u32 %v1355, 16
        %v1417 = vrot.slane %v1415, 1
        %v1418 = vsel %vm1370, %v1413, %v1417
        %v1420 = vshrl.u32 %v1302, 16
        %v1422 = vshll.u32 %v1302, 16
        %v1424 = vrot.slane %v1422, 1
        %v1425 = vor.u32 %v1420, %v1424
        %v1427 = vshll.u32 %v1356, 16
        %v1429 = vrot.slane %v1427, 1
        %v1430 = vsel %vm1370, %v1425, %v1429
        %v1432 = vshrl.u32 %v1303, 16
        %v1434 = vshll.u32 %v1303, 16
        %v1436 = vrot.slane %v1434, 1
        %v1437 = vor.u32 %v1432, %v1436
        %v1439 = vshll.u32 %v1357, 16
        %v1441 = vrot.slane %v1439, 1
        %v1442 = vsel %vm1370, %v1437, %v1441
        %v1444 = vshrl.u32 %v1304, 16
        %v1446 = vshll.u32 %v1304, 16
        %v1448 = vrot.slane %v1446, 1
        %v1449 = vor.u32 %v1444, %v1448
        %v1451 = vshll.u32 %v1358, 16
        %v1453 = vrot.slane %v1451, 1
        %v1454 = vsel %vm1370, %v1449, %v1453
        %v1456 = vshrl.u32 %v1305, 16
        %v1458 = vshll.u32 %v1305, 16
        %v1460 = vrot.slane %v1458, 1
        %v1461 = vor.u32 %v1456, %v1460
        %v1463 = vshll.u32 %v1359, 16
        %v1465 = vrot.slane %v1463, 1
        %v1466 = vsel %vm1370, %v1461, %v1465
        %v1468 = vshrl.u32 %v1306, 16
        %v1470 = vshll.u32 %v1306, 16
        %v1472 = vrot.slane %v1470, 1
        %v1473 = vor.u32 %v1468, %v1472
        %v1475 = vshll.u32 %v1360, 16
        %v1477 = vrot.slane %v1475, 1
        %v1478 = vsel %vm1370, %v1473, %v1477
        %v1480 = vshrl.u32 %v1307, 16
        %v1482 = vshll.u32 %v1307, 16
        %v1484 = vrot.slane %v1482, 1
        %v1485 = vor.u32 %v1480, %v1484
        %v1487 = vshll.u32 %v1361, 16
        %v1489 = vrot.slane %v1487, 1
        %v1490 = vsel %vm1370, %v1485, %v1489
        %v1492 = vshrl.u32 %v1308, 16
        %v1494 = vshll.u32 %v1308, 16
        %v1496 = vrot.slane %v1494, 1
        %v1497 = vor.u32 %v1492, %v1496
        %v1499 = vshll.u32 %v1362, 16
        %v1501 = vrot.slane %v1499, 1
        %v1502 = vsel %vm1370, %v1497, %v1501
        %v1504 = vshrl.u32 %v1309, 16
        %v1506 = vshll.u32 %v1309, 16
        %v1508 = vrot.slane %v1506, 1
        %v1509 = vor.u32 %v1504, %v1508
        %v1511 = vshll.u32 %v1363, 16
        %v1513 = vrot.slane %v1511, 1
        %v1514 = vsel %vm1370, %v1509, %v1513
        %v1516 = vshrl.u32 %v1310, 16
        %v1518 = vshll.u32 %v1310, 16
        %v1520 = vrot.slane %v1518, 1
        %v1521 = vor.u32 %v1516, %v1520
        %v1523 = vshll.u32 %v1364, 16
        %v1525 = vrot.slane %v1523, 1
        %v1526 = vsel %vm1370, %v1521, %v1525
        %v1528 = vshrl.u32 %v1311, 16
        %v1530 = vshll.u32 %v1311, 16
        %v1532 = vrot.slane %v1530, 1
        %v1533 = vor.u32 %v1528, %v1532
        %v1535 = vshll.u32 %v1365, 16
        %v1537 = vrot.slane %v1535, 1
        %v1538 = vsel %vm1370, %v1533, %v1537
        %v1540 = vshrl.u32 %v1312, 16
        %v1542 = vshll.u32 %v1312, 16
        %v1544 = vrot.slane %v1542, 1
        %v1545 = vor.u32 %v1540, %v1544
        %v1547 = vshll.u32 %v1366, 16
        %v1549 = vrot.slane %v1547, 1
        %v1550 = vsel %vm1370, %v1545, %v1549
        %v1552 = vshrl.u32 %v1313, 16
        %v1554 = vshll.u32 %v1313, 16
        %v1556 = vrot.slane %v1554, 1
        %v1557 = vor.u32 %v1552, %v1556
        %v1559 = vshll.u32 %v1367, 16
        %v1561 = vrot.slane %v1559, 1
        %v1562 = vsel %vm1370, %v1557, %v1561
        %v1564 = vshrl.u32 %v1314, 16
        %v1566 = vshll.u32 %v1314, 16
        %v1568 = vrot.slane %v1566, 1
        %v1569 = vor.u32 %v1564, %v1568
        %v1571 = vshll.u32 %v1368, 16
        %v1573 = vrot.slane %v1571, 1
        %v1574 = vsel %vm1370, %v1569, %v1573
        %v1576 = vshrl.u32 %v1315, 16
        %v1578 = vshll.u32 %v1315, 16
        %v1580 = vrot.slane %v1578, 1
        %v1581 = vor.u32 %v1576, %v1580
        %v1583 = vshll.u32 %v1369, 16
        %v1585 = vrot.slane %v1583, 1
        %v1586 = vsel %vm1370, %v1581, %v1585
        %1587 = vrot.lane.b32.xlu0 %v1382, 4
        %v1588 = vpop.permute.xlu0 %1587
        %1589 = vrot.lane.b32.xlu0 %v1394, 4
        %v1590 = vpop.permute.xlu0 %1589
        %1591 = vrot.lane.b32.xlu0 %v1406, 4
        %v1592 = vpop.permute.xlu0 %1591
        %1593 = vrot.lane.b32.xlu0 %v1418, 4
        %v1594 = vpop.permute.xlu0 %1593
        %1595 = vrot.lane.b32.xlu0 %v1430, 4
        %v1596 = vpop.permute.xlu0 %1595
        %1597 = vrot.lane.b32.xlu0 %v1442, 4
        %v1598 = vpop.permute.xlu0 %1597
        %1599 = vrot.lane.b32.xlu0 %v1454, 4
        %v1600 = vpop.permute.xlu0 %1599
        %1601 = vrot.lane.b32.xlu0 %v1466, 4
        %v1602 = vpop.permute.xlu0 %1601
        %1603 = vrot.lane.b32.xlu0 %v1478, 4
        %v1604 = vpop.permute.xlu0 %1603
        %1605 = vrot.lane.b32.xlu0 %v1490, 4
        %v1606 = vpop.permute.xlu0 %1605
        %1607 = vrot.lane.b32.xlu0 %v1502, 4
        %v1608 = vpop.permute.xlu0 %1607
        %1609 = vrot.lane.b32.xlu0 %v1514, 4
        %v1610 = vpop.permute.xlu0 %1609
        %1611 = vrot.lane.b32.xlu0 %v1526, 4
        %v1612 = vpop.permute.xlu0 %1611
        %1613 = vrot.lane.b32.xlu0 %v1538, 4
        %v1614 = vpop.permute.xlu0 %1613
        %1615 = vrot.lane.b32.xlu0 %v1550, 4
        %v1616 = vpop.permute.xlu0 %1615
        %1617 = vrot.lane.b32.xlu0 %v1562, 4
        %v1618 = vpop.permute.xlu0 %1617
        %1619 = vrot.lane.b32.xlu0 %v1574, 4
        %v1620 = vpop.permute.xlu0 %1619
        %1621 = vrot.lane.b32.xlu0 %v1586, 4
        %v1622 = vpop.permute.xlu0 %1621
        %v1641 = vunpack.c.l.b16 %v1056
        %v1642 = vunpack.c.l.b16 %v1057
        %v1643 = vunpack.c.l.b16 %v1058
        %v1644 = vunpack.c.l.b16 %v1059
        %v1645 = vunpack.c.l.b16 %v1060
        %v1646 = vunpack.c.l.b16 %v1061
        %v1647 = vunpack.c.l.b16 %v1062
        %v1648 = vunpack.c.l.b16 %v1063
        %v1649 = vunpack.c.l.b16 %v1064
        %v1650 = vunpack.c.l.b16 %v1065
        %v1651 = vunpack.c.l.b16 %v1066
        %v1652 = vunpack.c.l.b16 %v1067
        %v1653 = vunpack.c.l.b16 %v1068
        %v1654 = vunpack.c.l.b16 %v1069
        %v1655 = vunpack.c.l.b16 %v1070
        %v1656 = vunpack.c.l.b16 %v1071
        %v1657 = vunpack.c.l.b16 %v1072
        %v1658 = vunpack.c.l.b16 %v1073
        %v1659 = vpack.c.b16 %v1263, %v1641
        %v1660 = vpack.c.b16 %v1265, %v1642
        %v1661 = vpack.c.b16 %v1267, %v1643
        %v1662 = vpack.c.b16 %v1269, %v1644
        %v1663 = vpack.c.b16 %v1271, %v1645
        %v1664 = vpack.c.b16 %v1273, %v1646
        %v1665 = vpack.c.b16 %v1275, %v1647
        %v1666 = vpack.c.b16 %v1277, %v1648
        %v1667 = vpack.c.b16 %v1279, %v1649
        %v1668 = vpack.c.b16 %v1281, %v1650
        %v1669 = vpack.c.b16 %v1283, %v1651
        %v1670 = vpack.c.b16 %v1285, %v1652
        %v1671 = vpack.c.b16 %v1287, %v1653
        %v1672 = vpack.c.b16 %v1289, %v1654
        %v1673 = vpack.c.b16 %v1291, %v1655
        %v1674 = vpack.c.b16 %v1293, %v1656
        %v1675 = vpack.c.b16 %v1295, %v1657
        %v1676 = vpack.c.b16 %v1297, %v1658
        %vm1677 = vcmask 1046528
        %v1678 = vrot.slane %v1659, 1
        %v1679 = vrot.slane %v1352, 1
        %v1680 = vsel %vm1677, %v1678, %v1679
        %v1681 = vrot.slane %v1660, 1
        %v1682 = vrot.slane %v1353, 1
        %v1683 = vsel %vm1677, %v1681, %v1682
        %v1684 = vrot.slane %v1661, 1
        %v1685 = vrot.slane %v1354, 1
        %v1686 = vsel %vm1677, %v1684, %v1685
        %v1687 = vrot.slane %v1662, 1
        %v1688 = vrot.slane %v1355, 1
        %v1689 = vsel %vm1677, %v1687, %v1688
        %v1690 = vrot.slane %v1663, 1
        %v1691 = vrot.slane %v1356, 1
        %v1692 = vsel %vm1677, %v1690, %v1691
        %v1693 = vrot.slane %v1664, 1
        %v1694 = vrot.slane %v1357, 1
        %v1695 = vsel %vm1677, %v1693, %v1694
        %v1696 = vrot.slane %v1665, 1
        %v1697 = vrot.slane %v1358, 1
        %v1698 = vsel %vm1677, %v1696, %v1697
        %v1699 = vrot.slane %v1666, 1
        %v1700 = vrot.slane %v1359, 1
        %v1701 = vsel %vm1677, %v1699, %v1700
        %v1702 = vrot.slane %v1667, 1
        %v1703 = vrot.slane %v1360, 1
        %v1704 = vsel %vm1677, %v1702, %v1703
        %v1705 = vrot.slane %v1668, 1
        %v1706 = vrot.slane %v1361, 1
        %v1707 = vsel %vm1677, %v1705, %v1706
        %v1708 = vrot.slane %v1669, 1
        %v1709 = vrot.slane %v1362, 1
        %v1710 = vsel %vm1677, %v1708, %v1709
        %v1711 = vrot.slane %v1670, 1
        %v1712 = vrot.slane %v1363, 1
        %v1713 = vsel %vm1677, %v1711, %v1712
        %v1714 = vrot.slane %v1671, 1
        %v1715 = vrot.slane %v1364, 1
        %v1716 = vsel %vm1677, %v1714, %v1715
        %v1717 = vrot.slane %v1672, 1
        %v1718 = vrot.slane %v1365, 1
        %v1719 = vsel %vm1677, %v1717, %v1718
        %v1720 = vrot.slane %v1673, 1
        %v1721 = vrot.slane %v1366, 1
        %v1722 = vsel %vm1677, %v1720, %v1721
        %v1723 = vrot.slane %v1674, 1
        %v1724 = vrot.slane %v1367, 1
        %v1725 = vsel %vm1677, %v1723, %v1724
        %v1726 = vrot.slane %v1675, 1
        %v1727 = vrot.slane %v1368, 1
        %v1728 = vsel %vm1677, %v1726, %v1727
        %v1729 = vrot.slane %v1676, 1
        %v1730 = vrot.slane %v1369, 1
        %v1731 = vsel %vm1677, %v1729, %v1730
        %1732 = vrot.lane.b32.xlu0 %v1680, 8
        %v1733 = vpop.permute.xlu0 %1732
        %1734 = vrot.lane.b32.xlu0 %v1683, 8
        %v1735 = vpop.permute.xlu0 %1734
        %1736 = vrot.lane.b32.xlu0 %v1686, 8
        %v1737 = vpop.permute.xlu0 %1736
        %1738 = vrot.lane.b32.xlu0 %v1689, 8
        %v1739 = vpop.permute.xlu0 %1738
        %1740 = vrot.lane.b32.xlu0 %v1692, 8
        %v1741 = vpop.permute.xlu0 %1740
        %1742 = vrot.lane.b32.xlu0 %v1695, 8
        %v1743 = vpop.permute.xlu0 %1742
        %1744 = vrot.lane.b32.xlu0 %v1698, 8
        %v1745 = vpop.permute.xlu0 %1744
        %1746 = vrot.lane.b32.xlu0 %v1701, 8
        %v1747 = vpop.permute.xlu0 %1746
        %1748 = vrot.lane.b32.xlu0 %v1704, 8
        %v1749 = vpop.permute.xlu0 %1748
        %1750 = vrot.lane.b32.xlu0 %v1707, 8
        %v1751 = vpop.permute.xlu0 %1750
        %1752 = vrot.lane.b32.xlu0 %v1710, 8
        %v1753 = vpop.permute.xlu0 %1752
        %1754 = vrot.lane.b32.xlu0 %v1713, 8
        %v1755 = vpop.permute.xlu0 %1754
        %1756 = vrot.lane.b32.xlu0 %v1716, 8
        %v1757 = vpop.permute.xlu0 %1756
        %1758 = vrot.lane.b32.xlu0 %v1719, 8
        %v1759 = vpop.permute.xlu0 %1758
        %1760 = vrot.lane.b32.xlu0 %v1722, 8
        %v1761 = vpop.permute.xlu0 %1760
        %1762 = vrot.lane.b32.xlu0 %v1725, 8
        %v1763 = vpop.permute.xlu0 %1762
        %1764 = vrot.lane.b32.xlu0 %v1728, 8
        %v1765 = vpop.permute.xlu0 %1764
        %1766 = vrot.lane.b32.xlu0 %v1731, 8
        %v1767 = vpop.permute.xlu0 %1766
        %v1804 = vunpack.c.l.b16 %v1078
        %v1805 = vunpack.c.l.b16 %v1079
        %v1806 = vunpack.c.l.b16 %v1080
        %v1807 = vunpack.c.l.b16 %v1081
        %v1808 = vunpack.c.l.b16 %v1082
        %v1809 = vunpack.c.l.b16 %v1083
        %v1810 = vunpack.c.l.b16 %v1084
        %v1811 = vunpack.c.l.b16 %v1085
        %v1812 = vunpack.c.l.b16 %v1086
        %v1813 = vunpack.c.l.b16 %v1087
        %v1814 = vunpack.c.l.b16 %v1088
        %v1815 = vunpack.c.l.b16 %v1089
        %v1816 = vunpack.c.l.b16 %v1090
        %v1817 = vunpack.c.l.b16 %v1091
        %v1818 = vunpack.c.l.b16 %v1092
        %v1819 = vunpack.c.l.b16 %v1093
        %v1820 = vunpack.c.l.b16 %v1094
        %v1821 = vunpack.c.l.b16 %v1095
        %v1822 = vunpack.c.l.b16 %v1096
        %v1823 = vunpack.c.l.b16 %v1097
        %v1824 = vunpack.c.l.b16 %v1098
        %v1825 = vunpack.c.l.b16 %v1099
        %v1826 = vunpack.c.l.b16 %v1100
        %v1827 = vunpack.c.l.b16 %v1101
        %v1828 = vunpack.c.l.b16 %v1102
        %v1829 = vunpack.c.l.b16 %v1103
        %v1830 = vunpack.c.l.b16 %v1104
        %v1831 = vunpack.c.l.b16 %v1105
        %v1832 = vunpack.c.l.b16 %v1106
        %v1833 = vunpack.c.l.b16 %v1107
        %v1834 = vunpack.c.l.b16 %v1108
        %v1835 = vunpack.c.l.b16 %v1109
        %v1836 = vunpack.c.l.b16 %v1110
        %v1837 = vunpack.c.l.b16 %v1111
        %v1838 = vunpack.c.l.b16 %v1112
        %v1839 = vunpack.c.l.b16 %v1113
        %v1840 = vpack.c.b16 %v1805, %v1804
        %v1841 = vpack.c.b16 %v1807, %v1806
        %v1842 = vpack.c.b16 %v1809, %v1808
        %v1843 = vpack.c.b16 %v1811, %v1810
        %v1844 = vpack.c.b16 %v1813, %v1812
        %v1845 = vpack.c.b16 %v1815, %v1814
        %v1846 = vpack.c.b16 %v1817, %v1816
        %v1847 = vpack.c.b16 %v1819, %v1818
        %v1848 = vpack.c.b16 %v1821, %v1820
        %v1849 = vpack.c.b16 %v1823, %v1822
        %v1850 = vpack.c.b16 %v1825, %v1824
        %v1851 = vpack.c.b16 %v1827, %v1826
        %v1852 = vpack.c.b16 %v1829, %v1828
        %v1853 = vpack.c.b16 %v1831, %v1830
        %v1854 = vpack.c.b16 %v1833, %v1832
        %v1855 = vpack.c.b16 %v1835, %v1834
        %v1856 = vpack.c.b16 %v1837, %v1836
        %v1857 = vpack.c.b16 %v1839, %v1838
        %1858 = vrot.lane.b32.xlu0 %v1840, 12
        %v1859 = vpop.permute.xlu0 %1858
        %1860 = vrot.lane.b32.xlu0 %v1841, 12
        %v1861 = vpop.permute.xlu0 %1860
        %1862 = vrot.lane.b32.xlu0 %v1842, 12
        %v1863 = vpop.permute.xlu0 %1862
        %1864 = vrot.lane.b32.xlu0 %v1843, 12
        %v1865 = vpop.permute.xlu0 %1864
        %1866 = vrot.lane.b32.xlu0 %v1844, 12
        %v1867 = vpop.permute.xlu0 %1866
        %1868 = vrot.lane.b32.xlu0 %v1845, 12
        %v1869 = vpop.permute.xlu0 %1868
        %1870 = vrot.lane.b32.xlu0 %v1846, 12
        %v1871 = vpop.permute.xlu0 %1870
        %1872 = vrot.lane.b32.xlu0 %v1847, 12
        %v1873 = vpop.permute.xlu0 %1872
        %1874 = vrot.lane.b32.xlu0 %v1848, 12
        %v1875 = vpop.permute.xlu0 %1874
        %1876 = vrot.lane.b32.xlu0 %v1849, 12
        %v1877 = vpop.permute.xlu0 %1876
        %1878 = vrot.lane.b32.xlu0 %v1850, 12
        %v1879 = vpop.permute.xlu0 %1878
        %1880 = vrot.lane.b32.xlu0 %v1851, 12
        %v1881 = vpop.permute.xlu0 %1880
        %1882 = vrot.lane.b32.xlu0 %v1852, 12
        %v1883 = vpop.permute.xlu0 %1882
        %1884 = vrot.lane.b32.xlu0 %v1853, 12
        %v1885 = vpop.permute.xlu0 %1884
        %1886 = vrot.lane.b32.xlu0 %v1854, 12
        %v1887 = vpop.permute.xlu0 %1886
        %1888 = vrot.lane.b32.xlu0 %v1855, 12
        %v1889 = vpop.permute.xlu0 %1888
        %1890 = vrot.lane.b32.xlu0 %v1856, 12
        %v1891 = vpop.permute.xlu0 %1890
        %1892 = vrot.lane.b32.xlu0 %v1857, 12
        %v1893 = vpop.permute.xlu0 %1892
        %v1912 = vunpack.c.l.b16 %v1114
        %v1913 = vunpack.c.l.b16 %v1115
        %v1914 = vunpack.c.l.b16 %v1116
        %v1915 = vunpack.c.l.b16 %v1117
        %v1916 = vunpack.c.l.b16 %v1118
        %v1917 = vunpack.c.l.b16 %v1119
        %v1918 = vunpack.c.l.b16 %v1120
        %v1919 = vunpack.c.l.b16 %v1121
        %v1920 = vunpack.c.l.b16 %v1122
        %v1921 = vunpack.c.l.b16 %v1123
        %v1922 = vunpack.c.l.b16 %v1124
        %v1923 = vunpack.c.l.b16 %v1125
        %v1924 = vunpack.c.l.b16 %v1126
        %v1925 = vunpack.c.l.b16 %v1127
        %v1926 = vunpack.c.l.b16 %v1128
        %v1927 = vunpack.c.l.b16 %v1129
        %v1928 = vunpack.c.l.b16 %v1130
        %v1929 = vunpack.c.l.b16 %v1131
        %v1930 = vpack.c.b16 %v1912, %v1912
        %v1931 = vpack.c.b16 %v1913, %v1913
        %v1932 = vpack.c.b16 %v1914, %v1914
        %v1933 = vpack.c.b16 %v1915, %v1915
        %v1934 = vpack.c.b16 %v1916, %v1916
        %v1935 = vpack.c.b16 %v1917, %v1917
        %v1936 = vpack.c.b16 %v1918, %v1918
        %v1937 = vpack.c.b16 %v1919, %v1919
        %v1938 = vpack.c.b16 %v1920, %v1920
        %v1939 = vpack.c.b16 %v1921, %v1921
        %v1940 = vpack.c.b16 %v1922, %v1922
        %v1941 = vpack.c.b16 %v1923, %v1923
        %v1942 = vpack.c.b16 %v1924, %v1924
        %v1943 = vpack.c.b16 %v1925, %v1925
        %v1944 = vpack.c.b16 %v1926, %v1926
        %v1945 = vpack.c.b16 %v1927, %v1927
        %v1946 = vpack.c.b16 %v1928, %v1928
        %v1947 = vpack.c.b16 %v1929, %v1929
        %v1949 = vshrl.u32 %v1840, 16
        %v1951 = vshll.u32 %v1840, 16
        %v1953 = vrot.slane %v1951, 1
        %v1954 = vor.u32 %v1949, %v1953
        %v1956 = vshll.u32 %v1930, 16
        %v1958 = vrot.slane %v1956, 1
        %v1959 = vsel %vm1370, %v1954, %v1958
        %v1961 = vshrl.u32 %v1841, 16
        %v1963 = vshll.u32 %v1841, 16
        %v1965 = vrot.slane %v1963, 1
        %v1966 = vor.u32 %v1961, %v1965
        %v1968 = vshll.u32 %v1931, 16
        %v1970 = vrot.slane %v1968, 1
        %v1971 = vsel %vm1370, %v1966, %v1970
        %v1973 = vshrl.u32 %v1842, 16
        %v1975 = vshll.u32 %v1842, 16
        %v1977 = vrot.slane %v1975, 1
        %v1978 = vor.u32 %v1973, %v1977
        %v1980 = vshll.u32 %v1932, 16
        %v1982 = vrot.slane %v1980, 1
        %v1983 = vsel %vm1370, %v1978, %v1982
        %v1985 = vshrl.u32 %v1843, 16
        %v1987 = vshll.u32 %v1843, 16
        %v1989 = vrot.slane %v1987, 1
        %v1990 = vor.u32 %v1985, %v1989
        %v1992 = vshll.u32 %v1933, 16
        %v1994 = vrot.slane %v1992, 1
        %v1995 = vsel %vm1370, %v1990, %v1994
        %v1997 = vshrl.u32 %v1844, 16
        %v1999 = vshll.u32 %v1844, 16
        %v2001 = vrot.slane %v1999, 1
        %v2002 = vor.u32 %v1997, %v2001
        %v2004 = vshll.u32 %v1934, 16
        %v2006 = vrot.slane %v2004, 1
        %v2007 = vsel %vm1370, %v2002, %v2006
        %v2009 = vshrl.u32 %v1845, 16
        %v2011 = vshll.u32 %v1845, 16
        %v2013 = vrot.slane %v2011, 1
        %v2014 = vor.u32 %v2009, %v2013
        %v2016 = vshll.u32 %v1935, 16
        %v2018 = vrot.slane %v2016, 1
        %v2019 = vsel %vm1370, %v2014, %v2018
        %v2021 = vshrl.u32 %v1846, 16
        %v2023 = vshll.u32 %v1846, 16
        %v2025 = vrot.slane %v2023, 1
        %v2026 = vor.u32 %v2021, %v2025
        %v2028 = vshll.u32 %v1936, 16
        %v2030 = vrot.slane %v2028, 1
        %v2031 = vsel %vm1370, %v2026, %v2030
        %v2033 = vshrl.u32 %v1847, 16
        %v2035 = vshll.u32 %v1847, 16
        %v2037 = vrot.slane %v2035, 1
        %v2038 = vor.u32 %v2033, %v2037
        %v2040 = vshll.u32 %v1937, 16
        %v2042 = vrot.slane %v2040, 1
        %v2043 = vsel %vm1370, %v2038, %v2042
        %v2045 = vshrl.u32 %v1848, 16
        %v2047 = vshll.u32 %v1848, 16
        %v2049 = vrot.slane %v2047, 1
        %v2050 = vor.u32 %v2045, %v2049
        %v2052 = vshll.u32 %v1938, 16
        %v2054 = vrot.slane %v2052, 1
        %v2055 = vsel %vm1370, %v2050, %v2054
        %v2057 = vshrl.u32 %v1849, 16
        %v2059 = vshll.u32 %v1849, 16
        %v2061 = vrot.slane %v2059, 1
        %v2062 = vor.u32 %v2057, %v2061
        %v2064 = vshll.u32 %v1939, 16
        %v2066 = vrot.slane %v2064, 1
        %v2067 = vsel %vm1370, %v2062, %v2066
        %v2069 = vshrl.u32 %v1850, 16
        %v2071 = vshll.u32 %v1850, 16
        %v2073 = vrot.slane %v2071, 1
        %v2074 = vor.u32 %v2069, %v2073
        %v2076 = vshll.u32 %v1940, 16
        %v2078 = vrot.slane %v2076, 1
        %v2079 = vsel %vm1370, %v2074, %v2078
        %v2081 = vshrl.u32 %v1851, 16
        %v2083 = vshll.u32 %v1851, 16
        %v2085 = vrot.slane %v2083, 1
        %v2086 = vor.u32 %v2081, %v2085
        %v2088 = vshll.u32 %v1941, 16
        %v2090 = vrot.slane %v2088, 1
        %v2091 = vsel %vm1370, %v2086, %v2090
        %v2093 = vshrl.u32 %v1852, 16
        %v2095 = vshll.u32 %v1852, 16
        %v2097 = vrot.slane %v2095, 1
        %v2098 = vor.u32 %v2093, %v2097
        %v2100 = vshll.u32 %v1942, 16
        %v2102 = vrot.slane %v2100, 1
        %v2103 = vsel %vm1370, %v2098, %v2102
        %v2105 = vshrl.u32 %v1853, 16
        %v2107 = vshll.u32 %v1853, 16
        %v2109 = vrot.slane %v2107, 1
        %v2110 = vor.u32 %v2105, %v2109
        %v2112 = vshll.u32 %v1943, 16
        %v2114 = vrot.slane %v2112, 1
        %v2115 = vsel %vm1370, %v2110, %v2114
        %v2117 = vshrl.u32 %v1854, 16
        %v2119 = vshll.u32 %v1854, 16
        %v2121 = vrot.slane %v2119, 1
        %v2122 = vor.u32 %v2117, %v2121
        %v2124 = vshll.u32 %v1944, 16
        %v2126 = vrot.slane %v2124, 1
        %v2127 = vsel %vm1370, %v2122, %v2126
        %v2129 = vshrl.u32 %v1855, 16
        %v2131 = vshll.u32 %v1855, 16
        %v2133 = vrot.slane %v2131, 1
        %v2134 = vor.u32 %v2129, %v2133
        %v2136 = vshll.u32 %v1945, 16
        %v2138 = vrot.slane %v2136, 1
        %v2139 = vsel %vm1370, %v2134, %v2138
        %v2141 = vshrl.u32 %v1856, 16
        %v2143 = vshll.u32 %v1856, 16
        %v2145 = vrot.slane %v2143, 1
        %v2146 = vor.u32 %v2141, %v2145
        %v2148 = vshll.u32 %v1946, 16
        %v2150 = vrot.slane %v2148, 1
        %v2151 = vsel %vm1370, %v2146, %v2150
        %v2153 = vshrl.u32 %v1857, 16
        %v2155 = vshll.u32 %v1857, 16
        %v2157 = vrot.slane %v2155, 1
        %v2158 = vor.u32 %v2153, %v2157
        %v2160 = vshll.u32 %v1947, 16
        %v2162 = vrot.slane %v2160, 1
        %v2163 = vsel %vm1370, %v2158, %v2162
        %2164 = vrot.lane.b32.xlu0 %v1959, 16
        %v2165 = vpop.permute.xlu0 %2164
        %2166 = vrot.lane.b32.xlu0 %v1971, 16
        %v2167 = vpop.permute.xlu0 %2166
        %2168 = vrot.lane.b32.xlu0 %v1983, 16
        %v2169 = vpop.permute.xlu0 %2168
        %2170 = vrot.lane.b32.xlu0 %v1995, 16
        %v2171 = vpop.permute.xlu0 %2170
        %2172 = vrot.lane.b32.xlu0 %v2007, 16
        %v2173 = vpop.permute.xlu0 %2172
        %2174 = vrot.lane.b32.xlu0 %v2019, 16
        %v2175 = vpop.permute.xlu0 %2174
        %2176 = vrot.lane.b32.xlu0 %v2031, 16
        %v2177 = vpop.permute.xlu0 %2176
        %2178 = vrot.lane.b32.xlu0 %v2043, 16
        %v2179 = vpop.permute.xlu0 %2178
        %2180 = vrot.lane.b32.xlu0 %v2055, 16
        %v2181 = vpop.permute.xlu0 %2180
        %2182 = vrot.lane.b32.xlu0 %v2067, 16
        %v2183 = vpop.permute.xlu0 %2182
        %2184 = vrot.lane.b32.xlu0 %v2079, 16
        %v2185 = vpop.permute.xlu0 %2184
        %2186 = vrot.lane.b32.xlu0 %v2091, 16
        %v2187 = vpop.permute.xlu0 %2186
        %2188 = vrot.lane.b32.xlu0 %v2103, 16
        %v2189 = vpop.permute.xlu0 %2188
        %2190 = vrot.lane.b32.xlu0 %v2115, 16
        %v2191 = vpop.permute.xlu0 %2190
        %2192 = vrot.lane.b32.xlu0 %v2127, 16
        %v2193 = vpop.permute.xlu0 %2192
        %2194 = vrot.lane.b32.xlu0 %v2139, 16
        %v2195 = vpop.permute.xlu0 %2194
        %2196 = vrot.lane.b32.xlu0 %v2151, 16
        %v2197 = vpop.permute.xlu0 %2196
        %2198 = vrot.lane.b32.xlu0 %v2163, 16
        %v2199 = vpop.permute.xlu0 %2198
        %v2218 = vunpack.c.l.b16 %v1132
        %v2219 = vunpack.c.l.b16 %v1133
        %v2220 = vunpack.c.l.b16 %v1134
        %v2221 = vunpack.c.l.b16 %v1135
        %v2222 = vunpack.c.l.b16 %v1136
        %v2223 = vunpack.c.l.b16 %v1137
        %v2224 = vunpack.c.l.b16 %v1138
        %v2225 = vunpack.c.l.b16 %v1139
        %v2226 = vunpack.c.l.b16 %v1140
        %v2227 = vunpack.c.l.b16 %v1141
        %v2228 = vunpack.c.l.b16 %v1142
        %v2229 = vunpack.c.l.b16 %v1143
        %v2230 = vunpack.c.l.b16 %v1144
        %v2231 = vunpack.c.l.b16 %v1145
        %v2232 = vunpack.c.l.b16 %v1146
        %v2233 = vunpack.c.l.b16 %v1147
        %v2234 = vunpack.c.l.b16 %v1148
        %v2235 = vunpack.c.l.b16 %v1149
        %v2236 = vpack.c.b16 %v1805, %v2218
        %v2237 = vpack.c.b16 %v1807, %v2219
        %v2238 = vpack.c.b16 %v1809, %v2220
        %v2239 = vpack.c.b16 %v1811, %v2221
        %v2240 = vpack.c.b16 %v1813, %v2222
        %v2241 = vpack.c.b16 %v1815, %v2223
        %v2242 = vpack.c.b16 %v1817, %v2224
        %v2243 = vpack.c.b16 %v1819, %v2225
        %v2244 = vpack.c.b16 %v1821, %v2226
        %v2245 = vpack.c.b16 %v1823, %v2227
        %v2246 = vpack.c.b16 %v1825, %v2228
        %v2247 = vpack.c.b16 %v1827, %v2229
        %v2248 = vpack.c.b16 %v1829, %v2230
        %v2249 = vpack.c.b16 %v1831, %v2231
        %v2250 = vpack.c.b16 %v1833, %v2232
        %v2251 = vpack.c.b16 %v1835, %v2233
        %v2252 = vpack.c.b16 %v1837, %v2234
        %v2253 = vpack.c.b16 %v1839, %v2235
        %v2254 = vrot.slane %v2236, 1
        %v2255 = vrot.slane %v1930, 1
        %v2256 = vsel %vm1677, %v2254, %v2255
        %v2257 = vrot.slane %v2237, 1
        %v2258 = vrot.slane %v1931, 1
        %v2259 = vsel %vm1677, %v2257, %v2258
        %v2260 = vrot.slane %v2238, 1
        %v2261 = vrot.slane %v1932, 1
        %v2262 = vsel %vm1677, %v2260, %v2261
        %v2263 = vrot.slane %v2239, 1
        %v2264 = vrot.slane %v1933, 1
        %v2265 = vsel %vm1677, %v2263, %v2264
        %v2266 = vrot.slane %v2240, 1
        %v2267 = vrot.slane %v1934, 1
        %v2268 = vsel %vm1677, %v2266, %v2267
        %v2269 = vrot.slane %v2241, 1
        %v2270 = vrot.slane %v1935, 1
        %v2271 = vsel %vm1677, %v2269, %v2270
        %v2272 = vrot.slane %v2242, 1
        %v2273 = vrot.slane %v1936, 1
        %v2274 = vsel %vm1677, %v2272, %v2273
        %v2275 = vrot.slane %v2243, 1
        %v2276 = vrot.slane %v1937, 1
        %v2277 = vsel %vm1677, %v2275, %v2276
        %v2278 = vrot.slane %v2244, 1
        %v2279 = vrot.slane %v1938, 1
        %v2280 = vsel %vm1677, %v2278, %v2279
        %v2281 = vrot.slane %v2245, 1
        %v2282 = vrot.slane %v1939, 1
        %v2283 = vsel %vm1677, %v2281, %v2282
        %v2284 = vrot.slane %v2246, 1
        %v2285 = vrot.slane %v1940, 1
        %v2286 = vsel %vm1677, %v2284, %v2285
        %v2287 = vrot.slane %v2247, 1
        %v2288 = vrot.slane %v1941, 1
        %v2289 = vsel %vm1677, %v2287, %v2288
        %v2290 = vrot.slane %v2248, 1
        %v2291 = vrot.slane %v1942, 1
        %v2292 = vsel %vm1677, %v2290, %v2291
        %v2293 = vrot.slane %v2249, 1
        %v2294 = vrot.slane %v1943, 1
        %v2295 = vsel %vm1677, %v2293, %v2294
        %v2296 = vrot.slane %v2250, 1
        %v2297 = vrot.slane %v1944, 1
        %v2298 = vsel %vm1677, %v2296, %v2297
        %v2299 = vrot.slane %v2251, 1
        %v2300 = vrot.slane %v1945, 1
        %v2301 = vsel %vm1677, %v2299, %v2300
        %v2302 = vrot.slane %v2252, 1
        %v2303 = vrot.slane %v1946, 1
        %v2304 = vsel %vm1677, %v2302, %v2303
        %v2305 = vrot.slane %v2253, 1
        %v2306 = vrot.slane %v1947, 1
        %v2307 = vsel %vm1677, %v2305, %v2306
        %2308 = vrot.lane.b32.xlu0 %v2256, 20
        %v2309 = vpop.permute.xlu0 %2308
        %2310 = vrot.lane.b32.xlu0 %v2259, 20
        %v2311 = vpop.permute.xlu0 %2310
        %2312 = vrot.lane.b32.xlu0 %v2262, 20
        %v2313 = vpop.permute.xlu0 %2312
        %2314 = vrot.lane.b32.xlu0 %v2265, 20
        %v2315 = vpop.permute.xlu0 %2314
        %2316 = vrot.lane.b32.xlu0 %v2268, 20
        %v2317 = vpop.permute.xlu0 %2316
        %2318 = vrot.lane.b32.xlu0 %v2271, 20
        %v2319 = vpop.permute.xlu0 %2318
        %2320 = vrot.lane.b32.xlu0 %v2274, 20
        %v2321 = vpop.permute.xlu0 %2320
        %2322 = vrot.lane.b32.xlu0 %v2277, 20
        %v2323 = vpop.permute.xlu0 %2322
        %2324 = vrot.lane.b32.xlu0 %v2280, 20
        %v2325 = vpop.permute.xlu0 %2324
        %2326 = vrot.lane.b32.xlu0 %v2283, 20
        %v2327 = vpop.permute.xlu0 %2326
        %2328 = vrot.lane.b32.xlu0 %v2286, 20
        %v2329 = vpop.permute.xlu0 %2328
        %2330 = vrot.lane.b32.xlu0 %v2289, 20
        %v2331 = vpop.permute.xlu0 %2330
        %2332 = vrot.lane.b32.xlu0 %v2292, 20
        %v2333 = vpop.permute.xlu0 %2332
        %2334 = vrot.lane.b32.xlu0 %v2295, 20
        %v2335 = vpop.permute.xlu0 %2334
        %2336 = vrot.lane.b32.xlu0 %v2298, 20
        %v2337 = vpop.permute.xlu0 %2336
        %2338 = vrot.lane.b32.xlu0 %v2301, 20
        %v2339 = vpop.permute.xlu0 %2338
        %2340 = vrot.lane.b32.xlu0 %v2304, 20
        %v2341 = vpop.permute.xlu0 %2340
        %2342 = vrot.lane.b32.xlu0 %v2307, 20
        %v2343 = vpop.permute.xlu0 %2342
        %v2380 = vunpack.c.l.b16 %v1154
        %v2381 = vunpack.c.l.b16 %v1155
        %v2382 = vunpack.c.l.b16 %v1156
        %v2383 = vunpack.c.l.b16 %v1157
        %v2384 = vunpack.c.l.b16 %v1158
        %v2385 = vunpack.c.l.b16 %v1159
        %v2386 = vunpack.c.l.b16 %v1160
        %v2387 = vunpack.c.l.b16 %v1161
        %v2388 = vunpack.c.l.b16 %v1162
        %v2389 = vunpack.c.l.b16 %v1163
        %v2390 = vunpack.c.l.b16 %v1164
        %v2391 = vunpack.c.l.b16 %v1165
        %v2392 = vunpack.c.l.b16 %v1166
        %v2393 = vunpack.c.l.b16 %v1167
        %v2394 = vunpack.c.l.b16 %v1168
        %v2395 = vunpack.c.l.b16 %v1169
        %v2396 = vunpack.c.l.b16 %v1170
        %v2397 = vunpack.c.l.b16 %v1171
        %v2398 = vunpack.c.l.b16 %v1172
        %v2399 = vunpack.c.l.b16 %v1173
        %v2400 = vunpack.c.l.b16 %v1174
        %v2401 = vunpack.c.l.b16 %v1175
        %v2402 = vunpack.c.l.b16 %v1176
        %v2403 = vunpack.c.l.b16 %v1177
        %v2404 = vunpack.c.l.b16 %v1178
        %v2405 = vunpack.c.l.b16 %v1179
        %v2406 = vunpack.c.l.b16 %v1180
        %v2407 = vunpack.c.l.b16 %v1181
        %v2408 = vunpack.c.l.b16 %v1182
        %v2409 = vunpack.c.l.b16 %v1183
        %v2410 = vunpack.c.l.b16 %v1184
        %v2411 = vunpack.c.l.b16 %v1185
        %v2412 = vunpack.c.l.b16 %v1186
        %v2413 = vunpack.c.l.b16 %v1187
        %v2414 = vunpack.c.l.b16 %v1188
        %v2415 = vunpack.c.l.b16 %v1189
        %v2416 = vpack.c.b16 %v2381, %v2380
        %v2417 = vpack.c.b16 %v2383, %v2382
        %v2418 = vpack.c.b16 %v2385, %v2384
        %v2419 = vpack.c.b16 %v2387, %v2386
        %v2420 = vpack.c.b16 %v2389, %v2388
        %v2421 = vpack.c.b16 %v2391, %v2390
        %v2422 = vpack.c.b16 %v2393, %v2392
        %v2423 = vpack.c.b16 %v2395, %v2394
        %v2424 = vpack.c.b16 %v2397, %v2396
        %v2425 = vpack.c.b16 %v2399, %v2398
        %v2426 = vpack.c.b16 %v2401, %v2400
        %v2427 = vpack.c.b16 %v2403, %v2402
        %v2428 = vpack.c.b16 %v2405, %v2404
        %v2429 = vpack.c.b16 %v2407, %v2406
        %v2430 = vpack.c.b16 %v2409, %v2408
        %v2431 = vpack.c.b16 %v2411, %v2410
        %v2432 = vpack.c.b16 %v2413, %v2412
        %v2433 = vpack.c.b16 %v2415, %v2414
        %2434 = vrot.lane.b32.xlu0 %v2416, 24
        %v2435 = vpop.permute.xlu0 %2434
        %2436 = vrot.lane.b32.xlu0 %v2417, 24
        %v2437 = vpop.permute.xlu0 %2436
        %2438 = vrot.lane.b32.xlu0 %v2418, 24
        %v2439 = vpop.permute.xlu0 %2438
        %2440 = vrot.lane.b32.xlu0 %v2419, 24
        %v2441 = vpop.permute.xlu0 %2440
        %2442 = vrot.lane.b32.xlu0 %v2420, 24
        %v2443 = vpop.permute.xlu0 %2442
        %2444 = vrot.lane.b32.xlu0 %v2421, 24
        %v2445 = vpop.permute.xlu0 %2444
        %2446 = vrot.lane.b32.xlu0 %v2422, 24
        %v2447 = vpop.permute.xlu0 %2446
        %2448 = vrot.lane.b32.xlu0 %v2423, 24
        %v2449 = vpop.permute.xlu0 %2448
        %2450 = vrot.lane.b32.xlu0 %v2424, 24
        %v2451 = vpop.permute.xlu0 %2450
        %2452 = vrot.lane.b32.xlu0 %v2425, 24
        %v2453 = vpop.permute.xlu0 %2452
        %2454 = vrot.lane.b32.xlu0 %v2426, 24
        %v2455 = vpop.permute.xlu0 %2454
        %2456 = vrot.lane.b32.xlu0 %v2427, 24
        %v2457 = vpop.permute.xlu0 %2456
        %2458 = vrot.lane.b32.xlu0 %v2428, 24
        %v2459 = vpop.permute.xlu0 %2458
        %2460 = vrot.lane.b32.xlu0 %v2429, 24
        %v2461 = vpop.permute.xlu0 %2460
        %2462 = vrot.lane.b32.xlu0 %v2430, 24
        %v2463 = vpop.permute.xlu0 %2462
        %2464 = vrot.lane.b32.xlu0 %v2431, 24
        %v2465 = vpop.permute.xlu0 %2464
        %2466 = vrot.lane.b32.xlu0 %v2432, 24
        %v2467 = vpop.permute.xlu0 %2466
        %2468 = vrot.lane.b32.xlu0 %v2433, 24
        %v2469 = vpop.permute.xlu0 %2468
        %v2488 = vunpack.c.l.b16 %v1190
        %v2489 = vunpack.c.l.b16 %v1191
        %v2490 = vunpack.c.l.b16 %v1192
        %v2491 = vunpack.c.l.b16 %v1193
        %v2492 = vunpack.c.l.b16 %v1194
        %v2493 = vunpack.c.l.b16 %v1195
        %v2494 = vunpack.c.l.b16 %v1196
        %v2495 = vunpack.c.l.b16 %v1197
        %v2496 = vunpack.c.l.b16 %v1198
        %v2497 = vunpack.c.l.b16 %v1199
        %v2498 = vunpack.c.l.b16 %v1200
        %v2499 = vunpack.c.l.b16 %v1201
        %v2500 = vunpack.c.l.b16 %v1202
        %v2501 = vunpack.c.l.b16 %v1203
        %v2502 = vunpack.c.l.b16 %v1204
        %v2503 = vunpack.c.l.b16 %v1205
        %v2504 = vunpack.c.l.b16 %v1206
        %v2505 = vunpack.c.l.b16 %v1207
        %v2506 = vpack.c.b16 %v2488, %v2488
        %v2507 = vpack.c.b16 %v2489, %v2489
        %v2508 = vpack.c.b16 %v2490, %v2490
        %v2509 = vpack.c.b16 %v2491, %v2491
        %v2510 = vpack.c.b16 %v2492, %v2492
        %v2511 = vpack.c.b16 %v2493, %v2493
        %v2512 = vpack.c.b16 %v2494, %v2494
        %v2513 = vpack.c.b16 %v2495, %v2495
        %v2514 = vpack.c.b16 %v2496, %v2496
        %v2515 = vpack.c.b16 %v2497, %v2497
        %v2516 = vpack.c.b16 %v2498, %v2498
        %v2517 = vpack.c.b16 %v2499, %v2499
        %v2518 = vpack.c.b16 %v2500, %v2500
        %v2519 = vpack.c.b16 %v2501, %v2501
        %v2520 = vpack.c.b16 %v2502, %v2502
        %v2521 = vpack.c.b16 %v2503, %v2503
        %v2522 = vpack.c.b16 %v2504, %v2504
        %v2523 = vpack.c.b16 %v2505, %v2505
        %v2525 = vshrl.u32 %v2416, 16
        %v2527 = vshll.u32 %v2416, 16
        %v2529 = vrot.slane %v2527, 1
        %v2530 = vor.u32 %v2525, %v2529
        %v2532 = vshll.u32 %v2506, 16
        %v2534 = vrot.slane %v2532, 1
        %v2535 = vsel %vm1370, %v2530, %v2534
        %v2537 = vshrl.u32 %v2417, 16
        %v2539 = vshll.u32 %v2417, 16
        %v2541 = vrot.slane %v2539, 1
        %v2542 = vor.u32 %v2537, %v2541
        %v2544 = vshll.u32 %v2507, 16
        %v2546 = vrot.slane %v2544, 1
        %v2547 = vsel %vm1370, %v2542, %v2546
        %v2549 = vshrl.u32 %v2418, 16
        %v2551 = vshll.u32 %v2418, 16
        %v2553 = vrot.slane %v2551, 1
        %v2554 = vor.u32 %v2549, %v2553
        %v2556 = vshll.u32 %v2508, 16
        %v2558 = vrot.slane %v2556, 1
        %v2559 = vsel %vm1370, %v2554, %v2558
        %v2561 = vshrl.u32 %v2419, 16
        %v2563 = vshll.u32 %v2419, 16
        %v2565 = vrot.slane %v2563, 1
        %v2566 = vor.u32 %v2561, %v2565
        %v2568 = vshll.u32 %v2509, 16
        %v2570 = vrot.slane %v2568, 1
        %v2571 = vsel %vm1370, %v2566, %v2570
        %v2573 = vshrl.u32 %v2420, 16
        %v2575 = vshll.u32 %v2420, 16
        %v2577 = vrot.slane %v2575, 1
        %v2578 = vor.u32 %v2573, %v2577
        %v2580 = vshll.u32 %v2510, 16
        %v2582 = vrot.slane %v2580, 1
        %v2583 = vsel %vm1370, %v2578, %v2582
        %v2585 = vshrl.u32 %v2421, 16
        %v2587 = vshll.u32 %v2421, 16
        %v2589 = vrot.slane %v2587, 1
        %v2590 = vor.u32 %v2585, %v2589
        %v2592 = vshll.u32 %v2511, 16
        %v2594 = vrot.slane %v2592, 1
        %v2595 = vsel %vm1370, %v2590, %v2594
        %v2597 = vshrl.u32 %v2422, 16
        %v2599 = vshll.u32 %v2422, 16
        %v2601 = vrot.slane %v2599, 1
        %v2602 = vor.u32 %v2597, %v2601
        %v2604 = vshll.u32 %v2512, 16
        %v2606 = vrot.slane %v2604, 1
        %v2607 = vsel %vm1370, %v2602, %v2606
        %v2609 = vshrl.u32 %v2423, 16
        %v2611 = vshll.u32 %v2423, 16
        %v2613 = vrot.slane %v2611, 1
        %v2614 = vor.u32 %v2609, %v2613
        %v2616 = vshll.u32 %v2513, 16
        %v2618 = vrot.slane %v2616, 1
        %v2619 = vsel %vm1370, %v2614, %v2618
        %v2621 = vshrl.u32 %v2424, 16
        %v2623 = vshll.u32 %v2424, 16
        %v2625 = vrot.slane %v2623, 1
        %v2626 = vor.u32 %v2621, %v2625
        %v2628 = vshll.u32 %v2514, 16
        %v2630 = vrot.slane %v2628, 1
        %v2631 = vsel %vm1370, %v2626, %v2630
        %v2633 = vshrl.u32 %v2425, 16
        %v2635 = vshll.u32 %v2425, 16
        %v2637 = vrot.slane %v2635, 1
        %v2638 = vor.u32 %v2633, %v2637
        %v2640 = vshll.u32 %v2515, 16
        %v2642 = vrot.slane %v2640, 1
        %v2643 = vsel %vm1370, %v2638, %v2642
        %v2645 = vshrl.u32 %v2426, 16
        %v2647 = vshll.u32 %v2426, 16
        %v2649 = vrot.slane %v2647, 1
        %v2650 = vor.u32 %v2645, %v2649
        %v2652 = vshll.u32 %v2516, 16
        %v2654 = vrot.slane %v2652, 1
        %v2655 = vsel %vm1370, %v2650, %v2654
        %v2657 = vshrl.u32 %v2427, 16
        %v2659 = vshll.u32 %v2427, 16
        %v2661 = vrot.slane %v2659, 1
        %v2662 = vor.u32 %v2657, %v2661
        %v2664 = vshll.u32 %v2517, 16
        %v2666 = vrot.slane %v2664, 1
        %v2667 = vsel %vm1370, %v2662, %v2666
        %v2669 = vshrl.u32 %v2428, 16
        %v2671 = vshll.u32 %v2428, 16
        %v2673 = vrot.slane %v2671, 1
        %v2674 = vor.u32 %v2669, %v2673
        %v2676 = vshll.u32 %v2518, 16
        %v2678 = vrot.slane %v2676, 1
        %v2679 = vsel %vm1370, %v2674, %v2678
        %v2681 = vshrl.u32 %v2429, 16
        %v2683 = vshll.u32 %v2429, 16
        %v2685 = vrot.slane %v2683, 1
        %v2686 = vor.u32 %v2681, %v2685
        %v2688 = vshll.u32 %v2519, 16
        %v2690 = vrot.slane %v2688, 1
        %v2691 = vsel %vm1370, %v2686, %v2690
        %v2693 = vshrl.u32 %v2430, 16
        %v2695 = vshll.u32 %v2430, 16
        %v2697 = vrot.slane %v2695, 1
        %v2698 = vor.u32 %v2693, %v2697
        %v2700 = vshll.u32 %v2520, 16
        %v2702 = vrot.slane %v2700, 1
        %v2703 = vsel %vm1370, %v2698, %v2702
        %v2705 = vshrl.u32 %v2431, 16
        %v2707 = vshll.u32 %v2431, 16
        %v2709 = vrot.slane %v2707, 1
        %v2710 = vor.u32 %v2705, %v2709
        %v2712 = vshll.u32 %v2521, 16
        %v2714 = vrot.slane %v2712, 1
        %v2715 = vsel %vm1370, %v2710, %v2714
        %v2717 = vshrl.u32 %v2432, 16
        %v2719 = vshll.u32 %v2432, 16
        %v2721 = vrot.slane %v2719, 1
        %v2722 = vor.u32 %v2717, %v2721
        %v2724 = vshll.u32 %v2522, 16
        %v2726 = vrot.slane %v2724, 1
        %v2727 = vsel %vm1370, %v2722, %v2726
        %v2729 = vshrl.u32 %v2433, 16
        %v2731 = vshll.u32 %v2433, 16
        %v2733 = vrot.slane %v2731, 1
        %v2734 = vor.u32 %v2729, %v2733
        %v2736 = vshll.u32 %v2523, 16
        %v2738 = vrot.slane %v2736, 1
        %v2739 = vsel %vm1370, %v2734, %v2738
        %2740 = vrot.lane.b32.xlu0 %v2535, 28
        %v2741 = vpop.permute.xlu0 %2740
        %2742 = vrot.lane.b32.xlu0 %v2547, 28
        %v2743 = vpop.permute.xlu0 %2742
        %2744 = vrot.lane.b32.xlu0 %v2559, 28
        %v2745 = vpop.permute.xlu0 %2744
        %2746 = vrot.lane.b32.xlu0 %v2571, 28
        %v2747 = vpop.permute.xlu0 %2746
        %2748 = vrot.lane.b32.xlu0 %v2583, 28
        %v2749 = vpop.permute.xlu0 %2748
        %2750 = vrot.lane.b32.xlu0 %v2595, 28
        %v2751 = vpop.permute.xlu0 %2750
        %2752 = vrot.lane.b32.xlu0 %v2607, 28
        %v2753 = vpop.permute.xlu0 %2752
        %2754 = vrot.lane.b32.xlu0 %v2619, 28
        %v2755 = vpop.permute.xlu0 %2754
        %2756 = vrot.lane.b32.xlu0 %v2631, 28
        %v2757 = vpop.permute.xlu0 %2756
        %2758 = vrot.lane.b32.xlu0 %v2643, 28
        %v2759 = vpop.permute.xlu0 %2758
        %2760 = vrot.lane.b32.xlu0 %v2655, 28
        %v2761 = vpop.permute.xlu0 %2760
        %2762 = vrot.lane.b32.xlu0 %v2667, 28
        %v2763 = vpop.permute.xlu0 %2762
        %2764 = vrot.lane.b32.xlu0 %v2679, 28
        %v2765 = vpop.permute.xlu0 %2764
        %2766 = vrot.lane.b32.xlu0 %v2691, 28
        %v2767 = vpop.permute.xlu0 %2766
        %2768 = vrot.lane.b32.xlu0 %v2703, 28
        %v2769 = vpop.permute.xlu0 %2768
        %2770 = vrot.lane.b32.xlu0 %v2715, 28
        %v2771 = vpop.permute.xlu0 %2770
        %2772 = vrot.lane.b32.xlu0 %v2727, 28
        %v2773 = vpop.permute.xlu0 %2772
        %2774 = vrot.lane.b32.xlu0 %v2739, 28
        %v2775 = vpop.permute.xlu0 %2774
        %v2794 = vunpack.c.l.b16 %v1208
        %v2795 = vunpack.c.l.b16 %v1209
        %v2796 = vunpack.c.l.b16 %v1210
        %v2797 = vunpack.c.l.b16 %v1211
        %v2798 = vunpack.c.l.b16 %v1212
        %v2799 = vunpack.c.l.b16 %v1213
        %v2800 = vunpack.c.l.b16 %v1214
        %v2801 = vunpack.c.l.b16 %v1215
        %v2802 = vunpack.c.l.b16 %v1216
        %v2803 = vunpack.c.l.b16 %v1217
        %v2804 = vunpack.c.l.b16 %v1218
        %v2805 = vunpack.c.l.b16 %v1219
        %v2806 = vunpack.c.l.b16 %v1220
        %v2807 = vunpack.c.l.b16 %v1221
        %v2808 = vunpack.c.l.b16 %v1222
        %v2809 = vunpack.c.l.b16 %v1223
        %v2810 = vunpack.c.l.b16 %v1224
        %v2811 = vunpack.c.l.b16 %v1225
        %v2812 = vpack.c.b16 %v2381, %v2794
        %v2813 = vpack.c.b16 %v2383, %v2795
        %v2814 = vpack.c.b16 %v2385, %v2796
        %v2815 = vpack.c.b16 %v2387, %v2797
        %v2816 = vpack.c.b16 %v2389, %v2798
        %v2817 = vpack.c.b16 %v2391, %v2799
        %v2818 = vpack.c.b16 %v2393, %v2800
        %v2819 = vpack.c.b16 %v2395, %v2801
        %v2820 = vpack.c.b16 %v2397, %v2802
        %v2821 = vpack.c.b16 %v2399, %v2803
        %v2822 = vpack.c.b16 %v2401, %v2804
        %v2823 = vpack.c.b16 %v2403, %v2805
        %v2824 = vpack.c.b16 %v2405, %v2806
        %v2825 = vpack.c.b16 %v2407, %v2807
        %v2826 = vpack.c.b16 %v2409, %v2808
        %v2827 = vpack.c.b16 %v2411, %v2809
        %v2828 = vpack.c.b16 %v2413, %v2810
        %v2829 = vpack.c.b16 %v2415, %v2811
        %v2830 = vrot.slane %v2812, 1
        %v2831 = vrot.slane %v2506, 1
        %v2832 = vsel %vm1677, %v2830, %v2831
        %v2833 = vrot.slane %v2813, 1
        %v2834 = vrot.slane %v2507, 1
        %v2835 = vsel %vm1677, %v2833, %v2834
        %v2836 = vrot.slane %v2814, 1
        %v2837 = vrot.slane %v2508, 1
        %v2838 = vsel %vm1677, %v2836, %v2837
        %v2839 = vrot.slane %v2815, 1
        %v2840 = vrot.slane %v2509, 1
        %v2841 = vsel %vm1677, %v2839, %v2840
        %v2842 = vrot.slane %v2816, 1
        %v2843 = vrot.slane %v2510, 1
        %v2844 = vsel %vm1677, %v2842, %v2843
        %v2845 = vrot.slane %v2817, 1
        %v2846 = vrot.slane %v2511, 1
        %v2847 = vsel %vm1677, %v2845, %v2846
        %v2848 = vrot.slane %v2818, 1
        %v2849 = vrot.slane %v2512, 1
        %v2850 = vsel %vm1677, %v2848, %v2849
        %v2851 = vrot.slane %v2819, 1
        %v2852 = vrot.slane %v2513, 1
        %v2853 = vsel %vm1677, %v2851, %v2852
        %v2854 = vrot.slane %v2820, 1
        %v2855 = vrot.slane %v2514, 1
        %v2856 = vsel %vm1677, %v2854, %v2855
        %v2857 = vrot.slane %v2821, 1
        %v2858 = vrot.slane %v2515, 1
        %v2859 = vsel %vm1677, %v2857, %v2858
        %v2860 = vrot.slane %v2822, 1
        %v2861 = vrot.slane %v2516, 1
        %v2862 = vsel %vm1677, %v2860, %v2861
        %v2863 = vrot.slane %v2823, 1
        %v2864 = vrot.slane %v2517, 1
        %v2865 = vsel %vm1677, %v2863, %v2864
        %v2866 = vrot.slane %v2824, 1
        %v2867 = vrot.slane %v2518, 1
        %v2868 = vsel %vm1677, %v2866, %v2867
        %v2869 = vrot.slane %v2825, 1
        %v2870 = vrot.slane %v2519, 1
        %v2871 = vsel %vm1677, %v2869, %v2870
        %v2872 = vrot.slane %v2826, 1
        %v2873 = vrot.slane %v2520, 1
        %v2874 = vsel %vm1677, %v2872, %v2873
        %v2875 = vrot.slane %v2827, 1
        %v2876 = vrot.slane %v2521, 1
        %v2877 = vsel %vm1677, %v2875, %v2876
        %v2878 = vrot.slane %v2828, 1
        %v2879 = vrot.slane %v2522, 1
        %v2880 = vsel %vm1677, %v2878, %v2879
        %v2881 = vrot.slane %v2829, 1
        %v2882 = vrot.slane %v2523, 1
        %v2883 = vsel %vm1677, %v2881, %v2882
        %2884 = vrot.lane.b32.xlu0 %v2832, 32
        %v2885 = vpop.permute.xlu0 %2884
        %2886 = vrot.lane.b32.xlu0 %v2835, 32
        %v2887 = vpop.permute.xlu0 %2886
        %2888 = vrot.lane.b32.xlu0 %v2838, 32
        %v2889 = vpop.permute.xlu0 %2888
        %2890 = vrot.lane.b32.xlu0 %v2841, 32
        %v2891 = vpop.permute.xlu0 %2890
        %2892 = vrot.lane.b32.xlu0 %v2844, 32
        %v2893 = vpop.permute.xlu0 %2892
        %2894 = vrot.lane.b32.xlu0 %v2847, 32
        %v2895 = vpop.permute.xlu0 %2894
        %2896 = vrot.lane.b32.xlu0 %v2850, 32
        %v2897 = vpop.permute.xlu0 %2896
        %2898 = vrot.lane.b32.xlu0 %v2853, 32
        %v2899 = vpop.permute.xlu0 %2898
        %2900 = vrot.lane.b32.xlu0 %v2856, 32
        %v2901 = vpop.permute.xlu0 %2900
        %2902 = vrot.lane.b32.xlu0 %v2859, 32
        %v2903 = vpop.permute.xlu0 %2902
        %2904 = vrot.lane.b32.xlu0 %v2862, 32
        %v2905 = vpop.permute.xlu0 %2904
        %2906 = vrot.lane.b32.xlu0 %v2865, 32
        %v2907 = vpop.permute.xlu0 %2906
        %2908 = vrot.lane.b32.xlu0 %v2868, 32
        %v2909 = vpop.permute.xlu0 %2908
        %2910 = vrot.lane.b32.xlu0 %v2871, 32
        %v2911 = vpop.permute.xlu0 %2910
        %2912 = vrot.lane.b32.xlu0 %v2874, 32
        %v2913 = vpop.permute.xlu0 %2912
        %2914 = vrot.lane.b32.xlu0 %v2877, 32
        %v2915 = vpop.permute.xlu0 %2914
        %2916 = vrot.lane.b32.xlu0 %v2880, 32
        %v2917 = vpop.permute.xlu0 %2916
        %2918 = vrot.lane.b32.xlu0 %v2883, 32
        %v2919 = vpop.permute.xlu0 %2918
        %vm2920 = vcmask 31744
        %v2922 = vsel %vm2920, %v1298, %v1588
        %v2924 = vsel %vm2920, %v1299, %v1590
        %v2926 = vsel %vm2920, %v1300, %v1592
        %v2928 = vsel %vm2920, %v1301, %v1594
        %v2930 = vsel %vm2920, %v1302, %v1596
        %v2932 = vsel %vm2920, %v1303, %v1598
        %v2934 = vsel %vm2920, %v1304, %v1600
        %v2936 = vsel %vm2920, %v1305, %v1602
        %v2938 = vsel %vm2920, %v1306, %v1604
        %v2940 = vsel %vm2920, %v1307, %v1606
        %v2942 = vsel %vm2920, %v1308, %v1608
        %v2944 = vsel %vm2920, %v1309, %v1610
        %v2946 = vsel %vm2920, %v1310, %v1612
        %v2948 = vsel %vm2920, %v1311, %v1614
        %v2950 = vsel %vm2920, %v1312, %v1616
        %v2952 = vsel %vm2920, %v1313, %v1618
        %v2954 = vsel %vm2920, %v1314, %v1620
        %v2956 = vsel %vm2920, %v1315, %v1622
        %vm2957 = vcmask 64512
        %v2959 = vsel %vm2957, %v2922, %v1733
        %v2961 = vsel %vm2957, %v2924, %v1735
        %v2963 = vsel %vm2957, %v2926, %v1737
        %v2965 = vsel %vm2957, %v2928, %v1739
        %v2967 = vsel %vm2957, %v2930, %v1741
        %v2969 = vsel %vm2957, %v2932, %v1743
        %v2971 = vsel %vm2957, %v2934, %v1745
        %v2973 = vsel %vm2957, %v2936, %v1747
        %v2975 = vsel %vm2957, %v2938, %v1749
        %v2977 = vsel %vm2957, %v2940, %v1751
        %v2979 = vsel %vm2957, %v2942, %v1753
        %v2981 = vsel %vm2957, %v2944, %v1755
        %v2983 = vsel %vm2957, %v2946, %v1757
        %v2985 = vsel %vm2957, %v2948, %v1759
        %v2987 = vsel %vm2957, %v2950, %v1761
        %v2989 = vsel %vm2957, %v2952, %v1763
        %v2991 = vsel %vm2957, %v2954, %v1765
        %v2993 = vsel %vm2957, %v2956, %v1767
        %vm2994 = vcmask 97280
        %v2996 = vsel %vm2994, %v2959, %v1859
        %v2998 = vsel %vm2994, %v2961, %v1861
        %v3000 = vsel %vm2994, %v2963, %v1863
        %v3002 = vsel %vm2994, %v2965, %v1865
        %v3004 = vsel %vm2994, %v2967, %v1867
        %v3006 = vsel %vm2994, %v2969, %v1869
        %v3008 = vsel %vm2994, %v2971, %v1871
        %v3010 = vsel %vm2994, %v2973, %v1873
        %v3012 = vsel %vm2994, %v2975, %v1875
        %v3014 = vsel %vm2994, %v2977, %v1877
        %v3016 = vsel %vm2994, %v2979, %v1879
        %v3018 = vsel %vm2994, %v2981, %v1881
        %v3020 = vsel %vm2994, %v2983, %v1883
        %v3022 = vsel %vm2994, %v2985, %v1885
        %v3024 = vsel %vm2994, %v2987, %v1887
        %v3026 = vsel %vm2994, %v2989, %v1889
        %v3028 = vsel %vm2994, %v2991, %v1891
        %v3030 = vsel %vm2994, %v2993, %v1893
        %vm3031 = vcmask 130048
        %v3033 = vsel %vm3031, %v2996, %v2165
        %v3035 = vsel %vm3031, %v2998, %v2167
        %v3037 = vsel %vm3031, %v3000, %v2169
        %v3039 = vsel %vm3031, %v3002, %v2171
        %v3041 = vsel %vm3031, %v3004, %v2173
        %v3043 = vsel %vm3031, %v3006, %v2175
        %v3045 = vsel %vm3031, %v3008, %v2177
        %v3047 = vsel %vm3031, %v3010, %v2179
        %v3049 = vsel %vm3031, %v3012, %v2181
        %v3051 = vsel %vm3031, %v3014, %v2183
        %v3053 = vsel %vm3031, %v3016, %v2185
        %v3055 = vsel %vm3031, %v3018, %v2187
        %v3057 = vsel %vm3031, %v3020, %v2189
        %v3059 = vsel %vm3031, %v3022, %v2191
        %v3061 = vsel %vm3031, %v3024, %v2193
        %v3063 = vsel %vm3031, %v3026, %v2195
        %v3065 = vsel %vm3031, %v3028, %v2197
        %v3067 = vsel %vm3031, %v3030, %v2199
        %vm3068 = vcmask 162816
        %v3070 = vsel %vm3068, %v3033, %v2309
        %v3072 = vsel %vm3068, %v3035, %v2311
        %v3074 = vsel %vm3068, %v3037, %v2313
        %v3076 = vsel %vm3068, %v3039, %v2315
        %v3078 = vsel %vm3068, %v3041, %v2317
        %v3080 = vsel %vm3068, %v3043, %v2319
        %v3082 = vsel %vm3068, %v3045, %v2321
        %v3084 = vsel %vm3068, %v3047, %v2323
        %v3086 = vsel %vm3068, %v3049, %v2325
        %v3088 = vsel %vm3068, %v3051, %v2327
        %v3090 = vsel %vm3068, %v3053, %v2329
        %v3092 = vsel %vm3068, %v3055, %v2331
        %v3094 = vsel %vm3068, %v3057, %v2333
        %v3096 = vsel %vm3068, %v3059, %v2335
        %v3098 = vsel %vm3068, %v3061, %v2337
        %v3100 = vsel %vm3068, %v3063, %v2339
        %v3102 = vsel %vm3068, %v3065, %v2341
        %v3104 = vsel %vm3068, %v3067, %v2343
        %vm3105 = vcmask 195584
        %v3107 = vsel %vm3105, %v3070, %v2435
        %v3109 = vsel %vm3105, %v3072, %v2437
        %v3111 = vsel %vm3105, %v3074, %v2439
        %v3113 = vsel %vm3105, %v3076, %v2441
        %v3115 = vsel %vm3105, %v3078, %v2443
        %v3117 = vsel %vm3105, %v3080, %v2445
        %v3119 = vsel %vm3105, %v3082, %v2447
        %v3121 = vsel %vm3105, %v3084, %v2449
        %v3123 = vsel %vm3105, %v3086, %v2451
        %v3125 = vsel %vm3105, %v3088, %v2453
        %v3127 = vsel %vm3105, %v3090, %v2455
        %v3129 = vsel %vm3105, %v3092, %v2457
        %v3131 = vsel %vm3105, %v3094, %v2459
        %v3133 = vsel %vm3105, %v3096, %v2461
        %v3135 = vsel %vm3105, %v3098, %v2463
        %v3137 = vsel %vm3105, %v3100, %v2465
        %v3139 = vsel %vm3105, %v3102, %v2467
        %v3141 = vsel %vm3105, %v3104, %v2469
        %vm3142 = vcmask 228352
        %v3144 = vsel %vm3142, %v3107, %v2741
        %v3146 = vsel %vm3142, %v3109, %v2743
        %v3148 = vsel %vm3142, %v3111, %v2745
        %v3150 = vsel %vm3142, %v3113, %v2747
        %v3152 = vsel %vm3142, %v3115, %v2749
        %v3154 = vsel %vm3142, %v3117, %v2751
        %v3156 = vsel %vm3142, %v3119, %v2753
        %v3158 = vsel %vm3142, %v3121, %v2755
        %v3160 = vsel %vm3142, %v3123, %v2757
        %v3162 = vsel %vm3142, %v3125, %v2759
        %v3164 = vsel %vm3142, %v3127, %v2761
        %v3166 = vsel %vm3142, %v3129, %v2763
        %v3168 = vsel %vm3142, %v3131, %v2765
        %v3170 = vsel %vm3142, %v3133, %v2767
        %v3172 = vsel %vm3142, %v3135, %v2769
        %v3174 = vsel %vm3142, %v3137, %v2771
        %v3176 = vsel %vm3142, %v3139, %v2773
        %v3178 = vsel %vm3142, %v3141, %v2775
        %vm3179 = vcmask 261120
        %v3181 = vsel %vm3179, %v3144, %v2885
        %v3183 = vsel %vm3179, %v3146, %v2887
        %v3185 = vsel %vm3179, %v3148, %v2889
        %v3187 = vsel %vm3179, %v3150, %v2891
        %v3189 = vsel %vm3179, %v3152, %v2893
        %v3191 = vsel %vm3179, %v3154, %v2895
        %v3193 = vsel %vm3179, %v3156, %v2897
        %v3195 = vsel %vm3179, %v3158, %v2899
        %v3197 = vsel %vm3179, %v3160, %v2901
        %v3199 = vsel %vm3179, %v3162, %v2903
        %v3201 = vsel %vm3179, %v3164, %v2905
        %v3203 = vsel %vm3179, %v3166, %v2907
        %v3205 = vsel %vm3179, %v3168, %v2909
        %v3207 = vsel %vm3179, %v3170, %v2911
        %v3209 = vsel %vm3179, %v3172, %v2913
        %v3211 = vsel %vm3179, %v3174, %v2915
        %v3213 = vsel %vm3179, %v3176, %v2917
        %v3215 = vsel %vm3179, %v3178, %v2919
        %v3216 = vld [vmem:[#allocation7] sm:$0xf]
        %v3217 = vld [vmem:[#allocation7 + $0x4] sm:$0xf]
        %v3218 = vld [vmem:[#allocation7 + $0x8] sm:$0xf]
        %v3219 = vld [vmem:[#allocation7 + $0xc] sm:$0xf]
        %v3220 = vld [vmem:[#allocation7 + $0x10] sm:$0x3]
        %v3221 = vld [vmem:[#allocation9] sm:$0x1]
        %v3223 = vlaneseq
        %v3224 = vshrl.u32 %v3223, 7
        %v3225 = vsub.s32 0, %v3224
        %v3226 = vrot.slane %v3221, %v3225
        %v3233 = vunpack.c.l.b16 %v3216
        %v3234 = vunpack.c.l.b16 %v3217
        %v3235 = vunpack.c.l.b16 %v3218
        %v3236 = vunpack.c.l.b16 %v3219
        %v3237 = vunpack.c.l.b16 %v3220
        %v3238 = vpack.c.b16 %v3234, %v3233
        %v3239 = vpack.c.b16 %v3236, %v3235
        %v3240 = vpack.c.b16 %v3237, %v3237
        %vm3243 = vcmask 293888
        %v3244 = vsel %vm3243, %v3181, 0
        %v3246 = vsel %vm3243, %v3183, 0
        %v3248 = vsel %vm3243, %v3185, 0
        %v3250 = vsel %vm3243, %v3187, 0
        %v3252 = vsel %vm3243, %v3189, 0
        %v3254 = vsel %vm3243, %v3191, 0
        %v3256 = vsel %vm3243, %v3193, 0
        %v3258 = vsel %vm3243, %v3195, 0
        %v3260 = vsel %vm3243, %v3197, 0
        %v3262 = vsel %vm3243, %v3199, 0
        %v3264 = vsel %vm3243, %v3201, 0
        %v3266 = vsel %vm3243, %v3203, 0
        %v3268 = vsel %vm3243, %v3205, 0
        %v3270 = vsel %vm3243, %v3207, 0
        %v3272 = vsel %vm3243, %v3209, 0
        %v3274 = vsel %vm3243, %v3211, 0
        %v3276 = vsel %vm3243, %v3213, 0
        %v3278 = vsel %vm3243, %v3215, 0
        %vm3280 = vcmask 1041408
        %v3282 = vsel %vm3280, %v3240, 0
        %3284 = vmatprep.subr.bf16.mxu0 0
        %3285 = vmatpush1.bf16.msra.mxu0 %v3238
        %3286 = vmatprep.subr.bf16.mxu0 0
        %3287 = vmatpush1.bf16.msra.mxu0 %v3239
        %3288 = vmatprep.subr.bf16.mxu0 0
        %3289 = vmatpush1.bf16.msra.mxu0 %v3282
        %3290 = vmatprep.subr.bf16.mxu0 0
        %3291 = vmatpush1.bf16.msra.mxu0 0
        %3292 = vmatprep.subr.bf16.mxu0 0
        %3293 = vmatpush1.bf16.msra.mxu0 0
        %3294 = vmatprep.subr.bf16.mxu0 0
        %3295 = vmatpush1.bf16.msra.mxu0 0
        %3296 = vmatprep.subr.bf16.mxu0 0
        %3297 = vmatpush1.bf16.msra.mxu0 0
        %3298 = vmatprep.subr.bf16.mxu0 0
        %3299 = vmatpush1.bf16.msra.mxu0 0
        %3300 = vmatprep.subr.bf16.mxu0 0
        %3301 = vmatpush1.bf16.msra.mxu0 0
        %3302 = vmatprep.subr.bf16.mxu0 0
        %3303 = vmatpush1.bf16.msra.mxu0 0
        %3304 = vmatprep.subr.bf16.mxu0 0
        %3305 = vmatpush1.bf16.msra.mxu0 0
        %3306 = vmatprep.subr.bf16.mxu0 0
        %3307 = vmatpush1.bf16.msra.mxu0 0
        %3308 = vmatprep.subr.bf16.mxu0 0
        %3309 = vmatpush1.bf16.msra.mxu0 0
        %3310 = vmatprep.subr.bf16.mxu0 0
        %3311 = vmatpush1.bf16.msra.mxu0 0
        %3312 = vmatprep.subr.bf16.mxu0 0
        %3313 = vmatpush1.bf16.msra.mxu0 0
        %3314 = vmatprep.subr.bf16.mxu0 0
        %3315 = vmatpush1.bf16.msra.mxu0 0
        %3316 = vmatprep.mubr.bf16.mxu0 0
        %3317 = vmatmul.mubr.bf16.gmra.mrb[0].mxu0 %v3244
        %v3318 = vpop.f32.mrb[0].mxu0
        %v3319 = vadd.f32 %v3226, %v3318
        %v3320 = vpop.f32.mrb[0].mxu0
        %v3321 = vpop.f32.mrb[0].mxu0
        %v3322 = vadd.f32 %v3226, %v3321
        %v3323 = vpop.f32.mrb[0].mxu0
        %3324 = vmatprep.mubr.bf16.mxu0 0
        %3325 = vmatmul.mubr.bf16.gmra.mrb[0].mxu0 %v3246
        %v3326 = vpop.f32.mrb[0].mxu0
        %v3327 = vadd.f32 %v3226, %v3326
        %v3328 = vpop.f32.mrb[0].mxu0
        %v3329 = vpop.f32.mrb[0].mxu0
        %v3330 = vadd.f32 %v3226, %v3329
        %v3331 = vpop.f32.mrb[0].mxu0
        %3332 = vmatprep.mubr.bf16.mxu0 0
        %3333 = vmatmul.mubr.bf16.gmra.mrb[0].mxu0 %v3248
        %v3334 = vpop.f32.mrb[0].mxu0
        %v3335 = vadd.f32 %v3226, %v3334
        %v3336 = vpop.f32.mrb[0].mxu0
        %v3337 = vpop.f32.mrb[0].mxu0
        %v3338 = vadd.f32 %v3226, %v3337
        %v3339 = vpop.f32.mrb[0].mxu0
        %3340 = vmatprep.mubr.bf16.mxu0 0
        %3341 = vmatmul.mubr.bf16.gmra.mrb[0].mxu0 %v3250
        %v3342 = vpop.f32.mrb[0].mxu0
        %v3343 = vadd.f32 %v3226, %v3342
        %v3344 = vpop.f32.mrb[0].mxu0
        %v3345 = vpop.f32.mrb[0].mxu0
        %v3346 = vadd.f32 %v3226, %v3345
        %v3347 = vpop.f32.mrb[0].mxu0
        %3348 = vmatprep.mubr.bf16.mxu0 0
        %3349 = vmatmul.mubr.bf16.gmra.mrb[0].mxu0 %v3252
        %v3350 = vpop.f32.mrb[0].mxu0
        %v3351 = vadd.f32 %v3226, %v3350
        %v3352 = vpop.f32.mrb[0].mxu0
        %v3353 = vpop.f32.mrb[0].mxu0
        %v3354 = vadd.f32 %v3226, %v3353
        %v3355 = vpop.f32.mrb[0].mxu0
        %3356 = vmatprep.mubr.bf16.mxu0 0
        %3357 = vmatmul.mubr.bf16.gmra.mrb[0].mxu0 %v3254
        %v3358 = vpop.f32.mrb[0].mxu0
        %v3359 = vadd.f32 %v3226, %v3358
        %v3360 = vpop.f32.mrb[0].mxu0
        %v3361 = vpop.f32.mrb[0].mxu0
        %v3362 = vadd.f32 %v3226, %v3361
        %v3363 = vpop.f32.mrb[0].mxu0
        %3364 = vmatprep.mubr.bf16.mxu0 0
        %3365 = vmatmul.mubr.bf16.gmra.mrb[0].mxu0 %v3256
        %v3366 = vpop.f32.mrb[0].mxu0
        %v3367 = vadd.f32 %v3226, %v3366
        %v3368 = vpop.f32.mrb[0].mxu0
        %v3369 = vpop.f32.mrb[0].mxu0
        %v3370 = vadd.f32 %v3226, %v3369
        %v3371 = vpop.f32.mrb[0].mxu0
        %3372 = vmatprep.mubr.bf16.mxu0 0
        %3373 = vmatmul.mubr.bf16.gmra.mrb[0].mxu0 %v3258
        %v3374 = vpop.f32.mrb[0].mxu0
        %v3375 = vadd.f32 %v3226, %v3374
        %v3376 = vpop.f32.mrb[0].mxu0
        %v3377 = vpop.f32.mrb[0].mxu0
        %v3378 = vadd.f32 %v3226, %v3377
        %v3379 = vpop.f32.mrb[0].mxu0
        %3380 = vmatprep.mubr.bf16.mxu0 0
        %3381 = vmatmul.mubr.bf16.gmra.mrb[0].mxu0 %v3260
        %v3382 = vpop.f32.mrb[0].mxu0
        %v3383 = vadd.f32 %v3226, %v3382
        %v3384 = vpop.f32.mrb[0].mxu0
        %v3385 = vpop.f32.mrb[0].mxu0
        %v3386 = vadd.f32 %v3226, %v3385
        %v3387 = vpop.f32.mrb[0].mxu0
        %3388 = vmatprep.mubr.bf16.mxu0 0
        %3389 = vmatmul.mubr.bf16.gmra.mrb[0].mxu0 %v3262
        %v3390 = vpop.f32.mrb[0].mxu0
        %v3391 = vadd.f32 %v3226, %v3390
        %v3392 = vpop.f32.mrb[0].mxu0
        %v3393 = vpop.f32.mrb[0].mxu0
        %v3394 = vadd.f32 %v3226, %v3393
        %v3395 = vpop.f32.mrb[0].mxu0
        %3396 = vmatprep.mubr.bf16.mxu0 0
        %3397 = vmatmul.mubr.bf16.gmra.mrb[0].mxu0 %v3264
        %v3398 = vpop.f32.mrb[0].mxu0
        %v3399 = vadd.f32 %v3226, %v3398
        %v3400 = vpop.f32.mrb[0].mxu0
        %v3401 = vpop.f32.mrb[0].mxu0
        %v3402 = vadd.f32 %v3226, %v3401
        %v3403 = vpop.f32.mrb[0].mxu0
        %3404 = vmatprep.mubr.bf16.mxu0 0
        %3405 = vmatmul.mubr.bf16.gmra.mrb[0].mxu0 %v3266
        %v3406 = vpop.f32.mrb[0].mxu0
        %v3407 = vadd.f32 %v3226, %v3406
        %v3408 = vpop.f32.mrb[0].mxu0
        %v3409 = vpop.f32.mrb[0].mxu0
        %v3410 = vadd.f32 %v3226, %v3409
        %v3411 = vpop.f32.mrb[0].mxu0
        %3412 = vmatprep.mubr.bf16.mxu0 0
        %3413 = vmatmul.mubr.bf16.gmra.mrb[0].mxu0 %v3268
        %v3414 = vpop.f32.mrb[0].mxu0
        %v3415 = vadd.f32 %v3226, %v3414
        %v3416 = vpop.f32.mrb[0].mxu0
        %v3417 = vpop.f32.mrb[0].mxu0
        %v3418 = vadd.f32 %v3226, %v3417
        %v3419 = vpop.f32.mrb[0].mxu0
        %3420 = vmatprep.mubr.bf16.mxu0 0
        %3421 = vmatmul.mubr.bf16.gmra.mrb[0].mxu0 %v3270
        %v3422 = vpop.f32.mrb[0].mxu0
        %v3423 = vadd.f32 %v3226, %v3422
        %v3424 = vpop.f32.mrb[0].mxu0
        %v3425 = vpop.f32.mrb[0].mxu0
        %v3426 = vadd.f32 %v3226, %v3425
        %v3427 = vpop.f32.mrb[0].mxu0
        %3428 = vmatprep.mubr.bf16.mxu0 0
        %3429 = vmatmul.mubr.bf16.gmra.mrb[0].mxu0 %v3272
        %v3430 = vpop.f32.mrb[0].mxu0
        %v3431 = vadd.f32 %v3226, %v3430
        %v3432 = vpop.f32.mrb[0].mxu0
        %v3433 = vpop.f32.mrb[0].mxu0
        %v3434 = vadd.f32 %v3226, %v3433
        %v3435 = vpop.f32.mrb[0].mxu0
        %3436 = vmatprep.mubr.bf16.mxu0 0
        %3437 = vmatmul.mubr.bf16.gmra.mrb[0].mxu0 %v3274
        %v3438 = vpop.f32.mrb[0].mxu0
        %v3439 = vadd.f32 %v3226, %v3438
        %v3440 = vpop.f32.mrb[0].mxu0
        %v3441 = vpop.f32.mrb[0].mxu0
        %v3442 = vadd.f32 %v3226, %v3441
        %v3443 = vpop.f32.mrb[0].mxu0
        %3444 = vmatprep.mubr.bf16.mxu0 0
        %3445 = vmatmul.mubr.bf16.gmra.mrb[0].mxu0 %v3276
        %v3446 = vpop.f32.mrb[0].mxu0
        %v3447 = vadd.f32 %v3226, %v3446
        %v3448 = vpop.f32.mrb[0].mxu0
        %v3449 = vpop.f32.mrb[0].mxu0
        %v3450 = vadd.f32 %v3226, %v3449
        %v3451 = vpop.f32.mrb[0].mxu0
        %3452 = vmatprep.mubr.bf16.mxu0 0
        %3453 = vmatmul.mubr.bf16.gmra.mrb[0].mxu0 %v3278
        %v3454 = vpop.f32.mrb[0].mxu0
        %v3455 = vadd.f32 %v3226, %v3454
        %v3456 = vpop.f32.mrb[0].mxu0
        %v3457 = vpop.f32.mrb[0].mxu0
        %v3458 = vadd.f32 %v3226, %v3457
        %v3459 = vpop.f32.mrb[0].mxu0
        %3460 = vdwg.mxu0
        %v3461 = vmax.f32 %v3319, 0.0
        %v3462 = vmax.f32 %v3322, 0.0
        %v3463 = vmax.f32 %v3327, 0.0
        %v3464 = vmax.f32 %v3330, 0.0
        %v3465 = vmax.f32 %v3335, 0.0
        %v3466 = vmax.f32 %v3338, 0.0
        %v3467 = vmax.f32 %v3343, 0.0
        %v3468 = vmax.f32 %v3346, 0.0
        %v3469 = vmax.f32 %v3351, 0.0
        %v3470 = vmax.f32 %v3354, 0.0
        %v3471 = vmax.f32 %v3359, 0.0
        %v3472 = vmax.f32 %v3362, 0.0
        %v3473 = vmax.f32 %v3367, 0.0
        %v3474 = vmax.f32 %v3370, 0.0
        %v3475 = vmax.f32 %v3375, 0.0
        %v3476 = vmax.f32 %v3378, 0.0
        %v3477 = vmax.f32 %v3383, 0.0
        %v3478 = vmax.f32 %v3386, 0.0
        %v3479 = vmax.f32 %v3391, 0.0
        %v3480 = vmax.f32 %v3394, 0.0
        %v3481 = vmax.f32 %v3399, 0.0
        %v3482 = vmax.f32 %v3402, 0.0
        %v3483 = vmax.f32 %v3407, 0.0
        %v3484 = vmax.f32 %v3410, 0.0
        %v3485 = vmax.f32 %v3415, 0.0
        %v3486 = vmax.f32 %v3418, 0.0
        %v3487 = vmax.f32 %v3423, 0.0
        %v3488 = vmax.f32 %v3426, 0.0
        %v3489 = vmax.f32 %v3431, 0.0
        %v3490 = vmax.f32 %v3434, 0.0
        %v3491 = vmax.f32 %v3439, 0.0
        %v3492 = vmax.f32 %v3442, 0.0
        %v3493 = vmax.f32 %v3447, 0.0
        %v3494 = vmax.f32 %v3450, 0.0
        %v3495 = vmax.f32 %v3455, 0.0
        %v3496 = vmax.f32 %v3458, 0.0
        %v3497 = vmin.f32 %v3461, 6.0
        %v3498 = vmin.f32 %v3462, 6.0
        %v3499 = vmin.f32 %v3463, 6.0
        %v3500 = vmin.f32 %v3464, 6.0
        %v3501 = vmin.f32 %v3465, 6.0
        %v3502 = vmin.f32 %v3466, 6.0
        %v3503 = vmin.f32 %v3467, 6.0
        %v3504 = vmin.f32 %v3468, 6.0
        %v3505 = vmin.f32 %v3469, 6.0
        %v3506 = vmin.f32 %v3470, 6.0
        %v3507 = vmin.f32 %v3471, 6.0
        %v3508 = vmin.f32 %v3472, 6.0
        %v3509 = vmin.f32 %v3473, 6.0
        %v3510 = vmin.f32 %v3474, 6.0
        %v3511 = vmin.f32 %v3475, 6.0
        %v3512 = vmin.f32 %v3476, 6.0
        %v3513 = vmin.f32 %v3477, 6.0
        %v3514 = vmin.f32 %v3478, 6.0
        %v3515 = vmin.f32 %v3479, 6.0
        %v3516 = vmin.f32 %v3480, 6.0
        %v3517 = vmin.f32 %v3481, 6.0
        %v3518 = vmin.f32 %v3482, 6.0
        %v3519 = vmin.f32 %v3483, 6.0
        %v3520 = vmin.f32 %v3484, 6.0
        %v3521 = vmin.f32 %v3485, 6.0
        %v3522 = vmin.f32 %v3486, 6.0
        %v3523 = vmin.f32 %v3487, 6.0
        %v3524 = vmin.f32 %v3488, 6.0
        %v3525 = vmin.f32 %v3489, 6.0
        %v3526 = vmin.f32 %v3490, 6.0
        %v3527 = vmin.f32 %v3491, 6.0
        %v3528 = vmin.f32 %v3492, 6.0
        %v3529 = vmin.f32 %v3493, 6.0
        %v3530 = vmin.f32 %v3494, 6.0
        %v3531 = vmin.f32 %v3495, 6.0
        %v3532 = vmin.f32 %v3496, 6.0
        %s3533 = ssub.s32 %s998, 1
        %v3534 = vstv %s3533
        %v3535 = vadd.s32 %v3534, 1
        %v3536 = vadd.s32 %v3534, 2
        %v3537 = vadd.s32 %v3534, 3
        %v3538 = vadd.s32 %v3534, 4
        %v3539 = vadd.s32 %v3534, 5
        %v3540 = vadd.s32 %v3534, 6
        %v3541 = vadd.s32 %v3534, 7
        %v3542 = vadd.s32 %v3534, 8
        %v3543 = vadd.s32 %v3534, 9
        %v3544 = vadd.s32 %v3534, 10
        %v3545 = vadd.s32 %v3534, 11
        %v3546 = vadd.s32 %v3534, 12
        %v3547 = vadd.s32 %v3534, 13
        %v3548 = vadd.s32 %v3534, 14
        %v3549 = vadd.s32 %v3534, 15
        %v3550 = vadd.s32 %v3534, 16
        %v3551 = vadd.s32 %v3534, 17
        %vm3552 = vcmp.ge.s32.totalorder %v3534, 0
        %vm3553 = vcmp.ge.s32.totalorder %v3535, 0
        %vm3554 = vcmp.ge.s32.totalorder %v3536, 0
        %vm3555 = vcmp.ge.s32.totalorder %v3537, 0
        %vm3556 = vcmp.ge.s32.totalorder %v3538, 0
        %vm3557 = vcmp.ge.s32.totalorder %v3539, 0
        %vm3558 = vcmp.ge.s32.totalorder %v3540, 0
        %vm3559 = vcmp.ge.s32.totalorder %v3541, 0
        %vm3560 = vcmp.ge.s32.totalorder %v3542, 0
        %vm3561 = vcmp.ge.s32.totalorder %v3543, 0
        %vm3562 = vcmp.ge.s32.totalorder %v3544, 0
        %vm3563 = vcmp.ge.s32.totalorder %v3545, 0
        %vm3564 = vcmp.ge.s32.totalorder %v3546, 0
        %vm3565 = vcmp.ge.s32.totalorder %v3547, 0
        %vm3566 = vcmp.ge.s32.totalorder %v3548, 0
        %vm3567 = vcmp.ge.s32.totalorder %v3549, 0
        %vm3568 = vcmp.ge.s32.totalorder %v3550, 0
        %vm3569 = vcmp.ge.s32.totalorder %v3551, 0
        %vm3570 = vcmp.lt.s32.totalorder %v3534, 16
        %vm3571 = vcmp.lt.s32.totalorder %v3535, 16
        %vm3572 = vcmp.lt.s32.totalorder %v3536, 16
        %vm3573 = vcmp.lt.s32.totalorder %v3537, 16
        %vm3574 = vcmp.lt.s32.totalorder %v3538, 16
        %vm3575 = vcmp.lt.s32.totalorder %v3539, 16
        %vm3576 = vcmp.lt.s32.totalorder %v3540, 16
        %vm3577 = vcmp.lt.s32.totalorder %v3541, 16
        %vm3578 = vcmp.lt.s32.totalorder %v3542, 16
        %vm3579 = vcmp.lt.s32.totalorder %v3543, 16
        %vm3580 = vcmp.lt.s32.totalorder %v3544, 16
        %vm3581 = vcmp.lt.s32.totalorder %v3545, 16
        %vm3582 = vcmp.lt.s32.totalorder %v3546, 16
        %vm3583 = vcmp.lt.s32.totalorder %v3547, 16
        %vm3584 = vcmp.lt.s32.totalorder %v3548, 16
        %vm3585 = vcmp.lt.s32.totalorder %v3549, 16
        %vm3586 = vcmp.lt.s32.totalorder %v3550, 16
        %vm3587 = vcmp.lt.s32.totalorder %v3551, 16
        %vm3588 = vmand %vm3552, %vm3570
        %vm3589 = vmand %vm3553, %vm3571
        %vm3590 = vmand %vm3554, %vm3572
        %vm3591 = vmand %vm3555, %vm3573
        %vm3592 = vmand %vm3556, %vm3574
        %vm3593 = vmand %vm3557, %vm3575
        %vm3594 = vmand %vm3558, %vm3576
        %vm3595 = vmand %vm3559, %vm3577
        %vm3596 = vmand %vm3560, %vm3578
        %vm3597 = vmand %vm3561, %vm3579
        %vm3598 = vmand %vm3562, %vm3580
        %vm3599 = vmand %vm3563, %vm3581
        %vm3600 = vmand %vm3564, %vm3582
        %vm3601 = vmand %vm3565, %vm3583
        %vm3602 = vmand %vm3566, %vm3584
        %vm3603 = vmand %vm3567, %vm3585
        %vm3604 = vmand %vm3568, %vm3586
        %vm3605 = vmand %vm3569, %vm3587
        %v3606 = vsel %vm3588, 1, 0
        %v3607 = vsel %vm3589, 1, 0
        %v3608 = vsel %vm3590, 1, 0
        %v3609 = vsel %vm3591, 1, 0
        %v3610 = vsel %vm3592, 1, 0
        %v3611 = vsel %vm3593, 1, 0
        %v3612 = vsel %vm3594, 1, 0
        %v3613 = vsel %vm3595, 1, 0
        %v3614 = vsel %vm3596, 1, 0
        %v3615 = vsel %vm3597, 1, 0
        %v3616 = vsel %vm3598, 1, 0
        %v3617 = vsel %vm3599, 1, 0
        %v3618 = vsel %vm3600, 1, 0
        %v3619 = vsel %vm3601, 1, 0
        %v3620 = vsel %vm3602, 1, 0
        %v3621 = vsel %vm3603, 1, 0
        %v3622 = vsel %vm3604, 1, 0
        %v3623 = vsel %vm3605, 1, 0
        %vm3624 = vcmp.eq.s32.totalorder %v3606, 1
        %vm3625 = vcmp.eq.s32.totalorder %v3607, 1
        %vm3626 = vcmp.eq.s32.totalorder %v3608, 1
        %vm3627 = vcmp.eq.s32.totalorder %v3609, 1
        %vm3628 = vcmp.eq.s32.totalorder %v3610, 1
        %vm3629 = vcmp.eq.s32.totalorder %v3611, 1
        %vm3630 = vcmp.eq.s32.totalorder %v3612, 1
        %vm3631 = vcmp.eq.s32.totalorder %v3613, 1
        %vm3632 = vcmp.eq.s32.totalorder %v3614, 1
        %vm3633 = vcmp.eq.s32.totalorder %v3615, 1
        %vm3634 = vcmp.eq.s32.totalorder %v3616, 1
        %vm3635 = vcmp.eq.s32.totalorder %v3617, 1
        %vm3636 = vcmp.eq.s32.totalorder %v3618, 1
        %vm3637 = vcmp.eq.s32.totalorder %v3619, 1
        %vm3638 = vcmp.eq.s32.totalorder %v3620, 1
        %vm3639 = vcmp.eq.s32.totalorder %v3621, 1
        %vm3640 = vcmp.eq.s32.totalorder %v3622, 1
        %vm3641 = vcmp.eq.s32.totalorder %v3623, 1
        %v3642 = vsel %vm3624, %v3497, 0.0
        %v3643 = vsel %vm3624, %v3498, 0.0
        %v3644 = vsel %vm3625, %v3499, 0.0
        %v3645 = vsel %vm3625, %v3500, 0.0
        %v3646 = vsel %vm3626, %v3501, 0.0
        %v3647 = vsel %vm3626, %v3502, 0.0
        %v3648 = vsel %vm3627, %v3503, 0.0
        %v3649 = vsel %vm3627, %v3504, 0.0
        %v3650 = vsel %vm3628, %v3505, 0.0
        %v3651 = vsel %vm3628, %v3506, 0.0
        %v3652 = vsel %vm3629, %v3507, 0.0
        %v3653 = vsel %vm3629, %v3508, 0.0
        %v3654 = vsel %vm3630, %v3509, 0.0
        %v3655 = vsel %vm3630, %v3510, 0.0
        %v3656 = vsel %vm3631, %v3511, 0.0
        %v3657 = vsel %vm3631, %v3512, 0.0
        %v3658 = vsel %vm3632, %v3513, 0.0
        %v3659 = vsel %vm3632, %v3514, 0.0
        %v3660 = vsel %vm3633, %v3515, 0.0
        %v3661 = vsel %vm3633, %v3516, 0.0
        %v3662 = vsel %vm3634, %v3517, 0.0
        %v3663 = vsel %vm3634, %v3518, 0.0
        %v3664 = vsel %vm3635, %v3519, 0.0
        %v3665 = vsel %vm3635, %v3520, 0.0
        %v3666 = vsel %vm3636, %v3521, 0.0
        %v3667 = vsel %vm3636, %v3522, 0.0
        %v3668 = vsel %vm3637, %v3523, 0.0
        %v3669 = vsel %vm3637, %v3524, 0.0
        %v3670 = vsel %vm3638, %v3525, 0.0
        %v3671 = vsel %vm3638, %v3526, 0.0
        %v3672 = vsel %vm3639, %v3527, 0.0
        %v3673 = vsel %vm3639, %v3528, 0.0
        %v3674 = vsel %vm3640, %v3529, 0.0
        %v3675 = vsel %vm3640, %v3530, 0.0
        %v3676 = vsel %vm3641, %v3531, 0.0
        %v3677 = vsel %vm3641, %v3532, 0.0
        %v3678 = vld [vmem:[%s1153] sm:$0xf]
        %v3679 = vld [vmem:[%s1153 + $0x4] sm:$0xf]
        %v3680 = vld [vmem:[%s1153 + $0x8] sm:$0x1]
        %v3681 = vld [vmem:[%s1153 + $0xc] sm:$0xf]
        %v3682 = vld [vmem:[%s1153 + $0x10] sm:$0xf]
        %v3683 = vld [vmem:[%s1153 + $0x14] sm:$0x1]
        %v3684 = vld [vmem:[%s1153 + $0x18] sm:$0xf]
        %v3685 = vld [vmem:[%s1153 + $0x1c] sm:$0xf]
        %v3686 = vld [vmem:[%s1153 + $0x20] sm:$0x1]
        %v3687 = vld [vmem:[%s1153 + $0x24] sm:$0xf]
        %v3688 = vld [vmem:[%s1153 + $0x28] sm:$0xf]
        %v3689 = vld [vmem:[%s1153 + $0x2c] sm:$0x1]
        %v3690 = vld [vmem:[%s1153 + $0x30] sm:$0xf]
        %v3691 = vld [vmem:[%s1153 + $0x34] sm:$0xf]
        %v3692 = vld [vmem:[%s1153 + $0x38] sm:$0x1]
        %v3693 = vld [vmem:[%s1153 + $0x3c] sm:$0xf]
        %v3694 = vld [vmem:[%s1153 + $0x40] sm:$0xf]
        %v3695 = vld [vmem:[%s1153 + $0x44] sm:$0x1]
        %v3696 = vld [vmem:[%s1153 + $0x48] sm:$0xf]
        %v3697 = vld [vmem:[%s1153 + $0x4c] sm:$0xf]
        %v3698 = vld [vmem:[%s1153 + $0x50] sm:$0x1]
        %v3699 = vld [vmem:[%s1153 + $0x54] sm:$0xf]
        %v3700 = vld [vmem:[%s1153 + $0x58] sm:$0xf]
        %v3701 = vld [vmem:[%s1153 + $0x5c] sm:$0x1]
        %v3702 = vld [vmem:[%s1153 + $0x60] sm:$0xf]
        %v3703 = vld [vmem:[%s1153 + $0x64] sm:$0xf]
        %v3704 = vld [vmem:[%s1153 + $0x68] sm:$0x1]
        %v3705 = vld [vmem:[%s1153 + $0x6c] sm:$0xf]
        %v3706 = vld [vmem:[%s1153 + $0x70] sm:$0xf]
        %v3707 = vld [vmem:[%s1153 + $0x74] sm:$0x1]
        %v3708 = vld [vmem:[%s1153 + $0x78] sm:$0xf]
        %v3709 = vld [vmem:[%s1153 + $0x7c] sm:$0xf]
        %v3710 = vld [vmem:[%s1153 + $0x80] sm:$0x1]
        %v3711 = vld [vmem:[%s1153 + $0x84] sm:$0xf]
        %v3712 = vld [vmem:[%s1153 + $0x88] sm:$0xf]
        %v3713 = vld [vmem:[%s1153 + $0x8c] sm:$0x1]
        %v3714 = vld [vmem:[%s1153 + $0x90] sm:$0xf]
        %v3715 = vld [vmem:[%s1153 + $0x94] sm:$0xf]
        %v3716 = vld [vmem:[%s1153 + $0x98] sm:$0x1]
        %v3717 = vld [vmem:[%s1153 + $0x9c] sm:$0xf]
        %v3718 = vld [vmem:[%s1153 + $0xa0] sm:$0xf]
        %v3719 = vld [vmem:[%s1153 + $0xa4] sm:$0x1]
        %v3720 = vld [vmem:[%s1153 + $0xa8] sm:$0xf]
        %v3721 = vld [vmem:[%s1153 + $0xac] sm:$0xf]
        %v3722 = vld [vmem:[%s1153 + $0xb0] sm:$0x1]
        %v3723 = vld [vmem:[%s1153 + $0xb4] sm:$0xf]
        %v3724 = vld [vmem:[%s1153 + $0xb8] sm:$0xf]
        %v3725 = vld [vmem:[%s1153 + $0xbc] sm:$0x1]
        %vm3726 = vcmask 24576
        %vm3727 = vsmask.f32 256
        %vm3728 = vmand %vm3726, %vm3727
        %v3729 = vld [vmem:[#allocation3] sm:$0x1]
        %v3730 = vsel %vm3728, 0, %v3729
        %3731 = vst [vmem:[#allocation3] sm:$0x1] %v3730
        %v3732 = vld [vmem:[#allocation3 + $0xc] sm:$0x1]
        %v3733 = vsel %vm3728, 0, %v3732
        %3734 = vst [vmem:[#allocation3 + $0xc] sm:$0x1] %v3733
        %v3735 = vld [vmem:[#allocation3 + $0x18] sm:$0x1]
        %v3736 = vsel %vm3728, 0, %v3735
        %3737 = vst [vmem:[#allocation3 + $0x18] sm:$0x1] %v3736
        %v3738 = vld [vmem:[#allocation3 + $0x24] sm:$0x1]
        %v3739 = vsel %vm3728, 0, %v3738
        %3740 = vst [vmem:[#allocation3 + $0x24] sm:$0x1] %v3739
        %v3741 = vld [vmem:[#allocation3 + $0x30] sm:$0x1]
        %v3742 = vsel %vm3728, 0, %v3741
        %3743 = vst [vmem:[#allocation3 + $0x30] sm:$0x1] %v3742
        %v3744 = vld [vmem:[#allocation3 + $0x3c] sm:$0x1]
        %v3745 = vsel %vm3728, 0, %v3744
        %3746 = vst [vmem:[#allocation3 + $0x3c] sm:$0x1] %v3745
        %v3747 = vld [vmem:[#allocation3 + $0x48] sm:$0x1]
        %v3748 = vsel %vm3728, 0, %v3747
        %3749 = vst [vmem:[#allocation3 + $0x48] sm:$0x1] %v3748
        %v3750 = vld [vmem:[#allocation3 + $0x54] sm:$0x1]
        %v3751 = vsel %vm3728, 0, %v3750
        %3752 = vst [vmem:[#allocation3 + $0x54] sm:$0x1] %v3751
        %v3753 = vld [vmem:[#allocation3 + $0x60] sm:$0x1]
        %v3754 = vsel %vm3728, 0, %v3753
        %3755 = vst [vmem:[#allocation3 + $0x60] sm:$0x1] %v3754
        %v3756 = vld [vmem:[#allocation3 + $0x6c] sm:$0x1]
        %v3757 = vsel %vm3728, 0, %v3756
        %3758 = vst [vmem:[#allocation3 + $0x6c] sm:$0x1] %v3757
        %v3759 = vld [vmem:[#allocation3 + $0x78] sm:$0x1]
        %v3760 = vsel %vm3728, 0, %v3759
        %3761 = vst [vmem:[#allocation3 + $0x78] sm:$0x1] %v3760
        %v3762 = vld [vmem:[#allocation3 + $0x84] sm:$0x1]
        %v3763 = vsel %vm3728, 0, %v3762
        %3764 = vst [vmem:[#allocation3 + $0x84] sm:$0x1] %v3763
        %v3765 = vld [vmem:[#allocation3 + $0x90] sm:$0x1]
        %v3766 = vsel %vm3728, 0, %v3765
        %3767 = vst [vmem:[#allocation3 + $0x90] sm:$0x1] %v3766
        %v3768 = vld [vmem:[#allocation3 + $0x9c] sm:$0x1]
        %v3769 = vsel %vm3728, 0, %v3768
        %3770 = vst [vmem:[#allocation3 + $0x9c] sm:$0x1] %v3769
        %v3771 = vld [vmem:[#allocation3 + $0xa8] sm:$0x1]
        %v3772 = vsel %vm3728, 0, %v3771
        %3773 = vst [vmem:[#allocation3 + $0xa8] sm:$0x1] %v3772
        %v3774 = vld [vmem:[#allocation3 + $0xb4] sm:$0x1]
        %v3775 = vsel %vm3728, 0, %v3774
        %3776 = vst [vmem:[#allocation3 + $0xb4] sm:$0x1] %v3775
        %v3777 = vld [vmem:[#allocation3 + $0xc0] sm:$0x1]
        %v3778 = vsel %vm3728, 0, %v3777
        %3779 = vst [vmem:[#allocation3 + $0xc0] sm:$0x1] %v3778
        %v3780 = vld [vmem:[#allocation3 + $0xcc] sm:$0x1]
        %v3781 = vsel %vm3728, 0, %v3780
        %3782 = vst [vmem:[#allocation3 + $0xcc] sm:$0x1] %v3781
        %vm3783 = vsmask.f32 7938
        %vm3784 = vmand %vm3726, %vm3783
        %v3785 = vld [vmem:[#allocation3 + $0x8] sm:$0x1]
        %v3786 = vsel %vm3784, 0, %v3785
        %3787 = vst [vmem:[#allocation3 + $0x8] sm:$0x1] %v3786
        %v3788 = vld [vmem:[#allocation3 + $0x14] sm:$0x1]
        %v3789 = vsel %vm3784, 0, %v3788
        %3790 = vst [vmem:[#allocation3 + $0x14] sm:$0x1] %v3789
        %v3791 = vld [vmem:[#allocation3 + $0x20] sm:$0x1]
        %v3792 = vsel %vm3784, 0, %v3791
        %3793 = vst [vmem:[#allocation3 + $0x20] sm:$0x1] %v3792
        %v3794 = vld [vmem:[#allocation3 + $0x2c] sm:$0x1]
        %v3795 = vsel %vm3784, 0, %v3794
        %3796 = vst [vmem:[#allocation3 + $0x2c] sm:$0x1] %v3795
        %v3797 = vld [vmem:[#allocation3 + $0x38] sm:$0x1]
        %v3798 = vsel %vm3784, 0, %v3797
        %3799 = vst [vmem:[#allocation3 + $0x38] sm:$0x1] %v3798
        %v3800 = vld [vmem:[#allocation3 + $0x44] sm:$0x1]
        %v3801 = vsel %vm3784, 0, %v3800
        %3802 = vst [vmem:[#allocation3 + $0x44] sm:$0x1] %v3801
        %v3803 = vld [vmem:[#allocation3 + $0x50] sm:$0x1]
        %v3804 = vsel %vm3784, 0, %v3803
        %3805 = vst [vmem:[#allocation3 + $0x50] sm:$0x1] %v3804
        %v3806 = vld [vmem:[#allocation3 + $0x5c] sm:$0x1]
        %v3807 = vsel %vm3784, 0, %v3806
        %3808 = vst [vmem:[#allocation3 + $0x5c] sm:$0x1] %v3807
        %v3809 = vld [vmem:[#allocation3 + $0x68] sm:$0x1]
        %v3810 = vsel %vm3784, 0, %v3809
        %3811 = vst [vmem:[#allocation3 + $0x68] sm:$0x1] %v3810
        %v3812 = vld [vmem:[#allocation3 + $0x74] sm:$0x1]
        %v3813 = vsel %vm3784, 0, %v3812
        %3814 = vst [vmem:[#allocation3 + $0x74] sm:$0x1] %v3813
        %v3815 = vld [vmem:[#allocation3 + $0x80] sm:$0x1]
        %v3816 = vsel %vm3784, 0, %v3815
        %3817 = vst [vmem:[#allocation3 + $0x80] sm:$0x1] %v3816
        %v3818 = vld [vmem:[#allocation3 + $0x8c] sm:$0x1]
        %v3819 = vsel %vm3784, 0, %v3818
        %3820 = vst [vmem:[#allocation3 + $0x8c] sm:$0x1] %v3819
        %v3821 = vld [vmem:[#allocation3 + $0x98] sm:$0x1]
        %v3822 = vsel %vm3784, 0, %v3821
        %3823 = vst [vmem:[#allocation3 + $0x98] sm:$0x1] %v3822
        %v3824 = vld [vmem:[#allocation3 + $0xa4] sm:$0x1]
        %v3825 = vsel %vm3784, 0, %v3824
        %3826 = vst [vmem:[#allocation3 + $0xa4] sm:$0x1] %v3825
        %v3827 = vld [vmem:[#allocation3 + $0xb0] sm:$0x1]
        %v3828 = vsel %vm3784, 0, %v3827
        %3829 = vst [vmem:[#allocation3 + $0xb0] sm:$0x1] %v3828
        %v3830 = vld [vmem:[#allocation3 + $0xbc] sm:$0x1]
        %v3831 = vsel %vm3784, 0, %v3830
        %3832 = vst [vmem:[#allocation3 + $0xbc] sm:$0x1] %v3831
        %v3833 = vld [vmem:[#allocation3 + $0xc8] sm:$0x1]
        %v3834 = vsel %vm3784, 0, %v3833
        %3835 = vst [vmem:[#allocation3 + $0xc8] sm:$0x1] %v3834
        %v3836 = vld [vmem:[#allocation3 + $0xd4] sm:$0x1]
        %v3837 = vsel %vm3784, 0, %v3836
        %3838 = vst [vmem:[#allocation3 + $0xd4] sm:$0x1] %v3837
        %v3839 = vpack.c.bf16 %v3643, %v3642
        %v3840 = vpack.c.bf16 %v3645, %v3644
        %v3841 = vpack.c.bf16 %v3647, %v3646
        %v3842 = vpack.c.bf16 %v3649, %v3648
        %v3843 = vpack.c.bf16 %v3651, %v3650
        %v3844 = vpack.c.bf16 %v3653, %v3652
        %v3845 = vpack.c.bf16 %v3655, %v3654
        %v3846 = vpack.c.bf16 %v3657, %v3656
        %v3847 = vpack.c.bf16 %v3659, %v3658
        %v3848 = vpack.c.bf16 %v3661, %v3660
        %v3849 = vpack.c.bf16 %v3663, %v3662
        %v3850 = vpack.c.bf16 %v3665, %v3664
        %v3851 = vpack.c.bf16 %v3667, %v3666
        %v3852 = vpack.c.bf16 %v3669, %v3668
        %v3853 = vpack.c.bf16 %v3671, %v3670
        %v3854 = vpack.c.bf16 %v3673, %v3672
        %v3855 = vpack.c.bf16 %v3675, %v3674
        %v3856 = vpack.c.bf16 %v3677, %v3676
        %v3875 = vunpack.c.l.b16 %v3839
        %v3876 = vunpack.c.h.b16 %v3839
        %v3877 = vunpack.c.l.b16 %v3840
        %v3878 = vunpack.c.h.b16 %v3840
        %v3879 = vunpack.c.l.b16 %v3841
        %v3880 = vunpack.c.h.b16 %v3841
        %v3881 = vunpack.c.l.b16 %v3842
        %v3882 = vunpack.c.h.b16 %v3842
        %v3883 = vunpack.c.l.b16 %v3843
        %v3884 = vunpack.c.h.b16 %v3843
        %v3885 = vunpack.c.l.b16 %v3844
        %v3886 = vunpack.c.h.b16 %v3844
        %v3887 = vunpack.c.l.b16 %v3845
        %v3888 = vunpack.c.h.b16 %v3845
        %v3889 = vunpack.c.l.b16 %v3846
        %v3890 = vunpack.c.h.b16 %v3846
        %v3891 = vunpack.c.l.b16 %v3847
        %v3892 = vunpack.c.h.b16 %v3847
        %v3893 = vunpack.c.l.b16 %v3848
        %v3894 = vunpack.c.h.b16 %v3848
        %v3895 = vunpack.c.l.b16 %v3849
        %v3896 = vunpack.c.h.b16 %v3849
        %v3897 = vunpack.c.l.b16 %v3850
        %v3898 = vunpack.c.h.b16 %v3850
        %v3899 = vunpack.c.l.b16 %v3851
        %v3900 = vunpack.c.h.b16 %v3851
        %v3901 = vunpack.c.l.b16 %v3852
        %v3902 = vunpack.c.h.b16 %v3852
        %v3903 = vunpack.c.l.b16 %v3853
        %v3904 = vunpack.c.h.b16 %v3853
        %v3905 = vunpack.c.l.b16 %v3854
        %v3906 = vunpack.c.h.b16 %v3854
        %v3907 = vunpack.c.l.b16 %v3855
        %v3908 = vunpack.c.h.b16 %v3855
        %v3909 = vunpack.c.l.b16 %v3856
        %v3910 = vunpack.c.h.b16 %v3856
        %v3911 = vpack.c.b16 %v3875, %v3875
        %v3912 = vpack.c.b16 %v3876, %v3876
        %v3913 = vpack.c.b16 %v3877, %v3877
        %v3914 = vpack.c.b16 %v3878, %v3878
        %v3915 = vpack.c.b16 %v3879, %v3879
        %v3916 = vpack.c.b16 %v3880, %v3880
        %v3917 = vpack.c.b16 %v3881, %v3881
        %v3918 = vpack.c.b16 %v3882, %v3882
        %v3919 = vpack.c.b16 %v3883, %v3883
        %v3920 = vpack.c.b16 %v3884, %v3884
        %v3921 = vpack.c.b16 %v3885, %v3885
        %v3922 = vpack.c.b16 %v3886, %v3886
        %v3923 = vpack.c.b16 %v3887, %v3887
        %v3924 = vpack.c.b16 %v3888, %v3888
        %v3925 = vpack.c.b16 %v3889, %v3889
        %v3926 = vpack.c.b16 %v3890, %v3890
        %v3927 = vpack.c.b16 %v3891, %v3891
        %v3928 = vpack.c.b16 %v3892, %v3892
        %v3929 = vpack.c.b16 %v3893, %v3893
        %v3930 = vpack.c.b16 %v3894, %v3894
        %v3931 = vpack.c.b16 %v3895, %v3895
        %v3932 = vpack.c.b16 %v3896, %v3896
        %v3933 = vpack.c.b16 %v3897, %v3897
        %v3934 = vpack.c.b16 %v3898, %v3898
        %v3935 = vpack.c.b16 %v3899, %v3899
        %v3936 = vpack.c.b16 %v3900, %v3900
        %v3937 = vpack.c.b16 %v3901, %v3901
        %v3938 = vpack.c.b16 %v3902, %v3902
        %v3939 = vpack.c.b16 %v3903, %v3903
        %v3940 = vpack.c.b16 %v3904, %v3904
        %v3941 = vpack.c.b16 %v3905, %v3905
        %v3942 = vpack.c.b16 %v3906, %v3906
        %v3943 = vpack.c.b16 %v3907, %v3907
        %v3944 = vpack.c.b16 %v3908, %v3908
        %v3945 = vpack.c.b16 %v3909, %v3909
        %v3946 = vpack.c.b16 %v3910, %v3910
        %vm3947 = vsmask.f32 4368
        %vm3948 = vmor %vm3727, %vm3947
        %v3950 = vshrl.u32 %v3911, 16
        %v3952 = vrot.slane %v3950, 7
        %v3953 = vshll.u32 %v3911, 16
        %v3955 = vor.u32 %v3952, %v3953
        %v3956 = vrot.slane %v3952, 4
        %v3958 = vshrl.u32 %v3912, 16
        %v3960 = vrot.slane %v3958, 7
        %v3961 = vshll.u32 %v3912, 16
        %v3963 = vor.u32 %v3960, %v3961
        %v3964 = vsel %vm3948, %v3956, %v3963
        %v3965 = vrot.slane %v3960, 4
        %v3967 = vshrl.u32 %v3913, 16
        %v3969 = vrot.slane %v3967, 7
        %v3970 = vshll.u32 %v3913, 16
        %v3972 = vor.u32 %v3969, %v3970
        %v3973 = vrot.slane %v3969, 4
        %v3975 = vshrl.u32 %v3914, 16
        %v3977 = vrot.slane %v3975, 7
        %v3978 = vshll.u32 %v3914, 16
        %v3980 = vor.u32 %v3977, %v3978
        %v3981 = vsel %vm3948, %v3973, %v3980
        %v3982 = vrot.slane %v3977, 4
        %v3984 = vshrl.u32 %v3915, 16
        %v3986 = vrot.slane %v3984, 7
        %v3987 = vshll.u32 %v3915, 16
        %v3989 = vor.u32 %v3986, %v3987
        %v3990 = vrot.slane %v3986, 4
        %v3992 = vshrl.u32 %v3916, 16
        %v3994 = vrot.slane %v3992, 7
        %v3995 = vshll.u32 %v3916, 16
        %v3997 = vor.u32 %v3994, %v3995
        %v3998 = vsel %vm3948, %v3990, %v3997
        %v3999 = vrot.slane %v3994, 4
        %v4001 = vshrl.u32 %v3917, 16
        %v4003 = vrot.slane %v4001, 7
        %v4004 = vshll.u32 %v3917, 16
        %v4006 = vor.u32 %v4003, %v4004
        %v4007 = vrot.slane %v4003, 4
        %v4009 = vshrl.u32 %v3918, 16
        %v4011 = vrot.slane %v4009, 7
        %v4012 = vshll.u32 %v3918, 16
        %v4014 = vor.u32 %v4011, %v4012
        %v4015 = vsel %vm3948, %v4007, %v4014
        %v4016 = vrot.slane %v4011, 4
        %v4018 = vshrl.u32 %v3919, 16
        %v4020 = vrot.slane %v4018, 7
        %v4021 = vshll.u32 %v3919, 16
        %v4023 = vor.u32 %v4020, %v4021
        %v4024 = vrot.slane %v4020, 4
        %v4026 = vshrl.u32 %v3920, 16
        %v4028 = vrot.slane %v4026, 7
        %v4029 = vshll.u32 %v3920, 16
        %v4031 = vor.u32 %v4028, %v4029
        %v4032 = vsel %vm3948, %v4024, %v4031
        %v4033 = vrot.slane %v4028, 4
        %v4035 = vshrl.u32 %v3921, 16
        %v4037 = vrot.slane %v4035, 7
        %v4038 = vshll.u32 %v3921, 16
        %v4040 = vor.u32 %v4037, %v4038
        %v4041 = vrot.slane %v4037, 4
        %v4043 = vshrl.u32 %v3922, 16
        %v4045 = vrot.slane %v4043, 7
        %v4046 = vshll.u32 %v3922, 16
        %v4048 = vor.u32 %v4045, %v4046
        %v4049 = vsel %vm3948, %v4041, %v4048
        %v4050 = vrot.slane %v4045, 4
        %v4052 = vshrl.u32 %v3923, 16
        %v4054 = vrot.slane %v4052, 7
        %v4055 = vshll.u32 %v3923, 16
        %v4057 = vor.u32 %v4054, %v4055
        %v4058 = vrot.slane %v4054, 4
        %v4060 = vshrl.u32 %v3924, 16
        %v4062 = vrot.slane %v4060, 7
        %v4063 = vshll.u32 %v3924, 16
        %v4065 = vor.u32 %v4062, %v4063
        %v4066 = vsel %vm3948, %v4058, %v4065
        %v4067 = vrot.slane %v4062, 4
        %v4069 = vshrl.u32 %v3925, 16
        %v4071 = vrot.slane %v4069, 7
        %v4072 = vshll.u32 %v3925, 16
        %v4074 = vor.u32 %v4071, %v4072
        %v4075 = vrot.slane %v4071, 4
        %v4077 = vshrl.u32 %v3926, 16
        %v4079 = vrot.slane %v4077, 7
        %v4080 = vshll.u32 %v3926, 16
        %v4082 = vor.u32 %v4079, %v4080
        %v4083 = vsel %vm3948, %v4075, %v4082
        %v4084 = vrot.slane %v4079, 4
        %v4086 = vshrl.u32 %v3927, 16
        %v4088 = vrot.slane %v4086, 7
        %v4089 = vshll.u32 %v3927, 16
        %v4091 = vor.u32 %v4088, %v4089
        %v4092 = vrot.slane %v4088, 4
        %v4094 = vshrl.u32 %v3928, 16
        %v4096 = vrot.slane %v4094, 7
        %v4097 = vshll.u32 %v3928, 16
        %v4099 = vor.u32 %v4096, %v4097
        %v4100 = vsel %vm3948, %v4092, %v4099
        %v4101 = vrot.slane %v4096, 4
        %v4103 = vshrl.u32 %v3929, 16
        %v4105 = vrot.slane %v4103, 7
        %v4106 = vshll.u32 %v3929, 16
        %v4108 = vor.u32 %v4105, %v4106
        %v4109 = vrot.slane %v4105, 4
        %v4111 = vshrl.u32 %v3930, 16
        %v4113 = vrot.slane %v4111, 7
        %v4114 = vshll.u32 %v3930, 16
        %v4116 = vor.u32 %v4113, %v4114
        %v4117 = vsel %vm3948, %v4109, %v4116
        %v4118 = vrot.slane %v4113, 4
        %v4120 = vshrl.u32 %v3931, 16
        %v4122 = vrot.slane %v4120, 7
        %v4123 = vshll.u32 %v3931, 16
        %v4125 = vor.u32 %v4122, %v4123
        %v4126 = vrot.slane %v4122, 4
        %v4128 = vshrl.u32 %v3932, 16
        %v4130 = vrot.slane %v4128, 7
        %v4131 = vshll.u32 %v3932, 16
        %v4133 = vor.u32 %v4130, %v4131
        %v4134 = vsel %vm3948, %v4126, %v4133
        %v4135 = vrot.slane %v4130, 4
        %v4137 = vshrl.u32 %v3933, 16
        %v4139 = vrot.slane %v4137, 7
        %v4140 = vshll.u32 %v3933, 16
        %v4142 = vor.u32 %v4139, %v4140
        %v4143 = vrot.slane %v4139, 4
        %v4145 = vshrl.u32 %v3934, 16
        %v4147 = vrot.slane %v4145, 7
        %v4148 = vshll.u32 %v3934, 16
        %v4150 = vor.u32 %v4147, %v4148
        %v4151 = vsel %vm3948, %v4143, %v4150
        %v4152 = vrot.slane %v4147, 4
        %v4154 = vshrl.u32 %v3935, 16
        %v4156 = vrot.slane %v4154, 7
        %v4157 = vshll.u32 %v3935, 16
        %v4159 = vor.u32 %v4156, %v4157
        %v4160 = vrot.slane %v4156, 4
        %v4162 = vshrl.u32 %v3936, 16
        %v4164 = vrot.slane %v4162, 7
        %v4165 = vshll.u32 %v3936, 16
        %v4167 = vor.u32 %v4164, %v4165
        %v4168 = vsel %vm3948, %v4160, %v4167
        %v4169 = vrot.slane %v4164, 4
        %v4171 = vshrl.u32 %v3937, 16
        %v4173 = vrot.slane %v4171, 7
        %v4174 = vshll.u32 %v3937, 16
        %v4176 = vor.u32 %v4173, %v4174
        %v4177 = vrot.slane %v4173, 4
        %v4179 = vshrl.u32 %v3938, 16
        %v4181 = vrot.slane %v4179, 7
        %v4182 = vshll.u32 %v3938, 16
        %v4184 = vor.u32 %v4181, %v4182
        %v4185 = vsel %vm3948, %v4177, %v4184
        %v4186 = vrot.slane %v4181, 4
        %v4188 = vshrl.u32 %v3939, 16
        %v4190 = vrot.slane %v4188, 7
        %v4191 = vshll.u32 %v3939, 16
        %v4193 = vor.u32 %v4190, %v4191
        %v4194 = vrot.slane %v4190, 4
        %v4196 = vshrl.u32 %v3940, 16
        %v4198 = vrot.slane %v4196, 7
        %v4199 = vshll.u32 %v3940, 16
        %v4201 = vor.u32 %v4198, %v4199
        %v4202 = vsel %vm3948, %v4194, %v4201
        %v4203 = vrot.slane %v4198, 4
        %v4205 = vshrl.u32 %v3941, 16
        %v4207 = vrot.slane %v4205, 7
        %v4208 = vshll.u32 %v3941, 16
        %v4210 = vor.u32 %v4207, %v4208
        %v4211 = vrot.slane %v4207, 4
        %v4213 = vshrl.u32 %v3942, 16
        %v4215 = vrot.slane %v4213, 7
        %v4216 = vshll.u32 %v3942, 16
        %v4218 = vor.u32 %v4215, %v4216
        %v4219 = vsel %vm3948, %v4211, %v4218
        %v4220 = vrot.slane %v4215, 4
        %v4222 = vshrl.u32 %v3943, 16
        %v4224 = vrot.slane %v4222, 7
        %v4225 = vshll.u32 %v3943, 16
        %v4227 = vor.u32 %v4224, %v4225
        %v4228 = vrot.slane %v4224, 4
        %v4230 = vshrl.u32 %v3944, 16
        %v4232 = vrot.slane %v4230, 7
        %v4233 = vshll.u32 %v3944, 16
        %v4235 = vor.u32 %v4232, %v4233
        %v4236 = vsel %vm3948, %v4228, %v4235
        %v4237 = vrot.slane %v4232, 4
        %v4239 = vshrl.u32 %v3945, 16
        %v4241 = vrot.slane %v4239, 7
        %v4242 = vshll.u32 %v3945, 16
        %v4244 = vor.u32 %v4241, %v4242
        %v4245 = vrot.slane %v4241, 4
        %v4247 = vshrl.u32 %v3946, 16
        %v4249 = vrot.slane %v4247, 7
        %v4250 = vshll.u32 %v3946, 16
        %v4252 = vor.u32 %v4249, %v4250
        %v4253 = vsel %vm3948, %v4245, %v4252
        %v4254 = vrot.slane %v4249, 4
        %vm4309 = vcmask 27648
        %vm4310 = vmand %vm4309, %vm3783
        %v4311 = vld [vmem:[#allocation3] sm:$0xf]
        %v4312 = vsel %vm4310, %v3955, %v4311
        %4313 = vst [vmem:[#allocation3] sm:$0xf] %v4312
        %vm4314 = vcmask 27648
        %4315 = vst.msk [vmem:[#allocation3 + $0x4] sm:$0xf] %vm4314, %v3964
        %v4316 = vld [vmem:[#allocation3 + $0x8] sm:$0x1]
        %v4317 = vsel %vm3728, %v3965, %v4316
        %4318 = vst [vmem:[#allocation3 + $0x8] sm:$0x1] %v4317
        %v4319 = vld [vmem:[#allocation3 + $0xc] sm:$0xf]
        %v4320 = vsel %vm4310, %v3972, %v4319
        %4321 = vst [vmem:[#allocation3 + $0xc] sm:$0xf] %v4320
        %4322 = vst.msk [vmem:[#allocation3 + $0x10] sm:$0xf] %vm4314, %v3981
        %v4323 = vld [vmem:[#allocation3 + $0x14] sm:$0x1]
        %v4324 = vsel %vm3728, %v3982, %v4323
        %4325 = vst [vmem:[#allocation3 + $0x14] sm:$0x1] %v4324
        %v4326 = vld [vmem:[#allocation3 + $0x18] sm:$0xf]
        %v4327 = vsel %vm4310, %v3989, %v4326
        %4328 = vst [vmem:[#allocation3 + $0x18] sm:$0xf] %v4327
        %4329 = vst.msk [vmem:[#allocation3 + $0x1c] sm:$0xf] %vm4314, %v3998
        %v4330 = vld [vmem:[#allocation3 + $0x20] sm:$0x1]
        %v4331 = vsel %vm3728, %v3999, %v4330
        %4332 = vst [vmem:[#allocation3 + $0x20] sm:$0x1] %v4331
        %v4333 = vld [vmem:[#allocation3 + $0x24] sm:$0xf]
        %v4334 = vsel %vm4310, %v4006, %v4333
        %4335 = vst [vmem:[#allocation3 + $0x24] sm:$0xf] %v4334
        %4336 = vst.msk [vmem:[#allocation3 + $0x28] sm:$0xf] %vm4314, %v4015
        %v4337 = vld [vmem:[#allocation3 + $0x2c] sm:$0x1]
        %v4338 = vsel %vm3728, %v4016, %v4337
        %4339 = vst [vmem:[#allocation3 + $0x2c] sm:$0x1] %v4338
        %v4340 = vld [vmem:[#allocation3 + $0x30] sm:$0xf]
        %v4341 = vsel %vm4310, %v4023, %v4340
        %4342 = vst [vmem:[#allocation3 + $0x30] sm:$0xf] %v4341
        %4343 = vst.msk [vmem:[#allocation3 + $0x34] sm:$0xf] %vm4314, %v4032
        %v4344 = vld [vmem:[#allocation3 + $0x38] sm:$0x1]
        %v4345 = vsel %vm3728, %v4033, %v4344
        %4346 = vst [vmem:[#allocation3 + $0x38] sm:$0x1] %v4345
        %v4347 = vld [vmem:[#allocation3 + $0x3c] sm:$0xf]
        %v4348 = vsel %vm4310, %v4040, %v4347
        %4349 = vst [vmem:[#allocation3 + $0x3c] sm:$0xf] %v4348
        %4350 = vst.msk [vmem:[#allocation3 + $0x40] sm:$0xf] %vm4314, %v4049
        %v4351 = vld [vmem:[#allocation3 + $0x44] sm:$0x1]
        %v4352 = vsel %vm3728, %v4050, %v4351
        %4353 = vst [vmem:[#allocation3 + $0x44] sm:$0x1] %v4352
        %v4354 = vld [vmem:[#allocation3 + $0x48] sm:$0xf]
        %v4355 = vsel %vm4310, %v4057, %v4354
        %4356 = vst [vmem:[#allocation3 + $0x48] sm:$0xf] %v4355
        %4357 = vst.msk [vmem:[#allocation3 + $0x4c] sm:$0xf] %vm4314, %v4066
        %v4358 = vld [vmem:[#allocation3 + $0x50] sm:$0x1]
        %v4359 = vsel %vm3728, %v4067, %v4358
        %4360 = vst [vmem:[#allocation3 + $0x50] sm:$0x1] %v4359
        %v4361 = vld [vmem:[#allocation3 + $0x54] sm:$0xf]
        %v4362 = vsel %vm4310, %v4074, %v4361
        %4363 = vst [vmem:[#allocation3 + $0x54] sm:$0xf] %v4362
        %4364 = vst.msk [vmem:[#allocation3 + $0x58] sm:$0xf] %vm4314, %v4083
        %v4365 = vld [vmem:[#allocation3 + $0x5c] sm:$0x1]
        %v4366 = vsel %vm3728, %v4084, %v4365
        %4367 = vst [vmem:[#allocation3 + $0x5c] sm:$0x1] %v4366
        %v4368 = vld [vmem:[#allocation3 + $0x60] sm:$0xf]
        %v4369 = vsel %vm4310, %v4091, %v4368
        %4370 = vst [vmem:[#allocation3 + $0x60] sm:$0xf] %v4369
        %4371 = vst.msk [vmem:[#allocation3 + $0x64] sm:$0xf] %vm4314, %v4100
        %v4372 = vld [vmem:[#allocation3 + $0x68] sm:$0x1]
        %v4373 = vsel %vm3728, %v4101, %v4372
        %4374 = vst [vmem:[#allocation3 + $0x68] sm:$0x1] %v4373
        %v4375 = vld [vmem:[#allocation3 + $0x6c] sm:$0xf]
        %v4376 = vsel %vm4310, %v4108, %v4375
        %4377 = vst [vmem:[#allocation3 + $0x6c] sm:$0xf] %v4376
        %4378 = vst.msk [vmem:[#allocation3 + $0x70] sm:$0xf] %vm4314, %v4117
        %v4379 = vld [vmem:[#allocation3 + $0x74] sm:$0x1]
        %v4380 = vsel %vm3728, %v4118, %v4379
        %4381 = vst [vmem:[#allocation3 + $0x74] sm:$0x1] %v4380
        %v4382 = vld [vmem:[#allocation3 + $0x78] sm:$0xf]
        %v4383 = vsel %vm4310, %v4125, %v4382
        %4384 = vst [vmem:[#allocation3 + $0x78] sm:$0xf] %v4383
        %4385 = vst.msk [vmem:[#allocation3 + $0x7c] sm:$0xf] %vm4314, %v4134
        %v4386 = vld [vmem:[#allocation3 + $0x80] sm:$0x1]
        %v4387 = vsel %vm3728, %v4135, %v4386
        %4388 = vst [vmem:[#allocation3 + $0x80] sm:$0x1] %v4387
        %v4389 = vld [vmem:[#allocation3 + $0x84] sm:$0xf]
        %v4390 = vsel %vm4310, %v4142, %v4389
        %4391 = vst [vmem:[#allocation3 + $0x84] sm:$0xf] %v4390
        %4392 = vst.msk [vmem:[#allocation3 + $0x88] sm:$0xf] %vm4314, %v4151
        %v4393 = vld [vmem:[#allocation3 + $0x8c] sm:$0x1]
        %v4394 = vsel %vm3728, %v4152, %v4393
        %4395 = vst [vmem:[#allocation3 + $0x8c] sm:$0x1] %v4394
        %v4396 = vld [vmem:[#allocation3 + $0x90] sm:$0xf]
        %v4397 = vsel %vm4310, %v4159, %v4396
        %4398 = vst [vmem:[#allocation3 + $0x90] sm:$0xf] %v4397
        %4399 = vst.msk [vmem:[#allocation3 + $0x94] sm:$0xf] %vm4314, %v4168
        %v4400 = vld [vmem:[#allocation3 + $0x98] sm:$0x1]
        %v4401 = vsel %vm3728, %v4169, %v4400
        %4402 = vst [vmem:[#allocation3 + $0x98] sm:$0x1] %v4401
        %v4403 = vld [vmem:[#allocation3 + $0x9c] sm:$0xf]
        %v4404 = vsel %vm4310, %v4176, %v4403
        %4405 = vst [vmem:[#allocation3 + $0x9c] sm:$0xf] %v4404
        %4406 = vst.msk [vmem:[#allocation3 + $0xa0] sm:$0xf] %vm4314, %v4185
        %v4407 = vld [vmem:[#allocation3 + $0xa4] sm:$0x1]
        %v4408 = vsel %vm3728, %v4186, %v4407
        %4409 = vst [vmem:[#allocation3 + $0xa4] sm:$0x1] %v4408
        %v4410 = vld [vmem:[#allocation3 + $0xa8] sm:$0xf]
        %v4411 = vsel %vm4310, %v4193, %v4410
        %4412 = vst [vmem:[#allocation3 + $0xa8] sm:$0xf] %v4411
        %4413 = vst.msk [vmem:[#allocation3 + $0xac] sm:$0xf] %vm4314, %v4202
        %v4414 = vld [vmem:[#allocation3 + $0xb0] sm:$0x1]
        %v4415 = vsel %vm3728, %v4203, %v4414
        %4416 = vst [vmem:[#allocation3 + $0xb0] sm:$0x1] %v4415
        %v4417 = vld [vmem:[#allocation3 + $0xb4] sm:$0xf]
        %v4418 = vsel %vm4310, %v4210, %v4417
        %4419 = vst [vmem:[#allocation3 + $0xb4] sm:$0xf] %v4418
        %4420 = vst.msk [vmem:[#allocation3 + $0xb8] sm:$0xf] %vm4314, %v4219
        %v4421 = vld [vmem:[#allocation3 + $0xbc] sm:$0x1]
        %v4422 = vsel %vm3728, %v4220, %v4421
        %4423 = vst [vmem:[#allocation3 + $0xbc] sm:$0x1] %v4422
        %v4424 = vld [vmem:[#allocation3 + $0xc0] sm:$0xf]
        %v4425 = vsel %vm4310, %v4227, %v4424
        %4426 = vst [vmem:[#allocation3 + $0xc0] sm:$0xf] %v4425
        %4427 = vst.msk [vmem:[#allocation3 + $0xc4] sm:$0xf] %vm4314, %v4236
        %v4428 = vld [vmem:[#allocation3 + $0xc8] sm:$0x1]
        %v4429 = vsel %vm3728, %v4237, %v4428
        %4430 = vst [vmem:[#allocation3 + $0xc8] sm:$0x1] %v4429
        %v4431 = vld [vmem:[#allocation3 + $0xcc] sm:$0xf]
        %v4432 = vsel %vm4310, %v4244, %v4431
        %4433 = vst [vmem:[#allocation3 + $0xcc] sm:$0xf] %v4432
        %4434 = vst.msk [vmem:[#allocation3 + $0xd0] sm:$0xf] %vm4314, %v4253
        %v4435 = vld [vmem:[#allocation3 + $0xd4] sm:$0x1]
        %v4436 = vsel %vm3728, %v4254, %v4435
        %4437 = vst [vmem:[#allocation3 + $0xd4] sm:$0x1] %v4436
        %v4438 = vld [vmem:[#allocation3] sm:$0xf]
        %v4439 = vld [vmem:[#allocation3 + $0x4] sm:$0xf]
        %v4440 = vld [vmem:[#allocation3 + $0xc] sm:$0xf]
        %v4441 = vld [vmem:[#allocation3 + $0x10] sm:$0xf]
        %v4442 = vld [vmem:[#allocation3 + $0x18] sm:$0xf]
        %v4443 = vld [vmem:[#allocation3 + $0x1c] sm:$0xf]
        %v4444 = vld [vmem:[#allocation3 + $0x24] sm:$0xf]
        %v4445 = vld [vmem:[#allocation3 + $0x28] sm:$0xf]
        %v4446 = vld [vmem:[#allocation3 + $0x30] sm:$0xf]
        %v4447 = vld [vmem:[#allocation3 + $0x34] sm:$0xf]
        %v4448 = vld [vmem:[#allocation3 + $0x3c] sm:$0xf]
        %v4449 = vld [vmem:[#allocation3 + $0x40] sm:$0xf]
        %v4450 = vld [vmem:[#allocation3 + $0x48] sm:$0xf]
        %v4451 = vld [vmem:[#allocation3 + $0x4c] sm:$0xf]
        %v4452 = vld [vmem:[#allocation3 + $0x54] sm:$0xf]
        %v4453 = vld [vmem:[#allocation3 + $0x58] sm:$0xf]
        %v4454 = vld [vmem:[#allocation3 + $0x60] sm:$0xf]
        %v4455 = vld [vmem:[#allocation3 + $0x64] sm:$0xf]
        %v4456 = vld [vmem:[#allocation3 + $0x6c] sm:$0xf]
        %v4457 = vld [vmem:[#allocation3 + $0x70] sm:$0xf]
        %v4458 = vld [vmem:[#allocation3 + $0x78] sm:$0xf]
        %v4459 = vld [vmem:[#allocation3 + $0x7c] sm:$0xf]
        %v4460 = vld [vmem:[#allocation3 + $0x84] sm:$0xf]
        %v4461 = vld [vmem:[#allocation3 + $0x88] sm:$0xf]
        %v4462 = vld [vmem:[#allocation3 + $0x90] sm:$0xf]
        %v4463 = vld [vmem:[#allocation3 + $0x94] sm:$0xf]
        %v4464 = vld [vmem:[#allocation3 + $0x9c] sm:$0xf]
        %v4465 = vld [vmem:[#allocation3 + $0xa0] sm:$0xf]
        %v4466 = vld [vmem:[#allocation3 + $0xa8] sm:$0xf]
        %v4467 = vld [vmem:[#allocation3 + $0xac] sm:$0xf]
        %v4468 = vld [vmem:[#allocation3 + $0xb4] sm:$0xf]
        %v4469 = vld [vmem:[#allocation3 + $0xb8] sm:$0xf]
        %v4470 = vld [vmem:[#allocation3 + $0x8] sm:$0x1]
        %v4471 = vld [vmem:[#allocation3 + $0x14] sm:$0x1]
        %v4472 = vld [vmem:[#allocation3 + $0x20] sm:$0x1]
        %v4473 = vld [vmem:[#allocation3 + $0x2c] sm:$0x1]
        %v4474 = vld [vmem:[#allocation3 + $0x38] sm:$0x1]
        %v4475 = vld [vmem:[#allocation3 + $0x44] sm:$0x1]
        %v4476 = vld [vmem:[#allocation3 + $0x50] sm:$0x1]
        %v4477 = vld [vmem:[#allocation3 + $0x5c] sm:$0x1]
        %v4478 = vld [vmem:[#allocation3 + $0x68] sm:$0x1]
        %v4479 = vld [vmem:[#allocation3 + $0x74] sm:$0x1]
        %v4480 = vld [vmem:[#allocation3 + $0x80] sm:$0x1]
        %v4481 = vld [vmem:[#allocation3 + $0x8c] sm:$0x1]
        %v4482 = vld [vmem:[#allocation3 + $0x98] sm:$0x1]
        %v4483 = vld [vmem:[#allocation3 + $0xa4] sm:$0x1]
        %v4484 = vld [vmem:[#allocation3 + $0xb0] sm:$0x1]
        %v4485 = vld [vmem:[#allocation3 + $0xbc] sm:$0x1]
        %v4486 = vld [vmem:[#allocation3] sm:$0xe]
        %v4487 = vld [vmem:[#allocation3 + $0xc] sm:$0xe]
        %v4488 = vld [vmem:[#allocation3 + $0x18] sm:$0xe]
        %v4489 = vld [vmem:[#allocation3 + $0x24] sm:$0xe]
        %v4490 = vld [vmem:[#allocation3 + $0x30] sm:$0xe]
        %v4491 = vld [vmem:[#allocation3 + $0x3c] sm:$0xe]
        %v4492 = vld [vmem:[#allocation3 + $0x48] sm:$0xe]
        %v4493 = vld [vmem:[#allocation3 + $0x54] sm:$0xe]
        %v4494 = vld [vmem:[#allocation3 + $0x60] sm:$0xe]
        %v4495 = vld [vmem:[#allocation3 + $0x6c] sm:$0xe]
        %v4496 = vld [vmem:[#allocation3 + $0x78] sm:$0xe]
        %v4497 = vld [vmem:[#allocation3 + $0x84] sm:$0xe]
        %v4498 = vld [vmem:[#allocation3 + $0x90] sm:$0xe]
        %v4499 = vld [vmem:[#allocation3 + $0x9c] sm:$0xe]
        %v4500 = vld [vmem:[#allocation3 + $0xa8] sm:$0xe]
        %v4501 = vld [vmem:[#allocation3 + $0xb4] sm:$0xe]
        %s4502 = scalar_lea.vmem [#allocation3], 12
        %v4503 = vld [vmem:[%s4502] sm:$0xf]
        %v4504 = vld [vmem:[%s4502 + $0x4] sm:$0xf]
        %v4505 = vld [vmem:[%s4502 + $0xc] sm:$0xf]
        %v4506 = vld [vmem:[%s4502 + $0x10] sm:$0xf]
        %v4507 = vld [vmem:[%s4502 + $0x18] sm:$0xf]
        %v4508 = vld [vmem:[%s4502 + $0x1c] sm:$0xf]
        %v4509 = vld [vmem:[%s4502 + $0x24] sm:$0xf]
        %v4510 = vld [vmem:[%s4502 + $0x28] sm:$0xf]
        %v4511 = vld [vmem:[%s4502 + $0x30] sm:$0xf]
        %v4512 = vld [vmem:[%s4502 + $0x34] sm:$0xf]
        %v4513 = vld [vmem:[%s4502 + $0x3c] sm:$0xf]
        %v4514 = vld [vmem:[%s4502 + $0x40] sm:$0xf]
        %v4515 = vld [vmem:[%s4502 + $0x48] sm:$0xf]
        %v4516 = vld [vmem:[%s4502 + $0x4c] sm:$0xf]
        %v4517 = vld [vmem:[%s4502 + $0x54] sm:$0xf]
        %v4518 = vld [vmem:[%s4502 + $0x58] sm:$0xf]
        %v4519 = vld [vmem:[%s4502 + $0x60] sm:$0xf]
        %v4520 = vld [vmem:[%s4502 + $0x64] sm:$0xf]
        %v4521 = vld [vmem:[%s4502 + $0x6c] sm:$0xf]
        %v4522 = vld [vmem:[%s4502 + $0x70] sm:$0xf]
        %v4523 = vld [vmem:[%s4502 + $0x78] sm:$0xf]
        %v4524 = vld [vmem:[%s4502 + $0x7c] sm:$0xf]
        %v4525 = vld [vmem:[%s4502 + $0x84] sm:$0xf]
        %v4526 = vld [vmem:[%s4502 + $0x88] sm:$0xf]
        %v4527 = vld [vmem:[%s4502 + $0x90] sm:$0xf]
        %v4528 = vld [vmem:[%s4502 + $0x94] sm:$0xf]
        %v4529 = vld [vmem:[%s4502 + $0x9c] sm:$0xf]
        %v4530 = vld [vmem:[%s4502 + $0xa0] sm:$0xf]
        %v4531 = vld [vmem:[%s4502 + $0xa8] sm:$0xf]
        %v4532 = vld [vmem:[%s4502 + $0xac] sm:$0xf]
        %v4533 = vld [vmem:[%s4502 + $0xb4] sm:$0xf]
        %v4534 = vld [vmem:[%s4502 + $0xb8] sm:$0xf]
        %v4535 = vld [vmem:[%s4502 + $0x8] sm:$0x1]
        %v4536 = vld [vmem:[%s4502 + $0x14] sm:$0x1]
        %v4537 = vld [vmem:[%s4502 + $0x20] sm:$0x1]
        %v4538 = vld [vmem:[%s4502 + $0x2c] sm:$0x1]
        %v4539 = vld [vmem:[%s4502 + $0x38] sm:$0x1]
        %v4540 = vld [vmem:[%s4502 + $0x44] sm:$0x1]
        %v4541 = vld [vmem:[%s4502 + $0x50] sm:$0x1]
        %v4542 = vld [vmem:[%s4502 + $0x5c] sm:$0x1]
        %v4543 = vld [vmem:[%s4502 + $0x68] sm:$0x1]
        %v4544 = vld [vmem:[%s4502 + $0x74] sm:$0x1]
        %v4545 = vld [vmem:[%s4502 + $0x80] sm:$0x1]
        %v4546 = vld [vmem:[%s4502 + $0x8c] sm:$0x1]
        %v4547 = vld [vmem:[%s4502 + $0x98] sm:$0x1]
        %v4548 = vld [vmem:[%s4502 + $0xa4] sm:$0x1]
        %v4549 = vld [vmem:[%s4502 + $0xb0] sm:$0x1]
        %v4550 = vld [vmem:[%s4502 + $0xbc] sm:$0x1]
        %v4551 = vld [vmem:[%s4502] sm:$0xe]
        %v4552 = vld [vmem:[%s4502 + $0xc] sm:$0xe]
        %v4553 = vld [vmem:[%s4502 + $0x18] sm:$0xe]
        %v4554 = vld [vmem:[%s4502 + $0x24] sm:$0xe]
        %v4555 = vld [vmem:[%s4502 + $0x30] sm:$0xe]
        %v4556 = vld [vmem:[%s4502 + $0x3c] sm:$0xe]
        %v4557 = vld [vmem:[%s4502 + $0x48] sm:$0xe]
        %v4558 = vld [vmem:[%s4502 + $0x54] sm:$0xe]
        %v4559 = vld [vmem:[%s4502 + $0x60] sm:$0xe]
        %v4560 = vld [vmem:[%s4502 + $0x6c] sm:$0xe]
        %v4561 = vld [vmem:[%s4502 + $0x78] sm:$0xe]
        %v4562 = vld [vmem:[%s4502 + $0x84] sm:$0xe]
        %v4563 = vld [vmem:[%s4502 + $0x90] sm:$0xe]
        %v4564 = vld [vmem:[%s4502 + $0x9c] sm:$0xe]
        %v4565 = vld [vmem:[%s4502 + $0xa8] sm:$0xe]
        %v4566 = vld [vmem:[%s4502 + $0xb4] sm:$0xe]
        %s4567 = scalar_lea.vmem [#allocation3], 24
        %v4568 = vld [vmem:[%s4567] sm:$0xf]
        %v4569 = vld [vmem:[%s4567 + $0x4] sm:$0xf]
        %v4570 = vld [vmem:[%s4567 + $0xc] sm:$0xf]
        %v4571 = vld [vmem:[%s4567 + $0x10] sm:$0xf]
        %v4572 = vld [vmem:[%s4567 + $0x18] sm:$0xf]
        %v4573 = vld [vmem:[%s4567 + $0x1c] sm:$0xf]
        %v4574 = vld [vmem:[%s4567 + $0x24] sm:$0xf]
        %v4575 = vld [vmem:[%s4567 + $0x28] sm:$0xf]
        %v4576 = vld [vmem:[%s4567 + $0x30] sm:$0xf]
        %v4577 = vld [vmem:[%s4567 + $0x34] sm:$0xf]
        %v4578 = vld [vmem:[%s4567 + $0x3c] sm:$0xf]
        %v4579 = vld [vmem:[%s4567 + $0x40] sm:$0xf]
        %v4580 = vld [vmem:[%s4567 + $0x48] sm:$0xf]
        %v4581 = vld [vmem:[%s4567 + $0x4c] sm:$0xf]
        %v4582 = vld [vmem:[%s4567 + $0x54] sm:$0xf]
        %v4583 = vld [vmem:[%s4567 + $0x58] sm:$0xf]
        %v4584 = vld [vmem:[%s4567 + $0x60] sm:$0xf]
        %v4585 = vld [vmem:[%s4567 + $0x64] sm:$0xf]
        %v4586 = vld [vmem:[%s4567 + $0x6c] sm:$0xf]
        %v4587 = vld [vmem:[%s4567 + $0x70] sm:$0xf]
        %v4588 = vld [vmem:[%s4567 + $0x78] sm:$0xf]
        %v4589 = vld [vmem:[%s4567 + $0x7c] sm:$0xf]
        %v4590 = vld [vmem:[%s4567 + $0x84] sm:$0xf]
        %v4591 = vld [vmem:[%s4567 + $0x88] sm:$0xf]
        %v4592 = vld [vmem:[%s4567 + $0x90] sm:$0xf]
        %v4593 = vld [vmem:[%s4567 + $0x94] sm:$0xf]
        %v4594 = vld [vmem:[%s4567 + $0x9c] sm:$0xf]
        %v4595 = vld [vmem:[%s4567 + $0xa0] sm:$0xf]
        %v4596 = vld [vmem:[%s4567 + $0xa8] sm:$0xf]
        %v4597 = vld [vmem:[%s4567 + $0xac] sm:$0xf]
        %v4598 = vld [vmem:[%s4567 + $0xb4] sm:$0xf]
        %v4599 = vld [vmem:[%s4567 + $0xb8] sm:$0xf]
        %v4600 = vld [vmem:[%s4567 + $0x8] sm:$0x1]
        %v4601 = vld [vmem:[%s4567 + $0x14] sm:$0x1]
        %v4602 = vld [vmem:[%s4567 + $0x20] sm:$0x1]
        %v4603 = vld [vmem:[%s4567 + $0x2c] sm:$0x1]
        %v4604 = vld [vmem:[%s4567 + $0x38] sm:$0x1]
        %v4605 = vld [vmem:[%s4567 + $0x44] sm:$0x1]
        %v4606 = vld [vmem:[%s4567 + $0x50] sm:$0x1]
        %v4607 = vld [vmem:[%s4567 + $0x5c] sm:$0x1]
        %v4608 = vld [vmem:[%s4567 + $0x68] sm:$0x1]
        %v4609 = vld [vmem:[%s4567 + $0x74] sm:$0x1]
        %v4610 = vld [vmem:[%s4567 + $0x80] sm:$0x1]
        %v4611 = vld [vmem:[%s4567 + $0x8c] sm:$0x1]
        %v4612 = vld [vmem:[%s4567 + $0x98] sm:$0x1]
        %v4613 = vld [vmem:[%s4567 + $0xa4] sm:$0x1]
        %v4614 = vld [vmem:[%s4567 + $0xb0] sm:$0x1]
        %v4615 = vld [vmem:[%s4567 + $0xbc] sm:$0x1]
        %v4616 = vld [vmem:[%s4567] sm:$0xe]
        %v4617 = vld [vmem:[%s4567 + $0xc] sm:$0xe]
        %v4618 = vld [vmem:[%s4567 + $0x18] sm:$0xe]
        %v4619 = vld [vmem:[%s4567 + $0x24] sm:$0xe]
        %v4620 = vld [vmem:[%s4567 + $0x30] sm:$0xe]
        %v4621 = vld [vmem:[%s4567 + $0x3c] sm:$0xe]
        %v4622 = vld [vmem:[%s4567 + $0x48] sm:$0xe]
        %v4623 = vld [vmem:[%s4567 + $0x54] sm:$0xe]
        %v4624 = vld [vmem:[%s4567 + $0x60] sm:$0xe]
        %v4625 = vld [vmem:[%s4567 + $0x6c] sm:$0xe]
        %v4626 = vld [vmem:[%s4567 + $0x78] sm:$0xe]
        %v4627 = vld [vmem:[%s4567 + $0x84] sm:$0xe]
        %v4628 = vld [vmem:[%s4567 + $0x90] sm:$0xe]
        %v4629 = vld [vmem:[%s4567 + $0x9c] sm:$0xe]
        %v4630 = vld [vmem:[%s4567 + $0xa8] sm:$0xe]
        %v4631 = vld [vmem:[%s4567 + $0xb4] sm:$0xe]
        %v4664 = vunpack.c.l.b16 %v4438
        %v4665 = vunpack.c.l.b16 %v4439
        %v4666 = vunpack.c.l.b16 %v4440
        %v4667 = vunpack.c.l.b16 %v4441
        %v4668 = vunpack.c.l.b16 %v4442
        %v4669 = vunpack.c.l.b16 %v4443
        %v4670 = vunpack.c.l.b16 %v4444
        %v4671 = vunpack.c.l.b16 %v4445
        %v4672 = vunpack.c.l.b16 %v4446
        %v4673 = vunpack.c.l.b16 %v4447
        %v4674 = vunpack.c.l.b16 %v4448
        %v4675 = vunpack.c.l.b16 %v4449
        %v4676 = vunpack.c.l.b16 %v4450
        %v4677 = vunpack.c.l.b16 %v4451
        %v4678 = vunpack.c.l.b16 %v4452
        %v4679 = vunpack.c.l.b16 %v4453
        %v4680 = vunpack.c.l.b16 %v4454
        %v4681 = vunpack.c.l.b16 %v4455
        %v4682 = vunpack.c.l.b16 %v4456
        %v4683 = vunpack.c.l.b16 %v4457
        %v4684 = vunpack.c.l.b16 %v4458
        %v4685 = vunpack.c.l.b16 %v4459
        %v4686 = vunpack.c.l.b16 %v4460
        %v4687 = vunpack.c.l.b16 %v4461
        %v4688 = vunpack.c.l.b16 %v4462
        %v4689 = vunpack.c.l.b16 %v4463
        %v4690 = vunpack.c.l.b16 %v4464
        %v4691 = vunpack.c.l.b16 %v4465
        %v4692 = vunpack.c.l.b16 %v4466
        %v4693 = vunpack.c.l.b16 %v4467
        %v4694 = vunpack.c.l.b16 %v4468
        %v4695 = vunpack.c.l.b16 %v4469
        %v4696 = vpack.c.b16 %v4665, %v4664
        %v4697 = vpack.c.b16 %v4667, %v4666
        %v4698 = vpack.c.b16 %v4669, %v4668
        %v4699 = vpack.c.b16 %v4671, %v4670
        %v4700 = vpack.c.b16 %v4673, %v4672
        %v4701 = vpack.c.b16 %v4675, %v4674
        %v4702 = vpack.c.b16 %v4677, %v4676
        %v4703 = vpack.c.b16 %v4679, %v4678
        %v4704 = vpack.c.b16 %v4681, %v4680
        %v4705 = vpack.c.b16 %v4683, %v4682
        %v4706 = vpack.c.b16 %v4685, %v4684
        %v4707 = vpack.c.b16 %v4687, %v4686
        %v4708 = vpack.c.b16 %v4689, %v4688
        %v4709 = vpack.c.b16 %v4691, %v4690
        %v4710 = vpack.c.b16 %v4693, %v4692
        %v4711 = vpack.c.b16 %v4695, %v4694
        %v4728 = vunpack.c.l.b16 %v4470
        %v4729 = vunpack.c.l.b16 %v4471
        %v4730 = vunpack.c.l.b16 %v4472
        %v4731 = vunpack.c.l.b16 %v4473
        %v4732 = vunpack.c.l.b16 %v4474
        %v4733 = vunpack.c.l.b16 %v4475
        %v4734 = vunpack.c.l.b16 %v4476
        %v4735 = vunpack.c.l.b16 %v4477
        %v4736 = vunpack.c.l.b16 %v4478
        %v4737 = vunpack.c.l.b16 %v4479
        %v4738 = vunpack.c.l.b16 %v4480
        %v4739 = vunpack.c.l.b16 %v4481
        %v4740 = vunpack.c.l.b16 %v4482
        %v4741 = vunpack.c.l.b16 %v4483
        %v4742 = vunpack.c.l.b16 %v4484
        %v4743 = vunpack.c.l.b16 %v4485
        %v4744 = vpack.c.b16 %v4728, %v4728
        %v4745 = vpack.c.b16 %v4729, %v4729
        %v4746 = vpack.c.b16 %v4730, %v4730
        %v4747 = vpack.c.b16 %v4731, %v4731
        %v4748 = vpack.c.b16 %v4732, %v4732
        %v4749 = vpack.c.b16 %v4733, %v4733
        %v4750 = vpack.c.b16 %v4734, %v4734
        %v4751 = vpack.c.b16 %v4735, %v4735
        %v4752 = vpack.c.b16 %v4736, %v4736
        %v4753 = vpack.c.b16 %v4737, %v4737
        %v4754 = vpack.c.b16 %v4738, %v4738
        %v4755 = vpack.c.b16 %v4739, %v4739
        %v4756 = vpack.c.b16 %v4740, %v4740
        %v4757 = vpack.c.b16 %v4741, %v4741
        %v4758 = vpack.c.b16 %v4742, %v4742
        %v4759 = vpack.c.b16 %v4743, %v4743
        %v4761 = vshrl.u32 %v4696, 16
        %v4763 = vshll.u32 %v4696, 16
        %v4765 = vrot.slane %v4763, 1
        %v4766 = vor.u32 %v4761, %v4765
        %v4768 = vshll.u32 %v4744, 16
        %v4770 = vrot.slane %v4768, 1
        %v4771 = vsel %vm1370, %v4766, %v4770
        %v4773 = vshrl.u32 %v4697, 16
        %v4775 = vshll.u32 %v4697, 16
        %v4777 = vrot.slane %v4775, 1
        %v4778 = vor.u32 %v4773, %v4777
        %v4780 = vshll.u32 %v4745, 16
        %v4782 = vrot.slane %v4780, 1
        %v4783 = vsel %vm1370, %v4778, %v4782
        %v4785 = vshrl.u32 %v4698, 16
        %v4787 = vshll.u32 %v4698, 16
        %v4789 = vrot.slane %v4787, 1
        %v4790 = vor.u32 %v4785, %v4789
        %v4792 = vshll.u32 %v4746, 16
        %v4794 = vrot.slane %v4792, 1
        %v4795 = vsel %vm1370, %v4790, %v4794
        %v4797 = vshrl.u32 %v4699, 16
        %v4799 = vshll.u32 %v4699, 16
        %v4801 = vrot.slane %v4799, 1
        %v4802 = vor.u32 %v4797, %v4801
        %v4804 = vshll.u32 %v4747, 16
        %v4806 = vrot.slane %v4804, 1
        %v4807 = vsel %vm1370, %v4802, %v4806
        %v4809 = vshrl.u32 %v4700, 16
        %v4811 = vshll.u32 %v4700, 16
        %v4813 = vrot.slane %v4811, 1
        %v4814 = vor.u32 %v4809, %v4813
        %v4816 = vshll.u32 %v4748, 16
        %v4818 = vrot.slane %v4816, 1
        %v4819 = vsel %vm1370, %v4814, %v4818
        %v4821 = vshrl.u32 %v4701, 16
        %v4823 = vshll.u32 %v4701, 16
        %v4825 = vrot.slane %v4823, 1
        %v4826 = vor.u32 %v4821, %v4825
        %v4828 = vshll.u32 %v4749, 16
        %v4830 = vrot.slane %v4828, 1
        %v4831 = vsel %vm1370, %v4826, %v4830
        %v4833 = vshrl.u32 %v4702, 16
        %v4835 = vshll.u32 %v4702, 16
        %v4837 = vrot.slane %v4835, 1
        %v4838 = vor.u32 %v4833, %v4837
        %v4840 = vshll.u32 %v4750, 16
        %v4842 = vrot.slane %v4840, 1
        %v4843 = vsel %vm1370, %v4838, %v4842
        %v4845 = vshrl.u32 %v4703, 16
        %v4847 = vshll.u32 %v4703, 16
        %v4849 = vrot.slane %v4847, 1
        %v4850 = vor.u32 %v4845, %v4849
        %v4852 = vshll.u32 %v4751, 16
        %v4854 = vrot.slane %v4852, 1
        %v4855 = vsel %vm1370, %v4850, %v4854
        %v4857 = vshrl.u32 %v4704, 16
        %v4859 = vshll.u32 %v4704, 16
        %v4861 = vrot.slane %v4859, 1
        %v4862 = vor.u32 %v4857, %v4861
        %v4864 = vshll.u32 %v4752, 16
        %v4866 = vrot.slane %v4864, 1
        %v4867 = vsel %vm1370, %v4862, %v4866
        %v4869 = vshrl.u32 %v4705, 16
        %v4871 = vshll.u32 %v4705, 16
        %v4873 = vrot.slane %v4871, 1
        %v4874 = vor.u32 %v4869, %v4873
        %v4876 = vshll.u32 %v4753, 16
        %v4878 = vrot.slane %v4876, 1
        %v4879 = vsel %vm1370, %v4874, %v4878
        %v4881 = vshrl.u32 %v4706, 16
        %v4883 = vshll.u32 %v4706, 16
        %v4885 = vrot.slane %v4883, 1
        %v4886 = vor.u32 %v4881, %v4885
        %v4888 = vshll.u32 %v4754, 16
        %v4890 = vrot.slane %v4888, 1
        %v4891 = vsel %vm1370, %v4886, %v4890
        %v4893 = vshrl.u32 %v4707, 16
        %v4895 = vshll.u32 %v4707, 16
        %v4897 = vrot.slane %v4895, 1
        %v4898 = vor.u32 %v4893, %v4897
        %v4900 = vshll.u32 %v4755, 16
        %v4902 = vrot.slane %v4900, 1
        %v4903 = vsel %vm1370, %v4898, %v4902
        %v4905 = vshrl.u32 %v4708, 16
        %v4907 = vshll.u32 %v4708, 16
        %v4909 = vrot.slane %v4907, 1
        %v4910 = vor.u32 %v4905, %v4909
        %v4912 = vshll.u32 %v4756, 16
        %v4914 = vrot.slane %v4912, 1
        %v4915 = vsel %vm1370, %v4910, %v4914
        %v4917 = vshrl.u32 %v4709, 16
        %v4919 = vshll.u32 %v4709, 16
        %v4921 = vrot.slane %v4919, 1
        %v4922 = vor.u32 %v4917, %v4921
        %v4924 = vshll.u32 %v4757, 16
        %v4926 = vrot.slane %v4924, 1
        %v4927 = vsel %vm1370, %v4922, %v4926
        %v4929 = vshrl.u32 %v4710, 16
        %v4931 = vshll.u32 %v4710, 16
        %v4933 = vrot.slane %v4931, 1
        %v4934 = vor.u32 %v4929, %v4933
        %v4936 = vshll.u32 %v4758, 16
        %v4938 = vrot.slane %v4936, 1
        %v4939 = vsel %vm1370, %v4934, %v4938
        %v4941 = vshrl.u32 %v4711, 16
        %v4943 = vshll.u32 %v4711, 16
        %v4945 = vrot.slane %v4943, 1
        %v4946 = vor.u32 %v4941, %v4945
        %v4948 = vshll.u32 %v4759, 16
        %v4950 = vrot.slane %v4948, 1
        %v4951 = vsel %vm1370, %v4946, %v4950
        %4952 = vrot.lane.b32.xlu0 %v4771, 4
        %v4953 = vpop.permute.xlu0 %4952
        %4954 = vrot.lane.b32.xlu0 %v4783, 4
        %v4955 = vpop.permute.xlu0 %4954
        %4956 = vrot.lane.b32.xlu0 %v4795, 4
        %v4957 = vpop.permute.xlu0 %4956
        %4958 = vrot.lane.b32.xlu0 %v4807, 4
        %v4959 = vpop.permute.xlu0 %4958
        %4960 = vrot.lane.b32.xlu0 %v4819, 4
        %v4961 = vpop.permute.xlu0 %4960
        %4962 = vrot.lane.b32.xlu0 %v4831, 4
        %v4963 = vpop.permute.xlu0 %4962
        %4964 = vrot.lane.b32.xlu0 %v4843, 4
        %v4965 = vpop.permute.xlu0 %4964
        %4966 = vrot.lane.b32.xlu0 %v4855, 4
        %v4967 = vpop.permute.xlu0 %4966
        %4968 = vrot.lane.b32.xlu0 %v4867, 4
        %v4969 = vpop.permute.xlu0 %4968
        %4970 = vrot.lane.b32.xlu0 %v4879, 4
        %v4971 = vpop.permute.xlu0 %4970
        %4972 = vrot.lane.b32.xlu0 %v4891, 4
        %v4973 = vpop.permute.xlu0 %4972
        %4974 = vrot.lane.b32.xlu0 %v4903, 4
        %v4975 = vpop.permute.xlu0 %4974
        %4976 = vrot.lane.b32.xlu0 %v4915, 4
        %v4977 = vpop.permute.xlu0 %4976
        %4978 = vrot.lane.b32.xlu0 %v4927, 4
        %v4979 = vpop.permute.xlu0 %4978
        %4980 = vrot.lane.b32.xlu0 %v4939, 4
        %v4981 = vpop.permute.xlu0 %4980
        %4982 = vrot.lane.b32.xlu0 %v4951, 4
        %v4983 = vpop.permute.xlu0 %4982
        %v5000 = vunpack.c.l.b16 %v4486
        %v5001 = vunpack.c.l.b16 %v4487
        %v5002 = vunpack.c.l.b16 %v4488
        %v5003 = vunpack.c.l.b16 %v4489
        %v5004 = vunpack.c.l.b16 %v4490
        %v5005 = vunpack.c.l.b16 %v4491
        %v5006 = vunpack.c.l.b16 %v4492
        %v5007 = vunpack.c.l.b16 %v4493
        %v5008 = vunpack.c.l.b16 %v4494
        %v5009 = vunpack.c.l.b16 %v4495
        %v5010 = vunpack.c.l.b16 %v4496
        %v5011 = vunpack.c.l.b16 %v4497
        %v5012 = vunpack.c.l.b16 %v4498
        %v5013 = vunpack.c.l.b16 %v4499
        %v5014 = vunpack.c.l.b16 %v4500
        %v5015 = vunpack.c.l.b16 %v4501
        %v5016 = vpack.c.b16 %v4665, %v5000
        %v5017 = vpack.c.b16 %v4667, %v5001
        %v5018 = vpack.c.b16 %v4669, %v5002
        %v5019 = vpack.c.b16 %v4671, %v5003
        %v5020 = vpack.c.b16 %v4673, %v5004
        %v5021 = vpack.c.b16 %v4675, %v5005
        %v5022 = vpack.c.b16 %v4677, %v5006
        %v5023 = vpack.c.b16 %v4679, %v5007
        %v5024 = vpack.c.b16 %v4681, %v5008
        %v5025 = vpack.c.b16 %v4683, %v5009
        %v5026 = vpack.c.b16 %v4685, %v5010
        %v5027 = vpack.c.b16 %v4687, %v5011
        %v5028 = vpack.c.b16 %v4689, %v5012
        %v5029 = vpack.c.b16 %v4691, %v5013
        %v5030 = vpack.c.b16 %v4693, %v5014
        %v5031 = vpack.c.b16 %v4695, %v5015
        %v5032 = vrot.slane %v5016, 1
        %v5033 = vrot.slane %v4744, 1
        %v5034 = vsel %vm1677, %v5032, %v5033
        %v5035 = vrot.slane %v5017, 1
        %v5036 = vrot.slane %v4745, 1
        %v5037 = vsel %vm1677, %v5035, %v5036
        %v5038 = vrot.slane %v5018, 1
        %v5039 = vrot.slane %v4746, 1
        %v5040 = vsel %vm1677, %v5038, %v5039
        %v5041 = vrot.slane %v5019, 1
        %v5042 = vrot.slane %v4747, 1
        %v5043 = vsel %vm1677, %v5041, %v5042
        %v5044 = vrot.slane %v5020, 1
        %v5045 = vrot.slane %v4748, 1
        %v5046 = vsel %vm1677, %v5044, %v5045
        %v5047 = vrot.slane %v5021, 1
        %v5048 = vrot.slane %v4749, 1
        %v5049 = vsel %vm1677, %v5047, %v5048
        %v5050 = vrot.slane %v5022, 1
        %v5051 = vrot.slane %v4750, 1
        %v5052 = vsel %vm1677, %v5050, %v5051
        %v5053 = vrot.slane %v5023, 1
        %v5054 = vrot.slane %v4751, 1
        %v5055 = vsel %vm1677, %v5053, %v5054
        %v5056 = vrot.slane %v5024, 1
        %v5057 = vrot.slane %v4752, 1
        %v5058 = vsel %vm1677, %v5056, %v5057
        %v5059 = vrot.slane %v5025, 1
        %v5060 = vrot.slane %v4753, 1
        %v5061 = vsel %vm1677, %v5059, %v5060
        %v5062 = vrot.slane %v5026, 1
        %v5063 = vrot.slane %v4754, 1
        %v5064 = vsel %vm1677, %v5062, %v5063
        %v5065 = vrot.slane %v5027, 1
        %v5066 = vrot.slane %v4755, 1
        %v5067 = vsel %vm1677, %v5065, %v5066
        %v5068 = vrot.slane %v5028, 1
        %v5069 = vrot.slane %v4756, 1
        %v5070 = vsel %vm1677, %v5068, %v5069
        %v5071 = vrot.slane %v5029, 1
        %v5072 = vrot.slane %v4757, 1
        %v5073 = vsel %vm1677, %v5071, %v5072
        %v5074 = vrot.slane %v5030, 1
        %v5075 = vrot.slane %v4758, 1
        %v5076 = vsel %vm1677, %v5074, %v5075
        %v5077 = vrot.slane %v5031, 1
        %v5078 = vrot.slane %v4759, 1
        %v5079 = vsel %vm1677, %v5077, %v5078
        %5080 = vrot.lane.b32.xlu0 %v5034, 8
        %v5081 = vpop.permute.xlu0 %5080
        %5082 = vrot.lane.b32.xlu0 %v5037, 8
        %v5083 = vpop.permute.xlu0 %5082
        %5084 = vrot.lane.b32.xlu0 %v5040, 8
        %v5085 = vpop.permute.xlu0 %5084
        %5086 = vrot.lane.b32.xlu0 %v5043, 8
        %v5087 = vpop.permute.xlu0 %5086
        %5088 = vrot.lane.b32.xlu0 %v5046, 8
        %v5089 = vpop.permute.xlu0 %5088
        %5090 = vrot.lane.b32.xlu0 %v5049, 8
        %v5091 = vpop.permute.xlu0 %5090
        %5092 = vrot.lane.b32.xlu0 %v5052, 8
        %v5093 = vpop.permute.xlu0 %5092
        %5094 = vrot.lane.b32.xlu0 %v5055, 8
        %v5095 = vpop.permute.xlu0 %5094
        %5096 = vrot.lane.b32.xlu0 %v5058, 8
        %v5097 = vpop.permute.xlu0 %5096
        %5098 = vrot.lane.b32.xlu0 %v5061, 8
        %v5099 = vpop.permute.xlu0 %5098
        %5100 = vrot.lane.b32.xlu0 %v5064, 8
        %v5101 = vpop.permute.xlu0 %5100
        %5102 = vrot.lane.b32.xlu0 %v5067, 8
        %v5103 = vpop.permute.xlu0 %5102
        %5104 = vrot.lane.b32.xlu0 %v5070, 8
        %v5105 = vpop.permute.xlu0 %5104
        %5106 = vrot.lane.b32.xlu0 %v5073, 8
        %v5107 = vpop.permute.xlu0 %5106
        %5108 = vrot.lane.b32.xlu0 %v5076, 8
        %v5109 = vpop.permute.xlu0 %5108
        %5110 = vrot.lane.b32.xlu0 %v5079, 8
        %v5111 = vpop.permute.xlu0 %5110
        %v5144 = vunpack.c.l.b16 %v4503
        %v5145 = vunpack.c.l.b16 %v4504
        %v5146 = vunpack.c.l.b16 %v4505
        %v5147 = vunpack.c.l.b16 %v4506
        %v5148 = vunpack.c.l.b16 %v4507
        %v5149 = vunpack.c.l.b16 %v4508
        %v5150 = vunpack.c.l.b16 %v4509
        %v5151 = vunpack.c.l.b16 %v4510
        %v5152 = vunpack.c.l.b16 %v4511
        %v5153 = vunpack.c.l.b16 %v4512
        %v5154 = vunpack.c.l.b16 %v4513
        %v5155 = vunpack.c.l.b16 %v4514
        %v5156 = vunpack.c.l.b16 %v4515
        %v5157 = vunpack.c.l.b16 %v4516
        %v5158 = vunpack.c.l.b16 %v4517
        %v5159 = vunpack.c.l.b16 %v4518
        %v5160 = vunpack.c.l.b16 %v4519
        %v5161 = vunpack.c.l.b16 %v4520
        %v5162 = vunpack.c.l.b16 %v4521
        %v5163 = vunpack.c.l.b16 %v4522
        %v5164 = vunpack.c.l.b16 %v4523
        %v5165 = vunpack.c.l.b16 %v4524
        %v5166 = vunpack.c.l.b16 %v4525
        %v5167 = vunpack.c.l.b16 %v4526
        %v5168 = vunpack.c.l.b16 %v4527
        %v5169 = vunpack.c.l.b16 %v4528
        %v5170 = vunpack.c.l.b16 %v4529
        %v5171 = vunpack.c.l.b16 %v4530
        %v5172 = vunpack.c.l.b16 %v4531
        %v5173 = vunpack.c.l.b16 %v4532
        %v5174 = vunpack.c.l.b16 %v4533
        %v5175 = vunpack.c.l.b16 %v4534
        %v5176 = vpack.c.b16 %v5145, %v5144
        %v5177 = vpack.c.b16 %v5147, %v5146
        %v5178 = vpack.c.b16 %v5149, %v5148
        %v5179 = vpack.c.b16 %v5151, %v5150
        %v5180 = vpack.c.b16 %v5153, %v5152
        %v5181 = vpack.c.b16 %v5155, %v5154
        %v5182 = vpack.c.b16 %v5157, %v5156
        %v5183 = vpack.c.b16 %v5159, %v5158
        %v5184 = vpack.c.b16 %v5161, %v5160
        %v5185 = vpack.c.b16 %v5163, %v5162
        %v5186 = vpack.c.b16 %v5165, %v5164
        %v5187 = vpack.c.b16 %v5167, %v5166
        %v5188 = vpack.c.b16 %v5169, %v5168
        %v5189 = vpack.c.b16 %v5171, %v5170
        %v5190 = vpack.c.b16 %v5173, %v5172
        %v5191 = vpack.c.b16 %v5175, %v5174
        %5192 = vrot.lane.b32.xlu0 %v5176, 12
        %v5193 = vpop.permute.xlu0 %5192
        %5194 = vrot.lane.b32.xlu0 %v5177, 12
        %v5195 = vpop.permute.xlu0 %5194
        %5196 = vrot.lane.b32.xlu0 %v5178, 12
        %v5197 = vpop.permute.xlu0 %5196
        %5198 = vrot.lane.b32.xlu0 %v5179, 12
        %v5199 = vpop.permute.xlu0 %5198
        %5200 = vrot.lane.b32.xlu0 %v5180, 12
        %v5201 = vpop.permute.xlu0 %5200
        %5202 = vrot.lane.b32.xlu0 %v5181, 12
        %v5203 = vpop.permute.xlu0 %5202
        %5204 = vrot.lane.b32.xlu0 %v5182, 12
        %v5205 = vpop.permute.xlu0 %5204
        %5206 = vrot.lane.b32.xlu0 %v5183, 12
        %v5207 = vpop.permute.xlu0 %5206
        %5208 = vrot.lane.b32.xlu0 %v5184, 12
        %v5209 = vpop.permute.xlu0 %5208
        %5210 = vrot.lane.b32.xlu0 %v5185, 12
        %v5211 = vpop.permute.xlu0 %5210
        %5212 = vrot.lane.b32.xlu0 %v5186, 12
        %v5213 = vpop.permute.xlu0 %5212
        %5214 = vrot.lane.b32.xlu0 %v5187, 12
        %v5215 = vpop.permute.xlu0 %5214
        %5216 = vrot.lane.b32.xlu0 %v5188, 12
        %v5217 = vpop.permute.xlu0 %5216
        %5218 = vrot.lane.b32.xlu0 %v5189, 12
        %v5219 = vpop.permute.xlu0 %5218
        %5220 = vrot.lane.b32.xlu0 %v5190, 12
        %v5221 = vpop.permute.xlu0 %5220
        %5222 = vrot.lane.b32.xlu0 %v5191, 12
        %v5223 = vpop.permute.xlu0 %5222
        %v5240 = vunpack.c.l.b16 %v4535
        %v5241 = vunpack.c.l.b16 %v4536
        %v5242 = vunpack.c.l.b16 %v4537
        %v5243 = vunpack.c.l.b16 %v4538
        %v5244 = vunpack.c.l.b16 %v4539
        %v5245 = vunpack.c.l.b16 %v4540
        %v5246 = vunpack.c.l.b16 %v4541
        %v5247 = vunpack.c.l.b16 %v4542
        %v5248 = vunpack.c.l.b16 %v4543
        %v5249 = vunpack.c.l.b16 %v4544
        %v5250 = vunpack.c.l.b16 %v4545
        %v5251 = vunpack.c.l.b16 %v4546
        %v5252 = vunpack.c.l.b16 %v4547
        %v5253 = vunpack.c.l.b16 %v4548
        %v5254 = vunpack.c.l.b16 %v4549
        %v5255 = vunpack.c.l.b16 %v4550
        %v5256 = vpack.c.b16 %v5240, %v5240
        %v5257 = vpack.c.b16 %v5241, %v5241
        %v5258 = vpack.c.b16 %v5242, %v5242
        %v5259 = vpack.c.b16 %v5243, %v5243
        %v5260 = vpack.c.b16 %v5244, %v5244
        %v5261 = vpack.c.b16 %v5245, %v5245
        %v5262 = vpack.c.b16 %v5246, %v5246
        %v5263 = vpack.c.b16 %v5247, %v5247
        %v5264 = vpack.c.b16 %v5248, %v5248
        %v5265 = vpack.c.b16 %v5249, %v5249
        %v5266 = vpack.c.b16 %v5250, %v5250
        %v5267 = vpack.c.b16 %v5251, %v5251
        %v5268 = vpack.c.b16 %v5252, %v5252
        %v5269 = vpack.c.b16 %v5253, %v5253
        %v5270 = vpack.c.b16 %v5254, %v5254
        %v5271 = vpack.c.b16 %v5255, %v5255
        %v5273 = vshrl.u32 %v5176, 16
        %v5275 = vshll.u32 %v5176, 16
        %v5277 = vrot.slane %v5275, 1
        %v5278 = vor.u32 %v5273, %v5277
        %v5280 = vshll.u32 %v5256, 16
        %v5282 = vrot.slane %v5280, 1
        %v5283 = vsel %vm1370, %v5278, %v5282
        %v5285 = vshrl.u32 %v5177, 16
        %v5287 = vshll.u32 %v5177, 16
        %v5289 = vrot.slane %v5287, 1
        %v5290 = vor.u32 %v5285, %v5289
        %v5292 = vshll.u32 %v5257, 16
        %v5294 = vrot.slane %v5292, 1
        %v5295 = vsel %vm1370, %v5290, %v5294
        %v5297 = vshrl.u32 %v5178, 16
        %v5299 = vshll.u32 %v5178, 16
        %v5301 = vrot.slane %v5299, 1
        %v5302 = vor.u32 %v5297, %v5301
        %v5304 = vshll.u32 %v5258, 16
        %v5306 = vrot.slane %v5304, 1
        %v5307 = vsel %vm1370, %v5302, %v5306
        %v5309 = vshrl.u32 %v5179, 16
        %v5311 = vshll.u32 %v5179, 16
        %v5313 = vrot.slane %v5311, 1
        %v5314 = vor.u32 %v5309, %v5313
        %v5316 = vshll.u32 %v5259, 16
        %v5318 = vrot.slane %v5316, 1
        %v5319 = vsel %vm1370, %v5314, %v5318
        %v5321 = vshrl.u32 %v5180, 16
        %v5323 = vshll.u32 %v5180, 16
        %v5325 = vrot.slane %v5323, 1
        %v5326 = vor.u32 %v5321, %v5325
        %v5328 = vshll.u32 %v5260, 16
        %v5330 = vrot.slane %v5328, 1
        %v5331 = vsel %vm1370, %v5326, %v5330
        %v5333 = vshrl.u32 %v5181, 16
        %v5335 = vshll.u32 %v5181, 16
        %v5337 = vrot.slane %v5335, 1
        %v5338 = vor.u32 %v5333, %v5337
        %v5340 = vshll.u32 %v5261, 16
        %v5342 = vrot.slane %v5340, 1
        %v5343 = vsel %vm1370, %v5338, %v5342
        %v5345 = vshrl.u32 %v5182, 16
        %v5347 = vshll.u32 %v5182, 16
        %v5349 = vrot.slane %v5347, 1
        %v5350 = vor.u32 %v5345, %v5349
        %v5352 = vshll.u32 %v5262, 16
        %v5354 = vrot.slane %v5352, 1
        %v5355 = vsel %vm1370, %v5350, %v5354
        %v5357 = vshrl.u32 %v5183, 16
        %v5359 = vshll.u32 %v5183, 16
        %v5361 = vrot.slane %v5359, 1
        %v5362 = vor.u32 %v5357, %v5361
        %v5364 = vshll.u32 %v5263, 16
        %v5366 = vrot.slane %v5364, 1
        %v5367 = vsel %vm1370, %v5362, %v5366
        %v5369 = vshrl.u32 %v5184, 16
        %v5371 = vshll.u32 %v5184, 16
        %v5373 = vrot.slane %v5371, 1
        %v5374 = vor.u32 %v5369, %v5373
        %v5376 = vshll.u32 %v5264, 16
        %v5378 = vrot.slane %v5376, 1
        %v5379 = vsel %vm1370, %v5374, %v5378
        %v5381 = vshrl.u32 %v5185, 16
        %v5383 = vshll.u32 %v5185, 16
        %v5385 = vrot.slane %v5383, 1
        %v5386 = vor.u32 %v5381, %v5385
        %v5388 = vshll.u32 %v5265, 16
        %v5390 = vrot.slane %v5388, 1
        %v5391 = vsel %vm1370, %v5386, %v5390
        %v5393 = vshrl.u32 %v5186, 16
        %v5395 = vshll.u32 %v5186, 16
        %v5397 = vrot.slane %v5395, 1
        %v5398 = vor.u32 %v5393, %v5397
        %v5400 = vshll.u32 %v5266, 16
        %v5402 = vrot.slane %v5400, 1
        %v5403 = vsel %vm1370, %v5398, %v5402
        %v5405 = vshrl.u32 %v5187, 16
        %v5407 = vshll.u32 %v5187, 16
        %v5409 = vrot.slane %v5407, 1
        %v5410 = vor.u32 %v5405, %v5409
        %v5412 = vshll.u32 %v5267, 16
        %v5414 = vrot.slane %v5412, 1
        %v5415 = vsel %vm1370, %v5410, %v5414
        %v5417 = vshrl.u32 %v5188, 16
        %v5419 = vshll.u32 %v5188, 16
        %v5421 = vrot.slane %v5419, 1
        %v5422 = vor.u32 %v5417, %v5421
        %v5424 = vshll.u32 %v5268, 16
        %v5426 = vrot.slane %v5424, 1
        %v5427 = vsel %vm1370, %v5422, %v5426
        %v5429 = vshrl.u32 %v5189, 16
        %v5431 = vshll.u32 %v5189, 16
        %v5433 = vrot.slane %v5431, 1
        %v5434 = vor.u32 %v5429, %v5433
        %v5436 = vshll.u32 %v5269, 16
        %v5438 = vrot.slane %v5436, 1
        %v5439 = vsel %vm1370, %v5434, %v5438
        %v5441 = vshrl.u32 %v5190, 16
        %v5443 = vshll.u32 %v5190, 16
        %v5445 = vrot.slane %v5443, 1
        %v5446 = vor.u32 %v5441, %v5445
        %v5448 = vshll.u32 %v5270, 16
        %v5450 = vrot.slane %v5448, 1
        %v5451 = vsel %vm1370, %v5446, %v5450
        %v5453 = vshrl.u32 %v5191, 16
        %v5455 = vshll.u32 %v5191, 16
        %v5457 = vrot.slane %v5455, 1
        %v5458 = vor.u32 %v5453, %v5457
        %v5460 = vshll.u32 %v5271, 16
        %v5462 = vrot.slane %v5460, 1
        %v5463 = vsel %vm1370, %v5458, %v5462
        %5464 = vrot.lane.b32.xlu0 %v5283, 16
        %v5465 = vpop.permute.xlu0 %5464
        %5466 = vrot.lane.b32.xlu0 %v5295, 16
        %v5467 = vpop.permute.xlu0 %5466
        %5468 = vrot.lane.b32.xlu0 %v5307, 16
        %v5469 = vpop.permute.xlu0 %5468
        %5470 = vrot.lane.b32.xlu0 %v5319, 16
        %v5471 = vpop.permute.xlu0 %5470
        %5472 = vrot.lane.b32.xlu0 %v5331, 16
        %v5473 = vpop.permute.xlu0 %5472
        %5474 = vrot.lane.b32.xlu0 %v5343, 16
        %v5475 = vpop.permute.xlu0 %5474
        %5476 = vrot.lane.b32.xlu0 %v5355, 16
        %v5477 = vpop.permute.xlu0 %5476
        %5478 = vrot.lane.b32.xlu0 %v5367, 16
        %v5479 = vpop.permute.xlu0 %5478
        %5480 = vrot.lane.b32.xlu0 %v5379, 16
        %v5481 = vpop.permute.xlu0 %5480
        %5482 = vrot.lane.b32.xlu0 %v5391, 16
        %v5483 = vpop.permute.xlu0 %5482
        %5484 = vrot.lane.b32.xlu0 %v5403, 16
        %v5485 = vpop.permute.xlu0 %5484
        %5486 = vrot.lane.b32.xlu0 %v5415, 16
        %v5487 = vpop.permute.xlu0 %5486
        %5488 = vrot.lane.b32.xlu0 %v5427, 16
        %v5489 = vpop.permute.xlu0 %5488
        %5490 = vrot.lane.b32.xlu0 %v5439, 16
        %v5491 = vpop.permute.xlu0 %5490
        %5492 = vrot.lane.b32.xlu0 %v5451, 16
        %v5493 = vpop.permute.xlu0 %5492
        %5494 = vrot.lane.b32.xlu0 %v5463, 16
        %v5495 = vpop.permute.xlu0 %5494
        %v5512 = vunpack.c.l.b16 %v4551
        %v5513 = vunpack.c.l.b16 %v4552
        %v5514 = vunpack.c.l.b16 %v4553
        %v5515 = vunpack.c.l.b16 %v4554
        %v5516 = vunpack.c.l.b16 %v4555
        %v5517 = vunpack.c.l.b16 %v4556
        %v5518 = vunpack.c.l.b16 %v4557
        %v5519 = vunpack.c.l.b16 %v4558
        %v5520 = vunpack.c.l.b16 %v4559
        %v5521 = vunpack.c.l.b16 %v4560
        %v5522 = vunpack.c.l.b16 %v4561
        %v5523 = vunpack.c.l.b16 %v4562
        %v5524 = vunpack.c.l.b16 %v4563
        %v5525 = vunpack.c.l.b16 %v4564
        %v5526 = vunpack.c.l.b16 %v4565
        %v5527 = vunpack.c.l.b16 %v4566
        %v5528 = vpack.c.b16 %v5145, %v5512
        %v5529 = vpack.c.b16 %v5147, %v5513
        %v5530 = vpack.c.b16 %v5149, %v5514
        %v5531 = vpack.c.b16 %v5151, %v5515
        %v5532 = vpack.c.b16 %v5153, %v5516
        %v5533 = vpack.c.b16 %v5155, %v5517
        %v5534 = vpack.c.b16 %v5157, %v5518
        %v5535 = vpack.c.b16 %v5159, %v5519
        %v5536 = vpack.c.b16 %v5161, %v5520
        %v5537 = vpack.c.b16 %v5163, %v5521
        %v5538 = vpack.c.b16 %v5165, %v5522
        %v5539 = vpack.c.b16 %v5167, %v5523
        %v5540 = vpack.c.b16 %v5169, %v5524
        %v5541 = vpack.c.b16 %v5171, %v5525
        %v5542 = vpack.c.b16 %v5173, %v5526
        %v5543 = vpack.c.b16 %v5175, %v5527
        %v5544 = vrot.slane %v5528, 1
        %v5545 = vrot.slane %v5256, 1
        %v5546 = vsel %vm1677, %v5544, %v5545
        %v5547 = vrot.slane %v5529, 1
        %v5548 = vrot.slane %v5257, 1
        %v5549 = vsel %vm1677, %v5547, %v5548
        %v5550 = vrot.slane %v5530, 1
        %v5551 = vrot.slane %v5258, 1
        %v5552 = vsel %vm1677, %v5550, %v5551
        %v5553 = vrot.slane %v5531, 1
        %v5554 = vrot.slane %v5259, 1
        %v5555 = vsel %vm1677, %v5553, %v5554
        %v5556 = vrot.slane %v5532, 1
        %v5557 = vrot.slane %v5260, 1
        %v5558 = vsel %vm1677, %v5556, %v5557
        %v5559 = vrot.slane %v5533, 1
        %v5560 = vrot.slane %v5261, 1
        %v5561 = vsel %vm1677, %v5559, %v5560
        %v5562 = vrot.slane %v5534, 1
        %v5563 = vrot.slane %v5262, 1
        %v5564 = vsel %vm1677, %v5562, %v5563
        %v5565 = vrot.slane %v5535, 1
        %v5566 = vrot.slane %v5263, 1
        %v5567 = vsel %vm1677, %v5565, %v5566
        %v5568 = vrot.slane %v5536, 1
        %v5569 = vrot.slane %v5264, 1
        %v5570 = vsel %vm1677, %v5568, %v5569
        %v5571 = vrot.slane %v5537, 1
        %v5572 = vrot.slane %v5265, 1
        %v5573 = vsel %vm1677, %v5571, %v5572
        %v5574 = vrot.slane %v5538, 1
        %v5575 = vrot.slane %v5266, 1
        %v5576 = vsel %vm1677, %v5574, %v5575
        %v5577 = vrot.slane %v5539, 1
        %v5578 = vrot.slane %v5267, 1
        %v5579 = vsel %vm1677, %v5577, %v5578
        %v5580 = vrot.slane %v5540, 1
        %v5581 = vrot.slane %v5268, 1
        %v5582 = vsel %vm1677, %v5580, %v5581
        %v5583 = vrot.slane %v5541, 1
        %v5584 = vrot.slane %v5269, 1
        %v5585 = vsel %vm1677, %v5583, %v5584
        %v5586 = vrot.slane %v5542, 1
        %v5587 = vrot.slane %v5270, 1
        %v5588 = vsel %vm1677, %v5586, %v5587
        %v5589 = vrot.slane %v5543, 1
        %v5590 = vrot.slane %v5271, 1
        %v5591 = vsel %vm1677, %v5589, %v5590
        %5592 = vrot.lane.b32.xlu0 %v5546, 20
        %v5593 = vpop.permute.xlu0 %5592
        %5594 = vrot.lane.b32.xlu0 %v5549, 20
        %v5595 = vpop.permute.xlu0 %5594
        %5596 = vrot.lane.b32.xlu0 %v5552, 20
        %v5597 = vpop.permute.xlu0 %5596
        %5598 = vrot.lane.b32.xlu0 %v5555, 20
        %v5599 = vpop.permute.xlu0 %5598
        %5600 = vrot.lane.b32.xlu0 %v5558, 20
        %v5601 = vpop.permute.xlu0 %5600
        %5602 = vrot.lane.b32.xlu0 %v5561, 20
        %v5603 = vpop.permute.xlu0 %5602
        %5604 = vrot.lane.b32.xlu0 %v5564, 20
        %v5605 = vpop.permute.xlu0 %5604
        %5606 = vrot.lane.b32.xlu0 %v5567, 20
        %v5607 = vpop.permute.xlu0 %5606
        %5608 = vrot.lane.b32.xlu0 %v5570, 20
        %v5609 = vpop.permute.xlu0 %5608
        %5610 = vrot.lane.b32.xlu0 %v5573, 20
        %v5611 = vpop.permute.xlu0 %5610
        %5612 = vrot.lane.b32.xlu0 %v5576, 20
        %v5613 = vpop.permute.xlu0 %5612
        %5614 = vrot.lane.b32.xlu0 %v5579, 20
        %v5615 = vpop.permute.xlu0 %5614
        %5616 = vrot.lane.b32.xlu0 %v5582, 20
        %v5617 = vpop.permute.xlu0 %5616
        %5618 = vrot.lane.b32.xlu0 %v5585, 20
        %v5619 = vpop.permute.xlu0 %5618
        %5620 = vrot.lane.b32.xlu0 %v5588, 20
        %v5621 = vpop.permute.xlu0 %5620
        %5622 = vrot.lane.b32.xlu0 %v5591, 20
        %v5623 = vpop.permute.xlu0 %5622
        %v5656 = vunpack.c.l.b16 %v4568
        %v5657 = vunpack.c.l.b16 %v4569
        %v5658 = vunpack.c.l.b16 %v4570
        %v5659 = vunpack.c.l.b16 %v4571
        %v5660 = vunpack.c.l.b16 %v4572
        %v5661 = vunpack.c.l.b16 %v4573
        %v5662 = vunpack.c.l.b16 %v4574
        %v5663 = vunpack.c.l.b16 %v4575
        %v5664 = vunpack.c.l.b16 %v4576
        %v5665 = vunpack.c.l.b16 %v4577
        %v5666 = vunpack.c.l.b16 %v4578
        %v5667 = vunpack.c.l.b16 %v4579
        %v5668 = vunpack.c.l.b16 %v4580
        %v5669 = vunpack.c.l.b16 %v4581
        %v5670 = vunpack.c.l.b16 %v4582
        %v5671 = vunpack.c.l.b16 %v4583
        %v5672 = vunpack.c.l.b16 %v4584
        %v5673 = vunpack.c.l.b16 %v4585
        %v5674 = vunpack.c.l.b16 %v4586
        %v5675 = vunpack.c.l.b16 %v4587
        %v5676 = vunpack.c.l.b16 %v4588
        %v5677 = vunpack.c.l.b16 %v4589
        %v5678 = vunpack.c.l.b16 %v4590
        %v5679 = vunpack.c.l.b16 %v4591
        %v5680 = vunpack.c.l.b16 %v4592
        %v5681 = vunpack.c.l.b16 %v4593
        %v5682 = vunpack.c.l.b16 %v4594
        %v5683 = vunpack.c.l.b16 %v4595
        %v5684 = vunpack.c.l.b16 %v4596
        %v5685 = vunpack.c.l.b16 %v4597
        %v5686 = vunpack.c.l.b16 %v4598
        %v5687 = vunpack.c.l.b16 %v4599
        %v5688 = vpack.c.b16 %v5657, %v5656
        %v5689 = vpack.c.b16 %v5659, %v5658
        %v5690 = vpack.c.b16 %v5661, %v5660
        %v5691 = vpack.c.b16 %v5663, %v5662
        %v5692 = vpack.c.b16 %v5665, %v5664
        %v5693 = vpack.c.b16 %v5667, %v5666
        %v5694 = vpack.c.b16 %v5669, %v5668
        %v5695 = vpack.c.b16 %v5671, %v5670
        %v5696 = vpack.c.b16 %v5673, %v5672
        %v5697 = vpack.c.b16 %v5675, %v5674
        %v5698 = vpack.c.b16 %v5677, %v5676
        %v5699 = vpack.c.b16 %v5679, %v5678
        %v5700 = vpack.c.b16 %v5681, %v5680
        %v5701 = vpack.c.b16 %v5683, %v5682
        %v5702 = vpack.c.b16 %v5685, %v5684
        %v5703 = vpack.c.b16 %v5687, %v5686
        %5704 = vrot.lane.b32.xlu0 %v5688, 24
        %v5705 = vpop.permute.xlu0 %5704
        %5706 = vrot.lane.b32.xlu0 %v5689, 24
        %v5707 = vpop.permute.xlu0 %5706
        %5708 = vrot.lane.b32.xlu0 %v5690, 24
        %v5709 = vpop.permute.xlu0 %5708
        %5710 = vrot.lane.b32.xlu0 %v5691, 24
        %v5711 = vpop.permute.xlu0 %5710
        %5712 = vrot.lane.b32.xlu0 %v5692, 24
        %v5713 = vpop.permute.xlu0 %5712
        %5714 = vrot.lane.b32.xlu0 %v5693, 24
        %v5715 = vpop.permute.xlu0 %5714
        %5716 = vrot.lane.b32.xlu0 %v5694, 24
        %v5717 = vpop.permute.xlu0 %5716
        %5718 = vrot.lane.b32.xlu0 %v5695, 24
        %v5719 = vpop.permute.xlu0 %5718
        %5720 = vrot.lane.b32.xlu0 %v5696, 24
        %v5721 = vpop.permute.xlu0 %5720
        %5722 = vrot.lane.b32.xlu0 %v5697, 24
        %v5723 = vpop.permute.xlu0 %5722
        %5724 = vrot.lane.b32.xlu0 %v5698, 24
        %v5725 = vpop.permute.xlu0 %5724
        %5726 = vrot.lane.b32.xlu0 %v5699, 24
        %v5727 = vpop.permute.xlu0 %5726
        %5728 = vrot.lane.b32.xlu0 %v5700, 24
        %v5729 = vpop.permute.xlu0 %5728
        %5730 = vrot.lane.b32.xlu0 %v5701, 24
        %v5731 = vpop.permute.xlu0 %5730
        %5732 = vrot.lane.b32.xlu0 %v5702, 24
        %v5733 = vpop.permute.xlu0 %5732
        %5734 = vrot.lane.b32.xlu0 %v5703, 24
        %v5735 = vpop.permute.xlu0 %5734
        %v5752 = vunpack.c.l.b16 %v4600
        %v5753 = vunpack.c.l.b16 %v4601
        %v5754 = vunpack.c.l.b16 %v4602
        %v5755 = vunpack.c.l.b16 %v4603
        %v5756 = vunpack.c.l.b16 %v4604
        %v5757 = vunpack.c.l.b16 %v4605
        %v5758 = vunpack.c.l.b16 %v4606
        %v5759 = vunpack.c.l.b16 %v4607
        %v5760 = vunpack.c.l.b16 %v4608
        %v5761 = vunpack.c.l.b16 %v4609
        %v5762 = vunpack.c.l.b16 %v4610
        %v5763 = vunpack.c.l.b16 %v4611
        %v5764 = vunpack.c.l.b16 %v4612
        %v5765 = vunpack.c.l.b16 %v4613
        %v5766 = vunpack.c.l.b16 %v4614
        %v5767 = vunpack.c.l.b16 %v4615
        %v5768 = vpack.c.b16 %v5752, %v5752
        %v5769 = vpack.c.b16 %v5753, %v5753
        %v5770 = vpack.c.b16 %v5754, %v5754
        %v5771 = vpack.c.b16 %v5755, %v5755
        %v5772 = vpack.c.b16 %v5756, %v5756
        %v5773 = vpack.c.b16 %v5757, %v5757
        %v5774 = vpack.c.b16 %v5758, %v5758
        %v5775 = vpack.c.b16 %v5759, %v5759
        %v5776 = vpack.c.b16 %v5760, %v5760
        %v5777 = vpack.c.b16 %v5761, %v5761
        %v5778 = vpack.c.b16 %v5762, %v5762
        %v5779 = vpack.c.b16 %v5763, %v5763
        %v5780 = vpack.c.b16 %v5764, %v5764
        %v5781 = vpack.c.b16 %v5765, %v5765
        %v5782 = vpack.c.b16 %v5766, %v5766
        %v5783 = vpack.c.b16 %v5767, %v5767
        %v5785 = vshrl.u32 %v5688, 16
        %v5787 = vshll.u32 %v5688, 16
        %v5789 = vrot.slane %v5787, 1
        %v5790 = vor.u32 %v5785, %v5789
        %v5792 = vshll.u32 %v5768, 16
        %v5794 = vrot.slane %v5792, 1
        %v5795 = vsel %vm1370, %v5790, %v5794
        %v5797 = vshrl.u32 %v5689, 16
        %v5799 = vshll.u32 %v5689, 16
        %v5801 = vrot.slane %v5799, 1
        %v5802 = vor.u32 %v5797, %v5801
        %v5804 = vshll.u32 %v5769, 16
        %v5806 = vrot.slane %v5804, 1
        %v5807 = vsel %vm1370, %v5802, %v5806
        %v5809 = vshrl.u32 %v5690, 16
        %v5811 = vshll.u32 %v5690, 16
        %v5813 = vrot.slane %v5811, 1
        %v5814 = vor.u32 %v5809, %v5813
        %v5816 = vshll.u32 %v5770, 16
        %v5818 = vrot.slane %v5816, 1
        %v5819 = vsel %vm1370, %v5814, %v5818
        %v5821 = vshrl.u32 %v5691, 16
        %v5823 = vshll.u32 %v5691, 16
        %v5825 = vrot.slane %v5823, 1
        %v5826 = vor.u32 %v5821, %v5825
        %v5828 = vshll.u32 %v5771, 16
        %v5830 = vrot.slane %v5828, 1
        %v5831 = vsel %vm1370, %v5826, %v5830
        %v5833 = vshrl.u32 %v5692, 16
        %v5835 = vshll.u32 %v5692, 16
        %v5837 = vrot.slane %v5835, 1
        %v5838 = vor.u32 %v5833, %v5837
        %v5840 = vshll.u32 %v5772, 16
        %v5842 = vrot.slane %v5840, 1
        %v5843 = vsel %vm1370, %v5838, %v5842
        %v5845 = vshrl.u32 %v5693, 16
        %v5847 = vshll.u32 %v5693, 16
        %v5849 = vrot.slane %v5847, 1
        %v5850 = vor.u32 %v5845, %v5849
        %v5852 = vshll.u32 %v5773, 16
        %v5854 = vrot.slane %v5852, 1
        %v5855 = vsel %vm1370, %v5850, %v5854
        %v5857 = vshrl.u32 %v5694, 16
        %v5859 = vshll.u32 %v5694, 16
        %v5861 = vrot.slane %v5859, 1
        %v5862 = vor.u32 %v5857, %v5861
        %v5864 = vshll.u32 %v5774, 16
        %v5866 = vrot.slane %v5864, 1
        %v5867 = vsel %vm1370, %v5862, %v5866
        %v5869 = vshrl.u32 %v5695, 16
        %v5871 = vshll.u32 %v5695, 16
        %v5873 = vrot.slane %v5871, 1
        %v5874 = vor.u32 %v5869, %v5873
        %v5876 = vshll.u32 %v5775, 16
        %v5878 = vrot.slane %v5876, 1
        %v5879 = vsel %vm1370, %v5874, %v5878
        %v5881 = vshrl.u32 %v5696, 16
        %v5883 = vshll.u32 %v5696, 16
        %v5885 = vrot.slane %v5883, 1
        %v5886 = vor.u32 %v5881, %v5885
        %v5888 = vshll.u32 %v5776, 16
        %v5890 = vrot.slane %v5888, 1
        %v5891 = vsel %vm1370, %v5886, %v5890
        %v5893 = vshrl.u32 %v5697, 16
        %v5895 = vshll.u32 %v5697, 16
        %v5897 = vrot.slane %v5895, 1
        %v5898 = vor.u32 %v5893, %v5897
        %v5900 = vshll.u32 %v5777, 16
        %v5902 = vrot.slane %v5900, 1
        %v5903 = vsel %vm1370, %v5898, %v5902
        %v5905 = vshrl.u32 %v5698, 16
        %v5907 = vshll.u32 %v5698, 16
        %v5909 = vrot.slane %v5907, 1
        %v5910 = vor.u32 %v5905, %v5909
        %v5912 = vshll.u32 %v5778, 16
        %v5914 = vrot.slane %v5912, 1
        %v5915 = vsel %vm1370, %v5910, %v5914
        %v5917 = vshrl.u32 %v5699, 16
        %v5919 = vshll.u32 %v5699, 16
        %v5921 = vrot.slane %v5919, 1
        %v5922 = vor.u32 %v5917, %v5921
        %v5924 = vshll.u32 %v5779, 16
        %v5926 = vrot.slane %v5924, 1
        %v5927 = vsel %vm1370, %v5922, %v5926
        %v5929 = vshrl.u32 %v5700, 16
        %v5931 = vshll.u32 %v5700, 16
        %v5933 = vrot.slane %v5931, 1
        %v5934 = vor.u32 %v5929, %v5933
        %v5936 = vshll.u32 %v5780, 16
        %v5938 = vrot.slane %v5936, 1
        %v5939 = vsel %vm1370, %v5934, %v5938
        %v5941 = vshrl.u32 %v5701, 16
        %v5943 = vshll.u32 %v5701, 16
        %v5945 = vrot.slane %v5943, 1
        %v5946 = vor.u32 %v5941, %v5945
        %v5948 = vshll.u32 %v5781, 16
        %v5950 = vrot.slane %v5948, 1
        %v5951 = vsel %vm1370, %v5946, %v5950
        %v5953 = vshrl.u32 %v5702, 16
        %v5955 = vshll.u32 %v5702, 16
        %v5957 = vrot.slane %v5955, 1
        %v5958 = vor.u32 %v5953, %v5957
        %v5960 = vshll.u32 %v5782, 16
        %v5962 = vrot.slane %v5960, 1
        %v5963 = vsel %vm1370, %v5958, %v5962
        %v5965 = vshrl.u32 %v5703, 16
        %v5967 = vshll.u32 %v5703, 16
        %v5969 = vrot.slane %v5967, 1
        %v5970 = vor.u32 %v5965, %v5969
        %v5972 = vshll.u32 %v5783, 16
        %v5974 = vrot.slane %v5972, 1
        %v5975 = vsel %vm1370, %v5970, %v5974
        %5976 = vrot.lane.b32.xlu0 %v5795, 28
        %v5977 = vpop.permute.xlu0 %5976
        %5978 = vrot.lane.b32.xlu0 %v5807, 28
        %v5979 = vpop.permute.xlu0 %5978
        %5980 = vrot.lane.b32.xlu0 %v5819, 28
        %v5981 = vpop.permute.xlu0 %5980
        %5982 = vrot.lane.b32.xlu0 %v5831, 28
        %v5983 = vpop.permute.xlu0 %5982
        %5984 = vrot.lane.b32.xlu0 %v5843, 28
        %v5985 = vpop.permute.xlu0 %5984
        %5986 = vrot.lane.b32.xlu0 %v5855, 28
        %v5987 = vpop.permute.xlu0 %5986
        %5988 = vrot.lane.b32.xlu0 %v5867, 28
        %v5989 = vpop.permute.xlu0 %5988
        %5990 = vrot.lane.b32.xlu0 %v5879, 28
        %v5991 = vpop.permute.xlu0 %5990
        %5992 = vrot.lane.b32.xlu0 %v5891, 28
        %v5993 = vpop.permute.xlu0 %5992
        %5994 = vrot.lane.b32.xlu0 %v5903, 28
        %v5995 = vpop.permute.xlu0 %5994
        %5996 = vrot.lane.b32.xlu0 %v5915, 28
        %v5997 = vpop.permute.xlu0 %5996
        %5998 = vrot.lane.b32.xlu0 %v5927, 28
        %v5999 = vpop.permute.xlu0 %5998
        %6000 = vrot.lane.b32.xlu0 %v5939, 28
        %v6001 = vpop.permute.xlu0 %6000
        %6002 = vrot.lane.b32.xlu0 %v5951, 28
        %v6003 = vpop.permute.xlu0 %6002
        %6004 = vrot.lane.b32.xlu0 %v5963, 28
        %v6005 = vpop.permute.xlu0 %6004
        %6006 = vrot.lane.b32.xlu0 %v5975, 28
        %v6007 = vpop.permute.xlu0 %6006
        %v6024 = vunpack.c.l.b16 %v4616
        %v6025 = vunpack.c.l.b16 %v4617
        %v6026 = vunpack.c.l.b16 %v4618
        %v6027 = vunpack.c.l.b16 %v4619
        %v6028 = vunpack.c.l.b16 %v4620
        %v6029 = vunpack.c.l.b16 %v4621
        %v6030 = vunpack.c.l.b16 %v4622
        %v6031 = vunpack.c.l.b16 %v4623
        %v6032 = vunpack.c.l.b16 %v4624
        %v6033 = vunpack.c.l.b16 %v4625
        %v6034 = vunpack.c.l.b16 %v4626
        %v6035 = vunpack.c.l.b16 %v4627
        %v6036 = vunpack.c.l.b16 %v4628
        %v6037 = vunpack.c.l.b16 %v4629
        %v6038 = vunpack.c.l.b16 %v4630
        %v6039 = vunpack.c.l.b16 %v4631
        %v6040 = vpack.c.b16 %v5657, %v6024
        %v6041 = vpack.c.b16 %v5659, %v6025
        %v6042 = vpack.c.b16 %v5661, %v6026
        %v6043 = vpack.c.b16 %v5663, %v6027
        %v6044 = vpack.c.b16 %v5665, %v6028
        %v6045 = vpack.c.b16 %v5667, %v6029
        %v6046 = vpack.c.b16 %v5669, %v6030
        %v6047 = vpack.c.b16 %v5671, %v6031
        %v6048 = vpack.c.b16 %v5673, %v6032
        %v6049 = vpack.c.b16 %v5675, %v6033
        %v6050 = vpack.c.b16 %v5677, %v6034
        %v6051 = vpack.c.b16 %v5679, %v6035
        %v6052 = vpack.c.b16 %v5681, %v6036
        %v6053 = vpack.c.b16 %v5683, %v6037
        %v6054 = vpack.c.b16 %v5685, %v6038
        %v6055 = vpack.c.b16 %v5687, %v6039
        %v6056 = vrot.slane %v6040, 1
        %v6057 = vrot.slane %v5768, 1
        %v6058 = vsel %vm1677, %v6056, %v6057
        %v6059 = vrot.slane %v6041, 1
        %v6060 = vrot.slane %v5769, 1
        %v6061 = vsel %vm1677, %v6059, %v6060
        %v6062 = vrot.slane %v6042, 1
        %v6063 = vrot.slane %v5770, 1
        %v6064 = vsel %vm1677, %v6062, %v6063
        %v6065 = vrot.slane %v6043, 1
        %v6066 = vrot.slane %v5771, 1
        %v6067 = vsel %vm1677, %v6065, %v6066
        %v6068 = vrot.slane %v6044, 1
        %v6069 = vrot.slane %v5772, 1
        %v6070 = vsel %vm1677, %v6068, %v6069
        %v6071 = vrot.slane %v6045, 1
        %v6072 = vrot.slane %v5773, 1
        %v6073 = vsel %vm1677, %v6071, %v6072
        %v6074 = vrot.slane %v6046, 1
        %v6075 = vrot.slane %v5774, 1
        %v6076 = vsel %vm1677, %v6074, %v6075
        %v6077 = vrot.slane %v6047, 1
        %v6078 = vrot.slane %v5775, 1
        %v6079 = vsel %vm1677, %v6077, %v6078
        %v6080 = vrot.slane %v6048, 1
        %v6081 = vrot.slane %v5776, 1
        %v6082 = vsel %vm1677, %v6080, %v6081
        %v6083 = vrot.slane %v6049, 1
        %v6084 = vrot.slane %v5777, 1
        %v6085 = vsel %vm1677, %v6083, %v6084
        %v6086 = vrot.slane %v6050, 1
        %v6087 = vrot.slane %v5778, 1
        %v6088 = vsel %vm1677, %v6086, %v6087
        %v6089 = vrot.slane %v6051, 1
        %v6090 = vrot.slane %v5779, 1
        %v6091 = vsel %vm1677, %v6089, %v6090
        %v6092 = vrot.slane %v6052, 1
        %v6093 = vrot.slane %v5780, 1
        %v6094 = vsel %vm1677, %v6092, %v6093
        %v6095 = vrot.slane %v6053, 1
        %v6096 = vrot.slane %v5781, 1
        %v6097 = vsel %vm1677, %v6095, %v6096
        %v6098 = vrot.slane %v6054, 1
        %v6099 = vrot.slane %v5782, 1
        %v6100 = vsel %vm1677, %v6098, %v6099
        %v6101 = vrot.slane %v6055, 1
        %v6102 = vrot.slane %v5783, 1
        %v6103 = vsel %vm1677, %v6101, %v6102
        %6104 = vrot.lane.b32.xlu0 %v6058, 32
        %v6105 = vpop.permute.xlu0 %6104
        %6106 = vrot.lane.b32.xlu0 %v6061, 32
        %v6107 = vpop.permute.xlu0 %6106
        %6108 = vrot.lane.b32.xlu0 %v6064, 32
        %v6109 = vpop.permute.xlu0 %6108
        %6110 = vrot.lane.b32.xlu0 %v6067, 32
        %v6111 = vpop.permute.xlu0 %6110
        %6112 = vrot.lane.b32.xlu0 %v6070, 32
        %v6113 = vpop.permute.xlu0 %6112
        %6114 = vrot.lane.b32.xlu0 %v6073, 32
        %v6115 = vpop.permute.xlu0 %6114
        %6116 = vrot.lane.b32.xlu0 %v6076, 32
        %v6117 = vpop.permute.xlu0 %6116
        %6118 = vrot.lane.b32.xlu0 %v6079, 32
        %v6119 = vpop.permute.xlu0 %6118
        %6120 = vrot.lane.b32.xlu0 %v6082, 32
        %v6121 = vpop.permute.xlu0 %6120
        %6122 = vrot.lane.b32.xlu0 %v6085, 32
        %v6123 = vpop.permute.xlu0 %6122
        %6124 = vrot.lane.b32.xlu0 %v6088, 32
        %v6125 = vpop.permute.xlu0 %6124
        %6126 = vrot.lane.b32.xlu0 %v6091, 32
        %v6127 = vpop.permute.xlu0 %6126
        %6128 = vrot.lane.b32.xlu0 %v6094, 32
        %v6129 = vpop.permute.xlu0 %6128
        %6130 = vrot.lane.b32.xlu0 %v6097, 32
        %v6131 = vpop.permute.xlu0 %6130
        %6132 = vrot.lane.b32.xlu0 %v6100, 32
        %v6133 = vpop.permute.xlu0 %6132
        %6134 = vrot.lane.b32.xlu0 %v6103, 32
        %v6135 = vpop.permute.xlu0 %6134
        %v6137 = vsel %vm2920, %v4696, %v4953
        %v6139 = vsel %vm2920, %v4697, %v4955
        %v6141 = vsel %vm2920, %v4698, %v4957
        %v6143 = vsel %vm2920, %v4699, %v4959
        %v6145 = vsel %vm2920, %v4700, %v4961
        %v6147 = vsel %vm2920, %v4701, %v4963
        %v6149 = vsel %vm2920, %v4702, %v4965
        %v6151 = vsel %vm2920, %v4703, %v4967
        %v6153 = vsel %vm2920, %v4704, %v4969
        %v6155 = vsel %vm2920, %v4705, %v4971
        %v6157 = vsel %vm2920, %v4706, %v4973
        %v6159 = vsel %vm2920, %v4707, %v4975
        %v6161 = vsel %vm2920, %v4708, %v4977
        %v6163 = vsel %vm2920, %v4709, %v4979
        %v6165 = vsel %vm2920, %v4710, %v4981
        %v6167 = vsel %vm2920, %v4711, %v4983
        %v6169 = vsel %vm2957, %v6137, %v5081
        %v6171 = vsel %vm2957, %v6139, %v5083
        %v6173 = vsel %vm2957, %v6141, %v5085
        %v6175 = vsel %vm2957, %v6143, %v5087
        %v6177 = vsel %vm2957, %v6145, %v5089
        %v6179 = vsel %vm2957, %v6147, %v5091
        %v6181 = vsel %vm2957, %v6149, %v5093
        %v6183 = vsel %vm2957, %v6151, %v5095
        %v6185 = vsel %vm2957, %v6153, %v5097
        %v6187 = vsel %vm2957, %v6155, %v5099
        %v6189 = vsel %vm2957, %v6157, %v5101
        %v6191 = vsel %vm2957, %v6159, %v5103
        %v6193 = vsel %vm2957, %v6161, %v5105
        %v6195 = vsel %vm2957, %v6163, %v5107
        %v6197 = vsel %vm2957, %v6165, %v5109
        %v6199 = vsel %vm2957, %v6167, %v5111
        %v6201 = vsel %vm2994, %v6169, %v5193
        %v6203 = vsel %vm2994, %v6171, %v5195
        %v6205 = vsel %vm2994, %v6173, %v5197
        %v6207 = vsel %vm2994, %v6175, %v5199
        %v6209 = vsel %vm2994, %v6177, %v5201
        %v6211 = vsel %vm2994, %v6179, %v5203
        %v6213 = vsel %vm2994, %v6181, %v5205
        %v6215 = vsel %vm2994, %v6183, %v5207
        %v6217 = vsel %vm2994, %v6185, %v5209
        %v6219 = vsel %vm2994, %v6187, %v5211
        %v6221 = vsel %vm2994, %v6189, %v5213
        %v6223 = vsel %vm2994, %v6191, %v5215
        %v6225 = vsel %vm2994, %v6193, %v5217
        %v6227 = vsel %vm2994, %v6195, %v5219
        %v6229 = vsel %vm2994, %v6197, %v5221
        %v6231 = vsel %vm2994, %v6199, %v5223
        %v6233 = vsel %vm3031, %v6201, %v5465
        %v6235 = vsel %vm3031, %v6203, %v5467
        %v6237 = vsel %vm3031, %v6205, %v5469
        %v6239 = vsel %vm3031, %v6207, %v5471
        %v6241 = vsel %vm3031, %v6209, %v5473
        %v6243 = vsel %vm3031, %v6211, %v5475
        %v6245 = vsel %vm3031, %v6213, %v5477
        %v6247 = vsel %vm3031, %v6215, %v5479
        %v6249 = vsel %vm3031, %v6217, %v5481
        %v6251 = vsel %vm3031, %v6219, %v5483
        %v6253 = vsel %vm3031, %v6221, %v5485
        %v6255 = vsel %vm3031, %v6223, %v5487
        %v6257 = vsel %vm3031, %v6225, %v5489
        %v6259 = vsel %vm3031, %v6227, %v5491
        %v6261 = vsel %vm3031, %v6229, %v5493
        %v6263 = vsel %vm3031, %v6231, %v5495
        %v6265 = vsel %vm3068, %v6233, %v5593
        %v6267 = vsel %vm3068, %v6235, %v5595
        %v6269 = vsel %vm3068, %v6237, %v5597
        %v6271 = vsel %vm3068, %v6239, %v5599
        %v6273 = vsel %vm3068, %v6241, %v5601
        %v6275 = vsel %vm3068, %v6243, %v5603
        %v6277 = vsel %vm3068, %v6245, %v5605
        %v6279 = vsel %vm3068, %v6247, %v5607
        %v6281 = vsel %vm3068, %v6249, %v5609
        %v6283 = vsel %vm3068, %v6251, %v5611
        %v6285 = vsel %vm3068, %v6253, %v5613
        %v6287 = vsel %vm3068, %v6255, %v5615
        %v6289 = vsel %vm3068, %v6257, %v5617
        %v6291 = vsel %vm3068, %v6259, %v5619
        %v6293 = vsel %vm3068, %v6261, %v5621
        %v6295 = vsel %vm3068, %v6263, %v5623
        %v6297 = vsel %vm3105, %v6265, %v5705
        %v6299 = vsel %vm3105, %v6267, %v5707
        %v6301 = vsel %vm3105, %v6269, %v5709
        %v6303 = vsel %vm3105, %v6271, %v5711
        %v6305 = vsel %vm3105, %v6273, %v5713
        %v6307 = vsel %vm3105, %v6275, %v5715
        %v6309 = vsel %vm3105, %v6277, %v5717
        %v6311 = vsel %vm3105, %v6279, %v5719
        %v6313 = vsel %vm3105, %v6281, %v5721
        %v6315 = vsel %vm3105, %v6283, %v5723
        %v6317 = vsel %vm3105, %v6285, %v5725
        %v6319 = vsel %vm3105, %v6287, %v5727
        %v6321 = vsel %vm3105, %v6289, %v5729
        %v6323 = vsel %vm3105, %v6291, %v5731
        %v6325 = vsel %vm3105, %v6293, %v5733
        %v6327 = vsel %vm3105, %v6295, %v5735
        %v6329 = vsel %vm3142, %v6297, %v5977
        %v6331 = vsel %vm3142, %v6299, %v5979
        %v6333 = vsel %vm3142, %v6301, %v5981
        %v6335 = vsel %vm3142, %v6303, %v5983
        %v6337 = vsel %vm3142, %v6305, %v5985
        %v6339 = vsel %vm3142, %v6307, %v5987
        %v6341 = vsel %vm3142, %v6309, %v5989
        %v6343 = vsel %vm3142, %v6311, %v5991
        %v6345 = vsel %vm3142, %v6313, %v5993
        %v6347 = vsel %vm3142, %v6315, %v5995
        %v6349 = vsel %vm3142, %v6317, %v5997
        %v6351 = vsel %vm3142, %v6319, %v5999
        %v6353 = vsel %vm3142, %v6321, %v6001
        %v6355 = vsel %vm3142, %v6323, %v6003
        %v6357 = vsel %vm3142, %v6325, %v6005
        %v6359 = vsel %vm3142, %v6327, %v6007
        %v6361 = vsel %vm3179, %v6329, %v6105
        %v6363 = vsel %vm3179, %v6331, %v6107
        %v6365 = vsel %vm3179, %v6333, %v6109
        %v6367 = vsel %vm3179, %v6335, %v6111
        %v6369 = vsel %vm3179, %v6337, %v6113
        %v6371 = vsel %vm3179, %v6339, %v6115
        %v6373 = vsel %vm3179, %v6341, %v6117
        %v6375 = vsel %vm3179, %v6343, %v6119
        %v6377 = vsel %vm3179, %v6345, %v6121
        %v6379 = vsel %vm3179, %v6347, %v6123
        %v6381 = vsel %vm3179, %v6349, %v6125
        %v6383 = vsel %vm3179, %v6351, %v6127
        %v6385 = vsel %vm3179, %v6353, %v6129
        %v6387 = vsel %vm3179, %v6355, %v6131
        %v6389 = vsel %vm3179, %v6357, %v6133
        %v6391 = vsel %vm3179, %v6359, %v6135
        %v6392 = vld [vmem:[#allocation10] sm:$0xf]
        %v6393 = vld [vmem:[#allocation10 + $0x4] sm:$0xf]
        %v6394 = vld [vmem:[#allocation10 + $0x8] sm:$0xf]
        %v6395 = vld [vmem:[#allocation10 + $0xc] sm:$0xf]
        %v6396 = vld [vmem:[#allocation10 + $0x10] sm:$0x3]
        %v6397 = vld [vmem:[#allocation12] sm:$0x1]
        %v6399 = vlaneseq
        %v6400 = vshrl.u32 %v6399, 7
        %v6401 = vsub.s32 0, %v6400
        %v6402 = vrot.slane %v6397, %v6401
        %v6409 = vunpack.c.l.b16 %v6392
        %v6410 = vunpack.c.l.b16 %v6393
        %v6411 = vunpack.c.l.b16 %v6394
        %v6412 = vunpack.c.l.b16 %v6395
        %v6413 = vunpack.c.l.b16 %v6396
        %v6414 = vpack.c.b16 %v6410, %v6409
        %v6415 = vpack.c.b16 %v6412, %v6411
        %v6416 = vpack.c.b16 %v6413, %v6413
        %v6419 = vsel %vm3243, %v6361, 0
        %v6421 = vsel %vm3243, %v6363, 0
        %v6423 = vsel %vm3243, %v6365, 0
        %v6425 = vsel %vm3243, %v6367, 0
        %v6427 = vsel %vm3243, %v6369, 0
        %v6429 = vsel %vm3243, %v6371, 0
        %v6431 = vsel %vm3243, %v6373, 0
        %v6433 = vsel %vm3243, %v6375, 0
        %v6435 = vsel %vm3243, %v6377, 0
        %v6437 = vsel %vm3243, %v6379, 0
        %v6439 = vsel %vm3243, %v6381, 0
        %v6441 = vsel %vm3243, %v6383, 0
        %v6443 = vsel %vm3243, %v6385, 0
        %v6445 = vsel %vm3243, %v6387, 0
        %v6447 = vsel %vm3243, %v6389, 0
        %v6449 = vsel %vm3243, %v6391, 0
        %v6452 = vsel %vm3280, %v6416, 0
        %6454 = vmatprep.subr.bf16.mxu0 0
        %6455 = vmatpush1.bf16.msra.mxu0 %v6414
        %6456 = vmatprep.subr.bf16.mxu0 0
        %6457 = vmatpush1.bf16.msra.mxu0 %v6415
        %6458 = vmatprep.subr.bf16.mxu0 0
        %6459 = vmatpush1.bf16.msra.mxu0 %v6452
        %6460 = vmatprep.subr.bf16.mxu0 0
        %6461 = vmatpush1.bf16.msra.mxu0 0
        %6462 = vmatprep.subr.bf16.mxu0 0
        %6463 = vmatpush1.bf16.msra.mxu0 0
        %6464 = vmatprep.subr.bf16.mxu0 0
        %6465 = vmatpush1.bf16.msra.mxu0 0
        %6466 = vmatprep.subr.bf16.mxu0 0
        %6467 = vmatpush1.bf16.msra.mxu0 0
        %6468 = vmatprep.subr.bf16.mxu0 0
        %6469 = vmatpush1.bf16.msra.mxu0 0
        %6470 = vmatprep.subr.bf16.mxu0 0
        %6471 = vmatpush1.bf16.msra.mxu0 0
        %6472 = vmatprep.subr.bf16.mxu0 0
        %6473 = vmatpush1.bf16.msra.mxu0 0
        %6474 = vmatprep.subr.bf16.mxu0 0
        %6475 = vmatpush1.bf16.msra.mxu0 0
        %6476 = vmatprep.subr.bf16.mxu0 0
        %6477 = vmatpush1.bf16.msra.mxu0 0
        %6478 = vmatprep.subr.bf16.mxu0 0
        %6479 = vmatpush1.bf16.msra.mxu0 0
        %6480 = vmatprep.subr.bf16.mxu0 0
        %6481 = vmatpush1.bf16.msra.mxu0 0
        %6482 = vmatprep.subr.bf16.mxu0 0
        %6483 = vmatpush1.bf16.msra.mxu0 0
        %6484 = vmatprep.subr.bf16.mxu0 0
        %6485 = vmatpush1.bf16.msra.mxu0 0
        %6486 = vmatprep.mubr.bf16.mxu0 0
        %6487 = vmatmul.mubr.bf16.gmra.mrb[0].mxu0 %v6419
        %v6488 = vpop.f32.mrb[0].mxu0
        %v6489 = vadd.f32 %v6402, %v6488
        %v6490 = vpop.f32.mrb[0].mxu0
        %v6491 = vpop.f32.mrb[0].mxu0
        %v6492 = vadd.f32 %v6402, %v6491
        %v6493 = vpop.f32.mrb[0].mxu0
        %6494 = vmatprep.mubr.bf16.mxu0 0
        %6495 = vmatmul.mubr.bf16.gmra.mrb[0].mxu0 %v6421
        %v6496 = vpop.f32.mrb[0].mxu0
        %v6497 = vadd.f32 %v6402, %v6496
        %v6498 = vpop.f32.mrb[0].mxu0
        %v6499 = vpop.f32.mrb[0].mxu0
        %v6500 = vadd.f32 %v6402, %v6499
        %v6501 = vpop.f32.mrb[0].mxu0
        %6502 = vmatprep.mubr.bf16.mxu0 0
        %6503 = vmatmul.mubr.bf16.gmra.mrb[0].mxu0 %v6423
        %v6504 = vpop.f32.mrb[0].mxu0
        %v6505 = vadd.f32 %v6402, %v6504
        %v6506 = vpop.f32.mrb[0].mxu0
        %v6507 = vpop.f32.mrb[0].mxu0
        %v6508 = vadd.f32 %v6402, %v6507
        %v6509 = vpop.f32.mrb[0].mxu0
        %6510 = vmatprep.mubr.bf16.mxu0 0
        %6511 = vmatmul.mubr.bf16.gmra.mrb[0].mxu0 %v6425
        %v6512 = vpop.f32.mrb[0].mxu0
        %v6513 = vadd.f32 %v6402, %v6512
        %v6514 = vpop.f32.mrb[0].mxu0
        %v6515 = vpop.f32.mrb[0].mxu0
        %v6516 = vadd.f32 %v6402, %v6515
        %v6517 = vpop.f32.mrb[0].mxu0
        %6518 = vmatprep.mubr.bf16.mxu0 0
        %6519 = vmatmul.mubr.bf16.gmra.mrb[0].mxu0 %v6427
        %v6520 = vpop.f32.mrb[0].mxu0
        %v6521 = vadd.f32 %v6402, %v6520
        %v6522 = vpop.f32.mrb[0].mxu0
        %v6523 = vpop.f32.mrb[0].mxu0
        %v6524 = vadd.f32 %v6402, %v6523
        %v6525 = vpop.f32.mrb[0].mxu0
        %6526 = vmatprep.mubr.bf16.mxu0 0
        %6527 = vmatmul.mubr.bf16.gmra.mrb[0].mxu0 %v6429
        %v6528 = vpop.f32.mrb[0].mxu0
        %v6529 = vadd.f32 %v6402, %v6528
        %v6530 = vpop.f32.mrb[0].mxu0
        %v6531 = vpop.f32.mrb[0].mxu0
        %v6532 = vadd.f32 %v6402, %v6531
        %v6533 = vpop.f32.mrb[0].mxu0
        %6534 = vmatprep.mubr.bf16.mxu0 0
        %6535 = vmatmul.mubr.bf16.gmra.mrb[0].mxu0 %v6431
        %v6536 = vpop.f32.mrb[0].mxu0
        %v6537 = vadd.f32 %v6402, %v6536
        %v6538 = vpop.f32.mrb[0].mxu0
        %v6539 = vpop.f32.mrb[0].mxu0
        %v6540 = vadd.f32 %v6402, %v6539
        %v6541 = vpop.f32.mrb[0].mxu0
        %6542 = vmatprep.mubr.bf16.mxu0 0
        %6543 = vmatmul.mubr.bf16.gmra.mrb[0].mxu0 %v6433
        %v6544 = vpop.f32.mrb[0].mxu0
        %v6545 = vadd.f32 %v6402, %v6544
        %v6546 = vpop.f32.mrb[0].mxu0
        %v6547 = vpop.f32.mrb[0].mxu0
        %v6548 = vadd.f32 %v6402, %v6547
        %v6549 = vpop.f32.mrb[0].mxu0
        %6550 = vmatprep.mubr.bf16.mxu0 0
        %6551 = vmatmul.mubr.bf16.gmra.mrb[0].mxu0 %v6435
        %v6552 = vpop.f32.mrb[0].mxu0
        %v6553 = vadd.f32 %v6402, %v6552
        %v6554 = vpop.f32.mrb[0].mxu0
        %v6555 = vpop.f32.mrb[0].mxu0
        %v6556 = vadd.f32 %v6402, %v6555
        %v6557 = vpop.f32.mrb[0].mxu0
        %6558 = vmatprep.mubr.bf16.mxu0 0
        %6559 = vmatmul.mubr.bf16.gmra.mrb[0].mxu0 %v6437
        %v6560 = vpop.f32.mrb[0].mxu0
        %v6561 = vadd.f32 %v6402, %v6560
        %v6562 = vpop.f32.mrb[0].mxu0
        %v6563 = vpop.f32.mrb[0].mxu0
        %v6564 = vadd.f32 %v6402, %v6563
        %v6565 = vpop.f32.mrb[0].mxu0
        %6566 = vmatprep.mubr.bf16.mxu0 0
        %6567 = vmatmul.mubr.bf16.gmra.mrb[0].mxu0 %v6439
        %v6568 = vpop.f32.mrb[0].mxu0
        %v6569 = vadd.f32 %v6402, %v6568
        %v6570 = vpop.f32.mrb[0].mxu0
        %v6571 = vpop.f32.mrb[0].mxu0
        %v6572 = vadd.f32 %v6402, %v6571
        %v6573 = vpop.f32.mrb[0].mxu0
        %6574 = vmatprep.mubr.bf16.mxu0 0
        %6575 = vmatmul.mubr.bf16.gmra.mrb[0].mxu0 %v6441
        %v6576 = vpop.f32.mrb[0].mxu0
        %v6577 = vadd.f32 %v6402, %v6576
        %v6578 = vpop.f32.mrb[0].mxu0
        %v6579 = vpop.f32.mrb[0].mxu0
        %v6580 = vadd.f32 %v6402, %v6579
        %v6581 = vpop.f32.mrb[0].mxu0
        %6582 = vmatprep.mubr.bf16.mxu0 0
        %6583 = vmatmul.mubr.bf16.gmra.mrb[0].mxu0 %v6443
        %v6584 = vpop.f32.mrb[0].mxu0
        %v6585 = vadd.f32 %v6402, %v6584
        %v6586 = vpop.f32.mrb[0].mxu0
        %v6587 = vpop.f32.mrb[0].mxu0
        %v6588 = vadd.f32 %v6402, %v6587
        %v6589 = vpop.f32.mrb[0].mxu0
        %6590 = vmatprep.mubr.bf16.mxu0 0
        %6591 = vmatmul.mubr.bf16.gmra.mrb[0].mxu0 %v6445
        %v6592 = vpop.f32.mrb[0].mxu0
        %v6593 = vadd.f32 %v6402, %v6592
        %v6594 = vpop.f32.mrb[0].mxu0
        %v6595 = vpop.f32.mrb[0].mxu0
        %v6596 = vadd.f32 %v6402, %v6595
        %v6597 = vpop.f32.mrb[0].mxu0
        %6598 = vmatprep.mubr.bf16.mxu0 0
        %6599 = vmatmul.mubr.bf16.gmra.mrb[0].mxu0 %v6447
        %v6600 = vpop.f32.mrb[0].mxu0
        %v6601 = vadd.f32 %v6402, %v6600
        %v6602 = vpop.f32.mrb[0].mxu0
        %v6603 = vpop.f32.mrb[0].mxu0
        %v6604 = vadd.f32 %v6402, %v6603
        %v6605 = vpop.f32.mrb[0].mxu0
        %6606 = vmatprep.mubr.bf16.mxu0 0
        %6607 = vmatmul.mubr.bf16.gmra.mrb[0].mxu0 %v6449
        %v6608 = vpop.f32.mrb[0].mxu0
        %v6609 = vadd.f32 %v6402, %v6608
        %v6610 = vpop.f32.mrb[0].mxu0
        %v6611 = vpop.f32.mrb[0].mxu0
        %v6612 = vadd.f32 %v6402, %v6611
        %v6613 = vpop.f32.mrb[0].mxu0
        %6614 = vdwg.mxu0
        %vm6615 = vsmask.f32 3328
        %vm6616 = vsmask.f32 7440
        %vm6617 = vmor %vm6615, %vm6616
        %v6619 = vshrl.u32 %v3678, 16
        %v6621 = vrot.slane %v6619, 4
        %v6622 = vshll.u32 %v3678, 16
        %v6624 = vrot.slane %v6622, 5
        %v6625 = vor.u32 %v6621, %v6624
        %v6626 = vrot.slane %v6625, 4
        %v6628 = vshll.u32 %v3679, 16
        %v6630 = vrot.slane %v6628, 5
        %v6631 = vsel %vm6617, %v6626, %v6630
        %v6632 = vshrl.u32 %v3679, 16
        %v6634 = vrot.slane %v6632, 4
        %v6635 = vor.u32 %v6634, %v6630
        %v6636 = vrot.slane %v6635, 4
        %v6638 = vshll.u32 %v3680, 16
        %v6640 = vrot.slane %v6638, 5
        %v6641 = vsel %vm6617, %v6636, %v6640
        %v6643 = vshrl.u32 %v3681, 16
        %v6645 = vrot.slane %v6643, 4
        %v6646 = vshll.u32 %v3681, 16
        %v6648 = vrot.slane %v6646, 5
        %v6649 = vor.u32 %v6645, %v6648
        %v6650 = vrot.slane %v6649, 4
        %v6652 = vshll.u32 %v3682, 16
        %v6654 = vrot.slane %v6652, 5
        %v6655 = vsel %vm6617, %v6650, %v6654
        %v6656 = vshrl.u32 %v3682, 16
        %v6658 = vrot.slane %v6656, 4
        %v6659 = vor.u32 %v6658, %v6654
        %v6660 = vrot.slane %v6659, 4
        %v6662 = vshll.u32 %v3683, 16
        %v6664 = vrot.slane %v6662, 5
        %v6665 = vsel %vm6617, %v6660, %v6664
        %v6667 = vshrl.u32 %v3684, 16
        %v6669 = vrot.slane %v6667, 4
        %v6670 = vshll.u32 %v3684, 16
        %v6672 = vrot.slane %v6670, 5
        %v6673 = vor.u32 %v6669, %v6672
        %v6674 = vrot.slane %v6673, 4
        %v6676 = vshll.u32 %v3685, 16
        %v6678 = vrot.slane %v6676, 5
        %v6679 = vsel %vm6617, %v6674, %v6678
        %v6680 = vshrl.u32 %v3685, 16
        %v6682 = vrot.slane %v6680, 4
        %v6683 = vor.u32 %v6682, %v6678
        %v6684 = vrot.slane %v6683, 4
        %v6686 = vshll.u32 %v3686, 16
        %v6688 = vrot.slane %v6686, 5
        %v6689 = vsel %vm6617, %v6684, %v6688
        %v6691 = vshrl.u32 %v3687, 16
        %v6693 = vrot.slane %v6691, 4
        %v6694 = vshll.u32 %v3687, 16
        %v6696 = vrot.slane %v6694, 5
        %v6697 = vor.u32 %v6693, %v6696
        %v6698 = vrot.slane %v6697, 4
        %v6700 = vshll.u32 %v3688, 16
        %v6702 = vrot.slane %v6700, 5
        %v6703 = vsel %vm6617, %v6698, %v6702
        %v6704 = vshrl.u32 %v3688, 16
        %v6706 = vrot.slane %v6704, 4
        %v6707 = vor.u32 %v6706, %v6702
        %v6708 = vrot.slane %v6707, 4
        %v6710 = vshll.u32 %v3689, 16
        %v6712 = vrot.slane %v6710, 5
        %v6713 = vsel %vm6617, %v6708, %v6712
        %v6715 = vshrl.u32 %v3690, 16
        %v6717 = vrot.slane %v6715, 4
        %v6718 = vshll.u32 %v3690, 16
        %v6720 = vrot.slane %v6718, 5
        %v6721 = vor.u32 %v6717, %v6720
        %v6722 = vrot.slane %v6721, 4
        %v6724 = vshll.u32 %v3691, 16
        %v6726 = vrot.slane %v6724, 5
        %v6727 = vsel %vm6617, %v6722, %v6726
        %v6728 = vshrl.u32 %v3691, 16
        %v6730 = vrot.slane %v6728, 4
        %v6731 = vor.u32 %v6730, %v6726
        %v6732 = vrot.slane %v6731, 4
        %v6734 = vshll.u32 %v3692, 16
        %v6736 = vrot.slane %v6734, 5
        %v6737 = vsel %vm6617, %v6732, %v6736
        %v6739 = vshrl.u32 %v3693, 16
        %v6741 = vrot.slane %v6739, 4
        %v6742 = vshll.u32 %v3693, 16
        %v6744 = vrot.slane %v6742, 5
        %v6745 = vor.u32 %v6741, %v6744
        %v6746 = vrot.slane %v6745, 4
        %v6748 = vshll.u32 %v3694, 16
        %v6750 = vrot.slane %v6748, 5
        %v6751 = vsel %vm6617, %v6746, %v6750
        %v6752 = vshrl.u32 %v3694, 16
        %v6754 = vrot.slane %v6752, 4
        %v6755 = vor.u32 %v6754, %v6750
        %v6756 = vrot.slane %v6755, 4
        %v6758 = vshll.u32 %v3695, 16
        %v6760 = vrot.slane %v6758, 5
        %v6761 = vsel %vm6617, %v6756, %v6760
        %v6763 = vshrl.u32 %v3696, 16
        %v6765 = vrot.slane %v6763, 4
        %v6766 = vshll.u32 %v3696, 16
        %v6768 = vrot.slane %v6766, 5
        %v6769 = vor.u32 %v6765, %v6768
        %v6770 = vrot.slane %v6769, 4
        %v6772 = vshll.u32 %v3697, 16
        %v6774 = vrot.slane %v6772, 5
        %v6775 = vsel %vm6617, %v6770, %v6774
        %v6776 = vshrl.u32 %v3697, 16
        %v6778 = vrot.slane %v6776, 4
        %v6779 = vor.u32 %v6778, %v6774
        %v6780 = vrot.slane %v6779, 4
        %v6782 = vshll.u32 %v3698, 16
        %v6784 = vrot.slane %v6782, 5
        %v6785 = vsel %vm6617, %v6780, %v6784
        %v6787 = vshrl.u32 %v3699, 16
        %v6789 = vrot.slane %v6787, 4
        %v6790 = vshll.u32 %v3699, 16
        %v6792 = vrot.slane %v6790, 5
        %v6793 = vor.u32 %v6789, %v6792
        %v6794 = vrot.slane %v6793, 4
        %v6796 = vshll.u32 %v3700, 16
        %v6798 = vrot.slane %v6796, 5
        %v6799 = vsel %vm6617, %v6794, %v6798
        %v6800 = vshrl.u32 %v3700, 16
        %v6802 = vrot.slane %v6800, 4
        %v6803 = vor.u32 %v6802, %v6798
        %v6804 = vrot.slane %v6803, 4
        %v6806 = vshll.u32 %v3701, 16
        %v6808 = vrot.slane %v6806, 5
        %v6809 = vsel %vm6617, %v6804, %v6808
        %v6811 = vshrl.u32 %v3702, 16
        %v6813 = vrot.slane %v6811, 4
        %v6814 = vshll.u32 %v3702, 16
        %v6816 = vrot.slane %v6814, 5
        %v6817 = vor.u32 %v6813, %v6816
        %v6818 = vrot.slane %v6817, 4
        %v6820 = vshll.u32 %v3703, 16
        %v6822 = vrot.slane %v6820, 5
        %v6823 = vsel %vm6617, %v6818, %v6822
        %v6824 = vshrl.u32 %v3703, 16
        %v6826 = vrot.slane %v6824, 4
        %v6827 = vor.u32 %v6826, %v6822
        %v6828 = vrot.slane %v6827, 4
        %v6830 = vshll.u32 %v3704, 16
        %v6832 = vrot.slane %v6830, 5
        %v6833 = vsel %vm6617, %v6828, %v6832
        %v6835 = vshrl.u32 %v3705, 16
        %v6837 = vrot.slane %v6835, 4
        %v6838 = vshll.u32 %v3705, 16
        %v6840 = vrot.slane %v6838, 5
        %v6841 = vor.u32 %v6837, %v6840
        %v6842 = vrot.slane %v6841, 4
        %v6844 = vshll.u32 %v3706, 16
        %v6846 = vrot.slane %v6844, 5
        %v6847 = vsel %vm6617, %v6842, %v6846
        %v6848 = vshrl.u32 %v3706, 16
        %v6850 = vrot.slane %v6848, 4
        %v6851 = vor.u32 %v6850, %v6846
        %v6852 = vrot.slane %v6851, 4
        %v6854 = vshll.u32 %v3707, 16
        %v6856 = vrot.slane %v6854, 5
        %v6857 = vsel %vm6617, %v6852, %v6856
        %v6859 = vshrl.u32 %v3708, 16
        %v6861 = vrot.slane %v6859, 4
        %v6862 = vshll.u32 %v3708, 16
        %v6864 = vrot.slane %v6862, 5
        %v6865 = vor.u32 %v6861, %v6864
        %v6866 = vrot.slane %v6865, 4
        %v6868 = vshll.u32 %v3709, 16
        %v6870 = vrot.slane %v6868, 5
        %v6871 = vsel %vm6617, %v6866, %v6870
        %v6872 = vshrl.u32 %v3709, 16
        %v6874 = vrot.slane %v6872, 4
        %v6875 = vor.u32 %v6874, %v6870
        %v6876 = vrot.slane %v6875, 4
        %v6878 = vshll.u32 %v3710, 16
        %v6880 = vrot.slane %v6878, 5
        %v6881 = vsel %vm6617, %v6876, %v6880
        %v6883 = vshrl.u32 %v3711, 16
        %v6885 = vrot.slane %v6883, 4
        %v6886 = vshll.u32 %v3711, 16
        %v6888 = vrot.slane %v6886, 5
        %v6889 = vor.u32 %v6885, %v6888
        %v6890 = vrot.slane %v6889, 4
        %v6892 = vshll.u32 %v3712, 16
        %v6894 = vrot.slane %v6892, 5
        %v6895 = vsel %vm6617, %v6890, %v6894
        %v6896 = vshrl.u32 %v3712, 16
        %v6898 = vrot.slane %v6896, 4
        %v6899 = vor.u32 %v6898, %v6894
        %v6900 = vrot.slane %v6899, 4
        %v6902 = vshll.u32 %v3713, 16
        %v6904 = vrot.slane %v6902, 5
        %v6905 = vsel %vm6617, %v6900, %v6904
        %v6907 = vshrl.u32 %v3714, 16
        %v6909 = vrot.slane %v6907, 4
        %v6910 = vshll.u32 %v3714, 16
        %v6912 = vrot.slane %v6910, 5
        %v6913 = vor.u32 %v6909, %v6912
        %v6914 = vrot.slane %v6913, 4
        %v6916 = vshll.u32 %v3715, 16
        %v6918 = vrot.slane %v6916, 5
        %v6919 = vsel %vm6617, %v6914, %v6918
        %v6920 = vshrl.u32 %v3715, 16
        %v6922 = vrot.slane %v6920, 4
        %v6923 = vor.u32 %v6922, %v6918
        %v6924 = vrot.slane %v6923, 4
        %v6926 = vshll.u32 %v3716, 16
        %v6928 = vrot.slane %v6926, 5
        %v6929 = vsel %vm6617, %v6924, %v6928
        %v6931 = vshrl.u32 %v3717, 16
        %v6933 = vrot.slane %v6931, 4
        %v6934 = vshll.u32 %v3717, 16
        %v6936 = vrot.slane %v6934, 5
        %v6937 = vor.u32 %v6933, %v6936
        %v6938 = vrot.slane %v6937, 4
        %v6940 = vshll.u32 %v3718, 16
        %v6942 = vrot.slane %v6940, 5
        %v6943 = vsel %vm6617, %v6938, %v6942
        %v6944 = vshrl.u32 %v3718, 16
        %v6946 = vrot.slane %v6944, 4
        %v6947 = vor.u32 %v6946, %v6942
        %v6948 = vrot.slane %v6947, 4
        %v6950 = vshll.u32 %v3719, 16
        %v6952 = vrot.slane %v6950, 5
        %v6953 = vsel %vm6617, %v6948, %v6952
        %v6955 = vshrl.u32 %v3720, 16
        %v6957 = vrot.slane %v6955, 4
        %v6958 = vshll.u32 %v3720, 16
        %v6960 = vrot.slane %v6958, 5
        %v6961 = vor.u32 %v6957, %v6960
        %v6962 = vrot.slane %v6961, 4
        %v6964 = vshll.u32 %v3721, 16
        %v6966 = vrot.slane %v6964, 5
        %v6967 = vsel %vm6617, %v6962, %v6966
        %v6968 = vshrl.u32 %v3721, 16
        %v6970 = vrot.slane %v6968, 4
        %v6971 = vor.u32 %v6970, %v6966
        %v6972 = vrot.slane %v6971, 4
        %v6974 = vshll.u32 %v3722, 16
        %v6976 = vrot.slane %v6974, 5
        %v6977 = vsel %vm6617, %v6972, %v6976
        %v6979 = vshrl.u32 %v3723, 16
        %v6981 = vrot.slane %v6979, 4
        %v6982 = vshll.u32 %v3723, 16
        %v6984 = vrot.slane %v6982, 5
        %v6985 = vor.u32 %v6981, %v6984
        %v6986 = vrot.slane %v6985, 4
        %v6988 = vshll.u32 %v3724, 16
        %v6990 = vrot.slane %v6988, 5
        %v6991 = vsel %vm6617, %v6986, %v6990
        %v6992 = vshrl.u32 %v3724, 16
        %v6994 = vrot.slane %v6992, 4
        %v6995 = vor.u32 %v6994, %v6990
        %v6996 = vrot.slane %v6995, 4
        %v6998 = vshll.u32 %v3725, 16
        %v7000 = vrot.slane %v6998, 5
        %v7001 = vsel %vm6617, %v6996, %v7000
        %v7034 = vunpack.c.l.bf16 %v6631
        %v7035 = vunpack.c.l.bf16 %v6641
        %v7036 = vunpack.c.l.bf16 %v6655
        %v7037 = vunpack.c.l.bf16 %v6665
        %v7038 = vunpack.c.l.bf16 %v6679
        %v7039 = vunpack.c.l.bf16 %v6689
        %v7040 = vunpack.c.l.bf16 %v6703
        %v7041 = vunpack.c.l.bf16 %v6713
        %v7042 = vunpack.c.l.bf16 %v6727
        %v7043 = vunpack.c.l.bf16 %v6737
        %v7044 = vunpack.c.l.bf16 %v6751
        %v7045 = vunpack.c.l.bf16 %v6761
        %v7046 = vunpack.c.l.bf16 %v6775
        %v7047 = vunpack.c.l.bf16 %v6785
        %v7048 = vunpack.c.l.bf16 %v6799
        %v7049 = vunpack.c.l.bf16 %v6809
        %v7050 = vunpack.c.l.bf16 %v6823
        %v7051 = vunpack.c.l.bf16 %v6833
        %v7052 = vunpack.c.l.bf16 %v6847
        %v7053 = vunpack.c.l.bf16 %v6857
        %v7054 = vunpack.c.l.bf16 %v6871
        %v7055 = vunpack.c.l.bf16 %v6881
        %v7056 = vunpack.c.l.bf16 %v6895
        %v7057 = vunpack.c.l.bf16 %v6905
        %v7058 = vunpack.c.l.bf16 %v6919
        %v7059 = vunpack.c.l.bf16 %v6929
        %v7060 = vunpack.c.l.bf16 %v6943
        %v7061 = vunpack.c.l.bf16 %v6953
        %v7062 = vunpack.c.l.bf16 %v6967
        %v7063 = vunpack.c.l.bf16 %v6977
        %v7064 = vunpack.c.l.bf16 %v6991
        %v7065 = vunpack.c.l.bf16 %v7001
        %v7066 = vadd.f32 %v6489, %v7034
        %v7067 = vadd.f32 %v6492, %v7035
        %v7068 = vadd.f32 %v6497, %v7036
        %v7069 = vadd.f32 %v6500, %v7037
        %v7070 = vadd.f32 %v6505, %v7038
        %v7071 = vadd.f32 %v6508, %v7039
        %v7072 = vadd.f32 %v6513, %v7040
        %v7073 = vadd.f32 %v6516, %v7041
        %v7074 = vadd.f32 %v6521, %v7042
        %v7075 = vadd.f32 %v6524, %v7043
        %v7076 = vadd.f32 %v6529, %v7044
        %v7077 = vadd.f32 %v6532, %v7045
        %v7078 = vadd.f32 %v6537, %v7046
        %v7079 = vadd.f32 %v6540, %v7047
        %v7080 = vadd.f32 %v6545, %v7048
        %v7081 = vadd.f32 %v6548, %v7049
        %v7082 = vadd.f32 %v6553, %v7050
        %v7083 = vadd.f32 %v6556, %v7051
        %v7084 = vadd.f32 %v6561, %v7052
        %v7085 = vadd.f32 %v6564, %v7053
        %v7086 = vadd.f32 %v6569, %v7054
        %v7087 = vadd.f32 %v6572, %v7055
        %v7088 = vadd.f32 %v6577, %v7056
        %v7089 = vadd.f32 %v6580, %v7057
        %v7090 = vadd.f32 %v6585, %v7058
        %v7091 = vadd.f32 %v6588, %v7059
        %v7092 = vadd.f32 %v6593, %v7060
        %v7093 = vadd.f32 %v6596, %v7061
        %v7094 = vadd.f32 %v6601, %v7062
        %v7095 = vadd.f32 %v6604, %v7063
        %v7096 = vadd.f32 %v6609, %v7064
        %v7097 = vadd.f32 %v6612, %v7065
        %v7098 = vmax.f32 %v7066, 0.0
        %v7099 = vmax.f32 %v7067, 0.0
        %v7100 = vmax.f32 %v7068, 0.0
        %v7101 = vmax.f32 %v7069, 0.0
        %v7102 = vmax.f32 %v7070, 0.0
        %v7103 = vmax.f32 %v7071, 0.0
        %v7104 = vmax.f32 %v7072, 0.0
        %v7105 = vmax.f32 %v7073, 0.0
        %v7106 = vmax.f32 %v7074, 0.0
        %v7107 = vmax.f32 %v7075, 0.0
        %v7108 = vmax.f32 %v7076, 0.0
        %v7109 = vmax.f32 %v7077, 0.0
        %v7110 = vmax.f32 %v7078, 0.0
        %v7111 = vmax.f32 %v7079, 0.0
        %v7112 = vmax.f32 %v7080, 0.0
        %v7113 = vmax.f32 %v7081, 0.0
        %v7114 = vmax.f32 %v7082, 0.0
        %v7115 = vmax.f32 %v7083, 0.0
        %v7116 = vmax.f32 %v7084, 0.0
        %v7117 = vmax.f32 %v7085, 0.0
        %v7118 = vmax.f32 %v7086, 0.0
        %v7119 = vmax.f32 %v7087, 0.0
        %v7120 = vmax.f32 %v7088, 0.0
        %v7121 = vmax.f32 %v7089, 0.0
        %v7122 = vmax.f32 %v7090, 0.0
        %v7123 = vmax.f32 %v7091, 0.0
        %v7124 = vmax.f32 %v7092, 0.0
        %v7125 = vmax.f32 %v7093, 0.0
        %v7126 = vmax.f32 %v7094, 0.0
        %v7127 = vmax.f32 %v7095, 0.0
        %v7128 = vmax.f32 %v7096, 0.0
        %v7129 = vmax.f32 %v7097, 0.0
        %v7130 = vmin.f32 %v7098, 6.0
        %v7131 = vmin.f32 %v7099, 6.0
        %v7132 = vmin.f32 %v7100, 6.0
        %v7133 = vmin.f32 %v7101, 6.0
        %v7134 = vmin.f32 %v7102, 6.0
        %v7135 = vmin.f32 %v7103, 6.0
        %v7136 = vmin.f32 %v7104, 6.0
        %v7137 = vmin.f32 %v7105, 6.0
        %v7138 = vmin.f32 %v7106, 6.0
        %v7139 = vmin.f32 %v7107, 6.0
        %v7140 = vmin.f32 %v7108, 6.0
        %v7141 = vmin.f32 %v7109, 6.0
        %v7142 = vmin.f32 %v7110, 6.0
        %v7143 = vmin.f32 %v7111, 6.0
        %v7144 = vmin.f32 %v7112, 6.0
        %v7145 = vmin.f32 %v7113, 6.0
        %v7146 = vmin.f32 %v7114, 6.0
        %v7147 = vmin.f32 %v7115, 6.0
        %v7148 = vmin.f32 %v7116, 6.0
        %v7149 = vmin.f32 %v7117, 6.0
        %v7150 = vmin.f32 %v7118, 6.0
        %v7151 = vmin.f32 %v7119, 6.0
        %v7152 = vmin.f32 %v7120, 6.0
        %v7153 = vmin.f32 %v7121, 6.0
        %v7154 = vmin.f32 %v7122, 6.0
        %v7155 = vmin.f32 %v7123, 6.0
        %v7156 = vmin.f32 %v7124, 6.0
        %v7157 = vmin.f32 %v7125, 6.0
        %v7158 = vmin.f32 %v7126, 6.0
        %v7159 = vmin.f32 %v7127, 6.0
        %v7160 = vmin.f32 %v7128, 6.0
        %v7161 = vmin.f32 %v7129, 6.0
        %7162 = vst.msk [vmem:[%s310] sm:$0xff] %vm2920, %v7130
        %7163 = vst.msk [vmem:[%s310 + $0x8] sm:$0xff] %vm2920, %v7131
        %7164 = vst.msk [vmem:[%s310 + $0x10] sm:$0xff] %vm2920, %v7132
        %7165 = vst.msk [vmem:[%s310 + $0x18] sm:$0xff] %vm2920, %v7133
        %7166 = vst.msk [vmem:[%s310 + $0x20] sm:$0xff] %vm2920, %v7134
        %7167 = vst.msk [vmem:[%s310 + $0x28] sm:$0xff] %vm2920, %v7135
        %7168 = vst.msk [vmem:[%s310 + $0x30] sm:$0xff] %vm2920, %v7136
        %7169 = vst.msk [vmem:[%s310 + $0x38] sm:$0xff] %vm2920, %v7137
        %7170 = vst.msk [vmem:[%s310 + $0x40] sm:$0xff] %vm2920, %v7138
        %7171 = vst.msk [vmem:[%s310 + $0x48] sm:$0xff] %vm2920, %v7139
        %7172 = vst.msk [vmem:[%s310 + $0x50] sm:$0xff] %vm2920, %v7140
        %7173 = vst.msk [vmem:[%s310 + $0x58] sm:$0xff] %vm2920, %v7141
        %7174 = vst.msk [vmem:[%s310 + $0x60] sm:$0xff] %vm2920, %v7142
        %7175 = vst.msk [vmem:[%s310 + $0x68] sm:$0xff] %vm2920, %v7143
        %7176 = vst.msk [vmem:[%s310 + $0x70] sm:$0xff] %vm2920, %v7144
        %7177 = vst.msk [vmem:[%s310 + $0x78] sm:$0xff] %vm2920, %v7145
        %7178 = vst.msk [vmem:[%s310 + $0x80] sm:$0xff] %vm2920, %v7146
        %7179 = vst.msk [vmem:[%s310 + $0x88] sm:$0xff] %vm2920, %v7147
        %7180 = vst.msk [vmem:[%s310 + $0x90] sm:$0xff] %vm2920, %v7148
        %7181 = vst.msk [vmem:[%s310 + $0x98] sm:$0xff] %vm2920, %v7149
        %7182 = vst.msk [vmem:[%s310 + $0xa0] sm:$0xff] %vm2920, %v7150
        %7183 = vst.msk [vmem:[%s310 + $0xa8] sm:$0xff] %vm2920, %v7151
        %7184 = vst.msk [vmem:[%s310 + $0xb0] sm:$0xff] %vm2920, %v7152
        %7185 = vst.msk [vmem:[%s310 + $0xb8] sm:$0xff] %vm2920, %v7153
        %7186 = vst.msk [vmem:[%s310 + $0xc0] sm:$0xff] %vm2920, %v7154
        %7187 = vst.msk [vmem:[%s310 + $0xc8] sm:$0xff] %vm2920, %v7155
        %7188 = vst.msk [vmem:[%s310 + $0xd0] sm:$0xff] %vm2920, %v7156
        %7189 = vst.msk [vmem:[%s310 + $0xd8] sm:$0xff] %vm2920, %v7157
        %7190 = vst.msk [vmem:[%s310 + $0xe0] sm:$0xff] %vm2920, %v7158
        %7191 = vst.msk [vmem:[%s310 + $0xe8] sm:$0xff] %vm2920, %v7159
        %7192 = vst.msk [vmem:[%s310 + $0xf0] sm:$0xff] %vm2920, %v7160
        %7193 = vst.msk [vmem:[%s310 + $0xf8] sm:$0xff] %vm2920, %v7161
        %s7194 = sand.u32 %s156, 1
        %s7195 = scalar_lea.sflag [#allocation6], %s7194
        %s7196 = sand.u32 %s156, 1
        %s7197 = smul.addr %s7196, 256
        %s7198 = scalar_lea.vmem [#allocation13], %s7197
        // Predicated region
        $region65: #{tpu_custom_call.1} parent=39 // pred_check
          %p7199 = pneg %p166
        $region66: #{tpu_custom_call.1} parent=39 // pred_check_branch
          %7201 = sbr.rel (%p7199) target = $region68
        $region67: #{tpu_custom_call.1} parent=39 // pred_region
          %s7202 = smul.u32 16, %s29
          %s7204 = ssub.s32 4096, 4096
          %7205 = vsyncadd %s7195, %s7204
          %s7206 = smul.addr %s7202, 2
          %s7207 = smul.addr %s28, 32
          %s7208 = sadd.s32 %s7206, %s7207
          %s7209 = smul.addr %s7208, 128
          %s7210 = scalar_lea.hbm %s5, %s7209
          %s7211 = sshll.u32 %s7198, 4
          %s7212 = int_to_ptr.vmem [resolvable:$true] %s7211
          %7217 = dma.vmem_to_hbm [thread:$0]  %s7212, 4096, %s7210, %s7195, 128, 128, 8
        $region68: #{tpu_custom_call.1} parent=39 // pred_fallthru
          _
      $region40: #{tpu_custom_call.1} parent=5 // pred_fallthru
        _
      %p7218 = scmp.le.s32.totalorder 2, %s19
      // Predicated region
      $region69: #{tpu_custom_call.1} parent=5 // pred_check
        %p7219 = pneg %p7218
      $region70: #{tpu_custom_call.1} parent=5 // pred_check_branch
        %7221 = sbr.rel (%p7219) target = $region72
      $region71: #{tpu_custom_call.1} parent=5 // pred_region
        %s7222 = ssub.s32 %s19, 2
        // Predicated region
        $region73: #{tpu_custom_call.1} parent=71 // pred_check
          %p7223 = pneg %p172
        $region74: #{tpu_custom_call.1} parent=71 // pred_check_branch
          %7225 = sbr.rel (%p7223) target = $region76
        $region75: #{tpu_custom_call.1} parent=71 // pred_region
          %s7226 = sand.u32 %s157, 1
          %s7227 = scalar_lea.sflag [#allocation6], %s7226
          %s7228 = sand.u32 %s157, 1
          %s7229 = smul.addr %s7228, 256
          %s7230 = scalar_lea.vmem [#allocation13], %s7229
          %7231 = dma.done %s7227, 4096
        $region76: #{tpu_custom_call.1} parent=71 // pred_fallthru
          _
      $region72: #{tpu_custom_call.1} parent=5 // pred_fallthru
        _
    $region6: #{tpu_custom_call.1} parent=1 // loop_footer
      %s23 = sadd.s32 1, %s19
    $region7: #{tpu_custom_call.1} parent=1 // loop_footer_branch
      %18 = sbr.rel target = $region3
    $region8: #{tpu_custom_call.1} parent=1 // loop_exit
      _
    %7232 = vsyncpa [#allocation5], 1
    %s7233 = scalar_lea.sflag [#allocation5], 1
    %7234 = vsyncpa %s7233, 1
    %7235 = vsyncpa [#allocation8], 1
    %7236 = vsyncpa [#allocation11], 1
    %7237 = vsyncpa [#allocation6], 1
    %s7238 = scalar_lea.sflag [#allocation6], 1
    %7239 = vsyncpa %s7238, 1

</llo_original>
